<compile_context>
chip_gen: v7x
topology: tpu7x:2x2x1
jax: 0.10.0
libtpu: 0.0.40
codegen_flags: <defaults>
</compile_context>

<pallas_src>
import functools
import math

import jax
import jax.numpy as jnp
from jax import lax
from jax.experimental import pallas as pl
from jax.experimental.pallas import tpu as pltpu

_LN_EPS = 1e-5
_VMEM_LIMIT = 48 * 1024 * 1024   # above default scoped limit, headroom under v7x 64 MiB
_INV_SQRT2 = 1.0 / math.sqrt(2.0)


def _round_up(v, m):
    return (v + m - 1) // m * m


# ----------------------------------------------------------------------------
# window partition / reverse / shift mask / relative position index (XLA glue)
# ----------------------------------------------------------------------------
def _window_partition(x, ws):
    B, H, W, C = x.shape
    x = x.reshape(B, H // ws, ws, W // ws, ws, C)
    x = jnp.transpose(x, (0, 1, 3, 2, 4, 5))
    return x.reshape(-1, ws, ws, C)


def _window_reverse(windows, ws, x_size):
    H, W = x_size
    B = windows.shape[0] // ((H // ws) * (W // ws))
    x = windows.reshape(B, H // ws, W // ws, ws, ws, -1)
    x = jnp.transpose(x, (0, 1, 3, 2, 4, 5))
    return x.reshape(B, H, W, -1)


def _calculate_mask(x_size, window_size, shift_size):
    H, W = x_size
    img_mask = jnp.zeros((1, H, W, 1), jnp.float32)
    slices = (slice(0, -window_size), slice(-window_size, -shift_size),
              slice(-shift_size, None))
    cnt = 0
    for hs in slices:
        for ws_ in slices:
            img_mask = img_mask.at[:, hs, ws_, :].set(float(cnt))
            cnt += 1
    mask_windows = _window_partition(img_mask, window_size)
    mask_windows = mask_windows.reshape(-1, window_size * window_size)
    attn_mask = mask_windows[:, None, :] - mask_windows[:, :, None]
    return jnp.where(attn_mask != 0, -100.0, 0.0).astype(jnp.float32)


def _relative_position_index(ws):
    coords = jnp.stack(jnp.meshgrid(jnp.arange(ws), jnp.arange(ws), indexing="ij"))
    coords = coords.reshape(2, -1)
    rel = coords[:, :, None] - coords[:, None, :]
    rel = jnp.transpose(rel, (1, 2, 0)) + jnp.array([ws - 1, ws - 1])
    rel = rel.at[:, :, 0].multiply(2 * ws - 1)
    return rel.sum(-1)                       # (N, N) int32


def _adjusted_window(window_size, shift_size, x_size):
    # same adjustment as the SwinTransformerBlockV1 constructor
    if min(x_size) <= window_size:
        return min(x_size), 0
    return window_size, shift_size


# ----------------------------------------------------------------------------
# Kernel 1: fused norm1 + window attention (all windows of one image per step)
# ----------------------------------------------------------------------------
def _window_attn_kernel(x_ref, g1_ref, bt1_ref, wq_ref, bq_ref, wk_ref, bk_ref,
                        wv_ref, bv_ref, wp_ref, bp_ref, bias_ref, mask_ref, o_ref,
                        *, num_heads, scale, eps, compute_dtype):
    nw, n, c = x_ref.shape
    x = x_ref[...].reshape(nw * n, c).astype(jnp.float32)

    # LayerNorm (norm1) — per-token, so it commutes with roll/window partition.
    mean = jnp.mean(x, axis=-1, keepdims=True)
    d = x - mean
    var = jnp.mean(d * d, axis=-1, keepdims=True)
    xn = d * lax.rsqrt(var + eps) * g1_ref[...] + bt1_ref[...]
    xc = xn.astype(compute_dtype)

    mask = mask_ref[...]                                     # (nw, n, n) f32
    out = jnp.zeros((nw * n, c), jnp.float32)
    for h in range(num_heads):                               # static unroll
        q = jnp.dot(xc, wq_ref[h], preferred_element_type=jnp.float32) + bq_ref[h]
        k = jnp.dot(xc, wk_ref[h], preferred_element_type=jnp.float32) + bk_ref[h]
        v = jnp.dot(xc, wv_ref[h], preferred_element_type=jnp.float32) + bv_ref[h]
        hd = q.shape[-1]
        q3 = (q * scale).astype(compute_dtype).reshape(nw, n, hd)
        k3 = k.astype(compute_dtype).reshape(nw, n, hd)
        v3 = v.astype(compute_dtype).reshape(nw, n, hd)
        s = jnp.einsum("wqd,wkd->wqk", q3, k3,
                       preferred_element_type=jnp.float32)   # (nw, n, n)
        s = s + bias_ref[h][None, :, :] + mask
        s = s - jnp.max(s, axis=-1, keepdims=True)
        p = jnp.exp(s)
        p = p / jnp.sum(p, axis=-1, keepdims=True)
        oh = jnp.einsum("wqk,wkd->wqd", p.astype(compute_dtype), v3,
                        preferred_element_type=jnp.float32)  # (nw, n, hd)
        out = out + jnp.dot(oh.reshape(nw * n, hd).astype(compute_dtype), wp_ref[h],
                            preferred_element_type=jnp.float32)
    out = out + bp_ref[...]
    o_ref[...] = out.reshape(nw, n, c).astype(o_ref.dtype)


def _window_attention_pallas(x_windows, params, attn_mask, *, num_heads, window_size,
                             scale, compute_dtype, eps=_LN_EPS):
    Wtot, N, C = x_windows.shape
    nW = attn_mask.shape[0]
    num_images = Wtot // nW
    hd = C // num_heads
    cd = compute_dtype

    def split_w(w):       # (C, C) -> (nH, C, hd), pre-cast to compute dtype
        return jnp.transpose(w.reshape(C, num_heads, hd), (1, 0, 2)).astype(cd)

    def split_b(b):       # (C,) -> (nH, 1, hd), kept f32
        return b.reshape(num_heads, 1, hd).astype(jnp.float32)

    w_qkv, b_qkv = params["w_qkv"], params["b_qkv"]
    wq, wk, wv = split_w(w_qkv[:, 0:C]), split_w(w_qkv[:, C:2 * C]), split_w(w_qkv[:, 2 * C:3 * C])
    bq, bk, bv = split_b(b_qkv[0:C]), split_b(b_qkv[C:2 * C]), split_b(b_qkv[2 * C:3 * C])
    wp = params["w_proj"].reshape(num_heads, hd, C).astype(cd)
    bp = params["b_proj"].reshape(1, C).astype(jnp.float32)
    g1 = params["ln1_g"].reshape(1, C).astype(jnp.float32)
    bt1 = params["ln1_b"].reshape(1, C).astype(jnp.float32)

    rel_idx = _relative_position_index(window_size)
    bias = params["rpb_table"][rel_idx.reshape(-1)].reshape(N, N, num_heads)
    bias = jnp.transpose(bias, (2, 0, 1)).astype(jnp.float32)     # (nH, N, N)

    kernel = functools.partial(_window_attn_kernel, num_heads=num_heads, scale=scale,
                               eps=eps, compute_dtype=cd)
    return pl.pallas_call(
        kernel,
        out_shape=jax.ShapeDtypeStruct((Wtot, N, C), x_windows.dtype),
        grid_spec=pltpu.PrefetchScalarGridSpec(
            num_scalar_prefetch=0,
            grid=(num_images,),
            in_specs=[
                pl.BlockSpec((nW, N, C), lambda b: (b, 0, 0)),          # x windows (1 image)
                pl.BlockSpec((1, C), lambda b: (0, 0)),                 # ln1 gamma
                pl.BlockSpec((1, C), lambda b: (0, 0)),                 # ln1 beta
                pl.BlockSpec((num_heads, C, hd), lambda b: (0, 0, 0)),  # wq
                pl.BlockSpec((num_heads, 1, hd), lambda b: (0, 0, 0)),  # bq
                pl.BlockSpec((num_heads, C, hd), lambda b: (0, 0, 0)),  # wk
                pl.BlockSpec((num_heads, 1, hd), lambda b: (0, 0, 0)),  # bk
                pl.BlockSpec((num_heads, C, hd), lambda b: (0, 0, 0)),  # wv
                pl.BlockSpec((num_heads, 1, hd), lambda b: (0, 0, 0)),  # bv
                pl.BlockSpec((num_heads, hd, C), lambda b: (0, 0, 0)),  # w_proj (per head)
                pl.BlockSpec((1, C), lambda b: (0, 0)),                 # b_proj
                pl.BlockSpec((num_heads, N, N), lambda b: (0, 0, 0)),   # rel-pos bias
                pl.BlockSpec((nW, N, N), lambda b: (0, 0, 0)),          # shift mask
            ],
            out_specs=pl.BlockSpec((nW, N, C), lambda b: (b, 0, 0)),
        ),
        compiler_params=pltpu.CompilerParams(
            dimension_semantics=("parallel",),
            vmem_limit_bytes=_VMEM_LIMIT),
    )(x_windows, g1, bt1, wq, bq, wk, bk, wv, bv, wp, bp, bias, attn_mask)


# ----------------------------------------------------------------------------
# Kernel 2: fused residual + norm2 + MLP + residual (lane-padded channels)
# ----------------------------------------------------------------------------
def _ln2_mlp_residual_kernel(x_ref, a_ref, g_ref, bt_ref, w1_ref, b1_ref, w2_ref, b2_ref,
                             o_ref, *, c_real, eps, res_scale, compute_dtype):
    x = x_ref[...]
    a = a_ref[...]
    x1 = x + res_scale * a                                   # first residual (f32)

    cp = x1.shape[-1]
    inv_c = 1.0 / c_real
    cmask = (lax.broadcasted_iota(jnp.int32, (1, cp), 1) < c_real).astype(x1.dtype)
    mean = jnp.sum(x1 * cmask, axis=-1, keepdims=True) * inv_c
    d = (x1 - mean) * cmask
    var = jnp.sum(d * d, axis=-1, keepdims=True) * inv_c
    xn = d * lax.rsqrt(var + eps) * g_ref[...] + bt_ref[...]  # norm2 (over real C only)

    h = jnp.dot(xn.astype(compute_dtype), w1_ref[...],
                preferred_element_type=jnp.float32) + b1_ref[...]
    h = 0.5 * h * (1.0 + lax.erf(h * _INV_SQRT2))             # exact GELU (PyTorch default)
    y = jnp.dot(h.astype(compute_dtype), w2_ref[...],
                preferred_element_type=jnp.float32) + b2_ref[...]
    o_ref[...] = (x1 + res_scale * y).astype(o_ref.dtype)     # second residual


def _fused_ln2_mlp_residual(x, attn_out, params, *, res_scale, tile_m, compute_dtype,
                            eps=_LN_EPS):
    B, L, C = x.shape
    hid = params["w1"].shape[1]
    cd = compute_dtype

    Cp = _round_up(C, 128)         # lane-dense output / contraction dims
    Hp = _round_up(hid, 128)
    tokens = B * L
    tiles = (tokens + tile_m - 1) // tile_m
    Tp = tiles * tile_m            # no divisibility assert: pad the token dim

    x2 = jnp.pad(x.reshape(tokens, C), ((0, Tp - tokens), (0, Cp - C)))
    a2 = jnp.pad(attn_out.reshape(tokens, C), ((0, Tp - tokens), (0, Cp - C)))
    g2 = jnp.pad(params["ln2_g"], (0, Cp - C)).reshape(1, Cp).astype(jnp.float32)
    bt2 = jnp.pad(params["ln2_b"], (0, Cp - C)).reshape(1, Cp).astype(jnp.float32)
    w1p = jnp.pad(params["w1"], ((0, Cp - C), (0, Hp - hid))).astype(cd)
    b1p = jnp.pad(params["b1"], (0, Hp - hid)).reshape(1, Hp).astype(jnp.float32)
    w2p = jnp.pad(params["w2"], ((0, Hp - hid), (0, Cp - C))).astype(cd)
    b2p = jnp.pad(params["b2"], (0, Cp - C)).reshape(1, Cp).astype(jnp.float32)

    kernel = functools.partial(_ln2_mlp_residual_kernel, c_real=C, eps=eps,
                               res_scale=res_scale, compute_dtype=cd)
    y2 = pl.pallas_call(
        kernel,
        out_shape=jax.ShapeDtypeStruct((Tp, Cp), x.dtype),
        grid_spec=pltpu.PrefetchScalarGridSpec(
            num_scalar_prefetch=0,
            grid=(tiles,),
            in_specs=[
                pl.BlockSpec((tile_m, Cp), lambda i: (i, 0)),   # x tile
                pl.BlockSpec((tile_m, Cp), lambda i: (i, 0)),   # attention-branch tile
                pl.BlockSpec((1, Cp), lambda i: (0, 0)),        # ln2 gamma
                pl.BlockSpec((1, Cp), lambda i: (0, 0)),        # ln2 beta
                pl.BlockSpec((Cp, Hp), lambda i: (0, 0)),       # fc1 weight (resident)
                pl.BlockSpec((1, Hp), lambda i: (0, 0)),        # fc1 bias
                pl.BlockSpec((Hp, Cp), lambda i: (0, 0)),       # fc2 weight (resident)
                pl.BlockSpec((1, Cp), lambda i: (0, 0)),        # fc2 bias
            ],
            out_specs=pl.BlockSpec((tile_m, Cp), lambda i: (i, 0)),
        ),
        compiler_params=pltpu.CompilerParams(
            dimension_semantics=("parallel",),
            vmem_limit_bytes=_VMEM_LIMIT),
    )(x2, a2, g2, bt2, w1p, b1p, w2p, b2p)
    return y2[:tokens, :C].reshape(B, L, C)


# ----------------------------------------------------------------------------
# Full SwinTransformerBlockV1 forward
# ----------------------------------------------------------------------------
@functools.partial(jax.jit, static_argnames=("x_size", "num_heads", "window_size",
                                             "shift_size", "res_scale", "tile_m",
                                             "compute_dtype"))
def swin_block_v1_pallas(x, params, *, x_size, num_heads, window_size, shift_size,
                         res_scale=1.0, tile_m=256, compute_dtype=jnp.bfloat16):
    """x: (B, H*W, C). Returns (B, H*W, C)."""
    H, W = x_size
    B, L, C = x.shape
    ws, ss = _adjusted_window(window_size, shift_size, x_size)
    assert H % ws == 0 and W % ws == 0
    # TODO(synk): spatial padding for H/W not divisible by the window size is not implemented.
    # TODO(synk): Dropout / DropPath with p > 0 (training mode) is not implemented (p=0 -> identity).
    scale = (C // num_heads) ** (-0.5)

    # ---- attention branch (norm1 fused into the window kernel) ----
    y = x.reshape(B, H, W, C)
    if ss > 0:
        y = jnp.roll(y, (-ss, -ss), axis=(1, 2))
        mask = _calculate_mask((H, W), ws, ss)
    else:
        nW = (H // ws) * (W // ws)
        mask = jnp.zeros((nW, ws * ws, ws * ws), jnp.float32)
    xw = _window_partition(y, ws).reshape(-1, ws * ws, C)
    aw = _window_attention_pallas(xw, params, mask, num_heads=num_heads, window_size=ws,
                                  scale=scale, compute_dtype=compute_dtype)
    aw = _window_reverse(aw.reshape(-1, ws, ws, C), ws, (H, W))
    if ss > 0:
        aw = jnp.roll(aw, (ss, ss), axis=(1, 2))
    attn_out = aw.reshape(B, L, C)

    # ---- residual + norm2 + MLP + residual (one fused kernel) ----
    return _fused_ln2_mlp_residual(x, attn_out, params, res_scale=res_scale,
                                   tile_m=tile_m, compute_dtype=compute_dtype)


# ----------------------------------------------------------------------------
# Pure-JAX reference (mirrors the PyTorch module)
# ----------------------------------------------------------------------------
def swin_block_v1_reference(x, params, *, x_size, num_heads, window_size, shift_size,
                            res_scale=1.0, eps=_LN_EPS):
    H, W = x_size
    B, L, C = x.shape
    ws, ss = _adjusted_window(window_size, shift_size, x_size)
    N = ws * ws
    hd = C // num_heads
    scale = hd ** (-0.5)

    def layernorm(v, g, b):
        mu = jnp.mean(v, -1, keepdims=True)
        var = jnp.mean((v - mu) ** 2, -1, keepdims=True)
        return (v - mu) / jnp.sqrt(var + eps) * g + b

    xn = layernorm(x, params["ln1_g"], params["ln1_b"])
    y = xn.reshape(B, H, W, C)
    if ss > 0:
        y = jnp.roll(y, (-ss, -ss), axis=(1, 2))
    xw = _window_partition(y, ws).reshape(-1, N, C)
    B_ = xw.shape[0]

    qkv = xw @ params["w_qkv"] + params["b_qkv"]
    qkv = jnp.transpose(qkv.reshape(B_, N, 3, num_heads, hd), (2, 0, 3, 1, 4))
    q, k, v = qkv[0] * scale, qkv[1], qkv[2]
    attn = q @ jnp.swapaxes(k, -2, -1)
    rel_idx = _relative_position_index(ws)
    bias = params["rpb_table"][rel_idx.reshape(-1)].reshape(N, N, num_heads)
    attn = attn + jnp.transpose(bias, (2, 0, 1))[None]
    if ss > 0:
        mask = _calculate_mask((H, W), ws, ss)
        nW = mask.shape[0]
        attn = attn.reshape(B_ // nW, nW, num_heads, N, N) + mask[None, :, None]
        attn = attn.reshape(B_, num_heads, N, N)
    attn = jax.nn.softmax(attn, axis=-1)
    out = jnp.swapaxes(attn @ v, 1, 2).reshape(B_, N, C)
    out = out @ params["w_proj"] + params["b_proj"]
    out = _window_reverse(out.reshape(-1, ws, ws, C), ws, (H, W))
    if ss > 0:
        out = jnp.roll(out, (ss, ss), axis=(1, 2))
    attn_out = out.reshape(B, L, C)

    x1 = x + res_scale * attn_out
    xn2 = layernorm(x1, params["ln2_g"], params["ln2_b"])
    h = xn2 @ params["w1"] + params["b1"]
    h = 0.5 * h * (1.0 + lax.erf(h * _INV_SQRT2))
    return x1 + res_scale * (h @ params["w2"] + params["b2"])


if __name__ == "__main__":
    key = jax.random.PRNGKey(0)
    B, H, W, C = 2, 16, 16, 32
    num_heads, window_size, shift_size = 2, 8, 4   # shifted-window path (mask active)
    mlp_ratio = 4.0
    hid = int(C * mlp_ratio)
    res_scale = 1.0
    L = H * W

    ks = jax.random.split(key, 16)
    x = jax.random.normal(ks[0], (B, L, C), jnp.float32)
    params = {
        "ln1_g": 1.0 + 0.1 * jax.random.normal(ks[1], (C,), jnp.float32),
        "ln1_b": 0.1 * jax.random.normal(ks[2], (C,), jnp.float32),
        "w_qkv": 0.05 * jax.random.normal(ks[3], (C, 3 * C), jnp.float32),
        "b_qkv": 0.02 * jax.random.normal(ks[4], (3 * C,), jnp.float32),
        "w_proj": 0.05 * jax.random.normal(ks[5], (C, C), jnp.float32),
        "b_proj": 0.02 * jax.random.normal(ks[6], (C,), jnp.float32),
        "rpb_table": 0.02 * jax.random.normal(ks[7], ((2 * window_size - 1) ** 2, num_heads), jnp.float32),
        "ln2_g": 1.0 + 0.1 * jax.random.normal(ks[8], (C,), jnp.float32),
        "ln2_b": 0.1 * jax.random.normal(ks[9], (C,), jnp.float32),
        "w1": 0.05 * jax.random.normal(ks[10], (C, hid), jnp.float32),
        "b1": 0.02 * jax.random.normal(ks[11], (hid,), jnp.float32),
        "w2": 0.05 * jax.random.normal(ks[12], (hid, C), jnp.float32),
        "b2": 0.02 * jax.random.normal(ks[13], (C,), jnp.float32),
    }

    y_ref = swin_block_v1_reference(x, params, x_size=(H, W), num_heads=num_heads,
                                    window_size=window_size, shift_size=shift_size,
                                    res_scale=res_scale)

    # f32 compute path (tight check of the math)
    y_f32 = swin_block_v1_pallas(x, params, x_size=(H, W), num_heads=num_heads,
                                 window_size=window_size, shift_size=shift_size,
                                 res_scale=res_scale, tile_m=256,
                                 compute_dtype=jnp.float32)
    y_f32 = jax.block_until_ready(y_f32)
    assert y_f32.shape == (B, L, C)
    assert jnp.allclose(y_f32, y_ref, atol=1e-3, rtol=1e-3), "f32 kernel mismatch vs reference"

    # bf16 matmul / f32 accumulate path (default, MXU-friendly)
    y_bf16 = swin_block_v1_pallas(x, params, x_size=(H, W), num_heads=num_heads,
                                  window_size=window_size, shift_size=shift_size,
                                  res_scale=res_scale, tile_m=256,
                                  compute_dtype=jnp.bfloat16)
    y_bf16 = jax.block_until_ready(y_bf16)
    assert jnp.allclose(y_bf16, y_ref, atol=5e-2, rtol=5e-2), "bf16 kernel mismatch vs reference"

    print("KERNEL_OK")
</pallas_src>

<mosaic_0001>
module attributes {stable_mosaic.version = 11 : i64} {
  func.func @_window_attn_kernel(%arg0: i32, %arg1: memref<4x64x32xf32, #tpu.memory_space<vmem>>, %arg2: memref<1x32xf32, #tpu.memory_space<vmem>>, %arg3: memref<1x32xf32, #tpu.memory_space<vmem>>, %arg4: memref<2x32x16xf32, #tpu.memory_space<vmem>>, %arg5: memref<2x1x16xf32, #tpu.memory_space<vmem>>, %arg6: memref<2x32x16xf32, #tpu.memory_space<vmem>>, %arg7: memref<2x1x16xf32, #tpu.memory_space<vmem>>, %arg8: memref<2x32x16xf32, #tpu.memory_space<vmem>>, %arg9: memref<2x1x16xf32, #tpu.memory_space<vmem>>, %arg10: memref<2x16x32xf32, #tpu.memory_space<vmem>>, %arg11: memref<1x32xf32, #tpu.memory_space<vmem>>, %arg12: memref<2x64x64xf32, #tpu.memory_space<vmem>>, %arg13: memref<4x64x64xf32, #tpu.memory_space<vmem>>, %arg14: memref<4x64x32xf32, #tpu.memory_space<vmem>>) attributes {dimension_semantics = [#tpu.dimension_semantics<parallel>], iteration_bounds = array<i64: 2>, scalar_prefetch = 0 : i64, scratch_operands = 0 : i64, tpu.core_type = #tpu.core_type<tc>, window_params = [{transform_indices = @transform_0, window_bounds = array<i64: 4, 64, 32>}, {pipeline_mode = #tpu.pipeline_mode<synchronous>, transform_indices = @transform_1, window_bounds = array<i64: 1, 32>}, {pipeline_mode = #tpu.pipeline_mode<synchronous>, transform_indices = @transform_2, window_bounds = array<i64: 1, 32>}, {pipeline_mode = #tpu.pipeline_mode<synchronous>, transform_indices = @transform_3, window_bounds = array<i64: 2, 32, 16>}, {pipeline_mode = #tpu.pipeline_mode<synchronous>, transform_indices = @transform_4, window_bounds = array<i64: 2, 1, 16>}, {pipeline_mode = #tpu.pipeline_mode<synchronous>, transform_indices = @transform_5, window_bounds = array<i64: 2, 32, 16>}, {pipeline_mode = #tpu.pipeline_mode<synchronous>, transform_indices = @transform_6, window_bounds = array<i64: 2, 1, 16>}, {pipeline_mode = #tpu.pipeline_mode<synchronous>, transform_indices = @transform_7, window_bounds = array<i64: 2, 32, 16>}, {pipeline_mode = #tpu.pipeline_mode<synchronous>, transform_indices = @transform_8, window_bounds = array<i64: 2, 1, 16>}, {pipeline_mode = #tpu.pipeline_mode<synchronous>, transform_indices = @transform_9, window_bounds = array<i64: 2, 16, 32>}, {pipeline_mode = #tpu.pipeline_mode<synchronous>, transform_indices = @transform_10, window_bounds = array<i64: 1, 32>}, {pipeline_mode = #tpu.pipeline_mode<synchronous>, transform_indices = @transform_11, window_bounds = array<i64: 2, 64, 64>}, {pipeline_mode = #tpu.pipeline_mode<synchronous>, transform_indices = @transform_12, window_bounds = array<i64: 4, 64, 64>}, {transform_indices = @transform_13, window_bounds = array<i64: 4, 64, 32>}]} {
    %c0 = arith.constant 0 : index
    %c0_0 = arith.constant 0 : index
    %c0_1 = arith.constant 0 : index
    %0 = vector.load %arg1[%c0, %c0_0, %c0_1] : memref<4x64x32xf32, #tpu.memory_space<vmem>>, vector<4x64x32xf32>
    %1 = vector.shape_cast %0 : vector<4x64x32xf32> to vector<256x32xf32>
    %cst = arith.constant dense<0.000000e+00> : vector<256xf32>
    %2 = vector.multi_reduction <add>, %1, %cst [1] : vector<256x32xf32> to vector<256xf32>
    %3 = vector.shape_cast %2 : vector<256xf32> to vector<256x1xf32>
    %cst_2 = arith.constant 3.200000e+01 : f32
    %4 = vector.broadcast %cst_2 : f32 to vector<256x1xf32>
    %5 = arith.divf %3, %4 : vector<256x1xf32>
    %6 = vector.broadcast %5 : vector<256x1xf32> to vector<256x32xf32>
    %7 = arith.subf %1, %6 : vector<256x32xf32>
    %8 = arith.mulf %7, %7 : vector<256x32xf32>
    %cst_3 = arith.constant dense<0.000000e+00> : vector<256xf32>
    %9 = vector.multi_reduction <add>, %8, %cst_3 [1] : vector<256x32xf32> to vector<256xf32>
    %10 = vector.shape_cast %9 : vector<256xf32> to vector<256x1xf32>
    %cst_4 = arith.constant 3.200000e+01 : f32
    %11 = vector.broadcast %cst_4 : f32 to vector<256x1xf32>
    %12 = arith.divf %10, %11 : vector<256x1xf32>
    %cst_5 = arith.constant 9.99999974E-6 : f32
    %13 = vector.broadcast %cst_5 : f32 to vector<256x1xf32>
    %14 = arith.addf %12, %13 : vector<256x1xf32>
    %15 = math.rsqrt %14 : vector<256x1xf32>
    %16 = vector.broadcast %15 : vector<256x1xf32> to vector<256x32xf32>
    %17 = arith.mulf %7, %16 : vector<256x32xf32>
    %c0_6 = arith.constant 0 : index
    %c0_7 = arith.constant 0 : index
    %18 = vector.load %arg2[%c0_6, %c0_7] : memref<1x32xf32, #tpu.memory_space<vmem>>, vector<1x32xf32>
    %19 = vector.broadcast %18 : vector<1x32xf32> to vector<256x32xf32>
    %20 = arith.mulf %17, %19 : vector<256x32xf32>
    %c0_8 = arith.constant 0 : index
    %c0_9 = arith.constant 0 : index
    %21 = vector.load %arg3[%c0_8, %c0_9] : memref<1x32xf32, #tpu.memory_space<vmem>>, vector<1x32xf32>
    %22 = vector.broadcast %21 : vector<1x32xf32> to vector<256x32xf32>
    %23 = arith.addf %20, %22 : vector<256x32xf32>
    %c0_10 = arith.constant 0 : index
    %c0_11 = arith.constant 0 : index
    %c0_12 = arith.constant 0 : index
    %24 = vector.load %arg13[%c0_10, %c0_11, %c0_12] : memref<4x64x64xf32, #tpu.memory_space<vmem>>, vector<4x64x64xf32>
    %cst_13 = arith.constant 0.000000e+00 : f32
    %25 = vector.broadcast %cst_13 : f32 to vector<256x32xf32>
    %c0_14 = arith.constant 0 : index
    %c0_15 = arith.constant 0 : index
    %c0_16 = arith.constant 0 : index
    %26 = vector.load %arg4[%c0_14, %c0_15, %c0_16] : memref<2x32x16xf32, #tpu.memory_space<vmem>>, vector<1x32x16xf32>
    %27 = vector.shape_cast %26 : vector<1x32x16xf32> to vector<32x16xf32>
    %cst_17 = arith.constant dense<0.000000e+00> : vector<256x16xf32>
    %28 = tpu.matmul %23, %27, %cst_17 {dimension_numbers = #tpu.dot_dimension_numbers<[1], [0], [0], [1], [0, 0, 1, 1], [], []>} : vector<256x32xf32>, vector<32x16xf32>, vector<256x16xf32> -> vector<256x16xf32>
    %c0_18 = arith.constant 0 : index
    %c0_19 = arith.constant 0 : index
    %c0_20 = arith.constant 0 : index
    %29 = vector.load %arg5[%c0_18, %c0_19, %c0_20] : memref<2x1x16xf32, #tpu.memory_space<vmem>>, vector<1x1x16xf32>
    %30 = vector.shape_cast %29 : vector<1x1x16xf32> to vector<1x16xf32>
    %31 = vector.broadcast %30 : vector<1x16xf32> to vector<256x16xf32>
    %32 = arith.addf %28, %31 : vector<256x16xf32>
    %c0_21 = arith.constant 0 : index
    %c0_22 = arith.constant 0 : index
    %c0_23 = arith.constant 0 : index
    %33 = vector.load %arg6[%c0_21, %c0_22, %c0_23] : memref<2x32x16xf32, #tpu.memory_space<vmem>>, vector<1x32x16xf32>
    %34 = vector.shape_cast %33 : vector<1x32x16xf32> to vector<32x16xf32>
    %cst_24 = arith.constant dense<0.000000e+00> : vector<256x16xf32>
    %35 = tpu.matmul %23, %34, %cst_24 {dimension_numbers = #tpu.dot_dimension_numbers<[1], [0], [0], [1], [0, 0, 1, 1], [], []>} : vector<256x32xf32>, vector<32x16xf32>, vector<256x16xf32> -> vector<256x16xf32>
    %c0_25 = arith.constant 0 : index
    %c0_26 = arith.constant 0 : index
    %c0_27 = arith.constant 0 : index
    %36 = vector.load %arg7[%c0_25, %c0_26, %c0_27] : memref<2x1x16xf32, #tpu.memory_space<vmem>>, vector<1x1x16xf32>
    %37 = vector.shape_cast %36 : vector<1x1x16xf32> to vector<1x16xf32>
    %38 = vector.broadcast %37 : vector<1x16xf32> to vector<256x16xf32>
    %39 = arith.addf %35, %38 : vector<256x16xf32>
    %c0_28 = arith.constant 0 : index
    %c0_29 = arith.constant 0 : index
    %c0_30 = arith.constant 0 : index
    %40 = vector.load %arg8[%c0_28, %c0_29, %c0_30] : memref<2x32x16xf32, #tpu.memory_space<vmem>>, vector<1x32x16xf32>
    %41 = vector.shape_cast %40 : vector<1x32x16xf32> to vector<32x16xf32>
    %cst_31 = arith.constant dense<0.000000e+00> : vector<256x16xf32>
    %42 = tpu.matmul %23, %41, %cst_31 {dimension_numbers = #tpu.dot_dimension_numbers<[1], [0], [0], [1], [0, 0, 1, 1], [], []>} : vector<256x32xf32>, vector<32x16xf32>, vector<256x16xf32> -> vector<256x16xf32>
    %c0_32 = arith.constant 0 : index
    %c0_33 = arith.constant 0 : index
    %c0_34 = arith.constant 0 : index
    %43 = vector.load %arg9[%c0_32, %c0_33, %c0_34] : memref<2x1x16xf32, #tpu.memory_space<vmem>>, vector<1x1x16xf32>
    %44 = vector.shape_cast %43 : vector<1x1x16xf32> to vector<1x16xf32>
    %45 = vector.broadcast %44 : vector<1x16xf32> to vector<256x16xf32>
    %46 = arith.addf %42, %45 : vector<256x16xf32>
    %cst_35 = arith.constant 2.500000e-01 : f32
    %47 = vector.broadcast %cst_35 : f32 to vector<256x16xf32>
    %48 = arith.mulf %32, %47 : vector<256x16xf32>
    %49 = vector.shape_cast %48 : vector<256x16xf32> to vector<4x64x16xf32>
    %50 = vector.shape_cast %39 : vector<256x16xf32> to vector<4x64x16xf32>
    %51 = vector.shape_cast %46 : vector<256x16xf32> to vector<4x64x16xf32>
    "tpu.trace_start"() <{level = 10 : i32, message = "wqd,wkd->wqk"}> : () -> ()
    %cst_36 = arith.constant dense<0.000000e+00> : vector<4x64x64xf32>
    %52 = tpu.matmul %49, %50, %cst_36 {dimension_numbers = #tpu.dot_dimension_numbers<[2], [2], [1], [1], [0, 0, 0, 1, 1, 1], [0], [0]>} : vector<4x64x16xf32>, vector<4x64x16xf32>, vector<4x64x64xf32> -> vector<4x64x64xf32>
    "tpu.trace_stop"() : () -> ()
    %c0_37 = arith.constant 0 : index
    %c0_38 = arith.constant 0 : index
    %c0_39 = arith.constant 0 : index
    %53 = vector.load %arg12[%c0_37, %c0_38, %c0_39] : memref<2x64x64xf32, #tpu.memory_space<vmem>>, vector<1x64x64xf32>
    %54 = vector.shape_cast %53 : vector<1x64x64xf32> to vector<64x64xf32>
    %55 = vector.shape_cast %54 : vector<64x64xf32> to vector<1x64x64xf32>
    %56 = vector.broadcast %55 : vector<1x64x64xf32> to vector<4x64x64xf32>
    %57 = arith.addf %52, %56 : vector<4x64x64xf32>
    %58 = arith.addf %57, %24 : vector<4x64x64xf32>
    %cst_40 = arith.constant dense<0xFF800000> : vector<4x64xf32>
    %59 = vector.multi_reduction <maximumf>, %58, %cst_40 [2] : vector<4x64x64xf32> to vector<4x64xf32>
    %60 = vector.shape_cast %59 : vector<4x64xf32> to vector<4x64x1xf32>
    %61 = vector.broadcast %60 : vector<4x64x1xf32> to vector<4x64x64xf32>
    %62 = arith.subf %58, %61 : vector<4x64x64xf32>
    %63 = math.exp %62 : vector<4x64x64xf32>
    %cst_41 = arith.constant dense<0.000000e+00> : vector<4x64xf32>
    %64 = vector.multi_reduction <add>, %63, %cst_41 [2] : vector<4x64x64xf32> to vector<4x64xf32>
    %65 = vector.shape_cast %64 : vector<4x64xf32> to vector<4x64x1xf32>
    %66 = vector.broadcast %65 : vector<4x64x1xf32> to vector<4x64x64xf32>
    %67 = arith.divf %63, %66 : vector<4x64x64xf32>
    "tpu.trace_start"() <{level = 10 : i32, message = "wqk,wkd->wqd"}> : () -> ()
    %cst_42 = arith.constant dense<0.000000e+00> : vector<4x64x16xf32>
    %68 = tpu.matmul %67, %51, %cst_42 {dimension_numbers = #tpu.dot_dimension_numbers<[2], [1], [1], [2], [0, 0, 0, 1, 1, 2], [0], [0]>} : vector<4x64x64xf32>, vector<4x64x16xf32>, vector<4x64x16xf32> -> vector<4x64x16xf32>
    "tpu.trace_stop"() : () -> ()
    %69 = vector.shape_cast %68 : vector<4x64x16xf32> to vector<256x16xf32>
    %c0_43 = arith.constant 0 : index
    %c0_44 = arith.constant 0 : index
    %c0_45 = arith.constant 0 : index
    %70 = vector.load %arg10[%c0_43, %c0_44, %c0_45] : memref<2x16x32xf32, #tpu.memory_space<vmem>>, vector<1x16x32xf32>
    %71 = vector.shape_cast %70 : vector<1x16x32xf32> to vector<16x32xf32>
    %cst_46 = arith.constant dense<0.000000e+00> : vector<256x32xf32>
    %72 = tpu.matmul %69, %71, %cst_46 {dimension_numbers = #tpu.dot_dimension_numbers<[1], [0], [0], [1], [0, 0, 1, 1], [], []>} : vector<256x16xf32>, vector<16x32xf32>, vector<256x32xf32> -> vector<256x32xf32>
    %73 = arith.addf %25, %72 : vector<256x32xf32>
    %c1 = arith.constant 1 : index
    %c0_47 = arith.constant 0 : index
    %c0_48 = arith.constant 0 : index
    %74 = vector.load %arg4[%c1, %c0_47, %c0_48] : memref<2x32x16xf32, #tpu.memory_space<vmem>>, vector<1x32x16xf32>
    %75 = vector.shape_cast %74 : vector<1x32x16xf32> to vector<32x16xf32>
    %cst_49 = arith.constant dense<0.000000e+00> : vector<256x16xf32>
    %76 = tpu.matmul %23, %75, %cst_49 {dimension_numbers = #tpu.dot_dimension_numbers<[1], [0], [0], [1], [0, 0, 1, 1], [], []>} : vector<256x32xf32>, vector<32x16xf32>, vector<256x16xf32> -> vector<256x16xf32>
    %c1_50 = arith.constant 1 : index
    %c0_51 = arith.constant 0 : index
    %c0_52 = arith.constant 0 : index
    %77 = vector.load %arg5[%c1_50, %c0_51, %c0_52] : memref<2x1x16xf32, #tpu.memory_space<vmem>>, vector<1x1x16xf32>
    %78 = vector.shape_cast %77 : vector<1x1x16xf32> to vector<1x16xf32>
    %79 = vector.broadcast %78 : vector<1x16xf32> to vector<256x16xf32>
    %80 = arith.addf %76, %79 : vector<256x16xf32>
    %c1_53 = arith.constant 1 : index
    %c0_54 = arith.constant 0 : index
    %c0_55 = arith.constant 0 : index
    %81 = vector.load %arg6[%c1_53, %c0_54, %c0_55] : memref<2x32x16xf32, #tpu.memory_space<vmem>>, vector<1x32x16xf32>
    %82 = vector.shape_cast %81 : vector<1x32x16xf32> to vector<32x16xf32>
    %cst_56 = arith.constant dense<0.000000e+00> : vector<256x16xf32>
    %83 = tpu.matmul %23, %82, %cst_56 {dimension_numbers = #tpu.dot_dimension_numbers<[1], [0], [0], [1], [0, 0, 1, 1], [], []>} : vector<256x32xf32>, vector<32x16xf32>, vector<256x16xf32> -> vector<256x16xf32>
    %c1_57 = arith.constant 1 : index
    %c0_58 = arith.constant 0 : index
    %c0_59 = arith.constant 0 : index
    %84 = vector.load %arg7[%c1_57, %c0_58, %c0_59] : memref<2x1x16xf32, #tpu.memory_space<vmem>>, vector<1x1x16xf32>
    %85 = vector.shape_cast %84 : vector<1x1x16xf32> to vector<1x16xf32>
    %86 = vector.broadcast %85 : vector<1x16xf32> to vector<256x16xf32>
    %87 = arith.addf %83, %86 : vector<256x16xf32>
    %c1_60 = arith.constant 1 : index
    %c0_61 = arith.constant 0 : index
    %c0_62 = arith.constant 0 : index
    %88 = vector.load %arg8[%c1_60, %c0_61, %c0_62] : memref<2x32x16xf32, #tpu.memory_space<vmem>>, vector<1x32x16xf32>
    %89 = vector.shape_cast %88 : vector<1x32x16xf32> to vector<32x16xf32>
    %cst_63 = arith.constant dense<0.000000e+00> : vector<256x16xf32>
    %90 = tpu.matmul %23, %89, %cst_63 {dimension_numbers = #tpu.dot_dimension_numbers<[1], [0], [0], [1], [0, 0, 1, 1], [], []>} : vector<256x32xf32>, vector<32x16xf32>, vector<256x16xf32> -> vector<256x16xf32>
    %c1_64 = arith.constant 1 : index
    %c0_65 = arith.constant 0 : index
    %c0_66 = arith.constant 0 : index
    %91 = vector.load %arg9[%c1_64, %c0_65, %c0_66] : memref<2x1x16xf32, #tpu.memory_space<vmem>>, vector<1x1x16xf32>
    %92 = vector.shape_cast %91 : vector<1x1x16xf32> to vector<1x16xf32>
    %93 = vector.broadcast %92 : vector<1x16xf32> to vector<256x16xf32>
    %94 = arith.addf %90, %93 : vector<256x16xf32>
    %cst_67 = arith.constant 2.500000e-01 : f32
    %95 = vector.broadcast %cst_67 : f32 to vector<256x16xf32>
    %96 = arith.mulf %80, %95 : vector<256x16xf32>
    %97 = vector.shape_cast %96 : vector<256x16xf32> to vector<4x64x16xf32>
    %98 = vector.shape_cast %87 : vector<256x16xf32> to vector<4x64x16xf32>
    %99 = vector.shape_cast %94 : vector<256x16xf32> to vector<4x64x16xf32>
    "tpu.trace_start"() <{level = 10 : i32, message = "wqd,wkd->wqk"}> : () -> ()
    %cst_68 = arith.constant dense<0.000000e+00> : vector<4x64x64xf32>
    %100 = tpu.matmul %97, %98, %cst_68 {dimension_numbers = #tpu.dot_dimension_numbers<[2], [2], [1], [1], [0, 0, 0, 1, 1, 1], [0], [0]>} : vector<4x64x16xf32>, vector<4x64x16xf32>, vector<4x64x64xf32> -> vector<4x64x64xf32>
    "tpu.trace_stop"() : () -> ()
    %c1_69 = arith.constant 1 : index
    %c0_70 = arith.constant 0 : index
    %c0_71 = arith.constant 0 : index
    %101 = vector.load %arg12[%c1_69, %c0_70, %c0_71] : memref<2x64x64xf32, #tpu.memory_space<vmem>>, vector<1x64x64xf32>
    %102 = vector.shape_cast %101 : vector<1x64x64xf32> to vector<64x64xf32>
    %103 = vector.shape_cast %102 : vector<64x64xf32> to vector<1x64x64xf32>
    %104 = vector.broadcast %103 : vector<1x64x64xf32> to vector<4x64x64xf32>
    %105 = arith.addf %100, %104 : vector<4x64x64xf32>
    %106 = arith.addf %105, %24 : vector<4x64x64xf32>
    %cst_72 = arith.constant dense<0xFF800000> : vector<4x64xf32>
    %107 = vector.multi_reduction <maximumf>, %106, %cst_72 [2] : vector<4x64x64xf32> to vector<4x64xf32>
    %108 = vector.shape_cast %107 : vector<4x64xf32> to vector<4x64x1xf32>
    %109 = vector.broadcast %108 : vector<4x64x1xf32> to vector<4x64x64xf32>
    %110 = arith.subf %106, %109 : vector<4x64x64xf32>
    %111 = math.exp %110 : vector<4x64x64xf32>
    %cst_73 = arith.constant dense<0.000000e+00> : vector<4x64xf32>
    %112 = vector.multi_reduction <add>, %111, %cst_73 [2] : vector<4x64x64xf32> to vector<4x64xf32>
    %113 = vector.shape_cast %112 : vector<4x64xf32> to vector<4x64x1xf32>
    %114 = vector.broadcast %113 : vector<4x64x1xf32> to vector<4x64x64xf32>
    %115 = arith.divf %111, %114 : vector<4x64x64xf32>
    "tpu.trace_start"() <{level = 10 : i32, message = "wqk,wkd->wqd"}> : () -> ()
    %cst_74 = arith.constant dense<0.000000e+00> : vector<4x64x16xf32>
    %116 = tpu.matmul %115, %99, %cst_74 {dimension_numbers = #tpu.dot_dimension_numbers<[2], [1], [1], [2], [0, 0, 0, 1, 1, 2], [0], [0]>} : vector<4x64x64xf32>, vector<4x64x16xf32>, vector<4x64x16xf32> -> vector<4x64x16xf32>
    "tpu.trace_stop"() : () -> ()
    %117 = vector.shape_cast %116 : vector<4x64x16xf32> to vector<256x16xf32>
    %c1_75 = arith.constant 1 : index
    %c0_76 = arith.constant 0 : index
    %c0_77 = arith.constant 0 : index
    %118 = vector.load %arg10[%c1_75, %c0_76, %c0_77] : memref<2x16x32xf32, #tpu.memory_space<vmem>>, vector<1x16x32xf32>
    %119 = vector.shape_cast %118 : vector<1x16x32xf32> to vector<16x32xf32>
    %cst_78 = arith.constant dense<0.000000e+00> : vector<256x32xf32>
    %120 = tpu.matmul %117, %119, %cst_78 {dimension_numbers = #tpu.dot_dimension_numbers<[1], [0], [0], [1], [0, 0, 1, 1], [], []>} : vector<256x16xf32>, vector<16x32xf32>, vector<256x32xf32> -> vector<256x32xf32>
    %121 = arith.addf %73, %120 : vector<256x32xf32>
    %c0_79 = arith.constant 0 : index
    %c0_80 = arith.constant 0 : index
    %122 = vector.load %arg11[%c0_79, %c0_80] : memref<1x32xf32, #tpu.memory_space<vmem>>, vector<1x32xf32>
    %123 = vector.broadcast %122 : vector<1x32xf32> to vector<256x32xf32>
    %124 = arith.addf %121, %123 : vector<256x32xf32>
    %125 = vector.shape_cast %124 : vector<256x32xf32> to vector<4x64x32xf32>
    %c0_81 = arith.constant 0 : index
    %c0_82 = arith.constant 0 : index
    %c0_83 = arith.constant 0 : index
    %126 = vector.load %arg14[%c0_81, %c0_82, %c0_83] : memref<4x64x32xf32, #tpu.memory_space<vmem>>, vector<4x64x32xf32>
    tpu.vector_store %arg14[%c0_81, %c0_82, %c0_83], %125 {strides = array<i32>} : memref<4x64x32xf32, #tpu.memory_space<vmem>>, vector<4x64x32xf32>,
    return
  }
  func.func @transform_0(%arg0: i32) -> (i32, i32, i32) {
    %c0_i32 = arith.constant 0 : i32
    %c0_i32_0 = arith.constant 0 : i32
    %c0_i32_1 = arith.constant 0 : i32
    return %arg0, %c0_i32, %c0_i32_0 : i32, i32, i32
  }
  func.func @transform_1(%arg0: i32) -> (i32, i32) {
    %c0_i32 = arith.constant 0 : i32
    %c0_i32_0 = arith.constant 0 : i32
    %c0_i32_1 = arith.constant 0 : i32
    return %c0_i32, %c0_i32_0 : i32, i32
  }
  func.func @transform_2(%arg0: i32) -> (i32, i32) {
    %c0_i32 = arith.constant 0 : i32
    %c0_i32_0 = arith.constant 0 : i32
    %c0_i32_1 = arith.constant 0 : i32
    return %c0_i32, %c0_i32_0 : i32, i32
  }
  func.func @transform_3(%arg0: i32) -> (i32, i32, i32) {
    %c0_i32 = arith.constant 0 : i32
    %c0_i32_0 = arith.constant 0 : i32
    %c0_i32_1 = arith.constant 0 : i32
    %c0_i32_2 = arith.constant 0 : i32
    return %c0_i32, %c0_i32_0, %c0_i32_1 : i32, i32, i32
  }
  func.func @transform_4(%arg0: i32) -> (i32, i32, i32) {
    %c0_i32 = arith.constant 0 : i32
    %c0_i32_0 = arith.constant 0 : i32
    %c0_i32_1 = arith.constant 0 : i32
    %c0_i32_2 = arith.constant 0 : i32
    return %c0_i32, %c0_i32_0, %c0_i32_1 : i32, i32, i32
  }
  func.func @transform_5(%arg0: i32) -> (i32, i32, i32) {
    %c0_i32 = arith.constant 0 : i32
    %c0_i32_0 = arith.constant 0 : i32
    %c0_i32_1 = arith.constant 0 : i32
    %c0_i32_2 = arith.constant 0 : i32
    return %c0_i32, %c0_i32_0, %c0_i32_1 : i32, i32, i32
  }
  func.func @transform_6(%arg0: i32) -> (i32, i32, i32) {
    %c0_i32 = arith.constant 0 : i32
    %c0_i32_0 = arith.constant 0 : i32
    %c0_i32_1 = arith.constant 0 : i32
    %c0_i32_2 = arith.constant 0 : i32
    return %c0_i32, %c0_i32_0, %c0_i32_1 : i32, i32, i32
  }
  func.func @transform_7(%arg0: i32) -> (i32, i32, i32) {
    %c0_i32 = arith.constant 0 : i32
    %c0_i32_0 = arith.constant 0 : i32
    %c0_i32_1 = arith.constant 0 : i32
    %c0_i32_2 = arith.constant 0 : i32
    return %c0_i32, %c0_i32_0, %c0_i32_1 : i32, i32, i32
  }
  func.func @transform_8(%arg0: i32) -> (i32, i32, i32) {
    %c0_i32 = arith.constant 0 : i32
    %c0_i32_0 = arith.constant 0 : i32
    %c0_i32_1 = arith.constant 0 : i32
    %c0_i32_2 = arith.constant 0 : i32
    return %c0_i32, %c0_i32_0, %c0_i32_1 : i32, i32, i32
  }
  func.func @transform_9(%arg0: i32) -> (i32, i32, i32) {
    %c0_i32 = arith.constant 0 : i32
    %c0_i32_0 = arith.constant 0 : i32
    %c0_i32_1 = arith.constant 0 : i32
    %c0_i32_2 = arith.constant 0 : i32
    return %c0_i32, %c0_i32_0, %c0_i32_1 : i32, i32, i32
  }
  func.func @transform_10(%arg0: i32) -> (i32, i32) {
    %c0_i32 = arith.constant 0 : i32
    %c0_i32_0 = arith.constant 0 : i32
    %c0_i32_1 = arith.constant 0 : i32
    return %c0_i32, %c0_i32_0 : i32, i32
  }
  func.func @transform_11(%arg0: i32) -> (i32, i32, i32) {
    %c0_i32 = arith.constant 0 : i32
    %c0_i32_0 = arith.constant 0 : i32
    %c0_i32_1 = arith.constant 0 : i32
    %c0_i32_2 = arith.constant 0 : i32
    return %c0_i32, %c0_i32_0, %c0_i32_1 : i32, i32, i32
  }
  func.func @transform_12(%arg0: i32) -> (i32, i32, i32) {
    %c0_i32 = arith.constant 0 : i32
    %c0_i32_0 = arith.constant 0 : i32
    %c0_i32_1 = arith.constant 0 : i32
    %c0_i32_2 = arith.constant 0 : i32
    return %c0_i32, %c0_i32_0, %c0_i32_1 : i32, i32, i32
  }
  func.func @transform_13(%arg0: i32) -> (i32, i32, i32) {
    %c0_i32 = arith.constant 0 : i32
    %c0_i32_0 = arith.constant 0 : i32
    %c0_i32_1 = arith.constant 0 : i32
    return %arg0, %c0_i32, %c0_i32_0 : i32, i32, i32
  }
}

module attributes {stable_mosaic.version = 11 : i64} {
  func.func @_ln2_mlp_residual_kernel(%arg0: i32, %arg1: memref<256x128xf32, #tpu.memory_space<vmem>>, %arg2: memref<256x128xf32, #tpu.memory_space<vmem>>, %arg3: memref<1x128xf32, #tpu.memory_space<vmem>>, %arg4: memref<1x128xf32, #tpu.memory_space<vmem>>, %arg5: memref<128x128xf32, #tpu.memory_space<vmem>>, %arg6: memref<1x128xf32, #tpu.memory_space<vmem>>, %arg7: memref<128x128xf32, #tpu.memory_space<vmem>>, %arg8: memref<1x128xf32, #tpu.memory_space<vmem>>, %arg9: memref<256x128xf32, #tpu.memory_space<vmem>>) attributes {dimension_semantics = [#tpu.dimension_semantics<parallel>], iteration_bounds = array<i64: 2>, scalar_prefetch = 0 : i64, scratch_operands = 0 : i64, tpu.core_type = #tpu.core_type<tc>, window_params = [{transform_indices = @transform_0, window_bounds = array<i64: 256, 128>}, {transform_indices = @transform_1, window_bounds = array<i64: 256, 128>}, {pipeline_mode = #tpu.pipeline_mode<synchronous>, transform_indices = @transform_2, window_bounds = array<i64: 1, 128>}, {pipeline_mode = #tpu.pipeline_mode<synchronous>, transform_indices = @transform_3, window_bounds = array<i64: 1, 128>}, {pipeline_mode = #tpu.pipeline_mode<synchronous>, transform_indices = @transform_4, window_bounds = array<i64: 128, 128>}, {pipeline_mode = #tpu.pipeline_mode<synchronous>, transform_indices = @transform_5, window_bounds = array<i64: 1, 128>}, {pipeline_mode = #tpu.pipeline_mode<synchronous>, transform_indices = @transform_6, window_bounds = array<i64: 128, 128>}, {pipeline_mode = #tpu.pipeline_mode<synchronous>, transform_indices = @transform_7, window_bounds = array<i64: 1, 128>}, {transform_indices = @transform_8, window_bounds = array<i64: 256, 128>}]} {
    %c0 = arith.constant 0 : index
    %c0_0 = arith.constant 0 : index
    %0 = vector.load %arg1[%c0, %c0_0] : memref<256x128xf32, #tpu.memory_space<vmem>>, vector<256x128xf32>
    %c0_1 = arith.constant 0 : index
    %c0_2 = arith.constant 0 : index
    %1 = vector.load %arg2[%c0_1, %c0_2] : memref<256x128xf32, #tpu.memory_space<vmem>>, vector<256x128xf32>
    %cst = arith.constant 1.000000e+00 : f32
    %2 = vector.broadcast %cst : f32 to vector<256x128xf32>
    %3 = arith.mulf %2, %1 : vector<256x128xf32>
    %4 = arith.addf %0, %3 : vector<256x128xf32>
    %5 = tpu.iota {dimensions = array<i32: 1>} : vector<1x128xi32>
    %c32_i32 = arith.constant 32 : i32
    %6 = vector.broadcast %c32_i32 : i32 to vector<1x128xi32>
    %7 = arith.cmpi slt, %5, %6 : vector<1x128xi32>
    %8 = arith.extui %7 : vector<1x128xi1> to vector<1x128xi32>
    %9 = arith.sitofp %8 : vector<1x128xi32> to vector<1x128xf32>
    %10 = vector.broadcast %9 : vector<1x128xf32> to vector<256x128xf32>
    %11 = arith.mulf %4, %10 : vector<256x128xf32>
    %cst_3 = arith.constant dense<0.000000e+00> : vector<256xf32>
    %12 = vector.multi_reduction <add>, %11, %cst_3 [1] : vector<256x128xf32> to vector<256xf32>
    %13 = vector.shape_cast %12 : vector<256xf32> to vector<256x1xf32>
    %cst_4 = arith.constant 3.125000e-02 : f32
    %14 = vector.broadcast %cst_4 : f32 to vector<256x1xf32>
    %15 = arith.mulf %13, %14 : vector<256x1xf32>
    %16 = vector.broadcast %15 : vector<256x1xf32> to vector<256x128xf32>
    %17 = arith.subf %4, %16 : vector<256x128xf32>
    %18 = vector.broadcast %9 : vector<1x128xf32> to vector<256x128xf32>
    %19 = arith.mulf %17, %18 : vector<256x128xf32>
    %20 = arith.mulf %19, %19 : vector<256x128xf32>
    %cst_5 = arith.constant dense<0.000000e+00> : vector<256xf32>
    %21 = vector.multi_reduction <add>, %20, %cst_5 [1] : vector<256x128xf32> to vector<256xf32>
    %22 = vector.shape_cast %21 : vector<256xf32> to vector<256x1xf32>
    %cst_6 = arith.constant 3.125000e-02 : f32
    %23 = vector.broadcast %cst_6 : f32 to vector<256x1xf32>
    %24 = arith.mulf %22, %23 : vector<256x1xf32>
    %cst_7 = arith.constant 9.99999974E-6 : f32
    %25 = vector.broadcast %cst_7 : f32 to vector<256x1xf32>
    %26 = arith.addf %24, %25 : vector<256x1xf32>
    %27 = math.rsqrt %26 : vector<256x1xf32>
    %28 = vector.broadcast %27 : vector<256x1xf32> to vector<256x128xf32>
    %29 = arith.mulf %19, %28 : vector<256x128xf32>
    %c0_8 = arith.constant 0 : index
    %c0_9 = arith.constant 0 : index
    %30 = vector.load %arg3[%c0_8, %c0_9] : memref<1x128xf32, #tpu.memory_space<vmem>>, vector<1x128xf32>
    %31 = vector.broadcast %30 : vector<1x128xf32> to vector<256x128xf32>
    %32 = arith.mulf %29, %31 : vector<256x128xf32>
    %c0_10 = arith.constant 0 : index
    %c0_11 = arith.constant 0 : index
    %33 = vector.load %arg4[%c0_10, %c0_11] : memref<1x128xf32, #tpu.memory_space<vmem>>, vector<1x128xf32>
    %34 = vector.broadcast %33 : vector<1x128xf32> to vector<256x128xf32>
    %35 = arith.addf %32, %34 : vector<256x128xf32>
    %c0_12 = arith.constant 0 : index
    %c0_13 = arith.constant 0 : index
    %36 = vector.load %arg5[%c0_12, %c0_13] : memref<128x128xf32, #tpu.memory_space<vmem>>, vector<128x128xf32>
    %cst_14 = arith.constant dense<0.000000e+00> : vector<256x128xf32>
    %37 = tpu.matmul %35, %36, %cst_14 {dimension_numbers = #tpu.dot_dimension_numbers<[1], [0], [0], [1], [0, 0, 1, 1], [], []>} : vector<256x128xf32>, vector<128x128xf32>, vector<256x128xf32> -> vector<256x128xf32>
    %c0_15 = arith.constant 0 : index
    %c0_16 = arith.constant 0 : index
    %38 = vector.load %arg6[%c0_15, %c0_16] : memref<1x128xf32, #tpu.memory_space<vmem>>, vector<1x128xf32>
    %39 = vector.broadcast %38 : vector<1x128xf32> to vector<256x128xf32>
    %40 = arith.addf %37, %39 : vector<256x128xf32>
    %cst_17 = arith.constant 5.000000e-01 : f32
    %41 = vector.broadcast %cst_17 : f32 to vector<256x128xf32>
    %42 = arith.mulf %41, %40 : vector<256x128xf32>
    %cst_18 = arith.constant 0.707106769 : f32
    %43 = vector.broadcast %cst_18 : f32 to vector<256x128xf32>
    %44 = arith.mulf %40, %43 : vector<256x128xf32>
    %45 = math.erf %44 : vector<256x128xf32>
    %cst_19 = arith.constant 1.000000e+00 : f32
    %46 = vector.broadcast %cst_19 : f32 to vector<256x128xf32>
    %47 = arith.addf %46, %45 : vector<256x128xf32>
    %48 = arith.mulf %42, %47 : vector<256x128xf32>
    %c0_20 = arith.constant 0 : index
    %c0_21 = arith.constant 0 : index
    %49 = vector.load %arg7[%c0_20, %c0_21] : memref<128x128xf32, #tpu.memory_space<vmem>>, vector<128x128xf32>
    %cst_22 = arith.constant dense<0.000000e+00> : vector<256x128xf32>
    %50 = tpu.matmul %48, %49, %cst_22 {dimension_numbers = #tpu.dot_dimension_numbers<[1], [0], [0], [1], [0, 0, 1, 1], [], []>} : vector<256x128xf32>, vector<128x128xf32>, vector<256x128xf32> -> vector<256x128xf32>
    %c0_23 = arith.constant 0 : index
    %c0_24 = arith.constant 0 : index
    %51 = vector.load %arg8[%c0_23, %c0_24] : memref<1x128xf32, #tpu.memory_space<vmem>>, vector<1x128xf32>
    %52 = vector.broadcast %51 : vector<1x128xf32> to vector<256x128xf32>
    %53 = arith.addf %50, %52 : vector<256x128xf32>
    %cst_25 = arith.constant 1.000000e+00 : f32
    %54 = vector.broadcast %cst_25 : f32 to vector<256x128xf32>
    %55 = arith.mulf %54, %53 : vector<256x128xf32>
    %56 = arith.addf %4, %55 : vector<256x128xf32>
    %c0_26 = arith.constant 0 : index
    %c0_27 = arith.constant 0 : index
    %57 = vector.load %arg9[%c0_26, %c0_27] : memref<256x128xf32, #tpu.memory_space<vmem>>, vector<256x128xf32>
    tpu.vector_store %arg9[%c0_26, %c0_27], %56 {strides = array<i32>} : memref<256x128xf32, #tpu.memory_space<vmem>>, vector<256x128xf32>,
    return
  }
  func.func @transform_0(%arg0: i32) -> (i32, i32) {
    %c0_i32 = arith.constant 0 : i32
    %c0_i32_0 = arith.constant 0 : i32
    return %arg0, %c0_i32 : i32, i32
  }
  func.func @transform_1(%arg0: i32) -> (i32, i32) {
    %c0_i32 = arith.constant 0 : i32
    %c0_i32_0 = arith.constant 0 : i32
    return %arg0, %c0_i32 : i32, i32
  }
  func.func @transform_2(%arg0: i32) -> (i32, i32) {
    %c0_i32 = arith.constant 0 : i32
    %c0_i32_0 = arith.constant 0 : i32
    %c0_i32_1 = arith.constant 0 : i32
    return %c0_i32, %c0_i32_0 : i32, i32
  }
  func.func @transform_3(%arg0: i32) -> (i32, i32) {
    %c0_i32 = arith.constant 0 : i32
    %c0_i32_0 = arith.constant 0 : i32
    %c0_i32_1 = arith.constant 0 : i32
    return %c0_i32, %c0_i32_0 : i32, i32
  }
  func.func @transform_4(%arg0: i32) -> (i32, i32) {
    %c0_i32 = arith.constant 0 : i32
    %c0_i32_0 = arith.constant 0 : i32
    %c0_i32_1 = arith.constant 0 : i32
    return %c0_i32, %c0_i32_0 : i32, i32
  }
  func.func @transform_5(%arg0: i32) -> (i32, i32) {
    %c0_i32 = arith.constant 0 : i32
    %c0_i32_0 = arith.constant 0 : i32
    %c0_i32_1 = arith.constant 0 : i32
    return %c0_i32, %c0_i32_0 : i32, i32
  }
  func.func @transform_6(%arg0: i32) -> (i32, i32) {
    %c0_i32 = arith.constant 0 : i32
    %c0_i32_0 = arith.constant 0 : i32
    %c0_i32_1 = arith.constant 0 : i32
    return %c0_i32, %c0_i32_0 : i32, i32
  }
  func.func @transform_7(%arg0: i32) -> (i32, i32) {
    %c0_i32 = arith.constant 0 : i32
    %c0_i32_0 = arith.constant 0 : i32
    %c0_i32_1 = arith.constant 0 : i32
    return %c0_i32, %c0_i32_0 : i32, i32
  }
  func.func @transform_8(%arg0: i32) -> (i32, i32) {
    %c0_i32 = arith.constant 0 : i32
    %c0_i32_0 = arith.constant 0 : i32
    return %arg0, %c0_i32 : i32, i32
  }
}

</mosaic_0001>

<llo_original>
// kernel: sub.22
$region0: #{sub.22}
  %s0 = inlined_call_operand.vmem [shape: s32[2,8,8], index: 0, kind: input, shape index: {}]
  %s1 = inlined_call_operand.vmem [shape: s32[2,64], index: 1, kind: output, shape index: {}]
  $region1: #{sub.22} parent=0
    #allocation0 [shape = 'u8[4096]{0}', space=vmem, size = 0x1000, scoped, tag = 'scoped mem for output reshape']
    %s2 = smov 3
    %v3 = vld [vmem:[%s0] ss:$8 sm:%s2]
    %vm4 = vcmask 64512
    %5 = vst.msk [vmem:[#allocation0] sm:$0x3] %vm4, %v3
    %s6 = scalar_lea.vmem %s0, 7
    %s7 = smov 3
    %v8 = vld [vmem:[%s6] ss:$8 sm:%s7]
    %9 = vrot.lane.b32.xlu0 %v8, 56
    %v10 = vpop.permute.xlu0 %9
    %vm11 = vcmask 523712
    %12 = vst.msk [vmem:[#allocation0] sm:$0x3] %vm11, %v10
    %s13 = scalar_lea.vmem %s0, 6
    %s14 = smov 3
    %v15 = vld [vmem:[%s13] ss:$8 sm:%s14]
    %16 = vrot.lane.b32.xlu0 %v15, 48
    %v17 = vpop.permute.xlu0 %16
    %vm18 = vcmask 458112
    %19 = vst.msk [vmem:[#allocation0] sm:$0x3] %vm18, %v17
    %s20 = scalar_lea.vmem %s0, 5
    %s21 = smov 3
    %v22 = vld [vmem:[%s20] ss:$8 sm:%s21]
    %23 = vrot.lane.b32.xlu0 %v22, 40
    %v24 = vpop.permute.xlu0 %23
    %vm25 = vcmask 392512
    %26 = vst.msk [vmem:[#allocation0] sm:$0x3] %vm25, %v24
    %s27 = scalar_lea.vmem %s0, 4
    %s28 = smov 3
    %v29 = vld [vmem:[%s27] ss:$8 sm:%s28]
    %30 = vrot.lane.b32.xlu0 %v29, 32
    %v31 = vpop.permute.xlu0 %30
    %vm32 = vcmask 326912
    %33 = vst.msk [vmem:[#allocation0] sm:$0x3] %vm32, %v31
    %s34 = scalar_lea.vmem %s0, 3
    %s35 = smov 3
    %v36 = vld [vmem:[%s34] ss:$8 sm:%s35]
    %37 = vrot.lane.b32.xlu0 %v36, 24
    %v38 = vpop.permute.xlu0 %37
    %vm39 = vcmask 261312
    %40 = vst.msk [vmem:[#allocation0] sm:$0x3] %vm39, %v38
    %s41 = scalar_lea.vmem %s0, 2
    %s42 = smov 3
    %v43 = vld [vmem:[%s41] ss:$8 sm:%s42]
    %44 = vrot.lane.b32.xlu0 %v43, 16
    %v45 = vpop.permute.xlu0 %44
    %vm46 = vcmask 195712
    %47 = vst.msk [vmem:[#allocation0] sm:$0x3] %vm46, %v45
    %s48 = scalar_lea.vmem %s0, 1
    %s49 = smov 3
    %v50 = vld [vmem:[%s48] ss:$8 sm:%s49]
    %51 = vrot.lane.b32.xlu0 %v50, 8
    %v52 = vpop.permute.xlu0 %51
    %vm53 = vcmask 130112
    %54 = vst.msk [vmem:[#allocation0] sm:$0x3] %vm53, %v52
    %s56 = sshllo.u32 0, 2
    %v58 = vld [vmem:[#allocation0] sm:%s56]
    %s59 = sshllo.u32 0, 2
    %60 = vst [vmem:[%s1] sm:%s59] %v58

// kernel: sub.15
$region0: #{sub.15}
  %s0 = inlined_call_operand.vmem [shape: f32[1,2,2,8,8,1], index: 0, kind: input, shape index: {}]
  %s1 = inlined_call_operand.vmem [shape: f32[4,64], index: 1, kind: output, shape index: {}]
  $region1: #{sub.15} parent=0
    #allocation0 [shape = 'u8[4096]{0}', space=vmem, size = 0x1000, scoped, tag = 'scoped mem for output reshape']
    %v2 = vld [vmem:[%s0] ss:$8 sm:$0xf]
    %vm3 = vcmask 64512
    %4 = vst.msk [vmem:[#allocation0] sm:$0xf] %vm3, %v2
    %s5 = scalar_lea.vmem %s0, 7
    %v6 = vld [vmem:[%s5] ss:$8 sm:$0xf]
    %7 = vrot.lane.b32.xlu0 %v6, 56
    %v8 = vpop.permute.xlu0 %7
    %vm9 = vcmask 523712
    %10 = vst.msk [vmem:[#allocation0] sm:$0xf] %vm9, %v8
    %s11 = scalar_lea.vmem %s0, 6
    %v12 = vld [vmem:[%s11] ss:$8 sm:$0xf]
    %13 = vrot.lane.b32.xlu0 %v12, 48
    %v14 = vpop.permute.xlu0 %13
    %vm15 = vcmask 458112
    %16 = vst.msk [vmem:[#allocation0] sm:$0xf] %vm15, %v14
    %s17 = scalar_lea.vmem %s0, 5
    %v18 = vld [vmem:[%s17] ss:$8 sm:$0xf]
    %19 = vrot.lane.b32.xlu0 %v18, 40
    %v20 = vpop.permute.xlu0 %19
    %vm21 = vcmask 392512
    %22 = vst.msk [vmem:[#allocation0] sm:$0xf] %vm21, %v20
    %s23 = scalar_lea.vmem %s0, 4
    %v24 = vld [vmem:[%s23] ss:$8 sm:$0xf]
    %25 = vrot.lane.b32.xlu0 %v24, 32
    %v26 = vpop.permute.xlu0 %25
    %vm27 = vcmask 326912
    %28 = vst.msk [vmem:[#allocation0] sm:$0xf] %vm27, %v26
    %s29 = scalar_lea.vmem %s0, 3
    %v30 = vld [vmem:[%s29] ss:$8 sm:$0xf]
    %31 = vrot.lane.b32.xlu0 %v30, 24
    %v32 = vpop.permute.xlu0 %31
    %vm33 = vcmask 261312
    %34 = vst.msk [vmem:[#allocation0] sm:$0xf] %vm33, %v32
    %s35 = scalar_lea.vmem %s0, 2
    %v36 = vld [vmem:[%s35] ss:$8 sm:$0xf]
    %37 = vrot.lane.b32.xlu0 %v36, 16
    %v38 = vpop.permute.xlu0 %37
    %vm39 = vcmask 195712
    %40 = vst.msk [vmem:[#allocation0] sm:$0xf] %vm39, %v38
    %s41 = scalar_lea.vmem %s0, 1
    %v42 = vld [vmem:[%s41] ss:$8 sm:$0xf]
    %43 = vrot.lane.b32.xlu0 %v42, 8
    %v44 = vpop.permute.xlu0 %43
    %vm45 = vcmask 130112
    %46 = vst.msk [vmem:[#allocation0] sm:$0xf] %vm45, %v44
    %s48 = sshllo.u32 0, 4
    %v50 = vld [vmem:[#allocation0] sm:%s48]
    %s51 = sshllo.u32 0, 4
    %52 = vst [vmem:[%s1] sm:%s51] %v50

// kernel: swin_block_v1_pallas.3
$region0: #{swin_block_v1_pallas.3}
  #allocation0 [shape = 'u32[]', space=smem, size = 0x4, offset = 0x4, fixed_abs, tag = 'smem constant byte address 0x4 - core index']
  #allocation1 [shape = 'u32[144,128]{1,0:T(1,128)}', space=vmem, size = 0x12000, scoped, tag = 'internal scratch']
  %s0 = inlined_call_operand.vmem [shape: f32[512,128], index: 0, kind: input, shape index: {}]
  %s1 = inlined_call_operand.vmem [shape: f32[512,128], index: 1, kind: input, shape index: {}]
  %s2 = inlined_call_operand.vmem [shape: f32[1,128], index: 2, kind: input, shape index: {}]
  %s3 = inlined_call_operand.vmem [shape: f32[1,128], index: 3, kind: input, shape index: {}]
  %s4 = inlined_call_operand.vmem [shape: f32[128,128], index: 4, kind: input, shape index: {}]
  %s5 = inlined_call_operand.vmem [shape: f32[1,128], index: 5, kind: input, shape index: {}]
  %s6 = inlined_call_operand.vmem [shape: f32[128,128], index: 6, kind: input, shape index: {}]
  %s7 = inlined_call_operand.vmem [shape: f32[1,128], index: 7, kind: input, shape index: {}]
  %s8 = inlined_call_operand.vmem [shape: f32[512,128], index: 8, kind: output, shape index: {}]
  %s9 = sld [smem:[#allocation0]]
  $region65: #{swin_block_v1_pallas.3} parent=0
    _
  %s11 = ssub.s32 1, %s9
  %s12 = scalar_select 0, %s11, %s9
  loop: start=0, step=1, limit=4
  $region2: #{swin_block_v1_pallas.3} parent=0 // loop_pre_header
    _
  $region3: #{swin_block_v1_pallas.3} parent=0 // loop_header
    %s14 = sphi 0, %s18
    %p15 = scmp.ge.s32.totalorder %s14, 4
    %s24 = sphi 0, %s26
    %s27 = sphi 0, %s24
    %s28 = sphi 0, %s27
    %s44 = sphi 0, %s28
    %s50 = sphi 0, %s52
    %s53 = sphi 0, %s50
    %s54 = sphi 0, %s53
    %s70 = sphi 0, %s54
    %s74 = sphi 0, %s74
    %s76 = sphi 0, %s74
    %s77 = sphi 0, %s76
    %s91 = sphi 0, %s77
    %s95 = sphi 0, %s95
    %s97 = sphi 0, %s95
    %s98 = sphi 0, %s97
    %s112 = sphi 0, %s98
    %s116 = sphi 0, %s116
    %s118 = sphi 0, %s116
    %s119 = sphi 0, %s118
    %s133 = sphi 0, %s119
    %s137 = sphi 0, %s137
    %s139 = sphi 0, %s137
    %s140 = sphi 0, %s139
    %s154 = sphi 0, %s140
    %s158 = sphi 0, %s158
    %s160 = sphi 0, %s158
    %s161 = sphi 0, %s160
    %s175 = sphi 0, %s161
    %s179 = sphi 0, %s179
    %s181 = sphi 0, %s179
    %s182 = sphi 0, %s181
    %s196 = sphi 0, %s182
    %s202 = sphi 0, %s204
    %s205 = sphi 0, %s202
    %s206 = sphi 0, %s205
    %s222 = sphi 0, %s206
  $region4: #{swin_block_v1_pallas.3} parent=0 // loop_header_branch
    %17 = sbr.rel (%p15) target = $region8
  $region5: #{swin_block_v1_pallas.3} parent=0 // loop_body
    %s19 = ssub.s32 %s14, 1
    %s20 = ssub.s32 %s14, 2
    %s21 = sadd.s32 %s14, 1
    %s22 = ssub.s32 %s14, %s21
    %p23 = scmp.eq.s32.totalorder %s22, 0
    %s25 = sadd.s32 %s24, 1
    %s26 = scalar_select %p23, %s24, %s25
    %p29 = pneg %p23
    %p30 = scmp.eq.s32.totalorder %s14, 1
    %p31 = por %p29, %p30
    %p32 = scmp.ne.s32.totalorder %s24, %s27
    %p33 = scmp.eq.s32.totalorder %s14, 0
    %p34 = por %p32, %p33
    %p35 = scmp.ne.s32.totalorder %s24, %s27
    %p36 = scmp.eq.s32.totalorder %s19, 1
    %p37 = por %p35, %p36
    %p38 = scmp.ne.s32.totalorder %s27, %s28
    %p39 = scmp.eq.s32.totalorder %s19, 0
    %p40 = por %p38, %p39
    %p41 = scmp.ne.s32.totalorder %s27, %s28
    %p42 = scmp.eq.s32.totalorder %s20, 1
    %p43 = por %p41, %p42
    %p45 = scmp.ne.s32.totalorder %s28, %s44
    %p46 = scmp.eq.s32.totalorder %s20, 0
    %p47 = por %p45, %p46
    %s48 = ssub.s32 %s14, %s21
    %p49 = scmp.eq.s32.totalorder %s48, 0
    %s51 = sadd.s32 %s50, 1
    %s52 = scalar_select %p49, %s50, %s51
    %p55 = pneg %p49
    %p56 = scmp.eq.s32.totalorder %s14, 1
    %p57 = por %p55, %p56
    %p58 = scmp.ne.s32.totalorder %s50, %s53
    %p59 = scmp.eq.s32.totalorder %s14, 0
    %p60 = por %p58, %p59
    %p61 = scmp.ne.s32.totalorder %s50, %s53
    %p62 = scmp.eq.s32.totalorder %s19, 1
    %p63 = por %p61, %p62
    %p64 = scmp.ne.s32.totalorder %s53, %s54
    %p65 = scmp.eq.s32.totalorder %s19, 0
    %p66 = por %p64, %p65
    %p67 = scmp.ne.s32.totalorder %s53, %s54
    %p68 = scmp.eq.s32.totalorder %s20, 1
    %p69 = por %p67, %p68
    %p71 = scmp.ne.s32.totalorder %s54, %s70
    %p72 = scmp.eq.s32.totalorder %s20, 0
    %p73 = por %p71, %p72
    %s75 = sadd.s32 %s74, 1
    %p78 = scmp.eq.s32.totalorder %s14, 1
    %p79 = scmp.ne.s32.totalorder %s74, %s76
    %p80 = scmp.eq.s32.totalorder %s14, 0
    %p81 = por %p79, %p80
    %p82 = scmp.ne.s32.totalorder %s74, %s76
    %p83 = scmp.eq.s32.totalorder %s19, 1
    %p84 = por %p82, %p83
    %p85 = scmp.ne.s32.totalorder %s76, %s77
    %p86 = scmp.eq.s32.totalorder %s19, 0
    %p87 = por %p85, %p86
    %p88 = scmp.ne.s32.totalorder %s76, %s77
    %p89 = scmp.eq.s32.totalorder %s20, 1
    %p90 = por %p88, %p89
    %p92 = scmp.ne.s32.totalorder %s77, %s91
    %p93 = scmp.eq.s32.totalorder %s20, 0
    %p94 = por %p92, %p93
    %s96 = sadd.s32 %s95, 1
    %p99 = scmp.eq.s32.totalorder %s14, 1
    %p100 = scmp.ne.s32.totalorder %s95, %s97
    %p101 = scmp.eq.s32.totalorder %s14, 0
    %p102 = por %p100, %p101
    %p103 = scmp.ne.s32.totalorder %s95, %s97
    %p104 = scmp.eq.s32.totalorder %s19, 1
    %p105 = por %p103, %p104
    %p106 = scmp.ne.s32.totalorder %s97, %s98
    %p107 = scmp.eq.s32.totalorder %s19, 0
    %p108 = por %p106, %p107
    %p109 = scmp.ne.s32.totalorder %s97, %s98
    %p110 = scmp.eq.s32.totalorder %s20, 1
    %p111 = por %p109, %p110
    %p113 = scmp.ne.s32.totalorder %s98, %s112
    %p114 = scmp.eq.s32.totalorder %s20, 0
    %p115 = por %p113, %p114
    %s117 = sadd.s32 %s116, 1
    %p120 = scmp.eq.s32.totalorder %s14, 1
    %p121 = scmp.ne.s32.totalorder %s116, %s118
    %p122 = scmp.eq.s32.totalorder %s14, 0
    %p123 = por %p121, %p122
    %p124 = scmp.ne.s32.totalorder %s116, %s118
    %p125 = scmp.eq.s32.totalorder %s19, 1
    %p126 = por %p124, %p125
    %p127 = scmp.ne.s32.totalorder %s118, %s119
    %p128 = scmp.eq.s32.totalorder %s19, 0
    %p129 = por %p127, %p128
    %p130 = scmp.ne.s32.totalorder %s118, %s119
    %p131 = scmp.eq.s32.totalorder %s20, 1
    %p132 = por %p130, %p131
    %p134 = scmp.ne.s32.totalorder %s119, %s133
    %p135 = scmp.eq.s32.totalorder %s20, 0
    %p136 = por %p134, %p135
    %s138 = sadd.s32 %s137, 1
    %p141 = scmp.eq.s32.totalorder %s14, 1
    %p142 = scmp.ne.s32.totalorder %s137, %s139
    %p143 = scmp.eq.s32.totalorder %s14, 0
    %p144 = por %p142, %p143
    %p145 = scmp.ne.s32.totalorder %s137, %s139
    %p146 = scmp.eq.s32.totalorder %s19, 1
    %p147 = por %p145, %p146
    %p148 = scmp.ne.s32.totalorder %s139, %s140
    %p149 = scmp.eq.s32.totalorder %s19, 0
    %p150 = por %p148, %p149
    %p151 = scmp.ne.s32.totalorder %s139, %s140
    %p152 = scmp.eq.s32.totalorder %s20, 1
    %p153 = por %p151, %p152
    %p155 = scmp.ne.s32.totalorder %s140, %s154
    %p156 = scmp.eq.s32.totalorder %s20, 0
    %p157 = por %p155, %p156
    %s159 = sadd.s32 %s158, 1
    %p162 = scmp.eq.s32.totalorder %s14, 1
    %p163 = scmp.ne.s32.totalorder %s158, %s160
    %p164 = scmp.eq.s32.totalorder %s14, 0
    %p165 = por %p163, %p164
    %p166 = scmp.ne.s32.totalorder %s158, %s160
    %p167 = scmp.eq.s32.totalorder %s19, 1
    %p168 = por %p166, %p167
    %p169 = scmp.ne.s32.totalorder %s160, %s161
    %p170 = scmp.eq.s32.totalorder %s19, 0
    %p171 = por %p169, %p170
    %p172 = scmp.ne.s32.totalorder %s160, %s161
    %p173 = scmp.eq.s32.totalorder %s20, 1
    %p174 = por %p172, %p173
    %p176 = scmp.ne.s32.totalorder %s161, %s175
    %p177 = scmp.eq.s32.totalorder %s20, 0
    %p178 = por %p176, %p177
    %s180 = sadd.s32 %s179, 1
    %p183 = scmp.eq.s32.totalorder %s14, 1
    %p184 = scmp.ne.s32.totalorder %s179, %s181
    %p185 = scmp.eq.s32.totalorder %s14, 0
    %p186 = por %p184, %p185
    %p187 = scmp.ne.s32.totalorder %s179, %s181
    %p188 = scmp.eq.s32.totalorder %s19, 1
    %p189 = por %p187, %p188
    %p190 = scmp.ne.s32.totalorder %s181, %s182
    %p191 = scmp.eq.s32.totalorder %s19, 0
    %p192 = por %p190, %p191
    %p193 = scmp.ne.s32.totalorder %s181, %s182
    %p194 = scmp.eq.s32.totalorder %s20, 1
    %p195 = por %p193, %p194
    %p197 = scmp.ne.s32.totalorder %s182, %s196
    %p198 = scmp.eq.s32.totalorder %s20, 0
    %p199 = por %p197, %p198
    %s200 = ssub.s32 %s14, %s21
    %p201 = scmp.eq.s32.totalorder %s200, 0
    %s203 = sadd.s32 %s202, 1
    %s204 = scalar_select %p201, %s202, %s203
    %p207 = pneg %p201
    %p208 = scmp.eq.s32.totalorder %s14, 1
    %p209 = por %p207, %p208
    %p210 = scmp.ne.s32.totalorder %s202, %s205
    %p211 = scmp.eq.s32.totalorder %s14, 0
    %p212 = por %p210, %p211
    %p213 = scmp.ne.s32.totalorder %s202, %s205
    %p214 = scmp.eq.s32.totalorder %s19, 1
    %p215 = por %p213, %p214
    %p216 = scmp.ne.s32.totalorder %s205, %s206
    %p217 = scmp.eq.s32.totalorder %s19, 0
    %p218 = por %p216, %p217
    %p219 = scmp.ne.s32.totalorder %s205, %s206
    %p220 = scmp.eq.s32.totalorder %s20, 1
    %p221 = por %p219, %p220
    %p223 = scmp.ne.s32.totalorder %s206, %s222
    %p224 = scmp.eq.s32.totalorder %s20, 0
    %p225 = por %p223, %p224
    %p226 = scmp.le.s32.totalorder 1, %s14
    %p227 = scmp.lt.s32.totalorder %s14, 3
    %p228 = pnand %p226, %p227
    %p229 = pneg %p228
    // Predicated region
    $region9: #{swin_block_v1_pallas.3} parent=5 // pred_check
      _
    $region10: #{swin_block_v1_pallas.3} parent=5 // pred_check_branch
      %231 = sbr.rel (%p228) target = $region12
    $region11: #{swin_block_v1_pallas.3} parent=5 // pred_region
      %s232 = ssub.s32 %s14, 1
      // Predicated region
      $region13: #{swin_block_v1_pallas.3} parent=11 // pred_check
        %p233 = pneg %p87
      $region14: #{swin_block_v1_pallas.3} parent=11 // pred_check_branch
        %235 = sbr.rel (%p233) target = $region16
      $region15: #{swin_block_v1_pallas.3} parent=11 // pred_region
        _
      $region16: #{swin_block_v1_pallas.3} parent=11 // pred_fallthru
        _
      // Predicated region
      $region17: #{swin_block_v1_pallas.3} parent=11 // pred_check
        %p236 = pneg %p108
      $region18: #{swin_block_v1_pallas.3} parent=11 // pred_check_branch
        %238 = sbr.rel (%p236) target = $region20
      $region19: #{swin_block_v1_pallas.3} parent=11 // pred_region
        _
      $region20: #{swin_block_v1_pallas.3} parent=11 // pred_fallthru
        _
      // Predicated region
      $region21: #{swin_block_v1_pallas.3} parent=11 // pred_check
        %p239 = pneg %p129
      $region22: #{swin_block_v1_pallas.3} parent=11 // pred_check_branch
        %241 = sbr.rel (%p239) target = $region24
      $region23: #{swin_block_v1_pallas.3} parent=11 // pred_region
        _
      $region24: #{swin_block_v1_pallas.3} parent=11 // pred_fallthru
        _
      // Predicated region
      $region25: #{swin_block_v1_pallas.3} parent=11 // pred_check
        %p242 = pneg %p150
      $region26: #{swin_block_v1_pallas.3} parent=11 // pred_check_branch
        %244 = sbr.rel (%p242) target = $region28
      $region27: #{swin_block_v1_pallas.3} parent=11 // pred_region
        _
      $region28: #{swin_block_v1_pallas.3} parent=11 // pred_fallthru
        _
      // Predicated region
      $region29: #{swin_block_v1_pallas.3} parent=11 // pred_check
        %p245 = pneg %p171
      $region30: #{swin_block_v1_pallas.3} parent=11 // pred_check_branch
        %247 = sbr.rel (%p245) target = $region32
      $region31: #{swin_block_v1_pallas.3} parent=11 // pred_region
        _
      $region32: #{swin_block_v1_pallas.3} parent=11 // pred_fallthru
        _
      // Predicated region
      $region33: #{swin_block_v1_pallas.3} parent=11 // pred_check
        %p248 = pneg %p192
      $region34: #{swin_block_v1_pallas.3} parent=11 // pred_check_branch
        %250 = sbr.rel (%p248) target = $region36
      $region35: #{swin_block_v1_pallas.3} parent=11 // pred_region
        _
      $region36: #{swin_block_v1_pallas.3} parent=11 // pred_fallthru
        _
    $region12: #{swin_block_v1_pallas.3} parent=5 // pred_fallthru
      _
    %p251 = scmp.lt.s32.totalorder %s14, 2
    // Predicated region
    $region37: #{swin_block_v1_pallas.3} parent=5 // pred_check
      %p252 = pneg %p251
    $region38: #{swin_block_v1_pallas.3} parent=5 // pred_check_branch
      %254 = sbr.rel (%p252) target = $region40
    $region39: #{swin_block_v1_pallas.3} parent=5 // pred_region
      // Predicated region
      $region41: #{swin_block_v1_pallas.3} parent=39 // pred_check
        %p255 = pneg %p34
      $region42: #{swin_block_v1_pallas.3} parent=39 // pred_check_branch
        %257 = sbr.rel (%p255) target = $region44
      $region43: #{swin_block_v1_pallas.3} parent=39 // pred_region
        %s258 = smul.u32 32, %s14
        %p259 = scmp.lt.s32.totalorder %s258, 63
        %s260 = scalar_select %p259, %s258, 63
        %s261 = smul.addr %s260, 8
        %s262 = scalar_lea.vmem %s0, %s261
        %s263 = smul.u32 32, %s14
      $region44: #{swin_block_v1_pallas.3} parent=39 // pred_fallthru
        _
      // Predicated region
      $region45: #{swin_block_v1_pallas.3} parent=39 // pred_check
        %p264 = pneg %p60
      $region46: #{swin_block_v1_pallas.3} parent=39 // pred_check_branch
        %266 = sbr.rel (%p264) target = $region48
      $region47: #{swin_block_v1_pallas.3} parent=39 // pred_region
        %s267 = smul.u32 32, %s14
        %p268 = scmp.lt.s32.totalorder %s267, 63
        %s269 = scalar_select %p268, %s267, 63
        %s270 = smul.addr %s269, 8
        %s271 = scalar_lea.vmem %s1, %s270
        %s272 = smul.u32 32, %s14
      $region48: #{swin_block_v1_pallas.3} parent=39 // pred_fallthru
        _
    $region40: #{swin_block_v1_pallas.3} parent=5 // pred_fallthru
      _
    %p273 = scmp.le.s32.totalorder 1, %s14
    %p274 = scmp.lt.s32.totalorder %s14, 3
    %p275 = pnand %p273, %p274
    %p276 = pneg %p275
    // Predicated region
    $region49: #{swin_block_v1_pallas.3} parent=5 // pred_check
      _
    $region50: #{swin_block_v1_pallas.3} parent=5 // pred_check_branch
      %278 = sbr.rel (%p275) target = $region52
    $region51: #{swin_block_v1_pallas.3} parent=5 // pred_region
      %s279 = ssub.s32 %s14, 1
      %s280 = smul.u32 32, %s19
      %p281 = scmp.lt.s32.totalorder %s280, 63
      %s282 = scalar_select %p281, %s280, 63
      %s283 = smul.addr %s282, 8
      %s284 = scalar_lea.vmem %s0, %s283
      %p285 = pneg %p40
      %p286 = pneg %p37
      %s287 = smul.u32 32, %s19
      %p288 = scmp.lt.s32.totalorder %s287, 63
      %s289 = scalar_select %p288, %s287, 63
      %s290 = smul.addr %s289, 8
      %s291 = scalar_lea.vmem %s1, %s290
      %p292 = pneg %p66
      %p293 = pneg %p63
      %p294 = pneg %p87
      %p295 = pneg %p84
      %p296 = pneg %p108
      %p297 = pneg %p105
      %p298 = pneg %p129
      %p299 = pneg %p126
      %p300 = pneg %p150
      %p301 = pneg %p147
      %p302 = pneg %p171
      %p303 = pneg %p168
      %p304 = pneg %p192
      %p305 = pneg %p189
      %p306 = pneg %p218
      %p307 = pneg %p215
      %s308 = smul.u32 32, %s19
      %p309 = scmp.lt.s32.totalorder %s308, 63
      %s310 = scalar_select %p309, %s308, 63
      %s311 = smul.addr %s310, 8
      %s312 = scalar_lea.vmem %s8, %s311
      %s313 = smul.u32 32, %s19
      %p314 = scmp.lt.s32.totalorder %s313, 63
      %s315 = scalar_select %p314, %s313, 63
      %s316 = smul.addr %s315, 8
      %s317 = scalar_lea.vmem %s0, %s316
      %s318 = smul.u32 32, %s19
      %s319 = smul.u32 32, %s19
      %p320 = scmp.lt.s32.totalorder %s319, 63
      %s321 = scalar_select %p320, %s319, 63
      %s322 = smul.addr %s321, 8
      %s323 = scalar_lea.vmem %s1, %s322
      %s324 = smul.u32 32, %s19
      %s325 = smul.u32 32, %s19
      %p326 = scmp.lt.s32.totalorder %s325, 63
      %s327 = scalar_select %p326, %s325, 63
      %s328 = smul.addr %s327, 8
      %s329 = scalar_lea.vmem %s8, %s328
      %s330 = smul.u32 32, %s19
      %v331 = vld [vmem:[%s317] sm:$0xff]
      %v332 = vld [vmem:[%s317 + $0x8] sm:$0xff]
      %v333 = vld [vmem:[%s317 + $0x10] sm:$0xff]
      %v334 = vld [vmem:[%s317 + $0x18] sm:$0xff]
      %v335 = vld [vmem:[%s317 + $0x20] sm:$0xff]
      %v336 = vld [vmem:[%s317 + $0x28] sm:$0xff]
      %v337 = vld [vmem:[%s317 + $0x30] sm:$0xff]
      %v338 = vld [vmem:[%s317 + $0x38] sm:$0xff]
      %v339 = vld [vmem:[%s317 + $0x40] sm:$0xff]
      %v340 = vld [vmem:[%s317 + $0x48] sm:$0xff]
      %v341 = vld [vmem:[%s317 + $0x50] sm:$0xff]
      %v342 = vld [vmem:[%s317 + $0x58] sm:$0xff]
      %v343 = vld [vmem:[%s317 + $0x60] sm:$0xff]
      %v344 = vld [vmem:[%s317 + $0x68] sm:$0xff]
      %v345 = vld [vmem:[%s317 + $0x70] sm:$0xff]
      %v346 = vld [vmem:[%s317 + $0x78] sm:$0xff]
      %v347 = vld [vmem:[%s317 + $0x80] sm:$0xff]
      %v348 = vld [vmem:[%s317 + $0x88] sm:$0xff]
      %v349 = vld [vmem:[%s317 + $0x90] sm:$0xff]
      %v350 = vld [vmem:[%s317 + $0x98] sm:$0xff]
      %v351 = vld [vmem:[%s317 + $0xa0] sm:$0xff]
      %v352 = vld [vmem:[%s317 + $0xa8] sm:$0xff]
      %v353 = vld [vmem:[%s317 + $0xb0] sm:$0xff]
      %v354 = vld [vmem:[%s317 + $0xb8] sm:$0xff]
      %v355 = vld [vmem:[%s317 + $0xc0] sm:$0xff]
      %v356 = vld [vmem:[%s317 + $0xc8] sm:$0xff]
      %v357 = vld [vmem:[%s317 + $0xd0] sm:$0xff]
      %v358 = vld [vmem:[%s317 + $0xd8] sm:$0xff]
      %v359 = vld [vmem:[%s317 + $0xe0] sm:$0xff]
      %v360 = vld [vmem:[%s317 + $0xe8] sm:$0xff]
      %v361 = vld [vmem:[%s317 + $0xf0] sm:$0xff]
      %v362 = vld [vmem:[%s317 + $0xf8] sm:$0xff]
      %v363 = vld [vmem:[%s323] sm:$0xff]
      %v364 = vld [vmem:[%s323 + $0x8] sm:$0xff]
      %v365 = vld [vmem:[%s323 + $0x10] sm:$0xff]
      %v366 = vld [vmem:[%s323 + $0x18] sm:$0xff]
      %v367 = vld [vmem:[%s323 + $0x20] sm:$0xff]
      %v368 = vld [vmem:[%s323 + $0x28] sm:$0xff]
      %v369 = vld [vmem:[%s323 + $0x30] sm:$0xff]
      %v370 = vld [vmem:[%s323 + $0x38] sm:$0xff]
      %v371 = vld [vmem:[%s323 + $0x40] sm:$0xff]
      %v372 = vld [vmem:[%s323 + $0x48] sm:$0xff]
      %v373 = vld [vmem:[%s323 + $0x50] sm:$0xff]
      %v374 = vld [vmem:[%s323 + $0x58] sm:$0xff]
      %v375 = vld [vmem:[%s323 + $0x60] sm:$0xff]
      %v376 = vld [vmem:[%s323 + $0x68] sm:$0xff]
      %v377 = vld [vmem:[%s323 + $0x70] sm:$0xff]
      %v378 = vld [vmem:[%s323 + $0x78] sm:$0xff]
      %v379 = vld [vmem:[%s323 + $0x80] sm:$0xff]
      %v380 = vld [vmem:[%s323 + $0x88] sm:$0xff]
      %v381 = vld [vmem:[%s323 + $0x90] sm:$0xff]
      %v382 = vld [vmem:[%s323 + $0x98] sm:$0xff]
      %v383 = vld [vmem:[%s323 + $0xa0] sm:$0xff]
      %v384 = vld [vmem:[%s323 + $0xa8] sm:$0xff]
      %v385 = vld [vmem:[%s323 + $0xb0] sm:$0xff]
      %v386 = vld [vmem:[%s323 + $0xb8] sm:$0xff]
      %v387 = vld [vmem:[%s323 + $0xc0] sm:$0xff]
      %v388 = vld [vmem:[%s323 + $0xc8] sm:$0xff]
      %v389 = vld [vmem:[%s323 + $0xd0] sm:$0xff]
      %v390 = vld [vmem:[%s323 + $0xd8] sm:$0xff]
      %v391 = vld [vmem:[%s323 + $0xe0] sm:$0xff]
      %v392 = vld [vmem:[%s323 + $0xe8] sm:$0xff]
      %v393 = vld [vmem:[%s323 + $0xf0] sm:$0xff]
      %v394 = vld [vmem:[%s323 + $0xf8] sm:$0xff]
      %v395 = vadd.f32 %v331, %v363
      %v396 = vadd.f32 %v332, %v364
      %v397 = vadd.f32 %v333, %v365
      %v398 = vadd.f32 %v334, %v366
      %v399 = vadd.f32 %v335, %v367
      %v400 = vadd.f32 %v336, %v368
      %v401 = vadd.f32 %v337, %v369
      %v402 = vadd.f32 %v338, %v370
      %v403 = vadd.f32 %v339, %v371
      %v404 = vadd.f32 %v340, %v372
      %v405 = vadd.f32 %v341, %v373
      %v406 = vadd.f32 %v342, %v374
      %v407 = vadd.f32 %v343, %v375
      %v408 = vadd.f32 %v344, %v376
      %v409 = vadd.f32 %v345, %v377
      %v410 = vadd.f32 %v346, %v378
      %v411 = vadd.f32 %v347, %v379
      %v412 = vadd.f32 %v348, %v380
      %v413 = vadd.f32 %v349, %v381
      %v414 = vadd.f32 %v350, %v382
      %v415 = vadd.f32 %v351, %v383
      %v416 = vadd.f32 %v352, %v384
      %v417 = vadd.f32 %v353, %v385
      %v418 = vadd.f32 %v354, %v386
      %v419 = vadd.f32 %v355, %v387
      %v420 = vadd.f32 %v356, %v388
      %v421 = vadd.f32 %v357, %v389
      %v422 = vadd.f32 %v358, %v390
      %v423 = vadd.f32 %v359, %v391
      %v424 = vadd.f32 %v360, %v392
      %v425 = vadd.f32 %v361, %v393
      %v426 = vadd.f32 %v362, %v394
      %v427 = vlaneseq
      %v428 = vand.u32 %v427, 127
      %vm429 = vcmp.lt.s32.totalorder %v428, 32
      %v430 = vsel %vm429, 1, 0
      %v431 = vcvt.s32.f32 %v430
      %v432 = vmul.f32 %v395, %v431
      %v433 = vmul.f32 %v396, %v431
      %v434 = vmul.f32 %v397, %v431
      %v435 = vmul.f32 %v398, %v431
      %v436 = vmul.f32 %v399, %v431
      %v437 = vmul.f32 %v400, %v431
      %v438 = vmul.f32 %v401, %v431
      %v439 = vmul.f32 %v402, %v431
      %v440 = vmul.f32 %v403, %v431
      %v441 = vmul.f32 %v404, %v431
      %v442 = vmul.f32 %v405, %v431
      %v443 = vmul.f32 %v406, %v431
      %v444 = vmul.f32 %v407, %v431
      %v445 = vmul.f32 %v408, %v431
      %v446 = vmul.f32 %v409, %v431
      %v447 = vmul.f32 %v410, %v431
      %v448 = vmul.f32 %v411, %v431
      %v449 = vmul.f32 %v412, %v431
      %v450 = vmul.f32 %v413, %v431
      %v451 = vmul.f32 %v414, %v431
      %v452 = vmul.f32 %v415, %v431
      %v453 = vmul.f32 %v416, %v431
      %v454 = vmul.f32 %v417, %v431
      %v455 = vmul.f32 %v418, %v431
      %v456 = vmul.f32 %v419, %v431
      %v457 = vmul.f32 %v420, %v431
      %v458 = vmul.f32 %v421, %v431
      %v459 = vmul.f32 %v422, %v431
      %v460 = vmul.f32 %v423, %v431
      %v461 = vmul.f32 %v424, %v431
      %v462 = vmul.f32 %v425, %v431
      %v463 = vmul.f32 %v426, %v431
      %464 = vadd.xlane.f32.xlu0 %v432
      %v465 = vpop.xlane.xlu0 %464
      %466 = vadd.xlane.f32.xlu0 %v433
      %v467 = vpop.xlane.xlu0 %466
      %468 = vadd.xlane.f32.xlu0 %v434
      %v469 = vpop.xlane.xlu0 %468
      %470 = vadd.xlane.f32.xlu0 %v435
      %v471 = vpop.xlane.xlu0 %470
      %472 = vadd.xlane.f32.xlu0 %v436
      %v473 = vpop.xlane.xlu0 %472
      %474 = vadd.xlane.f32.xlu0 %v437
      %v475 = vpop.xlane.xlu0 %474
      %476 = vadd.xlane.f32.xlu0 %v438
      %v477 = vpop.xlane.xlu0 %476
      %478 = vadd.xlane.f32.xlu0 %v439
      %v479 = vpop.xlane.xlu0 %478
      %480 = vadd.xlane.f32.xlu0 %v440
      %v481 = vpop.xlane.xlu0 %480
      %482 = vadd.xlane.f32.xlu0 %v441
      %v483 = vpop.xlane.xlu0 %482
      %484 = vadd.xlane.f32.xlu0 %v442
      %v485 = vpop.xlane.xlu0 %484
      %486 = vadd.xlane.f32.xlu0 %v443
      %v487 = vpop.xlane.xlu0 %486
      %488 = vadd.xlane.f32.xlu0 %v444
      %v489 = vpop.xlane.xlu0 %488
      %490 = vadd.xlane.f32.xlu0 %v445
      %v491 = vpop.xlane.xlu0 %490
      %492 = vadd.xlane.f32.xlu0 %v446
      %v493 = vpop.xlane.xlu0 %492
      %494 = vadd.xlane.f32.xlu0 %v447
      %v495 = vpop.xlane.xlu0 %494
      %496 = vadd.xlane.f32.xlu0 %v448
      %v497 = vpop.xlane.xlu0 %496
      %498 = vadd.xlane.f32.xlu0 %v449
      %v499 = vpop.xlane.xlu0 %498
      %500 = vadd.xlane.f32.xlu0 %v450
      %v501 = vpop.xlane.xlu0 %500
      %502 = vadd.xlane.f32.xlu0 %v451
      %v503 = vpop.xlane.xlu0 %502
      %504 = vadd.xlane.f32.xlu0 %v452
      %v505 = vpop.xlane.xlu0 %504
      %506 = vadd.xlane.f32.xlu0 %v453
      %v507 = vpop.xlane.xlu0 %506
      %508 = vadd.xlane.f32.xlu0 %v454
      %v509 = vpop.xlane.xlu0 %508
      %510 = vadd.xlane.f32.xlu0 %v455
      %v511 = vpop.xlane.xlu0 %510
      %512 = vadd.xlane.f32.xlu0 %v456
      %v513 = vpop.xlane.xlu0 %512
      %514 = vadd.xlane.f32.xlu0 %v457
      %v515 = vpop.xlane.xlu0 %514
      %516 = vadd.xlane.f32.xlu0 %v458
      %v517 = vpop.xlane.xlu0 %516
      %518 = vadd.xlane.f32.xlu0 %v459
      %v519 = vpop.xlane.xlu0 %518
      %520 = vadd.xlane.f32.xlu0 %v460
      %v521 = vpop.xlane.xlu0 %520
      %522 = vadd.xlane.f32.xlu0 %v461
      %v523 = vpop.xlane.xlu0 %522
      %524 = vadd.xlane.f32.xlu0 %v462
      %v525 = vpop.xlane.xlu0 %524
      %526 = vadd.xlane.f32.xlu0 %v463
      %v527 = vpop.xlane.xlu0 %526
      %v528 = vmul.f32 %v465, 0.03125
      %v529 = vmul.f32 %v467, 0.03125
      %v530 = vmul.f32 %v469, 0.03125
      %v531 = vmul.f32 %v471, 0.03125
      %v532 = vmul.f32 %v473, 0.03125
      %v533 = vmul.f32 %v475, 0.03125
      %v534 = vmul.f32 %v477, 0.03125
      %v535 = vmul.f32 %v479, 0.03125
      %v536 = vmul.f32 %v481, 0.03125
      %v537 = vmul.f32 %v483, 0.03125
      %v538 = vmul.f32 %v485, 0.03125
      %v539 = vmul.f32 %v487, 0.03125
      %v540 = vmul.f32 %v489, 0.03125
      %v541 = vmul.f32 %v491, 0.03125
      %v542 = vmul.f32 %v493, 0.03125
      %v543 = vmul.f32 %v495, 0.03125
      %v544 = vmul.f32 %v497, 0.03125
      %v545 = vmul.f32 %v499, 0.03125
      %v546 = vmul.f32 %v501, 0.03125
      %v547 = vmul.f32 %v503, 0.03125
      %v548 = vmul.f32 %v505, 0.03125
      %v549 = vmul.f32 %v507, 0.03125
      %v550 = vmul.f32 %v509, 0.03125
      %v551 = vmul.f32 %v511, 0.03125
      %v552 = vmul.f32 %v513, 0.03125
      %v553 = vmul.f32 %v515, 0.03125
      %v554 = vmul.f32 %v517, 0.03125
      %v555 = vmul.f32 %v519, 0.03125
      %v556 = vmul.f32 %v521, 0.03125
      %v557 = vmul.f32 %v523, 0.03125
      %v558 = vmul.f32 %v525, 0.03125
      %v559 = vmul.f32 %v527, 0.03125
      %v560 = vsub.f32 %v395, %v528
      %v561 = vsub.f32 %v396, %v529
      %v562 = vsub.f32 %v397, %v530
      %v563 = vsub.f32 %v398, %v531
      %v564 = vsub.f32 %v399, %v532
      %v565 = vsub.f32 %v400, %v533
      %v566 = vsub.f32 %v401, %v534
      %v567 = vsub.f32 %v402, %v535
      %v568 = vsub.f32 %v403, %v536
      %v569 = vsub.f32 %v404, %v537
      %v570 = vsub.f32 %v405, %v538
      %v571 = vsub.f32 %v406, %v539
      %v572 = vsub.f32 %v407, %v540
      %v573 = vsub.f32 %v408, %v541
      %v574 = vsub.f32 %v409, %v542
      %v575 = vsub.f32 %v410, %v543
      %v576 = vsub.f32 %v411, %v544
      %v577 = vsub.f32 %v412, %v545
      %v578 = vsub.f32 %v413, %v546
      %v579 = vsub.f32 %v414, %v547
      %v580 = vsub.f32 %v415, %v548
      %v581 = vsub.f32 %v416, %v549
      %v582 = vsub.f32 %v417, %v550
      %v583 = vsub.f32 %v418, %v551
      %v584 = vsub.f32 %v419, %v552
      %v585 = vsub.f32 %v420, %v553
      %v586 = vsub.f32 %v421, %v554
      %v587 = vsub.f32 %v422, %v555
      %v588 = vsub.f32 %v423, %v556
      %v589 = vsub.f32 %v424, %v557
      %v590 = vsub.f32 %v425, %v558
      %v591 = vsub.f32 %v426, %v559
      %v592 = vmul.f32 %v560, %v431
      %v593 = vmul.f32 %v561, %v431
      %v594 = vmul.f32 %v562, %v431
      %v595 = vmul.f32 %v563, %v431
      %v596 = vmul.f32 %v564, %v431
      %v597 = vmul.f32 %v565, %v431
      %v598 = vmul.f32 %v566, %v431
      %v599 = vmul.f32 %v567, %v431
      %v600 = vmul.f32 %v568, %v431
      %v601 = vmul.f32 %v569, %v431
      %v602 = vmul.f32 %v570, %v431
      %v603 = vmul.f32 %v571, %v431
      %v604 = vmul.f32 %v572, %v431
      %v605 = vmul.f32 %v573, %v431
      %v606 = vmul.f32 %v574, %v431
      %v607 = vmul.f32 %v575, %v431
      %v608 = vmul.f32 %v576, %v431
      %v609 = vmul.f32 %v577, %v431
      %v610 = vmul.f32 %v578, %v431
      %v611 = vmul.f32 %v579, %v431
      %v612 = vmul.f32 %v580, %v431
      %v613 = vmul.f32 %v581, %v431
      %v614 = vmul.f32 %v582, %v431
      %v615 = vmul.f32 %v583, %v431
      %v616 = vmul.f32 %v584, %v431
      %v617 = vmul.f32 %v585, %v431
      %v618 = vmul.f32 %v586, %v431
      %v619 = vmul.f32 %v587, %v431
      %v620 = vmul.f32 %v588, %v431
      %v621 = vmul.f32 %v589, %v431
      %v622 = vmul.f32 %v590, %v431
      %v623 = vmul.f32 %v591, %v431
      %v624 = vmul.f32 %v592, %v592
      %v625 = vmul.f32 %v593, %v593
      %v626 = vmul.f32 %v594, %v594
      %v627 = vmul.f32 %v595, %v595
      %v628 = vmul.f32 %v596, %v596
      %v629 = vmul.f32 %v597, %v597
      %v630 = vmul.f32 %v598, %v598
      %v631 = vmul.f32 %v599, %v599
      %v632 = vmul.f32 %v600, %v600
      %v633 = vmul.f32 %v601, %v601
      %v634 = vmul.f32 %v602, %v602
      %v635 = vmul.f32 %v603, %v603
      %v636 = vmul.f32 %v604, %v604
      %v637 = vmul.f32 %v605, %v605
      %v638 = vmul.f32 %v606, %v606
      %v639 = vmul.f32 %v607, %v607
      %v640 = vmul.f32 %v608, %v608
      %v641 = vmul.f32 %v609, %v609
      %v642 = vmul.f32 %v610, %v610
      %v643 = vmul.f32 %v611, %v611
      %v644 = vmul.f32 %v612, %v612
      %v645 = vmul.f32 %v613, %v613
      %v646 = vmul.f32 %v614, %v614
      %v647 = vmul.f32 %v615, %v615
      %v648 = vmul.f32 %v616, %v616
      %v649 = vmul.f32 %v617, %v617
      %v650 = vmul.f32 %v618, %v618
      %v651 = vmul.f32 %v619, %v619
      %v652 = vmul.f32 %v620, %v620
      %v653 = vmul.f32 %v621, %v621
      %v654 = vmul.f32 %v622, %v622
      %v655 = vmul.f32 %v623, %v623
      %656 = vadd.xlane.f32.xlu0 %v624
      %v657 = vpop.xlane.xlu0 %656
      %658 = vadd.xlane.f32.xlu0 %v625
      %v659 = vpop.xlane.xlu0 %658
      %660 = vadd.xlane.f32.xlu0 %v626
      %v661 = vpop.xlane.xlu0 %660
      %662 = vadd.xlane.f32.xlu0 %v627
      %v663 = vpop.xlane.xlu0 %662
      %664 = vadd.xlane.f32.xlu0 %v628
      %v665 = vpop.xlane.xlu0 %664
      %666 = vadd.xlane.f32.xlu0 %v629
      %v667 = vpop.xlane.xlu0 %666
      %668 = vadd.xlane.f32.xlu0 %v630
      %v669 = vpop.xlane.xlu0 %668
      %670 = vadd.xlane.f32.xlu0 %v631
      %v671 = vpop.xlane.xlu0 %670
      %672 = vadd.xlane.f32.xlu0 %v632
      %v673 = vpop.xlane.xlu0 %672
      %674 = vadd.xlane.f32.xlu0 %v633
      %v675 = vpop.xlane.xlu0 %674
      %676 = vadd.xlane.f32.xlu0 %v634
      %v677 = vpop.xlane.xlu0 %676
      %678 = vadd.xlane.f32.xlu0 %v635
      %v679 = vpop.xlane.xlu0 %678
      %680 = vadd.xlane.f32.xlu0 %v636
      %v681 = vpop.xlane.xlu0 %680
      %682 = vadd.xlane.f32.xlu0 %v637
      %v683 = vpop.xlane.xlu0 %682
      %684 = vadd.xlane.f32.xlu0 %v638
      %v685 = vpop.xlane.xlu0 %684
      %686 = vadd.xlane.f32.xlu0 %v639
      %v687 = vpop.xlane.xlu0 %686
      %688 = vadd.xlane.f32.xlu0 %v640
      %v689 = vpop.xlane.xlu0 %688
      %690 = vadd.xlane.f32.xlu0 %v641
      %v691 = vpop.xlane.xlu0 %690
      %692 = vadd.xlane.f32.xlu0 %v642
      %v693 = vpop.xlane.xlu0 %692
      %694 = vadd.xlane.f32.xlu0 %v643
      %v695 = vpop.xlane.xlu0 %694
      %696 = vadd.xlane.f32.xlu0 %v644
      %v697 = vpop.xlane.xlu0 %696
      %698 = vadd.xlane.f32.xlu0 %v645
      %v699 = vpop.xlane.xlu0 %698
      %700 = vadd.xlane.f32.xlu0 %v646
      %v701 = vpop.xlane.xlu0 %700
      %702 = vadd.xlane.f32.xlu0 %v647
      %v703 = vpop.xlane.xlu0 %702
      %704 = vadd.xlane.f32.xlu0 %v648
      %v705 = vpop.xlane.xlu0 %704
      %706 = vadd.xlane.f32.xlu0 %v649
      %v707 = vpop.xlane.xlu0 %706
      %708 = vadd.xlane.f32.xlu0 %v650
      %v709 = vpop.xlane.xlu0 %708
      %710 = vadd.xlane.f32.xlu0 %v651
      %v711 = vpop.xlane.xlu0 %710
      %712 = vadd.xlane.f32.xlu0 %v652
      %v713 = vpop.xlane.xlu0 %712
      %714 = vadd.xlane.f32.xlu0 %v653
      %v715 = vpop.xlane.xlu0 %714
      %716 = vadd.xlane.f32.xlu0 %v654
      %v717 = vpop.xlane.xlu0 %716
      %718 = vadd.xlane.f32.xlu0 %v655
      %v719 = vpop.xlane.xlu0 %718
      %v720 = vmul.f32 %v657, 0.03125
      %v721 = vmul.f32 %v659, 0.03125
      %v722 = vmul.f32 %v661, 0.03125
      %v723 = vmul.f32 %v663, 0.03125
      %v724 = vmul.f32 %v665, 0.03125
      %v725 = vmul.f32 %v667, 0.03125
      %v726 = vmul.f32 %v669, 0.03125
      %v727 = vmul.f32 %v671, 0.03125
      %v728 = vmul.f32 %v673, 0.03125
      %v729 = vmul.f32 %v675, 0.03125
      %v730 = vmul.f32 %v677, 0.03125
      %v731 = vmul.f32 %v679, 0.03125
      %v732 = vmul.f32 %v681, 0.03125
      %v733 = vmul.f32 %v683, 0.03125
      %v734 = vmul.f32 %v685, 0.03125
      %v735 = vmul.f32 %v687, 0.03125
      %v736 = vmul.f32 %v689, 0.03125
      %v737 = vmul.f32 %v691, 0.03125
      %v738 = vmul.f32 %v693, 0.03125
      %v739 = vmul.f32 %v695, 0.03125
      %v740 = vmul.f32 %v697, 0.03125
      %v741 = vmul.f32 %v699, 0.03125
      %v742 = vmul.f32 %v701, 0.03125
      %v743 = vmul.f32 %v703, 0.03125
      %v744 = vmul.f32 %v705, 0.03125
      %v745 = vmul.f32 %v707, 0.03125
      %v746 = vmul.f32 %v709, 0.03125
      %v747 = vmul.f32 %v711, 0.03125
      %v748 = vmul.f32 %v713, 0.03125
      %v749 = vmul.f32 %v715, 0.03125
      %v750 = vmul.f32 %v717, 0.03125
      %v751 = vmul.f32 %v719, 0.03125
      %v752 = vadd.f32 %v720, 1e-05
      %v753 = vadd.f32 %v721, 1e-05
      %v754 = vadd.f32 %v722, 1e-05
      %v755 = vadd.f32 %v723, 1e-05
      %v756 = vadd.f32 %v724, 1e-05
      %v757 = vadd.f32 %v725, 1e-05
      %v758 = vadd.f32 %v726, 1e-05
      %v759 = vadd.f32 %v727, 1e-05
      %v760 = vadd.f32 %v728, 1e-05
      %v761 = vadd.f32 %v729, 1e-05
      %v762 = vadd.f32 %v730, 1e-05
      %v763 = vadd.f32 %v731, 1e-05
      %v764 = vadd.f32 %v732, 1e-05
      %v765 = vadd.f32 %v733, 1e-05
      %v766 = vadd.f32 %v734, 1e-05
      %v767 = vadd.f32 %v735, 1e-05
      %v768 = vadd.f32 %v736, 1e-05
      %v769 = vadd.f32 %v737, 1e-05
      %v770 = vadd.f32 %v738, 1e-05
      %v771 = vadd.f32 %v739, 1e-05
      %v772 = vadd.f32 %v740, 1e-05
      %v773 = vadd.f32 %v741, 1e-05
      %v774 = vadd.f32 %v742, 1e-05
      %v775 = vadd.f32 %v743, 1e-05
      %v776 = vadd.f32 %v744, 1e-05
      %v777 = vadd.f32 %v745, 1e-05
      %v778 = vadd.f32 %v746, 1e-05
      %v779 = vadd.f32 %v747, 1e-05
      %v780 = vadd.f32 %v748, 1e-05
      %v781 = vadd.f32 %v749, 1e-05
      %v782 = vadd.f32 %v750, 1e-05
      %v783 = vadd.f32 %v751, 1e-05
      %v784 = vrsqrt.pop %v752
      %v785 = vrsqrt.pop %v753
      %v786 = vrsqrt.pop %v754
      %v787 = vrsqrt.pop %v755
      %v788 = vrsqrt.pop %v756
      %v789 = vrsqrt.pop %v757
      %v790 = vrsqrt.pop %v758
      %v791 = vrsqrt.pop %v759
      %v792 = vrsqrt.pop %v760
      %v793 = vrsqrt.pop %v761
      %v794 = vrsqrt.pop %v762
      %v795 = vrsqrt.pop %v763
      %v796 = vrsqrt.pop %v764
      %v797 = vrsqrt.pop %v765
      %v798 = vrsqrt.pop %v766
      %v799 = vrsqrt.pop %v767
      %v800 = vrsqrt.pop %v768
      %v801 = vrsqrt.pop %v769
      %v802 = vrsqrt.pop %v770
      %v803 = vrsqrt.pop %v771
      %v804 = vrsqrt.pop %v772
      %v805 = vrsqrt.pop %v773
      %v806 = vrsqrt.pop %v774
      %v807 = vrsqrt.pop %v775
      %v808 = vrsqrt.pop %v776
      %v809 = vrsqrt.pop %v777
      %v810 = vrsqrt.pop %v778
      %v811 = vrsqrt.pop %v779
      %v812 = vrsqrt.pop %v780
      %v813 = vrsqrt.pop %v781
      %v814 = vrsqrt.pop %v782
      %v815 = vrsqrt.pop %v783
      %v816 = vmul.f32 %v592, %v784
      %v817 = vmul.f32 %v593, %v785
      %v818 = vmul.f32 %v594, %v786
      %v819 = vmul.f32 %v595, %v787
      %v820 = vmul.f32 %v596, %v788
      %v821 = vmul.f32 %v597, %v789
      %v822 = vmul.f32 %v598, %v790
      %v823 = vmul.f32 %v599, %v791
      %v824 = vmul.f32 %v600, %v792
      %v825 = vmul.f32 %v601, %v793
      %v826 = vmul.f32 %v602, %v794
      %v827 = vmul.f32 %v603, %v795
      %v828 = vmul.f32 %v604, %v796
      %v829 = vmul.f32 %v605, %v797
      %v830 = vmul.f32 %v606, %v798
      %v831 = vmul.f32 %v607, %v799
      %v832 = vmul.f32 %v608, %v800
      %v833 = vmul.f32 %v609, %v801
      %v834 = vmul.f32 %v610, %v802
      %v835 = vmul.f32 %v611, %v803
      %v836 = vmul.f32 %v612, %v804
      %v837 = vmul.f32 %v613, %v805
      %v838 = vmul.f32 %v614, %v806
      %v839 = vmul.f32 %v615, %v807
      %v840 = vmul.f32 %v616, %v808
      %v841 = vmul.f32 %v617, %v809
      %v842 = vmul.f32 %v618, %v810
      %v843 = vmul.f32 %v619, %v811
      %v844 = vmul.f32 %v620, %v812
      %v845 = vmul.f32 %v621, %v813
      %v846 = vmul.f32 %v622, %v814
      %v847 = vmul.f32 %v623, %v815
      %v848 = vld [vmem:[%s2] sm:$0x1]
      %v850 = vlaneseq
      %v851 = vshrl.u32 %v850, 7
      %v852 = vsub.s32 0, %v851
      %v853 = vrot.slane %v848, %v852
      %v855 = vmul.f32 %v816, %v853
      %v856 = vmul.f32 %v817, %v853
      %v857 = vmul.f32 %v818, %v853
      %v858 = vmul.f32 %v819, %v853
      %v859 = vmul.f32 %v820, %v853
      %v860 = vmul.f32 %v821, %v853
      %v861 = vmul.f32 %v822, %v853
      %v862 = vmul.f32 %v823, %v853
      %v863 = vmul.f32 %v824, %v853
      %v864 = vmul.f32 %v825, %v853
      %v865 = vmul.f32 %v826, %v853
      %v866 = vmul.f32 %v827, %v853
      %v867 = vmul.f32 %v828, %v853
      %v868 = vmul.f32 %v829, %v853
      %v869 = vmul.f32 %v830, %v853
      %v870 = vmul.f32 %v831, %v853
      %v871 = vmul.f32 %v832, %v853
      %v872 = vmul.f32 %v833, %v853
      %v873 = vmul.f32 %v834, %v853
      %v874 = vmul.f32 %v835, %v853
      %v875 = vmul.f32 %v836, %v853
      %v876 = vmul.f32 %v837, %v853
      %v877 = vmul.f32 %v838, %v853
      %v878 = vmul.f32 %v839, %v853
      %v879 = vmul.f32 %v840, %v853
      %v880 = vmul.f32 %v841, %v853
      %v881 = vmul.f32 %v842, %v853
      %v882 = vmul.f32 %v843, %v853
      %v883 = vmul.f32 %v844, %v853
      %v884 = vmul.f32 %v845, %v853
      %v885 = vmul.f32 %v846, %v853
      %v886 = vmul.f32 %v847, %v853
      %v887 = vld [vmem:[%s3] sm:$0x1]
      %v889 = vlaneseq
      %v890 = vshrl.u32 %v889, 7
      %v891 = vsub.s32 0, %v890
      %v892 = vrot.slane %v887, %v891
      %v894 = vadd.f32 %v855, %v892
      %v895 = vadd.f32 %v856, %v892
      %v896 = vadd.f32 %v857, %v892
      %v897 = vadd.f32 %v858, %v892
      %v898 = vadd.f32 %v859, %v892
      %v899 = vadd.f32 %v860, %v892
      %v900 = vadd.f32 %v861, %v892
      %v901 = vadd.f32 %v862, %v892
      %v902 = vadd.f32 %v863, %v892
      %v903 = vadd.f32 %v864, %v892
      %v904 = vadd.f32 %v865, %v892
      %v905 = vadd.f32 %v866, %v892
      %v906 = vadd.f32 %v867, %v892
      %v907 = vadd.f32 %v868, %v892
      %v908 = vadd.f32 %v869, %v892
      %v909 = vadd.f32 %v870, %v892
      %v910 = vadd.f32 %v871, %v892
      %v911 = vadd.f32 %v872, %v892
      %v912 = vadd.f32 %v873, %v892
      %v913 = vadd.f32 %v874, %v892
      %v914 = vadd.f32 %v875, %v892
      %v915 = vadd.f32 %v876, %v892
      %v916 = vadd.f32 %v877, %v892
      %v917 = vadd.f32 %v878, %v892
      %v918 = vadd.f32 %v879, %v892
      %v919 = vadd.f32 %v880, %v892
      %v920 = vadd.f32 %v881, %v892
      %v921 = vadd.f32 %v882, %v892
      %v922 = vadd.f32 %v883, %v892
      %v923 = vadd.f32 %v884, %v892
      %v924 = vadd.f32 %v885, %v892
      %v925 = vadd.f32 %v886, %v892
      %v926 = vld [vmem:[%s4] sm:$0xff]
      %v927 = vld [vmem:[%s4 + $0x8] sm:$0xff]
      %v928 = vld [vmem:[%s4 + $0x10] sm:$0xff]
      %v929 = vld [vmem:[%s4 + $0x18] sm:$0xff]
      %v930 = vld [vmem:[%s4 + $0x20] sm:$0xff]
      %v931 = vld [vmem:[%s4 + $0x28] sm:$0xff]
      %v932 = vld [vmem:[%s4 + $0x30] sm:$0xff]
      %v933 = vld [vmem:[%s4 + $0x38] sm:$0xff]
      %v934 = vld [vmem:[%s4 + $0x40] sm:$0xff]
      %v935 = vld [vmem:[%s4 + $0x48] sm:$0xff]
      %v936 = vld [vmem:[%s4 + $0x50] sm:$0xff]
      %v937 = vld [vmem:[%s4 + $0x58] sm:$0xff]
      %v938 = vld [vmem:[%s4 + $0x60] sm:$0xff]
      %v939 = vld [vmem:[%s4 + $0x68] sm:$0xff]
      %v940 = vld [vmem:[%s4 + $0x70] sm:$0xff]
      %v941 = vld [vmem:[%s4 + $0x78] sm:$0xff]
      %v942 = vld [vmem:[%s5] sm:$0x1]
      %v944 = vlaneseq
      %v945 = vshrl.u32 %v944, 7
      %v946 = vsub.s32 0, %v945
      %v947 = vrot.slane %v942, %v946
      %949 = vmatprep.subr.mxu0 0.0
      %950 = vmatpush1.msra.mxu0 %v926
      %951 = vmatprep.subr.mxu0 0.0
      %952 = vmatpush1.msra.mxu0 %v927
      %953 = vmatprep.subr.mxu0 0.0
      %954 = vmatpush1.msra.mxu0 %v928
      %955 = vmatprep.subr.mxu0 0.0
      %956 = vmatpush1.msra.mxu0 %v929
      %957 = vmatprep.subr.mxu0 0.0
      %958 = vmatpush1.msra.mxu0 %v930
      %959 = vmatprep.subr.mxu0 0.0
      %960 = vmatpush1.msra.mxu0 %v931
      %961 = vmatprep.subr.mxu0 0.0
      %962 = vmatpush1.msra.mxu0 %v932
      %963 = vmatprep.subr.mxu0 0.0
      %964 = vmatpush1.msra.mxu0 %v933
      %965 = vmatprep.subr.mxu0 0.0
      %966 = vmatpush1.msra.mxu0 %v934
      %967 = vmatprep.subr.mxu0 0.0
      %968 = vmatpush1.msra.mxu0 %v935
      %969 = vmatprep.subr.mxu0 0.0
      %970 = vmatpush1.msra.mxu0 %v936
      %971 = vmatprep.subr.mxu0 0.0
      %972 = vmatpush1.msra.mxu0 %v937
      %973 = vmatprep.subr.mxu0 0.0
      %974 = vmatpush1.msra.mxu0 %v938
      %975 = vmatprep.subr.mxu0 0.0
      %976 = vmatpush1.msra.mxu0 %v939
      %977 = vmatprep.subr.mxu0 0.0
      %978 = vmatpush1.msra.mxu0 %v940
      %979 = vmatprep.subr.mxu0 0.0
      %980 = vmatpush1.msra.mxu0 %v941
      %981 = vmatprep.subr.mxu0 0.0
      %982 = vmatpush1.msra.mxu0 0.0
      %983 = vmatprep.subr.mxu0 0.0
      %984 = vmatpush1.msra.mxu0 0.0
      %985 = vmatprep.subr.mxu0 0.0
      %986 = vmatpush1.msra.mxu0 0.0
      %987 = vmatprep.subr.mxu0 0.0
      %988 = vmatpush1.msra.mxu0 0.0
      %989 = vmatprep.subr.mxu0 0.0
      %990 = vmatpush1.msra.mxu0 0.0
      %991 = vmatprep.subr.mxu0 0.0
      %992 = vmatpush1.msra.mxu0 0.0
      %993 = vmatprep.subr.mxu0 0.0
      %994 = vmatpush1.msra.mxu0 0.0
      %995 = vmatprep.subr.mxu0 0.0
      %996 = vmatpush1.msra.mxu0 0.0
      %997 = vmatprep.subr.mxu0 0.0
      %998 = vmatpush1.msra.mxu0 0.0
      %999 = vmatprep.subr.mxu0 0.0
      %1000 = vmatpush1.msra.mxu0 0.0
      %1001 = vmatprep.subr.mxu0 0.0
      %1002 = vmatpush1.msra.mxu0 0.0
      %1003 = vmatprep.subr.mxu0 0.0
      %1004 = vmatpush1.msra.mxu0 0.0
      %1005 = vmatprep.subr.mxu0 0.0
      %1006 = vmatpush1.msra.mxu0 0.0
      %1007 = vmatprep.subr.mxu0 0.0
      %1008 = vmatpush1.msra.mxu0 0.0
      %1009 = vmatprep.subr.mxu0 0.0
      %1010 = vmatpush1.msra.mxu0 0.0
      %1011 = vmatprep.subr.mxu0 0.0
      %1012 = vmatpush1.msra.mxu0 0.0
      %1013 = vmatprep.mubr.f32.mxu0 0.0
      %1014 = vmatmul.mubr.f32.gmra.mrb[0].mxu0 %v894
      %v1015 = vpop.f32.mrb[0].mxu0
      %v1016 = vadd.f32 %v947, %v1015
      %v1017 = vpop.f32.mrb[0].mxu0
      %1018 = vmatprep.mubr.f32.mxu0 0.0
      %1019 = vmatmul.mubr.f32.gmra.mrb[0].mxu0 %v895
      %v1020 = vpop.f32.mrb[0].mxu0
      %v1021 = vadd.f32 %v947, %v1020
      %v1022 = vpop.f32.mrb[0].mxu0
      %1023 = vmatprep.mubr.f32.mxu0 0.0
      %1024 = vmatmul.mubr.f32.gmra.mrb[0].mxu0 %v896
      %v1025 = vpop.f32.mrb[0].mxu0
      %v1026 = vadd.f32 %v947, %v1025
      %v1027 = vpop.f32.mrb[0].mxu0
      %1028 = vmatprep.mubr.f32.mxu0 0.0
      %1029 = vmatmul.mubr.f32.gmra.mrb[0].mxu0 %v897
      %v1030 = vpop.f32.mrb[0].mxu0
      %v1031 = vadd.f32 %v947, %v1030
      %v1032 = vpop.f32.mrb[0].mxu0
      %1033 = vmatprep.mubr.f32.mxu0 0.0
      %1034 = vmatmul.mubr.f32.gmra.mrb[0].mxu0 %v898
      %v1035 = vpop.f32.mrb[0].mxu0
      %v1036 = vadd.f32 %v947, %v1035
      %v1037 = vpop.f32.mrb[0].mxu0
      %1038 = vmatprep.mubr.f32.mxu0 0.0
      %1039 = vmatmul.mubr.f32.gmra.mrb[0].mxu0 %v899
      %v1040 = vpop.f32.mrb[0].mxu0
      %v1041 = vadd.f32 %v947, %v1040
      %v1042 = vpop.f32.mrb[0].mxu0
      %1043 = vmatprep.mubr.f32.mxu0 0.0
      %1044 = vmatmul.mubr.f32.gmra.mrb[0].mxu0 %v900
      %v1045 = vpop.f32.mrb[0].mxu0
      %v1046 = vadd.f32 %v947, %v1045
      %v1047 = vpop.f32.mrb[0].mxu0
      %1048 = vmatprep.mubr.f32.mxu0 0.0
      %1049 = vmatmul.mubr.f32.gmra.mrb[0].mxu0 %v901
      %v1050 = vpop.f32.mrb[0].mxu0
      %v1051 = vadd.f32 %v947, %v1050
      %v1052 = vpop.f32.mrb[0].mxu0
      %1053 = vmatprep.mubr.f32.mxu0 0.0
      %1054 = vmatmul.mubr.f32.gmra.mrb[0].mxu0 %v902
      %v1055 = vpop.f32.mrb[0].mxu0
      %v1056 = vadd.f32 %v947, %v1055
      %v1057 = vpop.f32.mrb[0].mxu0
      %1058 = vmatprep.mubr.f32.mxu0 0.0
      %1059 = vmatmul.mubr.f32.gmra.mrb[0].mxu0 %v903
      %v1060 = vpop.f32.mrb[0].mxu0
      %v1061 = vadd.f32 %v947, %v1060
      %v1062 = vpop.f32.mrb[0].mxu0
      %1063 = vmatprep.mubr.f32.mxu0 0.0
      %1064 = vmatmul.mubr.f32.gmra.mrb[0].mxu0 %v904
      %v1065 = vpop.f32.mrb[0].mxu0
      %v1066 = vadd.f32 %v947, %v1065
      %v1067 = vpop.f32.mrb[0].mxu0
      %1068 = vmatprep.mubr.f32.mxu0 0.0
      %1069 = vmatmul.mubr.f32.gmra.mrb[0].mxu0 %v905
      %v1070 = vpop.f32.mrb[0].mxu0
      %v1071 = vadd.f32 %v947, %v1070
      %v1072 = vpop.f32.mrb[0].mxu0
      %1073 = vmatprep.mubr.f32.mxu0 0.0
      %1074 = vmatmul.mubr.f32.gmra.mrb[0].mxu0 %v906
      %v1075 = vpop.f32.mrb[0].mxu0
      %v1076 = vadd.f32 %v947, %v1075
      %v1077 = vpop.f32.mrb[0].mxu0
      %1078 = vmatprep.mubr.f32.mxu0 0.0
      %1079 = vmatmul.mubr.f32.gmra.mrb[0].mxu0 %v907
      %v1080 = vpop.f32.mrb[0].mxu0
      %v1081 = vadd.f32 %v947, %v1080
      %v1082 = vpop.f32.mrb[0].mxu0
      %1083 = vmatprep.mubr.f32.mxu0 0.0
      %1084 = vmatmul.mubr.f32.gmra.mrb[0].mxu0 %v908
      %v1085 = vpop.f32.mrb[0].mxu0
      %v1086 = vadd.f32 %v947, %v1085
      %v1087 = vpop.f32.mrb[0].mxu0
      %1088 = vmatprep.mubr.f32.mxu0 0.0
      %1089 = vmatmul.mubr.f32.gmra.mrb[0].mxu0 %v909
      %v1090 = vpop.f32.mrb[0].mxu0
      %v1091 = vadd.f32 %v947, %v1090
      %v1092 = vpop.f32.mrb[0].mxu0
      %1093 = vmatprep.mubr.f32.mxu0 0.0
      %1094 = vmatmul.mubr.f32.gmra.mrb[0].mxu0 %v910
      %v1095 = vpop.f32.mrb[0].mxu0
      %v1096 = vadd.f32 %v947, %v1095
      %v1097 = vpop.f32.mrb[0].mxu0
      %1098 = vmatprep.mubr.f32.mxu0 0.0
      %1099 = vmatmul.mubr.f32.gmra.mrb[0].mxu0 %v911
      %v1100 = vpop.f32.mrb[0].mxu0
      %v1101 = vadd.f32 %v947, %v1100
      %v1102 = vpop.f32.mrb[0].mxu0
      %1103 = vmatprep.mubr.f32.mxu0 0.0
      %1104 = vmatmul.mubr.f32.gmra.mrb[0].mxu0 %v912
      %v1105 = vpop.f32.mrb[0].mxu0
      %v1106 = vadd.f32 %v947, %v1105
      %v1107 = vpop.f32.mrb[0].mxu0
      %1108 = vmatprep.mubr.f32.mxu0 0.0
      %1109 = vmatmul.mubr.f32.gmra.mrb[0].mxu0 %v913
      %v1110 = vpop.f32.mrb[0].mxu0
      %v1111 = vadd.f32 %v947, %v1110
      %v1112 = vpop.f32.mrb[0].mxu0
      %1113 = vmatprep.mubr.f32.mxu0 0.0
      %1114 = vmatmul.mubr.f32.gmra.mrb[0].mxu0 %v914
      %v1115 = vpop.f32.mrb[0].mxu0
      %v1116 = vadd.f32 %v947, %v1115
      %v1117 = vpop.f32.mrb[0].mxu0
      %1118 = vmatprep.mubr.f32.mxu0 0.0
      %1119 = vmatmul.mubr.f32.gmra.mrb[0].mxu0 %v915
      %v1120 = vpop.f32.mrb[0].mxu0
      %v1121 = vadd.f32 %v947, %v1120
      %v1122 = vpop.f32.mrb[0].mxu0
      %1123 = vmatprep.mubr.f32.mxu0 0.0
      %1124 = vmatmul.mubr.f32.gmra.mrb[0].mxu0 %v916
      %v1125 = vpop.f32.mrb[0].mxu0
      %v1126 = vadd.f32 %v947, %v1125
      %v1127 = vpop.f32.mrb[0].mxu0
      %1128 = vmatprep.mubr.f32.mxu0 0.0
      %1129 = vmatmul.mubr.f32.gmra.mrb[0].mxu0 %v917
      %v1130 = vpop.f32.mrb[0].mxu0
      %v1131 = vadd.f32 %v947, %v1130
      %v1132 = vpop.f32.mrb[0].mxu0
      %1133 = vmatprep.mubr.f32.mxu0 0.0
      %1134 = vmatmul.mubr.f32.gmra.mrb[0].mxu0 %v918
      %v1135 = vpop.f32.mrb[0].mxu0
      %v1136 = vadd.f32 %v947, %v1135
      %v1137 = vpop.f32.mrb[0].mxu0
      %1138 = vmatprep.mubr.f32.mxu0 0.0
      %1139 = vmatmul.mubr.f32.gmra.mrb[0].mxu0 %v919
      %v1140 = vpop.f32.mrb[0].mxu0
      %v1141 = vadd.f32 %v947, %v1140
      %v1142 = vpop.f32.mrb[0].mxu0
      %1143 = vmatprep.mubr.f32.mxu0 0.0
      %1144 = vmatmul.mubr.f32.gmra.mrb[0].mxu0 %v920
      %v1145 = vpop.f32.mrb[0].mxu0
      %v1146 = vadd.f32 %v947, %v1145
      %v1147 = vpop.f32.mrb[0].mxu0
      %1148 = vmatprep.mubr.f32.mxu0 0.0
      %1149 = vmatmul.mubr.f32.gmra.mrb[0].mxu0 %v921
      %v1150 = vpop.f32.mrb[0].mxu0
      %v1151 = vadd.f32 %v947, %v1150
      %v1152 = vpop.f32.mrb[0].mxu0
      %1153 = vmatprep.mubr.f32.mxu0 0.0
      %1154 = vmatmul.mubr.f32.gmra.mrb[0].mxu0 %v922
      %v1155 = vpop.f32.mrb[0].mxu0
      %v1156 = vadd.f32 %v947, %v1155
      %v1157 = vpop.f32.mrb[0].mxu0
      %1158 = vmatprep.mubr.f32.mxu0 0.0
      %1159 = vmatmul.mubr.f32.gmra.mrb[0].mxu0 %v923
      %v1160 = vpop.f32.mrb[0].mxu0
      %v1161 = vadd.f32 %v947, %v1160
      %v1162 = vpop.f32.mrb[0].mxu0
      %1163 = vmatprep.mubr.f32.mxu0 0.0
      %1164 = vmatmul.mubr.f32.gmra.mrb[0].mxu0 %v924
      %v1165 = vpop.f32.mrb[0].mxu0
      %v1166 = vadd.f32 %v947, %v1165
      %v1167 = vpop.f32.mrb[0].mxu0
      %1168 = vmatprep.mubr.f32.mxu0 0.0
      %1169 = vmatmul.mubr.f32.gmra.mrb[0].mxu0 %v925
      %v1170 = vpop.f32.mrb[0].mxu0
      %v1171 = vadd.f32 %v947, %v1170
      %v1172 = vpop.f32.mrb[0].mxu0
      %1173 = vdwg.mxu0
      %v1174 = vmul.f32 %v1016, 0.5
      %v1175 = vmul.f32 %v1021, 0.5
      %v1176 = vmul.f32 %v1026, 0.5
      %v1177 = vmul.f32 %v1031, 0.5
      %v1178 = vmul.f32 %v1036, 0.5
      %v1179 = vmul.f32 %v1041, 0.5
      %v1180 = vmul.f32 %v1046, 0.5
      %v1181 = vmul.f32 %v1051, 0.5
      %v1182 = vmul.f32 %v1056, 0.5
      %v1183 = vmul.f32 %v1061, 0.5
      %v1184 = vmul.f32 %v1066, 0.5
      %v1185 = vmul.f32 %v1071, 0.5
      %v1186 = vmul.f32 %v1076, 0.5
      %v1187 = vmul.f32 %v1081, 0.5
      %v1188 = vmul.f32 %v1086, 0.5
      %v1189 = vmul.f32 %v1091, 0.5
      %v1190 = vmul.f32 %v1096, 0.5
      %v1191 = vmul.f32 %v1101, 0.5
      %v1192 = vmul.f32 %v1106, 0.5
      %v1193 = vmul.f32 %v1111, 0.5
      %v1194 = vmul.f32 %v1116, 0.5
      %v1195 = vmul.f32 %v1121, 0.5
      %v1196 = vmul.f32 %v1126, 0.5
      %v1197 = vmul.f32 %v1131, 0.5
      %v1198 = vmul.f32 %v1136, 0.5
      %v1199 = vmul.f32 %v1141, 0.5
      %v1200 = vmul.f32 %v1146, 0.5
      %v1201 = vmul.f32 %v1151, 0.5
      %v1202 = vmul.f32 %v1156, 0.5
      %v1203 = vmul.f32 %v1161, 0.5
      %v1204 = vmul.f32 %v1166, 0.5
      %v1205 = vmul.f32 %v1171, 0.5
      %v1206 = vmul.f32 %v1016, 0.70710677
      %v1207 = vmul.f32 %v1021, 0.70710677
      %v1208 = vmul.f32 %v1026, 0.70710677
      %v1209 = vmul.f32 %v1031, 0.70710677
      %v1210 = vmul.f32 %v1036, 0.70710677
      %v1211 = vmul.f32 %v1041, 0.70710677
      %v1212 = vmul.f32 %v1046, 0.70710677
      %v1213 = vmul.f32 %v1051, 0.70710677
      %v1214 = vmul.f32 %v1056, 0.70710677
      %v1215 = vmul.f32 %v1061, 0.70710677
      %v1216 = vmul.f32 %v1066, 0.70710677
      %v1217 = vmul.f32 %v1071, 0.70710677
      %v1218 = vmul.f32 %v1076, 0.70710677
      %v1219 = vmul.f32 %v1081, 0.70710677
      %v1220 = vmul.f32 %v1086, 0.70710677
      %v1221 = vmul.f32 %v1091, 0.70710677
      %v1222 = vmul.f32 %v1096, 0.70710677
      %v1223 = vmul.f32 %v1101, 0.70710677
      %v1224 = vmul.f32 %v1106, 0.70710677
      %v1225 = vmul.f32 %v1111, 0.70710677
      %v1226 = vmul.f32 %v1116, 0.70710677
      %v1227 = vmul.f32 %v1121, 0.70710677
      %v1228 = vmul.f32 %v1126, 0.70710677
      %v1229 = vmul.f32 %v1131, 0.70710677
      %v1230 = vmul.f32 %v1136, 0.70710677
      %v1231 = vmul.f32 %v1141, 0.70710677
      %v1232 = vmul.f32 %v1146, 0.70710677
      %v1233 = vmul.f32 %v1151, 0.70710677
      %v1234 = vmul.f32 %v1156, 0.70710677
      %v1235 = vmul.f32 %v1161, 0.70710677
      %v1236 = vmul.f32 %v1166, 0.70710677
      %v1237 = vmul.f32 %v1171, 0.70710677
      %v1238 = verf.f32.pop %v1206
      %v1239 = verf.f32.pop %v1207
      %v1240 = verf.f32.pop %v1208
      %v1241 = verf.f32.pop %v1209
      %v1242 = verf.f32.pop %v1210
      %v1243 = verf.f32.pop %v1211
      %v1244 = verf.f32.pop %v1212
      %v1245 = verf.f32.pop %v1213
      %v1246 = verf.f32.pop %v1214
      %v1247 = verf.f32.pop %v1215
      %v1248 = verf.f32.pop %v1216
      %v1249 = verf.f32.pop %v1217
      %v1250 = verf.f32.pop %v1218
      %v1251 = verf.f32.pop %v1219
      %v1252 = verf.f32.pop %v1220
      %v1253 = verf.f32.pop %v1221
      %v1254 = verf.f32.pop %v1222
      %v1255 = verf.f32.pop %v1223
      %v1256 = verf.f32.pop %v1224
      %v1257 = verf.f32.pop %v1225
      %v1258 = verf.f32.pop %v1226
      %v1259 = verf.f32.pop %v1227
      %v1260 = verf.f32.pop %v1228
      %v1261 = verf.f32.pop %v1229
      %v1262 = verf.f32.pop %v1230
      %v1263 = verf.f32.pop %v1231
      %v1264 = verf.f32.pop %v1232
      %v1265 = verf.f32.pop %v1233
      %v1266 = verf.f32.pop %v1234
      %v1267 = verf.f32.pop %v1235
      %v1268 = verf.f32.pop %v1236
      %v1269 = verf.f32.pop %v1237
      %v1270 = vadd.f32 %v1238, 1.0
      %v1271 = vadd.f32 %v1239, 1.0
      %v1272 = vadd.f32 %v1240, 1.0
      %v1273 = vadd.f32 %v1241, 1.0
      %v1274 = vadd.f32 %v1242, 1.0
      %v1275 = vadd.f32 %v1243, 1.0
      %v1276 = vadd.f32 %v1244, 1.0
      %v1277 = vadd.f32 %v1245, 1.0
      %v1278 = vadd.f32 %v1246, 1.0
      %v1279 = vadd.f32 %v1247, 1.0
      %v1280 = vadd.f32 %v1248, 1.0
      %v1281 = vadd.f32 %v1249, 1.0
      %v1282 = vadd.f32 %v1250, 1.0
      %v1283 = vadd.f32 %v1251, 1.0
      %v1284 = vadd.f32 %v1252, 1.0
      %v1285 = vadd.f32 %v1253, 1.0
      %v1286 = vadd.f32 %v1254, 1.0
      %v1287 = vadd.f32 %v1255, 1.0
      %v1288 = vadd.f32 %v1256, 1.0
      %v1289 = vadd.f32 %v1257, 1.0
      %v1290 = vadd.f32 %v1258, 1.0
      %v1291 = vadd.f32 %v1259, 1.0
      %v1292 = vadd.f32 %v1260, 1.0
      %v1293 = vadd.f32 %v1261, 1.0
      %v1294 = vadd.f32 %v1262, 1.0
      %v1295 = vadd.f32 %v1263, 1.0
      %v1296 = vadd.f32 %v1264, 1.0
      %v1297 = vadd.f32 %v1265, 1.0
      %v1298 = vadd.f32 %v1266, 1.0
      %v1299 = vadd.f32 %v1267, 1.0
      %v1300 = vadd.f32 %v1268, 1.0
      %v1301 = vadd.f32 %v1269, 1.0
      %v1302 = vmul.f32 %v1174, %v1270
      %v1303 = vmul.f32 %v1175, %v1271
      %v1304 = vmul.f32 %v1176, %v1272
      %v1305 = vmul.f32 %v1177, %v1273
      %v1306 = vmul.f32 %v1178, %v1274
      %v1307 = vmul.f32 %v1179, %v1275
      %v1308 = vmul.f32 %v1180, %v1276
      %v1309 = vmul.f32 %v1181, %v1277
      %v1310 = vmul.f32 %v1182, %v1278
      %v1311 = vmul.f32 %v1183, %v1279
      %v1312 = vmul.f32 %v1184, %v1280
      %v1313 = vmul.f32 %v1185, %v1281
      %v1314 = vmul.f32 %v1186, %v1282
      %v1315 = vmul.f32 %v1187, %v1283
      %v1316 = vmul.f32 %v1188, %v1284
      %v1317 = vmul.f32 %v1189, %v1285
      %v1318 = vmul.f32 %v1190, %v1286
      %v1319 = vmul.f32 %v1191, %v1287
      %v1320 = vmul.f32 %v1192, %v1288
      %v1321 = vmul.f32 %v1193, %v1289
      %v1322 = vmul.f32 %v1194, %v1290
      %v1323 = vmul.f32 %v1195, %v1291
      %v1324 = vmul.f32 %v1196, %v1292
      %v1325 = vmul.f32 %v1197, %v1293
      %v1326 = vmul.f32 %v1198, %v1294
      %v1327 = vmul.f32 %v1199, %v1295
      %v1328 = vmul.f32 %v1200, %v1296
      %v1329 = vmul.f32 %v1201, %v1297
      %v1330 = vmul.f32 %v1202, %v1298
      %v1331 = vmul.f32 %v1203, %v1299
      %v1332 = vmul.f32 %v1204, %v1300
      %v1333 = vmul.f32 %v1205, %v1301
      %v1334 = vld [vmem:[%s6] sm:$0xff]
      %v1335 = vld [vmem:[%s6 + $0x8] sm:$0xff]
      %v1336 = vld [vmem:[%s6 + $0x10] sm:$0xff]
      %v1337 = vld [vmem:[%s6 + $0x18] sm:$0xff]
      %v1338 = vld [vmem:[%s6 + $0x20] sm:$0xff]
      %v1339 = vld [vmem:[%s6 + $0x28] sm:$0xff]
      %v1340 = vld [vmem:[%s6 + $0x30] sm:$0xff]
      %v1341 = vld [vmem:[%s6 + $0x38] sm:$0xff]
      %v1342 = vld [vmem:[%s6 + $0x40] sm:$0xff]
      %v1343 = vld [vmem:[%s6 + $0x48] sm:$0xff]
      %v1344 = vld [vmem:[%s6 + $0x50] sm:$0xff]
      %v1345 = vld [vmem:[%s6 + $0x58] sm:$0xff]
      %v1346 = vld [vmem:[%s6 + $0x60] sm:$0xff]
      %v1347 = vld [vmem:[%s6 + $0x68] sm:$0xff]
      %v1348 = vld [vmem:[%s6 + $0x70] sm:$0xff]
      %v1349 = vld [vmem:[%s6 + $0x78] sm:$0xff]
      %v1350 = vld [vmem:[%s7] sm:$0x1]
      %v1352 = vlaneseq
      %v1353 = vshrl.u32 %v1352, 7
      %v1354 = vsub.s32 0, %v1353
      %v1355 = vrot.slane %v1350, %v1354
      %1357 = vmatprep.subr.mxu0 0.0
      %1358 = vmatpush1.msra.mxu0 %v1334
      %1359 = vmatprep.subr.mxu0 0.0
      %1360 = vmatpush1.msra.mxu0 %v1335
      %1361 = vmatprep.subr.mxu0 0.0
      %1362 = vmatpush1.msra.mxu0 %v1336
      %1363 = vmatprep.subr.mxu0 0.0
      %1364 = vmatpush1.msra.mxu0 %v1337
      %1365 = vmatprep.subr.mxu0 0.0
      %1366 = vmatpush1.msra.mxu0 %v1338
      %1367 = vmatprep.subr.mxu0 0.0
      %1368 = vmatpush1.msra.mxu0 %v1339
      %1369 = vmatprep.subr.mxu0 0.0
      %1370 = vmatpush1.msra.mxu0 %v1340
      %1371 = vmatprep.subr.mxu0 0.0
      %1372 = vmatpush1.msra.mxu0 %v1341
      %1373 = vmatprep.subr.mxu0 0.0
      %1374 = vmatpush1.msra.mxu0 %v1342
      %1375 = vmatprep.subr.mxu0 0.0
      %1376 = vmatpush1.msra.mxu0 %v1343
      %1377 = vmatprep.subr.mxu0 0.0
      %1378 = vmatpush1.msra.mxu0 %v1344
      %1379 = vmatprep.subr.mxu0 0.0
      %1380 = vmatpush1.msra.mxu0 %v1345
      %1381 = vmatprep.subr.mxu0 0.0
      %1382 = vmatpush1.msra.mxu0 %v1346
      %1383 = vmatprep.subr.mxu0 0.0
      %1384 = vmatpush1.msra.mxu0 %v1347
      %1385 = vmatprep.subr.mxu0 0.0
      %1386 = vmatpush1.msra.mxu0 %v1348
      %1387 = vmatprep.subr.mxu0 0.0
      %1388 = vmatpush1.msra.mxu0 %v1349
      %1389 = vmatprep.subr.mxu0 0.0
      %1390 = vmatpush1.msra.mxu0 0.0
      %1391 = vmatprep.subr.mxu0 0.0
      %1392 = vmatpush1.msra.mxu0 0.0
      %1393 = vmatprep.subr.mxu0 0.0
      %1394 = vmatpush1.msra.mxu0 0.0
      %1395 = vmatprep.subr.mxu0 0.0
      %1396 = vmatpush1.msra.mxu0 0.0
      %1397 = vmatprep.subr.mxu0 0.0
      %1398 = vmatpush1.msra.mxu0 0.0
      %1399 = vmatprep.subr.mxu0 0.0
      %1400 = vmatpush1.msra.mxu0 0.0
      %1401 = vmatprep.subr.mxu0 0.0
      %1402 = vmatpush1.msra.mxu0 0.0
      %1403 = vmatprep.subr.mxu0 0.0
      %1404 = vmatpush1.msra.mxu0 0.0
      %1405 = vmatprep.subr.mxu0 0.0
      %1406 = vmatpush1.msra.mxu0 0.0
      %1407 = vmatprep.subr.mxu0 0.0
      %1408 = vmatpush1.msra.mxu0 0.0
      %1409 = vmatprep.subr.mxu0 0.0
      %1410 = vmatpush1.msra.mxu0 0.0
      %1411 = vmatprep.subr.mxu0 0.0
      %1412 = vmatpush1.msra.mxu0 0.0
      %1413 = vmatprep.subr.mxu0 0.0
      %1414 = vmatpush1.msra.mxu0 0.0
      %1415 = vmatprep.subr.mxu0 0.0
      %1416 = vmatpush1.msra.mxu0 0.0
      %1417 = vmatprep.subr.mxu0 0.0
      %1418 = vmatpush1.msra.mxu0 0.0
      %1419 = vmatprep.subr.mxu0 0.0
      %1420 = vmatpush1.msra.mxu0 0.0
      %1421 = vmatprep.mubr.f32.mxu0 0.0
      %1422 = vmatmul.mubr.f32.gmra.mrb[0].mxu0 %v1302
      %v1423 = vpop.f32.mrb[0].mxu0
      %v1424 = vadd.f32 %v1355, %v1423
      %v1425 = vpop.f32.mrb[0].mxu0
      %1426 = vmatprep.mubr.f32.mxu0 0.0
      %1427 = vmatmul.mubr.f32.gmra.mrb[0].mxu0 %v1303
      %v1428 = vpop.f32.mrb[0].mxu0
      %v1429 = vadd.f32 %v1355, %v1428
      %v1430 = vpop.f32.mrb[0].mxu0
      %1431 = vmatprep.mubr.f32.mxu0 0.0
      %1432 = vmatmul.mubr.f32.gmra.mrb[0].mxu0 %v1304
      %v1433 = vpop.f32.mrb[0].mxu0
      %v1434 = vadd.f32 %v1355, %v1433
      %v1435 = vpop.f32.mrb[0].mxu0
      %1436 = vmatprep.mubr.f32.mxu0 0.0
      %1437 = vmatmul.mubr.f32.gmra.mrb[0].mxu0 %v1305
      %v1438 = vpop.f32.mrb[0].mxu0
      %v1439 = vadd.f32 %v1355, %v1438
      %v1440 = vpop.f32.mrb[0].mxu0
      %1441 = vmatprep.mubr.f32.mxu0 0.0
      %1442 = vmatmul.mubr.f32.gmra.mrb[0].mxu0 %v1306
      %v1443 = vpop.f32.mrb[0].mxu0
      %v1444 = vadd.f32 %v1355, %v1443
      %v1445 = vpop.f32.mrb[0].mxu0
      %1446 = vmatprep.mubr.f32.mxu0 0.0
      %1447 = vmatmul.mubr.f32.gmra.mrb[0].mxu0 %v1307
      %v1448 = vpop.f32.mrb[0].mxu0
      %v1449 = vadd.f32 %v1355, %v1448
      %v1450 = vpop.f32.mrb[0].mxu0
      %1451 = vmatprep.mubr.f32.mxu0 0.0
      %1452 = vmatmul.mubr.f32.gmra.mrb[0].mxu0 %v1308
      %v1453 = vpop.f32.mrb[0].mxu0
      %v1454 = vadd.f32 %v1355, %v1453
      %v1455 = vpop.f32.mrb[0].mxu0
      %1456 = vmatprep.mubr.f32.mxu0 0.0
      %1457 = vmatmul.mubr.f32.gmra.mrb[0].mxu0 %v1309
      %v1458 = vpop.f32.mrb[0].mxu0
      %v1459 = vadd.f32 %v1355, %v1458
      %v1460 = vpop.f32.mrb[0].mxu0
      %1461 = vmatprep.mubr.f32.mxu0 0.0
      %1462 = vmatmul.mubr.f32.gmra.mrb[0].mxu0 %v1310
      %v1463 = vpop.f32.mrb[0].mxu0
      %v1464 = vadd.f32 %v1355, %v1463
      %v1465 = vpop.f32.mrb[0].mxu0
      %1466 = vmatprep.mubr.f32.mxu0 0.0
      %1467 = vmatmul.mubr.f32.gmra.mrb[0].mxu0 %v1311
      %v1468 = vpop.f32.mrb[0].mxu0
      %v1469 = vadd.f32 %v1355, %v1468
      %v1470 = vpop.f32.mrb[0].mxu0
      %1471 = vmatprep.mubr.f32.mxu0 0.0
      %1472 = vmatmul.mubr.f32.gmra.mrb[0].mxu0 %v1312
      %v1473 = vpop.f32.mrb[0].mxu0
      %v1474 = vadd.f32 %v1355, %v1473
      %v1475 = vpop.f32.mrb[0].mxu0
      %1476 = vmatprep.mubr.f32.mxu0 0.0
      %1477 = vmatmul.mubr.f32.gmra.mrb[0].mxu0 %v1313
      %v1478 = vpop.f32.mrb[0].mxu0
      %v1479 = vadd.f32 %v1355, %v1478
      %v1480 = vpop.f32.mrb[0].mxu0
      %1481 = vmatprep.mubr.f32.mxu0 0.0
      %1482 = vmatmul.mubr.f32.gmra.mrb[0].mxu0 %v1314
      %v1483 = vpop.f32.mrb[0].mxu0
      %v1484 = vadd.f32 %v1355, %v1483
      %v1485 = vpop.f32.mrb[0].mxu0
      %1486 = vmatprep.mubr.f32.mxu0 0.0
      %1487 = vmatmul.mubr.f32.gmra.mrb[0].mxu0 %v1315
      %v1488 = vpop.f32.mrb[0].mxu0
      %v1489 = vadd.f32 %v1355, %v1488
      %v1490 = vpop.f32.mrb[0].mxu0
      %1491 = vmatprep.mubr.f32.mxu0 0.0
      %1492 = vmatmul.mubr.f32.gmra.mrb[0].mxu0 %v1316
      %v1493 = vpop.f32.mrb[0].mxu0
      %v1494 = vadd.f32 %v1355, %v1493
      %v1495 = vpop.f32.mrb[0].mxu0
      %1496 = vmatprep.mubr.f32.mxu0 0.0
      %1497 = vmatmul.mubr.f32.gmra.mrb[0].mxu0 %v1317
      %v1498 = vpop.f32.mrb[0].mxu0
      %v1499 = vadd.f32 %v1355, %v1498
      %v1500 = vpop.f32.mrb[0].mxu0
      %1501 = vmatprep.mubr.f32.mxu0 0.0
      %1502 = vmatmul.mubr.f32.gmra.mrb[0].mxu0 %v1318
      %v1503 = vpop.f32.mrb[0].mxu0
      %v1504 = vadd.f32 %v1355, %v1503
      %v1505 = vpop.f32.mrb[0].mxu0
      %1506 = vmatprep.mubr.f32.mxu0 0.0
      %1507 = vmatmul.mubr.f32.gmra.mrb[0].mxu0 %v1319
      %v1508 = vpop.f32.mrb[0].mxu0
      %v1509 = vadd.f32 %v1355, %v1508
      %v1510 = vpop.f32.mrb[0].mxu0
      %1511 = vmatprep.mubr.f32.mxu0 0.0
      %1512 = vmatmul.mubr.f32.gmra.mrb[0].mxu0 %v1320
      %v1513 = vpop.f32.mrb[0].mxu0
      %v1514 = vadd.f32 %v1355, %v1513
      %v1515 = vpop.f32.mrb[0].mxu0
      %1516 = vmatprep.mubr.f32.mxu0 0.0
      %1517 = vmatmul.mubr.f32.gmra.mrb[0].mxu0 %v1321
      %v1518 = vpop.f32.mrb[0].mxu0
      %v1519 = vadd.f32 %v1355, %v1518
      %v1520 = vpop.f32.mrb[0].mxu0
      %1521 = vmatprep.mubr.f32.mxu0 0.0
      %1522 = vmatmul.mubr.f32.gmra.mrb[0].mxu0 %v1322
      %v1523 = vpop.f32.mrb[0].mxu0
      %v1524 = vadd.f32 %v1355, %v1523
      %v1525 = vpop.f32.mrb[0].mxu0
      %1526 = vmatprep.mubr.f32.mxu0 0.0
      %1527 = vmatmul.mubr.f32.gmra.mrb[0].mxu0 %v1323
      %v1528 = vpop.f32.mrb[0].mxu0
      %v1529 = vadd.f32 %v1355, %v1528
      %v1530 = vpop.f32.mrb[0].mxu0
      %1531 = vmatprep.mubr.f32.mxu0 0.0
      %1532 = vmatmul.mubr.f32.gmra.mrb[0].mxu0 %v1324
      %v1533 = vpop.f32.mrb[0].mxu0
      %v1534 = vadd.f32 %v1355, %v1533
      %v1535 = vpop.f32.mrb[0].mxu0
      %1536 = vmatprep.mubr.f32.mxu0 0.0
      %1537 = vmatmul.mubr.f32.gmra.mrb[0].mxu0 %v1325
      %v1538 = vpop.f32.mrb[0].mxu0
      %v1539 = vadd.f32 %v1355, %v1538
      %v1540 = vpop.f32.mrb[0].mxu0
      %1541 = vmatprep.mubr.f32.mxu0 0.0
      %1542 = vmatmul.mubr.f32.gmra.mrb[0].mxu0 %v1326
      %v1543 = vpop.f32.mrb[0].mxu0
      %v1544 = vadd.f32 %v1355, %v1543
      %v1545 = vpop.f32.mrb[0].mxu0
      %1546 = vmatprep.mubr.f32.mxu0 0.0
      %1547 = vmatmul.mubr.f32.gmra.mrb[0].mxu0 %v1327
      %v1548 = vpop.f32.mrb[0].mxu0
      %v1549 = vadd.f32 %v1355, %v1548
      %v1550 = vpop.f32.mrb[0].mxu0
      %1551 = vmatprep.mubr.f32.mxu0 0.0
      %1552 = vmatmul.mubr.f32.gmra.mrb[0].mxu0 %v1328
      %v1553 = vpop.f32.mrb[0].mxu0
      %v1554 = vadd.f32 %v1355, %v1553
      %v1555 = vpop.f32.mrb[0].mxu0
      %1556 = vmatprep.mubr.f32.mxu0 0.0
      %1557 = vmatmul.mubr.f32.gmra.mrb[0].mxu0 %v1329
      %v1558 = vpop.f32.mrb[0].mxu0
      %v1559 = vadd.f32 %v1355, %v1558
      %v1560 = vpop.f32.mrb[0].mxu0
      %1561 = vmatprep.mubr.f32.mxu0 0.0
      %1562 = vmatmul.mubr.f32.gmra.mrb[0].mxu0 %v1330
      %v1563 = vpop.f32.mrb[0].mxu0
      %v1564 = vadd.f32 %v1355, %v1563
      %v1565 = vpop.f32.mrb[0].mxu0
      %1566 = vmatprep.mubr.f32.mxu0 0.0
      %1567 = vmatmul.mubr.f32.gmra.mrb[0].mxu0 %v1331
      %v1568 = vpop.f32.mrb[0].mxu0
      %v1569 = vadd.f32 %v1355, %v1568
      %v1570 = vpop.f32.mrb[0].mxu0
      %1571 = vmatprep.mubr.f32.mxu0 0.0
      %1572 = vmatmul.mubr.f32.gmra.mrb[0].mxu0 %v1332
      %v1573 = vpop.f32.mrb[0].mxu0
      %v1574 = vadd.f32 %v1355, %v1573
      %v1575 = vpop.f32.mrb[0].mxu0
      %1576 = vmatprep.mubr.f32.mxu0 0.0
      %1577 = vmatmul.mubr.f32.gmra.mrb[0].mxu0 %v1333
      %v1578 = vpop.f32.mrb[0].mxu0
      %v1579 = vadd.f32 %v1355, %v1578
      %v1580 = vpop.f32.mrb[0].mxu0
      %1581 = vdwg.mxu0
      %v1582 = vadd.f32 %v395, %v1424
      %v1583 = vadd.f32 %v396, %v1429
      %v1584 = vadd.f32 %v397, %v1434
      %v1585 = vadd.f32 %v398, %v1439
      %v1586 = vadd.f32 %v399, %v1444
      %v1587 = vadd.f32 %v400, %v1449
      %v1588 = vadd.f32 %v401, %v1454
      %v1589 = vadd.f32 %v402, %v1459
      %v1590 = vadd.f32 %v403, %v1464
      %v1591 = vadd.f32 %v404, %v1469
      %v1592 = vadd.f32 %v405, %v1474
      %v1593 = vadd.f32 %v406, %v1479
      %v1594 = vadd.f32 %v407, %v1484
      %v1595 = vadd.f32 %v408, %v1489
      %v1596 = vadd.f32 %v409, %v1494
      %v1597 = vadd.f32 %v410, %v1499
      %v1598 = vadd.f32 %v411, %v1504
      %v1599 = vadd.f32 %v412, %v1509
      %v1600 = vadd.f32 %v413, %v1514
      %v1601 = vadd.f32 %v414, %v1519
      %v1602 = vadd.f32 %v415, %v1524
      %v1603 = vadd.f32 %v416, %v1529
      %v1604 = vadd.f32 %v417, %v1534
      %v1605 = vadd.f32 %v418, %v1539
      %v1606 = vadd.f32 %v419, %v1544
      %v1607 = vadd.f32 %v420, %v1549
      %v1608 = vadd.f32 %v421, %v1554
      %v1609 = vadd.f32 %v422, %v1559
      %v1610 = vadd.f32 %v423, %v1564
      %v1611 = vadd.f32 %v424, %v1569
      %v1612 = vadd.f32 %v425, %v1574
      %v1613 = vadd.f32 %v426, %v1579
      %1614 = vst [vmem:[%s329] sm:$0xff] %v1582
      %1615 = vst [vmem:[%s329 + $0x8] sm:$0xff] %v1583
      %1616 = vst [vmem:[%s329 + $0x10] sm:$0xff] %v1584
      %1617 = vst [vmem:[%s329 + $0x18] sm:$0xff] %v1585
      %1618 = vst [vmem:[%s329 + $0x20] sm:$0xff] %v1586
      %1619 = vst [vmem:[%s329 + $0x28] sm:$0xff] %v1587
      %1620 = vst [vmem:[%s329 + $0x30] sm:$0xff] %v1588
      %1621 = vst [vmem:[%s329 + $0x38] sm:$0xff] %v1589
      %1622 = vst [vmem:[%s329 + $0x40] sm:$0xff] %v1590
      %1623 = vst [vmem:[%s329 + $0x48] sm:$0xff] %v1591
      %1624 = vst [vmem:[%s329 + $0x50] sm:$0xff] %v1592
      %1625 = vst [vmem:[%s329 + $0x58] sm:$0xff] %v1593
      %1626 = vst [vmem:[%s329 + $0x60] sm:$0xff] %v1594
      %1627 = vst [vmem:[%s329 + $0x68] sm:$0xff] %v1595
      %1628 = vst [vmem:[%s329 + $0x70] sm:$0xff] %v1596
      %1629 = vst [vmem:[%s329 + $0x78] sm:$0xff] %v1597
      %1630 = vst [vmem:[%s329 + $0x80] sm:$0xff] %v1598
      %1631 = vst [vmem:[%s329 + $0x88] sm:$0xff] %v1599
      %1632 = vst [vmem:[%s329 + $0x90] sm:$0xff] %v1600
      %1633 = vst [vmem:[%s329 + $0x98] sm:$0xff] %v1601
      %1634 = vst [vmem:[%s329 + $0xa0] sm:$0xff] %v1602
      %1635 = vst [vmem:[%s329 + $0xa8] sm:$0xff] %v1603
      %1636 = vst [vmem:[%s329 + $0xb0] sm:$0xff] %v1604
      %1637 = vst [vmem:[%s329 + $0xb8] sm:$0xff] %v1605
      %1638 = vst [vmem:[%s329 + $0xc0] sm:$0xff] %v1606
      %1639 = vst [vmem:[%s329 + $0xc8] sm:$0xff] %v1607
      %1640 = vst [vmem:[%s329 + $0xd0] sm:$0xff] %v1608
      %1641 = vst [vmem:[%s329 + $0xd8] sm:$0xff] %v1609
      %1642 = vst [vmem:[%s329 + $0xe0] sm:$0xff] %v1610
      %1643 = vst [vmem:[%s329 + $0xe8] sm:$0xff] %v1611
      %1644 = vst [vmem:[%s329 + $0xf0] sm:$0xff] %v1612
      %1645 = vst [vmem:[%s329 + $0xf8] sm:$0xff] %v1613
      %s1646 = smul.u32 32, %s19
      %p1647 = scmp.lt.s32.totalorder %s1646, 63
      %s1648 = scalar_select %p1647, %s1646, 63
      %s1649 = smul.addr %s1648, 8
      %s1650 = scalar_lea.vmem %s8, %s1649
      // Predicated region
      $region53: #{swin_block_v1_pallas.3} parent=51 // pred_check
        %p1651 = pneg %p215
      $region54: #{swin_block_v1_pallas.3} parent=51 // pred_check_branch
        %1653 = sbr.rel (%p1651) target = $region56
      $region55: #{swin_block_v1_pallas.3} parent=51 // pred_region
        %s1654 = smul.u32 32, %s19
      $region56: #{swin_block_v1_pallas.3} parent=51 // pred_fallthru
        _
    $region52: #{swin_block_v1_pallas.3} parent=5 // pred_fallthru
      _
    %p1655 = scmp.le.s32.totalorder 2, %s14
    // Predicated region
    $region57: #{swin_block_v1_pallas.3} parent=5 // pred_check
      %p1656 = pneg %p1655
    $region58: #{swin_block_v1_pallas.3} parent=5 // pred_check_branch
      %1658 = sbr.rel (%p1656) target = $region60
    $region59: #{swin_block_v1_pallas.3} parent=5 // pred_region
      %s1659 = ssub.s32 %s14, 2
      // Predicated region
      $region61: #{swin_block_v1_pallas.3} parent=59 // pred_check
        %p1660 = pneg %p221
      $region62: #{swin_block_v1_pallas.3} parent=59 // pred_check_branch
        %1662 = sbr.rel (%p1660) target = $region64
      $region63: #{swin_block_v1_pallas.3} parent=59 // pred_region
        %s1663 = smul.u32 32, %s20
        %p1664 = scmp.lt.s32.totalorder %s1663, 63
        %s1665 = scalar_select %p1664, %s1663, 63
        %s1666 = smul.addr %s1665, 8
        %s1667 = scalar_lea.vmem %s8, %s1666
      $region64: #{swin_block_v1_pallas.3} parent=59 // pred_fallthru
        _
    $region60: #{swin_block_v1_pallas.3} parent=5 // pred_fallthru
      _
  $region6: #{swin_block_v1_pallas.3} parent=0 // loop_footer
    %s18 = sadd.s32 1, %s14
  $region7: #{swin_block_v1_pallas.3} parent=0 // loop_footer_branch
    %13 = sbr.rel target = $region3
  $region8: #{swin_block_v1_pallas.3} parent=0 // loop_exit
    _

// kernel: swin_block_v1_pallas.2
$region0: #{swin_block_v1_pallas.2}
  #allocation0 [shape = 'u32[]', space=smem, size = 0x4, offset = 0x4, fixed_abs, tag = 'smem constant byte address 0x4 - core index']
  #allocation1 [shape = 'u32[144,128]{1,0:T(1,128)}', space=vmem, size = 0x12000, scoped, tag = 'internal scratch']
  %s0 = inlined_call_operand.vmem [shape: f32[8,64,32], index: 0, kind: input, shape index: {}]
  %s1 = inlined_call_operand.vmem [shape: f32[1,32], index: 1, kind: input, shape index: {}]
  %s2 = inlined_call_operand.vmem [shape: f32[1,32], index: 2, kind: input, shape index: {}]
  %s3 = inlined_call_operand.vmem [shape: f32[2,32,16], index: 3, kind: input, shape index: {}]
  %s4 = inlined_call_operand.vmem [shape: f32[2,1,16], index: 4, kind: input, shape index: {}]
  %s5 = inlined_call_operand.vmem [shape: f32[2,32,16], index: 5, kind: input, shape index: {}]
  %s6 = inlined_call_operand.vmem [shape: f32[2,1,16], index: 6, kind: input, shape index: {}]
  %s7 = inlined_call_operand.vmem [shape: f32[2,32,16], index: 7, kind: input, shape index: {}]
  %s8 = inlined_call_operand.vmem [shape: f32[2,1,16], index: 8, kind: input, shape index: {}]
  %s9 = inlined_call_operand.vmem [shape: f32[2,16,32], index: 9, kind: input, shape index: {}]
  %s10 = inlined_call_operand.vmem [shape: f32[1,32], index: 10, kind: input, shape index: {}]
  %s11 = inlined_call_operand.vmem [shape: f32[2,64,64], index: 11, kind: input, shape index: {}]
  %s12 = inlined_call_operand.vmem [shape: f32[4,64,64], index: 12, kind: input, shape index: {}]
  %s13 = inlined_call_operand.vmem [shape: f32[8,64,32], index: 13, kind: output, shape index: {}]
  %s14 = sld [smem:[#allocation0]]
  $region85: #{swin_block_v1_pallas.2} parent=0
    _
  %s16 = ssub.s32 1, %s14
  %s17 = scalar_select 0, %s16, %s14
  loop: start=0, step=1, limit=4
  $region2: #{swin_block_v1_pallas.2} parent=0 // loop_pre_header
    _
  $region3: #{swin_block_v1_pallas.2} parent=0 // loop_header
    %s19 = sphi 0, %s23
    %p20 = scmp.ge.s32.totalorder %s19, 4
    %s29 = sphi 0, %s31
    %s32 = sphi 0, %s29
    %s33 = sphi 0, %s32
    %s49 = sphi 0, %s33
    %s53 = sphi 0, %s53
    %s55 = sphi 0, %s53
    %s56 = sphi 0, %s55
    %s70 = sphi 0, %s56
    %s74 = sphi 0, %s74
    %s76 = sphi 0, %s74
    %s77 = sphi 0, %s76
    %s91 = sphi 0, %s77
    %s95 = sphi 0, %s95
    %s97 = sphi 0, %s95
    %s98 = sphi 0, %s97
    %s112 = sphi 0, %s98
    %s116 = sphi 0, %s116
    %s118 = sphi 0, %s116
    %s119 = sphi 0, %s118
    %s133 = sphi 0, %s119
    %s137 = sphi 0, %s137
    %s139 = sphi 0, %s137
    %s140 = sphi 0, %s139
    %s154 = sphi 0, %s140
    %s158 = sphi 0, %s158
    %s160 = sphi 0, %s158
    %s161 = sphi 0, %s160
    %s175 = sphi 0, %s161
    %s179 = sphi 0, %s179
    %s181 = sphi 0, %s179
    %s182 = sphi 0, %s181
    %s196 = sphi 0, %s182
    %s200 = sphi 0, %s200
    %s202 = sphi 0, %s200
    %s203 = sphi 0, %s202
    %s217 = sphi 0, %s203
    %s221 = sphi 0, %s221
    %s223 = sphi 0, %s221
    %s224 = sphi 0, %s223
    %s238 = sphi 0, %s224
    %s242 = sphi 0, %s242
    %s244 = sphi 0, %s242
    %s245 = sphi 0, %s244
    %s259 = sphi 0, %s245
    %s263 = sphi 0, %s263
    %s265 = sphi 0, %s263
    %s266 = sphi 0, %s265
    %s280 = sphi 0, %s266
    %s284 = sphi 0, %s284
    %s286 = sphi 0, %s284
    %s287 = sphi 0, %s286
    %s301 = sphi 0, %s287
    %s307 = sphi 0, %s309
    %s310 = sphi 0, %s307
    %s311 = sphi 0, %s310
    %s327 = sphi 0, %s311
  $region4: #{swin_block_v1_pallas.2} parent=0 // loop_header_branch
    %22 = sbr.rel (%p20) target = $region8
  $region5: #{swin_block_v1_pallas.2} parent=0 // loop_body
    %s24 = ssub.s32 %s19, 1
    %s25 = ssub.s32 %s19, 2
    %s26 = sadd.s32 %s19, 1
    %s27 = ssub.s32 %s19, %s26
    %p28 = scmp.eq.s32.totalorder %s27, 0
    %s30 = sadd.s32 %s29, 1
    %s31 = scalar_select %p28, %s29, %s30
    %p34 = pneg %p28
    %p35 = scmp.eq.s32.totalorder %s19, 1
    %p36 = por %p34, %p35
    %p37 = scmp.ne.s32.totalorder %s29, %s32
    %p38 = scmp.eq.s32.totalorder %s19, 0
    %p39 = por %p37, %p38
    %p40 = scmp.ne.s32.totalorder %s29, %s32
    %p41 = scmp.eq.s32.totalorder %s24, 1
    %p42 = por %p40, %p41
    %p43 = scmp.ne.s32.totalorder %s32, %s33
    %p44 = scmp.eq.s32.totalorder %s24, 0
    %p45 = por %p43, %p44
    %p46 = scmp.ne.s32.totalorder %s32, %s33
    %p47 = scmp.eq.s32.totalorder %s25, 1
    %p48 = por %p46, %p47
    %p50 = scmp.ne.s32.totalorder %s33, %s49
    %p51 = scmp.eq.s32.totalorder %s25, 0
    %p52 = por %p50, %p51
    %s54 = sadd.s32 %s53, 1
    %p57 = scmp.eq.s32.totalorder %s19, 1
    %p58 = scmp.ne.s32.totalorder %s53, %s55
    %p59 = scmp.eq.s32.totalorder %s19, 0
    %p60 = por %p58, %p59
    %p61 = scmp.ne.s32.totalorder %s53, %s55
    %p62 = scmp.eq.s32.totalorder %s24, 1
    %p63 = por %p61, %p62
    %p64 = scmp.ne.s32.totalorder %s55, %s56
    %p65 = scmp.eq.s32.totalorder %s24, 0
    %p66 = por %p64, %p65
    %p67 = scmp.ne.s32.totalorder %s55, %s56
    %p68 = scmp.eq.s32.totalorder %s25, 1
    %p69 = por %p67, %p68
    %p71 = scmp.ne.s32.totalorder %s56, %s70
    %p72 = scmp.eq.s32.totalorder %s25, 0
    %p73 = por %p71, %p72
    %s75 = sadd.s32 %s74, 1
    %p78 = scmp.eq.s32.totalorder %s19, 1
    %p79 = scmp.ne.s32.totalorder %s74, %s76
    %p80 = scmp.eq.s32.totalorder %s19, 0
    %p81 = por %p79, %p80
    %p82 = scmp.ne.s32.totalorder %s74, %s76
    %p83 = scmp.eq.s32.totalorder %s24, 1
    %p84 = por %p82, %p83
    %p85 = scmp.ne.s32.totalorder %s76, %s77
    %p86 = scmp.eq.s32.totalorder %s24, 0
    %p87 = por %p85, %p86
    %p88 = scmp.ne.s32.totalorder %s76, %s77
    %p89 = scmp.eq.s32.totalorder %s25, 1
    %p90 = por %p88, %p89
    %p92 = scmp.ne.s32.totalorder %s77, %s91
    %p93 = scmp.eq.s32.totalorder %s25, 0
    %p94 = por %p92, %p93
    %s96 = sadd.s32 %s95, 1
    %p99 = scmp.eq.s32.totalorder %s19, 1
    %p100 = scmp.ne.s32.totalorder %s95, %s97
    %p101 = scmp.eq.s32.totalorder %s19, 0
    %p102 = por %p100, %p101
    %p103 = scmp.ne.s32.totalorder %s95, %s97
    %p104 = scmp.eq.s32.totalorder %s24, 1
    %p105 = por %p103, %p104
    %p106 = scmp.ne.s32.totalorder %s97, %s98
    %p107 = scmp.eq.s32.totalorder %s24, 0
    %p108 = por %p106, %p107
    %p109 = scmp.ne.s32.totalorder %s97, %s98
    %p110 = scmp.eq.s32.totalorder %s25, 1
    %p111 = por %p109, %p110
    %p113 = scmp.ne.s32.totalorder %s98, %s112
    %p114 = scmp.eq.s32.totalorder %s25, 0
    %p115 = por %p113, %p114
    %s117 = sadd.s32 %s116, 1
    %p120 = scmp.eq.s32.totalorder %s19, 1
    %p121 = scmp.ne.s32.totalorder %s116, %s118
    %p122 = scmp.eq.s32.totalorder %s19, 0
    %p123 = por %p121, %p122
    %p124 = scmp.ne.s32.totalorder %s116, %s118
    %p125 = scmp.eq.s32.totalorder %s24, 1
    %p126 = por %p124, %p125
    %p127 = scmp.ne.s32.totalorder %s118, %s119
    %p128 = scmp.eq.s32.totalorder %s24, 0
    %p129 = por %p127, %p128
    %p130 = scmp.ne.s32.totalorder %s118, %s119
    %p131 = scmp.eq.s32.totalorder %s25, 1
    %p132 = por %p130, %p131
    %p134 = scmp.ne.s32.totalorder %s119, %s133
    %p135 = scmp.eq.s32.totalorder %s25, 0
    %p136 = por %p134, %p135
    %s138 = sadd.s32 %s137, 1
    %p141 = scmp.eq.s32.totalorder %s19, 1
    %p142 = scmp.ne.s32.totalorder %s137, %s139
    %p143 = scmp.eq.s32.totalorder %s19, 0
    %p144 = por %p142, %p143
    %p145 = scmp.ne.s32.totalorder %s137, %s139
    %p146 = scmp.eq.s32.totalorder %s24, 1
    %p147 = por %p145, %p146
    %p148 = scmp.ne.s32.totalorder %s139, %s140
    %p149 = scmp.eq.s32.totalorder %s24, 0
    %p150 = por %p148, %p149
    %p151 = scmp.ne.s32.totalorder %s139, %s140
    %p152 = scmp.eq.s32.totalorder %s25, 1
    %p153 = por %p151, %p152
    %p155 = scmp.ne.s32.totalorder %s140, %s154
    %p156 = scmp.eq.s32.totalorder %s25, 0
    %p157 = por %p155, %p156
    %s159 = sadd.s32 %s158, 1
    %p162 = scmp.eq.s32.totalorder %s19, 1
    %p163 = scmp.ne.s32.totalorder %s158, %s160
    %p164 = scmp.eq.s32.totalorder %s19, 0
    %p165 = por %p163, %p164
    %p166 = scmp.ne.s32.totalorder %s158, %s160
    %p167 = scmp.eq.s32.totalorder %s24, 1
    %p168 = por %p166, %p167
    %p169 = scmp.ne.s32.totalorder %s160, %s161
    %p170 = scmp.eq.s32.totalorder %s24, 0
    %p171 = por %p169, %p170
    %p172 = scmp.ne.s32.totalorder %s160, %s161
    %p173 = scmp.eq.s32.totalorder %s25, 1
    %p174 = por %p172, %p173
    %p176 = scmp.ne.s32.totalorder %s161, %s175
    %p177 = scmp.eq.s32.totalorder %s25, 0
    %p178 = por %p176, %p177
    %s180 = sadd.s32 %s179, 1
    %p183 = scmp.eq.s32.totalorder %s19, 1
    %p184 = scmp.ne.s32.totalorder %s179, %s181
    %p185 = scmp.eq.s32.totalorder %s19, 0
    %p186 = por %p184, %p185
    %p187 = scmp.ne.s32.totalorder %s179, %s181
    %p188 = scmp.eq.s32.totalorder %s24, 1
    %p189 = por %p187, %p188
    %p190 = scmp.ne.s32.totalorder %s181, %s182
    %p191 = scmp.eq.s32.totalorder %s24, 0
    %p192 = por %p190, %p191
    %p193 = scmp.ne.s32.totalorder %s181, %s182
    %p194 = scmp.eq.s32.totalorder %s25, 1
    %p195 = por %p193, %p194
    %p197 = scmp.ne.s32.totalorder %s182, %s196
    %p198 = scmp.eq.s32.totalorder %s25, 0
    %p199 = por %p197, %p198
    %s201 = sadd.s32 %s200, 1
    %p204 = scmp.eq.s32.totalorder %s19, 1
    %p205 = scmp.ne.s32.totalorder %s200, %s202
    %p206 = scmp.eq.s32.totalorder %s19, 0
    %p207 = por %p205, %p206
    %p208 = scmp.ne.s32.totalorder %s200, %s202
    %p209 = scmp.eq.s32.totalorder %s24, 1
    %p210 = por %p208, %p209
    %p211 = scmp.ne.s32.totalorder %s202, %s203
    %p212 = scmp.eq.s32.totalorder %s24, 0
    %p213 = por %p211, %p212
    %p214 = scmp.ne.s32.totalorder %s202, %s203
    %p215 = scmp.eq.s32.totalorder %s25, 1
    %p216 = por %p214, %p215
    %p218 = scmp.ne.s32.totalorder %s203, %s217
    %p219 = scmp.eq.s32.totalorder %s25, 0
    %p220 = por %p218, %p219
    %s222 = sadd.s32 %s221, 1
    %p225 = scmp.eq.s32.totalorder %s19, 1
    %p226 = scmp.ne.s32.totalorder %s221, %s223
    %p227 = scmp.eq.s32.totalorder %s19, 0
    %p228 = por %p226, %p227
    %p229 = scmp.ne.s32.totalorder %s221, %s223
    %p230 = scmp.eq.s32.totalorder %s24, 1
    %p231 = por %p229, %p230
    %p232 = scmp.ne.s32.totalorder %s223, %s224
    %p233 = scmp.eq.s32.totalorder %s24, 0
    %p234 = por %p232, %p233
    %p235 = scmp.ne.s32.totalorder %s223, %s224
    %p236 = scmp.eq.s32.totalorder %s25, 1
    %p237 = por %p235, %p236
    %p239 = scmp.ne.s32.totalorder %s224, %s238
    %p240 = scmp.eq.s32.totalorder %s25, 0
    %p241 = por %p239, %p240
    %s243 = sadd.s32 %s242, 1
    %p246 = scmp.eq.s32.totalorder %s19, 1
    %p247 = scmp.ne.s32.totalorder %s242, %s244
    %p248 = scmp.eq.s32.totalorder %s19, 0
    %p249 = por %p247, %p248
    %p250 = scmp.ne.s32.totalorder %s242, %s244
    %p251 = scmp.eq.s32.totalorder %s24, 1
    %p252 = por %p250, %p251
    %p253 = scmp.ne.s32.totalorder %s244, %s245
    %p254 = scmp.eq.s32.totalorder %s24, 0
    %p255 = por %p253, %p254
    %p256 = scmp.ne.s32.totalorder %s244, %s245
    %p257 = scmp.eq.s32.totalorder %s25, 1
    %p258 = por %p256, %p257
    %p260 = scmp.ne.s32.totalorder %s245, %s259
    %p261 = scmp.eq.s32.totalorder %s25, 0
    %p262 = por %p260, %p261
    %s264 = sadd.s32 %s263, 1
    %p267 = scmp.eq.s32.totalorder %s19, 1
    %p268 = scmp.ne.s32.totalorder %s263, %s265
    %p269 = scmp.eq.s32.totalorder %s19, 0
    %p270 = por %p268, %p269
    %p271 = scmp.ne.s32.totalorder %s263, %s265
    %p272 = scmp.eq.s32.totalorder %s24, 1
    %p273 = por %p271, %p272
    %p274 = scmp.ne.s32.totalorder %s265, %s266
    %p275 = scmp.eq.s32.totalorder %s24, 0
    %p276 = por %p274, %p275
    %p277 = scmp.ne.s32.totalorder %s265, %s266
    %p278 = scmp.eq.s32.totalorder %s25, 1
    %p279 = por %p277, %p278
    %p281 = scmp.ne.s32.totalorder %s266, %s280
    %p282 = scmp.eq.s32.totalorder %s25, 0
    %p283 = por %p281, %p282
    %s285 = sadd.s32 %s284, 1
    %p288 = scmp.eq.s32.totalorder %s19, 1
    %p289 = scmp.ne.s32.totalorder %s284, %s286
    %p290 = scmp.eq.s32.totalorder %s19, 0
    %p291 = por %p289, %p290
    %p292 = scmp.ne.s32.totalorder %s284, %s286
    %p293 = scmp.eq.s32.totalorder %s24, 1
    %p294 = por %p292, %p293
    %p295 = scmp.ne.s32.totalorder %s286, %s287
    %p296 = scmp.eq.s32.totalorder %s24, 0
    %p297 = por %p295, %p296
    %p298 = scmp.ne.s32.totalorder %s286, %s287
    %p299 = scmp.eq.s32.totalorder %s25, 1
    %p300 = por %p298, %p299
    %p302 = scmp.ne.s32.totalorder %s287, %s301
    %p303 = scmp.eq.s32.totalorder %s25, 0
    %p304 = por %p302, %p303
    %s305 = ssub.s32 %s19, %s26
    %p306 = scmp.eq.s32.totalorder %s305, 0
    %s308 = sadd.s32 %s307, 1
    %s309 = scalar_select %p306, %s307, %s308
    %p312 = pneg %p306
    %p313 = scmp.eq.s32.totalorder %s19, 1
    %p314 = por %p312, %p313
    %p315 = scmp.ne.s32.totalorder %s307, %s310
    %p316 = scmp.eq.s32.totalorder %s19, 0
    %p317 = por %p315, %p316
    %p318 = scmp.ne.s32.totalorder %s307, %s310
    %p319 = scmp.eq.s32.totalorder %s24, 1
    %p320 = por %p318, %p319
    %p321 = scmp.ne.s32.totalorder %s310, %s311
    %p322 = scmp.eq.s32.totalorder %s24, 0
    %p323 = por %p321, %p322
    %p324 = scmp.ne.s32.totalorder %s310, %s311
    %p325 = scmp.eq.s32.totalorder %s25, 1
    %p326 = por %p324, %p325
    %p328 = scmp.ne.s32.totalorder %s311, %s327
    %p329 = scmp.eq.s32.totalorder %s25, 0
    %p330 = por %p328, %p329
    %p331 = scmp.le.s32.totalorder 1, %s19
    %p332 = scmp.lt.s32.totalorder %s19, 3
    %p333 = pnand %p331, %p332
    %p334 = pneg %p333
    // Predicated region
    $region9: #{swin_block_v1_pallas.2} parent=5 // pred_check
      _
    $region10: #{swin_block_v1_pallas.2} parent=5 // pred_check_branch
      %336 = sbr.rel (%p333) target = $region12
    $region11: #{swin_block_v1_pallas.2} parent=5 // pred_region
      %s337 = ssub.s32 %s19, 1
      // Predicated region
      $region13: #{swin_block_v1_pallas.2} parent=11 // pred_check
        %p338 = pneg %p66
      $region14: #{swin_block_v1_pallas.2} parent=11 // pred_check_branch
        %340 = sbr.rel (%p338) target = $region16
      $region15: #{swin_block_v1_pallas.2} parent=11 // pred_region
        _
      $region16: #{swin_block_v1_pallas.2} parent=11 // pred_fallthru
        _
      // Predicated region
      $region17: #{swin_block_v1_pallas.2} parent=11 // pred_check
        %p341 = pneg %p87
      $region18: #{swin_block_v1_pallas.2} parent=11 // pred_check_branch
        %343 = sbr.rel (%p341) target = $region20
      $region19: #{swin_block_v1_pallas.2} parent=11 // pred_region
        _
      $region20: #{swin_block_v1_pallas.2} parent=11 // pred_fallthru
        _
      // Predicated region
      $region21: #{swin_block_v1_pallas.2} parent=11 // pred_check
        %p344 = pneg %p108
      $region22: #{swin_block_v1_pallas.2} parent=11 // pred_check_branch
        %346 = sbr.rel (%p344) target = $region24
      $region23: #{swin_block_v1_pallas.2} parent=11 // pred_region
        _
      $region24: #{swin_block_v1_pallas.2} parent=11 // pred_fallthru
        _
      // Predicated region
      $region25: #{swin_block_v1_pallas.2} parent=11 // pred_check
        %p347 = pneg %p129
      $region26: #{swin_block_v1_pallas.2} parent=11 // pred_check_branch
        %349 = sbr.rel (%p347) target = $region28
      $region27: #{swin_block_v1_pallas.2} parent=11 // pred_region
        _
      $region28: #{swin_block_v1_pallas.2} parent=11 // pred_fallthru
        _
      // Predicated region
      $region29: #{swin_block_v1_pallas.2} parent=11 // pred_check
        %p350 = pneg %p150
      $region30: #{swin_block_v1_pallas.2} parent=11 // pred_check_branch
        %352 = sbr.rel (%p350) target = $region32
      $region31: #{swin_block_v1_pallas.2} parent=11 // pred_region
        _
      $region32: #{swin_block_v1_pallas.2} parent=11 // pred_fallthru
        _
      // Predicated region
      $region33: #{swin_block_v1_pallas.2} parent=11 // pred_check
        %p353 = pneg %p171
      $region34: #{swin_block_v1_pallas.2} parent=11 // pred_check_branch
        %355 = sbr.rel (%p353) target = $region36
      $region35: #{swin_block_v1_pallas.2} parent=11 // pred_region
        _
      $region36: #{swin_block_v1_pallas.2} parent=11 // pred_fallthru
        _
      // Predicated region
      $region37: #{swin_block_v1_pallas.2} parent=11 // pred_check
        %p356 = pneg %p192
      $region38: #{swin_block_v1_pallas.2} parent=11 // pred_check_branch
        %358 = sbr.rel (%p356) target = $region40
      $region39: #{swin_block_v1_pallas.2} parent=11 // pred_region
        _
      $region40: #{swin_block_v1_pallas.2} parent=11 // pred_fallthru
        _
      // Predicated region
      $region41: #{swin_block_v1_pallas.2} parent=11 // pred_check
        %p359 = pneg %p213
      $region42: #{swin_block_v1_pallas.2} parent=11 // pred_check_branch
        %361 = sbr.rel (%p359) target = $region44
      $region43: #{swin_block_v1_pallas.2} parent=11 // pred_region
        _
      $region44: #{swin_block_v1_pallas.2} parent=11 // pred_fallthru
        _
      // Predicated region
      $region45: #{swin_block_v1_pallas.2} parent=11 // pred_check
        %p362 = pneg %p234
      $region46: #{swin_block_v1_pallas.2} parent=11 // pred_check_branch
        %364 = sbr.rel (%p362) target = $region48
      $region47: #{swin_block_v1_pallas.2} parent=11 // pred_region
        _
      $region48: #{swin_block_v1_pallas.2} parent=11 // pred_fallthru
        _
      // Predicated region
      $region49: #{swin_block_v1_pallas.2} parent=11 // pred_check
        %p365 = pneg %p255
      $region50: #{swin_block_v1_pallas.2} parent=11 // pred_check_branch
        %367 = sbr.rel (%p365) target = $region52
      $region51: #{swin_block_v1_pallas.2} parent=11 // pred_region
        _
      $region52: #{swin_block_v1_pallas.2} parent=11 // pred_fallthru
        _
      // Predicated region
      $region53: #{swin_block_v1_pallas.2} parent=11 // pred_check
        %p368 = pneg %p276
      $region54: #{swin_block_v1_pallas.2} parent=11 // pred_check_branch
        %370 = sbr.rel (%p368) target = $region56
      $region55: #{swin_block_v1_pallas.2} parent=11 // pred_region
        _
      $region56: #{swin_block_v1_pallas.2} parent=11 // pred_fallthru
        _
      // Predicated region
      $region57: #{swin_block_v1_pallas.2} parent=11 // pred_check
        %p371 = pneg %p297
      $region58: #{swin_block_v1_pallas.2} parent=11 // pred_check_branch
        %373 = sbr.rel (%p371) target = $region60
      $region59: #{swin_block_v1_pallas.2} parent=11 // pred_region
        _
      $region60: #{swin_block_v1_pallas.2} parent=11 // pred_fallthru
        _
    $region12: #{swin_block_v1_pallas.2} parent=5 // pred_fallthru
      _
    %p374 = scmp.lt.s32.totalorder %s19, 2
    // Predicated region
    $region61: #{swin_block_v1_pallas.2} parent=5 // pred_check
      %p375 = pneg %p374
    $region62: #{swin_block_v1_pallas.2} parent=5 // pred_check_branch
      %377 = sbr.rel (%p375) target = $region64
    $region63: #{swin_block_v1_pallas.2} parent=5 // pred_region
      // Predicated region
      $region65: #{swin_block_v1_pallas.2} parent=63 // pred_check
        %p378 = pneg %p39
      $region66: #{swin_block_v1_pallas.2} parent=63 // pred_check_branch
        %380 = sbr.rel (%p378) target = $region68
      $region67: #{swin_block_v1_pallas.2} parent=63 // pred_region
        %s381 = smul.u32 4, %s19
        %p382 = scmp.lt.s32.totalorder %s381, 7
        %s383 = scalar_select %p382, %s381, 7
        %s384 = smul.addr %s383, 8
        %s385 = smul.addr %s384, 8
        %s386 = scalar_lea.vmem %s0, %s385
        %s387 = smul.u32 4, %s19
      $region68: #{swin_block_v1_pallas.2} parent=63 // pred_fallthru
        _
    $region64: #{swin_block_v1_pallas.2} parent=5 // pred_fallthru
      _
    %p388 = scmp.le.s32.totalorder 1, %s19
    %p389 = scmp.lt.s32.totalorder %s19, 3
    %p390 = pnand %p388, %p389
    %p391 = pneg %p390
    // Predicated region
    $region69: #{swin_block_v1_pallas.2} parent=5 // pred_check
      _
    $region70: #{swin_block_v1_pallas.2} parent=5 // pred_check_branch
      %393 = sbr.rel (%p390) target = $region72
    $region71: #{swin_block_v1_pallas.2} parent=5 // pred_region
      %s394 = ssub.s32 %s19, 1
      %s395 = smul.u32 4, %s24
      %p396 = scmp.lt.s32.totalorder %s395, 7
      %s397 = scalar_select %p396, %s395, 7
      %s398 = smul.addr %s397, 8
      %s399 = smul.addr %s398, 8
      %s400 = scalar_lea.vmem %s0, %s399
      %p401 = pneg %p45
      %p402 = pneg %p42
      %p403 = pneg %p66
      %p404 = pneg %p63
      %p405 = pneg %p87
      %p406 = pneg %p84
      %p407 = pneg %p108
      %p408 = pneg %p105
      %p409 = pneg %p129
      %p410 = pneg %p126
      %p411 = pneg %p150
      %p412 = pneg %p147
      %p413 = pneg %p171
      %p414 = pneg %p168
      %p415 = pneg %p192
      %p416 = pneg %p189
      %p417 = pneg %p213
      %p418 = pneg %p210
      %p419 = pneg %p234
      %p420 = pneg %p231
      %p421 = pneg %p255
      %p422 = pneg %p252
      %p423 = pneg %p276
      %p424 = pneg %p273
      %p425 = pneg %p297
      %p426 = pneg %p294
      %p427 = pneg %p323
      %p428 = pneg %p320
      %s429 = smul.u32 4, %s24
      %p430 = scmp.lt.s32.totalorder %s429, 7
      %s431 = scalar_select %p430, %s429, 7
      %s432 = smul.addr %s431, 8
      %s433 = smul.addr %s432, 8
      %s434 = scalar_lea.vmem %s13, %s433
      %s435 = smul.u32 4, %s24
      %p436 = scmp.lt.s32.totalorder %s435, 7
      %s437 = scalar_select %p436, %s435, 7
      %s438 = smul.addr %s437, 8
      %s439 = smul.addr %s438, 8
      %s440 = scalar_lea.vmem %s0, %s439
      %s441 = smul.u32 4, %s24
      %s442 = smul.u32 4, %s24
      %p443 = scmp.lt.s32.totalorder %s442, 7
      %s444 = scalar_select %p443, %s442, 7
      %s445 = smul.addr %s444, 8
      %s446 = smul.addr %s445, 8
      %s447 = scalar_lea.vmem %s13, %s446
      %s448 = smul.u32 4, %s24
      %v449 = vld [vmem:[%s440] sm:$0xff]
      %v450 = vld [vmem:[%s440 + $0x8] sm:$0xff]
      %v451 = vld [vmem:[%s440 + $0x10] sm:$0xff]
      %v452 = vld [vmem:[%s440 + $0x18] sm:$0xff]
      %v453 = vld [vmem:[%s440 + $0x20] sm:$0xff]
      %v454 = vld [vmem:[%s440 + $0x28] sm:$0xff]
      %v455 = vld [vmem:[%s440 + $0x30] sm:$0xff]
      %v456 = vld [vmem:[%s440 + $0x38] sm:$0xff]
      %v457 = vld [vmem:[%s440 + $0x40] sm:$0xff]
      %v458 = vld [vmem:[%s440 + $0x48] sm:$0xff]
      %v459 = vld [vmem:[%s440 + $0x50] sm:$0xff]
      %v460 = vld [vmem:[%s440 + $0x58] sm:$0xff]
      %v461 = vld [vmem:[%s440 + $0x60] sm:$0xff]
      %v462 = vld [vmem:[%s440 + $0x68] sm:$0xff]
      %v463 = vld [vmem:[%s440 + $0x70] sm:$0xff]
      %v464 = vld [vmem:[%s440 + $0x78] sm:$0xff]
      %v465 = vld [vmem:[%s440 + $0x80] sm:$0xff]
      %v466 = vld [vmem:[%s440 + $0x88] sm:$0xff]
      %v467 = vld [vmem:[%s440 + $0x90] sm:$0xff]
      %v468 = vld [vmem:[%s440 + $0x98] sm:$0xff]
      %v469 = vld [vmem:[%s440 + $0xa0] sm:$0xff]
      %v470 = vld [vmem:[%s440 + $0xa8] sm:$0xff]
      %v471 = vld [vmem:[%s440 + $0xb0] sm:$0xff]
      %v472 = vld [vmem:[%s440 + $0xb8] sm:$0xff]
      %v473 = vld [vmem:[%s440 + $0xc0] sm:$0xff]
      %v474 = vld [vmem:[%s440 + $0xc8] sm:$0xff]
      %v475 = vld [vmem:[%s440 + $0xd0] sm:$0xff]
      %v476 = vld [vmem:[%s440 + $0xd8] sm:$0xff]
      %v477 = vld [vmem:[%s440 + $0xe0] sm:$0xff]
      %v478 = vld [vmem:[%s440 + $0xe8] sm:$0xff]
      %v479 = vld [vmem:[%s440 + $0xf0] sm:$0xff]
      %v480 = vld [vmem:[%s440 + $0xf8] sm:$0xff]
      %vm481 = vcmask 261120
      %v482 = vsel %vm481, %v449, 0.0
      %483 = vadd.xlane.f32.xlu0 %v482
      %v484 = vpop.xlane.xlu0 %483
      %v485 = vsel %vm481, %v450, 0.0
      %486 = vadd.xlane.f32.xlu0 %v485
      %v487 = vpop.xlane.xlu0 %486
      %v488 = vsel %vm481, %v451, 0.0
      %489 = vadd.xlane.f32.xlu0 %v488
      %v490 = vpop.xlane.xlu0 %489
      %v491 = vsel %vm481, %v452, 0.0
      %492 = vadd.xlane.f32.xlu0 %v491
      %v493 = vpop.xlane.xlu0 %492
      %v494 = vsel %vm481, %v453, 0.0
      %495 = vadd.xlane.f32.xlu0 %v494
      %v496 = vpop.xlane.xlu0 %495
      %v497 = vsel %vm481, %v454, 0.0
      %498 = vadd.xlane.f32.xlu0 %v497
      %v499 = vpop.xlane.xlu0 %498
      %v500 = vsel %vm481, %v455, 0.0
      %501 = vadd.xlane.f32.xlu0 %v500
      %v502 = vpop.xlane.xlu0 %501
      %v503 = vsel %vm481, %v456, 0.0
      %504 = vadd.xlane.f32.xlu0 %v503
      %v505 = vpop.xlane.xlu0 %504
      %v506 = vsel %vm481, %v457, 0.0
      %507 = vadd.xlane.f32.xlu0 %v506
      %v508 = vpop.xlane.xlu0 %507
      %v509 = vsel %vm481, %v458, 0.0
      %510 = vadd.xlane.f32.xlu0 %v509
      %v511 = vpop.xlane.xlu0 %510
      %v512 = vsel %vm481, %v459, 0.0
      %513 = vadd.xlane.f32.xlu0 %v512
      %v514 = vpop.xlane.xlu0 %513
      %v515 = vsel %vm481, %v460, 0.0
      %516 = vadd.xlane.f32.xlu0 %v515
      %v517 = vpop.xlane.xlu0 %516
      %v518 = vsel %vm481, %v461, 0.0
      %519 = vadd.xlane.f32.xlu0 %v518
      %v520 = vpop.xlane.xlu0 %519
      %v521 = vsel %vm481, %v462, 0.0
      %522 = vadd.xlane.f32.xlu0 %v521
      %v523 = vpop.xlane.xlu0 %522
      %v524 = vsel %vm481, %v463, 0.0
      %525 = vadd.xlane.f32.xlu0 %v524
      %v526 = vpop.xlane.xlu0 %525
      %v527 = vsel %vm481, %v464, 0.0
      %528 = vadd.xlane.f32.xlu0 %v527
      %v529 = vpop.xlane.xlu0 %528
      %v530 = vsel %vm481, %v465, 0.0
      %531 = vadd.xlane.f32.xlu0 %v530
      %v532 = vpop.xlane.xlu0 %531
      %v533 = vsel %vm481, %v466, 0.0
      %534 = vadd.xlane.f32.xlu0 %v533
      %v535 = vpop.xlane.xlu0 %534
      %v536 = vsel %vm481, %v467, 0.0
      %537 = vadd.xlane.f32.xlu0 %v536
      %v538 = vpop.xlane.xlu0 %537
      %v539 = vsel %vm481, %v468, 0.0
      %540 = vadd.xlane.f32.xlu0 %v539
      %v541 = vpop.xlane.xlu0 %540
      %v542 = vsel %vm481, %v469, 0.0
      %543 = vadd.xlane.f32.xlu0 %v542
      %v544 = vpop.xlane.xlu0 %543
      %v545 = vsel %vm481, %v470, 0.0
      %546 = vadd.xlane.f32.xlu0 %v545
      %v547 = vpop.xlane.xlu0 %546
      %v548 = vsel %vm481, %v471, 0.0
      %549 = vadd.xlane.f32.xlu0 %v548
      %v550 = vpop.xlane.xlu0 %549
      %v551 = vsel %vm481, %v472, 0.0
      %552 = vadd.xlane.f32.xlu0 %v551
      %v553 = vpop.xlane.xlu0 %552
      %v554 = vsel %vm481, %v473, 0.0
      %555 = vadd.xlane.f32.xlu0 %v554
      %v556 = vpop.xlane.xlu0 %555
      %v557 = vsel %vm481, %v474, 0.0
      %558 = vadd.xlane.f32.xlu0 %v557
      %v559 = vpop.xlane.xlu0 %558
      %v560 = vsel %vm481, %v475, 0.0
      %561 = vadd.xlane.f32.xlu0 %v560
      %v562 = vpop.xlane.xlu0 %561
      %v563 = vsel %vm481, %v476, 0.0
      %564 = vadd.xlane.f32.xlu0 %v563
      %v565 = vpop.xlane.xlu0 %564
      %v566 = vsel %vm481, %v477, 0.0
      %567 = vadd.xlane.f32.xlu0 %v566
      %v568 = vpop.xlane.xlu0 %567
      %v569 = vsel %vm481, %v478, 0.0
      %570 = vadd.xlane.f32.xlu0 %v569
      %v571 = vpop.xlane.xlu0 %570
      %v572 = vsel %vm481, %v479, 0.0
      %573 = vadd.xlane.f32.xlu0 %v572
      %v574 = vpop.xlane.xlu0 %573
      %v575 = vsel %vm481, %v480, 0.0
      %576 = vadd.xlane.f32.xlu0 %v575
      %v577 = vpop.xlane.xlu0 %576
      %v578 = vrcp.pop 32.0
      %v579 = vmul.f32 %v484, %v578
      %v580 = vmul.f32 %v487, %v578
      %v581 = vmul.f32 %v490, %v578
      %v582 = vmul.f32 %v493, %v578
      %v583 = vmul.f32 %v496, %v578
      %v584 = vmul.f32 %v499, %v578
      %v585 = vmul.f32 %v502, %v578
      %v586 = vmul.f32 %v505, %v578
      %v587 = vmul.f32 %v508, %v578
      %v588 = vmul.f32 %v511, %v578
      %v589 = vmul.f32 %v514, %v578
      %v590 = vmul.f32 %v517, %v578
      %v591 = vmul.f32 %v520, %v578
      %v592 = vmul.f32 %v523, %v578
      %v593 = vmul.f32 %v526, %v578
      %v594 = vmul.f32 %v529, %v578
      %v595 = vmul.f32 %v532, %v578
      %v596 = vmul.f32 %v535, %v578
      %v597 = vmul.f32 %v538, %v578
      %v598 = vmul.f32 %v541, %v578
      %v599 = vmul.f32 %v544, %v578
      %v600 = vmul.f32 %v547, %v578
      %v601 = vmul.f32 %v550, %v578
      %v602 = vmul.f32 %v553, %v578
      %v603 = vmul.f32 %v556, %v578
      %v604 = vmul.f32 %v559, %v578
      %v605 = vmul.f32 %v562, %v578
      %v606 = vmul.f32 %v565, %v578
      %v607 = vmul.f32 %v568, %v578
      %v608 = vmul.f32 %v571, %v578
      %v609 = vmul.f32 %v574, %v578
      %v610 = vmul.f32 %v577, %v578
      %v611 = vsub.f32 %v449, %v579
      %v612 = vsub.f32 %v450, %v580
      %v613 = vsub.f32 %v451, %v581
      %v614 = vsub.f32 %v452, %v582
      %v615 = vsub.f32 %v453, %v583
      %v616 = vsub.f32 %v454, %v584
      %v617 = vsub.f32 %v455, %v585
      %v618 = vsub.f32 %v456, %v586
      %v619 = vsub.f32 %v457, %v587
      %v620 = vsub.f32 %v458, %v588
      %v621 = vsub.f32 %v459, %v589
      %v622 = vsub.f32 %v460, %v590
      %v623 = vsub.f32 %v461, %v591
      %v624 = vsub.f32 %v462, %v592
      %v625 = vsub.f32 %v463, %v593
      %v626 = vsub.f32 %v464, %v594
      %v627 = vsub.f32 %v465, %v595
      %v628 = vsub.f32 %v466, %v596
      %v629 = vsub.f32 %v467, %v597
      %v630 = vsub.f32 %v468, %v598
      %v631 = vsub.f32 %v469, %v599
      %v632 = vsub.f32 %v470, %v600
      %v633 = vsub.f32 %v471, %v601
      %v634 = vsub.f32 %v472, %v602
      %v635 = vsub.f32 %v473, %v603
      %v636 = vsub.f32 %v474, %v604
      %v637 = vsub.f32 %v475, %v605
      %v638 = vsub.f32 %v476, %v606
      %v639 = vsub.f32 %v477, %v607
      %v640 = vsub.f32 %v478, %v608
      %v641 = vsub.f32 %v479, %v609
      %v642 = vsub.f32 %v480, %v610
      %v643 = vmul.f32 %v611, %v611
      %v644 = vmul.f32 %v612, %v612
      %v645 = vmul.f32 %v613, %v613
      %v646 = vmul.f32 %v614, %v614
      %v647 = vmul.f32 %v615, %v615
      %v648 = vmul.f32 %v616, %v616
      %v649 = vmul.f32 %v617, %v617
      %v650 = vmul.f32 %v618, %v618
      %v651 = vmul.f32 %v619, %v619
      %v652 = vmul.f32 %v620, %v620
      %v653 = vmul.f32 %v621, %v621
      %v654 = vmul.f32 %v622, %v622
      %v655 = vmul.f32 %v623, %v623
      %v656 = vmul.f32 %v624, %v624
      %v657 = vmul.f32 %v625, %v625
      %v658 = vmul.f32 %v626, %v626
      %v659 = vmul.f32 %v627, %v627
      %v660 = vmul.f32 %v628, %v628
      %v661 = vmul.f32 %v629, %v629
      %v662 = vmul.f32 %v630, %v630
      %v663 = vmul.f32 %v631, %v631
      %v664 = vmul.f32 %v632, %v632
      %v665 = vmul.f32 %v633, %v633
      %v666 = vmul.f32 %v634, %v634
      %v667 = vmul.f32 %v635, %v635
      %v668 = vmul.f32 %v636, %v636
      %v669 = vmul.f32 %v637, %v637
      %v670 = vmul.f32 %v638, %v638
      %v671 = vmul.f32 %v639, %v639
      %v672 = vmul.f32 %v640, %v640
      %v673 = vmul.f32 %v641, %v641
      %v674 = vmul.f32 %v642, %v642
      %v675 = vsel %vm481, %v643, 0.0
      %676 = vadd.xlane.f32.xlu0 %v675
      %v677 = vpop.xlane.xlu0 %676
      %v678 = vsel %vm481, %v644, 0.0
      %679 = vadd.xlane.f32.xlu0 %v678
      %v680 = vpop.xlane.xlu0 %679
      %v681 = vsel %vm481, %v645, 0.0
      %682 = vadd.xlane.f32.xlu0 %v681
      %v683 = vpop.xlane.xlu0 %682
      %v684 = vsel %vm481, %v646, 0.0
      %685 = vadd.xlane.f32.xlu0 %v684
      %v686 = vpop.xlane.xlu0 %685
      %v687 = vsel %vm481, %v647, 0.0
      %688 = vadd.xlane.f32.xlu0 %v687
      %v689 = vpop.xlane.xlu0 %688
      %v690 = vsel %vm481, %v648, 0.0
      %691 = vadd.xlane.f32.xlu0 %v690
      %v692 = vpop.xlane.xlu0 %691
      %v693 = vsel %vm481, %v649, 0.0
      %694 = vadd.xlane.f32.xlu0 %v693
      %v695 = vpop.xlane.xlu0 %694
      %v696 = vsel %vm481, %v650, 0.0
      %697 = vadd.xlane.f32.xlu0 %v696
      %v698 = vpop.xlane.xlu0 %697
      %v699 = vsel %vm481, %v651, 0.0
      %700 = vadd.xlane.f32.xlu0 %v699
      %v701 = vpop.xlane.xlu0 %700
      %v702 = vsel %vm481, %v652, 0.0
      %703 = vadd.xlane.f32.xlu0 %v702
      %v704 = vpop.xlane.xlu0 %703
      %v705 = vsel %vm481, %v653, 0.0
      %706 = vadd.xlane.f32.xlu0 %v705
      %v707 = vpop.xlane.xlu0 %706
      %v708 = vsel %vm481, %v654, 0.0
      %709 = vadd.xlane.f32.xlu0 %v708
      %v710 = vpop.xlane.xlu0 %709
      %v711 = vsel %vm481, %v655, 0.0
      %712 = vadd.xlane.f32.xlu0 %v711
      %v713 = vpop.xlane.xlu0 %712
      %v714 = vsel %vm481, %v656, 0.0
      %715 = vadd.xlane.f32.xlu0 %v714
      %v716 = vpop.xlane.xlu0 %715
      %v717 = vsel %vm481, %v657, 0.0
      %718 = vadd.xlane.f32.xlu0 %v717
      %v719 = vpop.xlane.xlu0 %718
      %v720 = vsel %vm481, %v658, 0.0
      %721 = vadd.xlane.f32.xlu0 %v720
      %v722 = vpop.xlane.xlu0 %721
      %v723 = vsel %vm481, %v659, 0.0
      %724 = vadd.xlane.f32.xlu0 %v723
      %v725 = vpop.xlane.xlu0 %724
      %v726 = vsel %vm481, %v660, 0.0
      %727 = vadd.xlane.f32.xlu0 %v726
      %v728 = vpop.xlane.xlu0 %727
      %v729 = vsel %vm481, %v661, 0.0
      %730 = vadd.xlane.f32.xlu0 %v729
      %v731 = vpop.xlane.xlu0 %730
      %v732 = vsel %vm481, %v662, 0.0
      %733 = vadd.xlane.f32.xlu0 %v732
      %v734 = vpop.xlane.xlu0 %733
      %v735 = vsel %vm481, %v663, 0.0
      %736 = vadd.xlane.f32.xlu0 %v735
      %v737 = vpop.xlane.xlu0 %736
      %v738 = vsel %vm481, %v664, 0.0
      %739 = vadd.xlane.f32.xlu0 %v738
      %v740 = vpop.xlane.xlu0 %739
      %v741 = vsel %vm481, %v665, 0.0
      %742 = vadd.xlane.f32.xlu0 %v741
      %v743 = vpop.xlane.xlu0 %742
      %v744 = vsel %vm481, %v666, 0.0
      %745 = vadd.xlane.f32.xlu0 %v744
      %v746 = vpop.xlane.xlu0 %745
      %v747 = vsel %vm481, %v667, 0.0
      %748 = vadd.xlane.f32.xlu0 %v747
      %v749 = vpop.xlane.xlu0 %748
      %v750 = vsel %vm481, %v668, 0.0
      %751 = vadd.xlane.f32.xlu0 %v750
      %v752 = vpop.xlane.xlu0 %751
      %v753 = vsel %vm481, %v669, 0.0
      %754 = vadd.xlane.f32.xlu0 %v753
      %v755 = vpop.xlane.xlu0 %754
      %v756 = vsel %vm481, %v670, 0.0
      %757 = vadd.xlane.f32.xlu0 %v756
      %v758 = vpop.xlane.xlu0 %757
      %v759 = vsel %vm481, %v671, 0.0
      %760 = vadd.xlane.f32.xlu0 %v759
      %v761 = vpop.xlane.xlu0 %760
      %v762 = vsel %vm481, %v672, 0.0
      %763 = vadd.xlane.f32.xlu0 %v762
      %v764 = vpop.xlane.xlu0 %763
      %v765 = vsel %vm481, %v673, 0.0
      %766 = vadd.xlane.f32.xlu0 %v765
      %v767 = vpop.xlane.xlu0 %766
      %v768 = vsel %vm481, %v674, 0.0
      %769 = vadd.xlane.f32.xlu0 %v768
      %v770 = vpop.xlane.xlu0 %769
      %v771 = vmul.f32 %v677, %v578
      %v772 = vmul.f32 %v680, %v578
      %v773 = vmul.f32 %v683, %v578
      %v774 = vmul.f32 %v686, %v578
      %v775 = vmul.f32 %v689, %v578
      %v776 = vmul.f32 %v692, %v578
      %v777 = vmul.f32 %v695, %v578
      %v778 = vmul.f32 %v698, %v578
      %v779 = vmul.f32 %v701, %v578
      %v780 = vmul.f32 %v704, %v578
      %v781 = vmul.f32 %v707, %v578
      %v782 = vmul.f32 %v710, %v578
      %v783 = vmul.f32 %v713, %v578
      %v784 = vmul.f32 %v716, %v578
      %v785 = vmul.f32 %v719, %v578
      %v786 = vmul.f32 %v722, %v578
      %v787 = vmul.f32 %v725, %v578
      %v788 = vmul.f32 %v728, %v578
      %v789 = vmul.f32 %v731, %v578
      %v790 = vmul.f32 %v734, %v578
      %v791 = vmul.f32 %v737, %v578
      %v792 = vmul.f32 %v740, %v578
      %v793 = vmul.f32 %v743, %v578
      %v794 = vmul.f32 %v746, %v578
      %v795 = vmul.f32 %v749, %v578
      %v796 = vmul.f32 %v752, %v578
      %v797 = vmul.f32 %v755, %v578
      %v798 = vmul.f32 %v758, %v578
      %v799 = vmul.f32 %v761, %v578
      %v800 = vmul.f32 %v764, %v578
      %v801 = vmul.f32 %v767, %v578
      %v802 = vmul.f32 %v770, %v578
      %v803 = vadd.f32 %v771, 1e-05
      %v804 = vadd.f32 %v772, 1e-05
      %v805 = vadd.f32 %v773, 1e-05
      %v806 = vadd.f32 %v774, 1e-05
      %v807 = vadd.f32 %v775, 1e-05
      %v808 = vadd.f32 %v776, 1e-05
      %v809 = vadd.f32 %v777, 1e-05
      %v810 = vadd.f32 %v778, 1e-05
      %v811 = vadd.f32 %v779, 1e-05
      %v812 = vadd.f32 %v780, 1e-05
      %v813 = vadd.f32 %v781, 1e-05
      %v814 = vadd.f32 %v782, 1e-05
      %v815 = vadd.f32 %v783, 1e-05
      %v816 = vadd.f32 %v784, 1e-05
      %v817 = vadd.f32 %v785, 1e-05
      %v818 = vadd.f32 %v786, 1e-05
      %v819 = vadd.f32 %v787, 1e-05
      %v820 = vadd.f32 %v788, 1e-05
      %v821 = vadd.f32 %v789, 1e-05
      %v822 = vadd.f32 %v790, 1e-05
      %v823 = vadd.f32 %v791, 1e-05
      %v824 = vadd.f32 %v792, 1e-05
      %v825 = vadd.f32 %v793, 1e-05
      %v826 = vadd.f32 %v794, 1e-05
      %v827 = vadd.f32 %v795, 1e-05
      %v828 = vadd.f32 %v796, 1e-05
      %v829 = vadd.f32 %v797, 1e-05
      %v830 = vadd.f32 %v798, 1e-05
      %v831 = vadd.f32 %v799, 1e-05
      %v832 = vadd.f32 %v800, 1e-05
      %v833 = vadd.f32 %v801, 1e-05
      %v834 = vadd.f32 %v802, 1e-05
      %v835 = vrsqrt.pop %v803
      %v836 = vrsqrt.pop %v804
      %v837 = vrsqrt.pop %v805
      %v838 = vrsqrt.pop %v806
      %v839 = vrsqrt.pop %v807
      %v840 = vrsqrt.pop %v808
      %v841 = vrsqrt.pop %v809
      %v842 = vrsqrt.pop %v810
      %v843 = vrsqrt.pop %v811
      %v844 = vrsqrt.pop %v812
      %v845 = vrsqrt.pop %v813
      %v846 = vrsqrt.pop %v814
      %v847 = vrsqrt.pop %v815
      %v848 = vrsqrt.pop %v816
      %v849 = vrsqrt.pop %v817
      %v850 = vrsqrt.pop %v818
      %v851 = vrsqrt.pop %v819
      %v852 = vrsqrt.pop %v820
      %v853 = vrsqrt.pop %v821
      %v854 = vrsqrt.pop %v822
      %v855 = vrsqrt.pop %v823
      %v856 = vrsqrt.pop %v824
      %v857 = vrsqrt.pop %v825
      %v858 = vrsqrt.pop %v826
      %v859 = vrsqrt.pop %v827
      %v860 = vrsqrt.pop %v828
      %v861 = vrsqrt.pop %v829
      %v862 = vrsqrt.pop %v830
      %v863 = vrsqrt.pop %v831
      %v864 = vrsqrt.pop %v832
      %v865 = vrsqrt.pop %v833
      %v866 = vrsqrt.pop %v834
      %v867 = vmul.f32 %v611, %v835
      %v868 = vmul.f32 %v612, %v836
      %v869 = vmul.f32 %v613, %v837
      %v870 = vmul.f32 %v614, %v838
      %v871 = vmul.f32 %v615, %v839
      %v872 = vmul.f32 %v616, %v840
      %v873 = vmul.f32 %v617, %v841
      %v874 = vmul.f32 %v618, %v842
      %v875 = vmul.f32 %v619, %v843
      %v876 = vmul.f32 %v620, %v844
      %v877 = vmul.f32 %v621, %v845
      %v878 = vmul.f32 %v622, %v846
      %v879 = vmul.f32 %v623, %v847
      %v880 = vmul.f32 %v624, %v848
      %v881 = vmul.f32 %v625, %v849
      %v882 = vmul.f32 %v626, %v850
      %v883 = vmul.f32 %v627, %v851
      %v884 = vmul.f32 %v628, %v852
      %v885 = vmul.f32 %v629, %v853
      %v886 = vmul.f32 %v630, %v854
      %v887 = vmul.f32 %v631, %v855
      %v888 = vmul.f32 %v632, %v856
      %v889 = vmul.f32 %v633, %v857
      %v890 = vmul.f32 %v634, %v858
      %v891 = vmul.f32 %v635, %v859
      %v892 = vmul.f32 %v636, %v860
      %v893 = vmul.f32 %v637, %v861
      %v894 = vmul.f32 %v638, %v862
      %v895 = vmul.f32 %v639, %v863
      %v896 = vmul.f32 %v640, %v864
      %v897 = vmul.f32 %v641, %v865
      %v898 = vmul.f32 %v642, %v866
      %v899 = vld [vmem:[%s1] sm:$0x1]
      %v901 = vlaneseq
      %v902 = vshrl.u32 %v901, 7
      %v903 = vsub.s32 0, %v902
      %v904 = vrot.slane %v899, %v903
      %v906 = vmul.f32 %v867, %v904
      %v907 = vmul.f32 %v868, %v904
      %v908 = vmul.f32 %v869, %v904
      %v909 = vmul.f32 %v870, %v904
      %v910 = vmul.f32 %v871, %v904
      %v911 = vmul.f32 %v872, %v904
      %v912 = vmul.f32 %v873, %v904
      %v913 = vmul.f32 %v874, %v904
      %v914 = vmul.f32 %v875, %v904
      %v915 = vmul.f32 %v876, %v904
      %v916 = vmul.f32 %v877, %v904
      %v917 = vmul.f32 %v878, %v904
      %v918 = vmul.f32 %v879, %v904
      %v919 = vmul.f32 %v880, %v904
      %v920 = vmul.f32 %v881, %v904
      %v921 = vmul.f32 %v882, %v904
      %v922 = vmul.f32 %v883, %v904
      %v923 = vmul.f32 %v884, %v904
      %v924 = vmul.f32 %v885, %v904
      %v925 = vmul.f32 %v886, %v904
      %v926 = vmul.f32 %v887, %v904
      %v927 = vmul.f32 %v888, %v904
      %v928 = vmul.f32 %v889, %v904
      %v929 = vmul.f32 %v890, %v904
      %v930 = vmul.f32 %v891, %v904
      %v931 = vmul.f32 %v892, %v904
      %v932 = vmul.f32 %v893, %v904
      %v933 = vmul.f32 %v894, %v904
      %v934 = vmul.f32 %v895, %v904
      %v935 = vmul.f32 %v896, %v904
      %v936 = vmul.f32 %v897, %v904
      %v937 = vmul.f32 %v898, %v904
      %v938 = vld [vmem:[%s2] sm:$0x1]
      %v940 = vlaneseq
      %v941 = vshrl.u32 %v940, 7
      %v942 = vsub.s32 0, %v941
      %v943 = vrot.slane %v938, %v942
      %v945 = vadd.f32 %v906, %v943
      %v946 = vadd.f32 %v907, %v943
      %v947 = vadd.f32 %v908, %v943
      %v948 = vadd.f32 %v909, %v943
      %v949 = vadd.f32 %v910, %v943
      %v950 = vadd.f32 %v911, %v943
      %v951 = vadd.f32 %v912, %v943
      %v952 = vadd.f32 %v913, %v943
      %v953 = vadd.f32 %v914, %v943
      %v954 = vadd.f32 %v915, %v943
      %v955 = vadd.f32 %v916, %v943
      %v956 = vadd.f32 %v917, %v943
      %v957 = vadd.f32 %v918, %v943
      %v958 = vadd.f32 %v919, %v943
      %v959 = vadd.f32 %v920, %v943
      %v960 = vadd.f32 %v921, %v943
      %v961 = vadd.f32 %v922, %v943
      %v962 = vadd.f32 %v923, %v943
      %v963 = vadd.f32 %v924, %v943
      %v964 = vadd.f32 %v925, %v943
      %v965 = vadd.f32 %v926, %v943
      %v966 = vadd.f32 %v927, %v943
      %v967 = vadd.f32 %v928, %v943
      %v968 = vadd.f32 %v929, %v943
      %v969 = vadd.f32 %v930, %v943
      %v970 = vadd.f32 %v931, %v943
      %v971 = vadd.f32 %v932, %v943
      %v972 = vadd.f32 %v933, %v943
      %v973 = vadd.f32 %v934, %v943
      %v974 = vadd.f32 %v935, %v943
      %v975 = vadd.f32 %v936, %v943
      %v976 = vadd.f32 %v937, %v943
      %v977 = vld [vmem:[%s12] sm:$0xff]
      %v978 = vld [vmem:[%s12 + $0x8] sm:$0xff]
      %v979 = vld [vmem:[%s12 + $0x10] sm:$0xff]
      %v980 = vld [vmem:[%s12 + $0x18] sm:$0xff]
      %v981 = vld [vmem:[%s12 + $0x20] sm:$0xff]
      %v982 = vld [vmem:[%s12 + $0x28] sm:$0xff]
      %v983 = vld [vmem:[%s12 + $0x30] sm:$0xff]
      %v984 = vld [vmem:[%s12 + $0x38] sm:$0xff]
      %v985 = vld [vmem:[%s12 + $0x40] sm:$0xff]
      %v986 = vld [vmem:[%s12 + $0x48] sm:$0xff]
      %v987 = vld [vmem:[%s12 + $0x50] sm:$0xff]
      %v988 = vld [vmem:[%s12 + $0x58] sm:$0xff]
      %v989 = vld [vmem:[%s12 + $0x60] sm:$0xff]
      %v990 = vld [vmem:[%s12 + $0x68] sm:$0xff]
      %v991 = vld [vmem:[%s12 + $0x70] sm:$0xff]
      %v992 = vld [vmem:[%s12 + $0x78] sm:$0xff]
      %v993 = vld [vmem:[%s12 + $0x80] sm:$0xff]
      %v994 = vld [vmem:[%s12 + $0x88] sm:$0xff]
      %v995 = vld [vmem:[%s12 + $0x90] sm:$0xff]
      %v996 = vld [vmem:[%s12 + $0x98] sm:$0xff]
      %v997 = vld [vmem:[%s12 + $0xa0] sm:$0xff]
      %v998 = vld [vmem:[%s12 + $0xa8] sm:$0xff]
      %v999 = vld [vmem:[%s12 + $0xb0] sm:$0xff]
      %v1000 = vld [vmem:[%s12 + $0xb8] sm:$0xff]
      %v1001 = vld [vmem:[%s12 + $0xc0] sm:$0xff]
      %v1002 = vld [vmem:[%s12 + $0xc8] sm:$0xff]
      %v1003 = vld [vmem:[%s12 + $0xd0] sm:$0xff]
      %v1004 = vld [vmem:[%s12 + $0xd8] sm:$0xff]
      %v1005 = vld [vmem:[%s12 + $0xe0] sm:$0xff]
      %v1006 = vld [vmem:[%s12 + $0xe8] sm:$0xff]
      %v1007 = vld [vmem:[%s12 + $0xf0] sm:$0xff]
      %v1008 = vld [vmem:[%s12 + $0xf8] sm:$0xff]
      %v1009 = vld [vmem:[%s3] sm:$0xff]
      %v1010 = vld [vmem:[%s3 + $0x8] sm:$0xff]
      %v1011 = vld [vmem:[%s3 + $0x10] sm:$0xff]
      %v1012 = vld [vmem:[%s3 + $0x18] sm:$0xff]
      %v1013 = vld [vmem:[%s4] sm:$0x1]
      %v1015 = vlaneseq
      %v1016 = vshrl.u32 %v1015, 7
      %v1017 = vsub.s32 0, %v1016
      %v1018 = vrot.slane %v1013, %v1017
      %v1021 = vsel %vm481, %v945, 0
      %v1024 = vsel %vm481, %v946, 0
      %v1027 = vsel %vm481, %v947, 0
      %v1030 = vsel %vm481, %v948, 0
      %v1033 = vsel %vm481, %v949, 0
      %v1036 = vsel %vm481, %v950, 0
      %v1039 = vsel %vm481, %v951, 0
      %v1042 = vsel %vm481, %v952, 0
      %v1045 = vsel %vm481, %v953, 0
      %v1048 = vsel %vm481, %v954, 0
      %v1051 = vsel %vm481, %v955, 0
      %v1054 = vsel %vm481, %v956, 0
      %v1057 = vsel %vm481, %v957, 0
      %v1060 = vsel %vm481, %v958, 0
      %v1063 = vsel %vm481, %v959, 0
      %v1066 = vsel %vm481, %v960, 0
      %v1069 = vsel %vm481, %v961, 0
      %v1072 = vsel %vm481, %v962, 0
      %v1075 = vsel %vm481, %v963, 0
      %v1078 = vsel %vm481, %v964, 0
      %v1081 = vsel %vm481, %v965, 0
      %v1084 = vsel %vm481, %v966, 0
      %v1087 = vsel %vm481, %v967, 0
      %v1090 = vsel %vm481, %v968, 0
      %v1093 = vsel %vm481, %v969, 0
      %v1096 = vsel %vm481, %v970, 0
      %v1099 = vsel %vm481, %v971, 0
      %v1102 = vsel %vm481, %v972, 0
      %v1105 = vsel %vm481, %v973, 0
      %v1108 = vsel %vm481, %v974, 0
      %v1111 = vsel %vm481, %v975, 0
      %v1114 = vsel %vm481, %v976, 0
      %1116 = vmatprep.subr.mxu0 0.0
      %1117 = vmatpush1.msra.mxu0 %v1009
      %1118 = vmatprep.subr.mxu0 0.0
      %1119 = vmatpush1.msra.mxu0 %v1010
      %1120 = vmatprep.subr.mxu0 0.0
      %1121 = vmatpush1.msra.mxu0 %v1011
      %1122 = vmatprep.subr.mxu0 0.0
      %1123 = vmatpush1.msra.mxu0 %v1012
      %1124 = vmatprep.subr.mxu0 0.0
      %1125 = vmatpush1.msra.mxu0 0.0
      %1126 = vmatprep.subr.mxu0 0.0
      %1127 = vmatpush1.msra.mxu0 0.0
      %1128 = vmatprep.subr.mxu0 0.0
      %1129 = vmatpush1.msra.mxu0 0.0
      %1130 = vmatprep.subr.mxu0 0.0
      %1131 = vmatpush1.msra.mxu0 0.0
      %1132 = vmatprep.subr.mxu0 0.0
      %1133 = vmatpush1.msra.mxu0 0.0
      %1134 = vmatprep.subr.mxu0 0.0
      %1135 = vmatpush1.msra.mxu0 0.0
      %1136 = vmatprep.subr.mxu0 0.0
      %1137 = vmatpush1.msra.mxu0 0.0
      %1138 = vmatprep.subr.mxu0 0.0
      %1139 = vmatpush1.msra.mxu0 0.0
      %1140 = vmatprep.subr.mxu0 0.0
      %1141 = vmatpush1.msra.mxu0 0.0
      %1142 = vmatprep.subr.mxu0 0.0
      %1143 = vmatpush1.msra.mxu0 0.0
      %1144 = vmatprep.subr.mxu0 0.0
      %1145 = vmatpush1.msra.mxu0 0.0
      %1146 = vmatprep.subr.mxu0 0.0
      %1147 = vmatpush1.msra.mxu0 0.0
      %1148 = vmatprep.subr.mxu0 0.0
      %1149 = vmatpush1.msra.mxu0 0.0
      %1150 = vmatprep.subr.mxu0 0.0
      %1151 = vmatpush1.msra.mxu0 0.0
      %1152 = vmatprep.subr.mxu0 0.0
      %1153 = vmatpush1.msra.mxu0 0.0
      %1154 = vmatprep.subr.mxu0 0.0
      %1155 = vmatpush1.msra.mxu0 0.0
      %1156 = vmatprep.subr.mxu0 0.0
      %1157 = vmatpush1.msra.mxu0 0.0
      %1158 = vmatprep.subr.mxu0 0.0
      %1159 = vmatpush1.msra.mxu0 0.0
      %1160 = vmatprep.subr.mxu0 0.0
      %1161 = vmatpush1.msra.mxu0 0.0
      %1162 = vmatprep.subr.mxu0 0.0
      %1163 = vmatpush1.msra.mxu0 0.0
      %1164 = vmatprep.subr.mxu0 0.0
      %1165 = vmatpush1.msra.mxu0 0.0
      %1166 = vmatprep.subr.mxu0 0.0
      %1167 = vmatpush1.msra.mxu0 0.0
      %1168 = vmatprep.subr.mxu0 0.0
      %1169 = vmatpush1.msra.mxu0 0.0
      %1170 = vmatprep.subr.mxu0 0.0
      %1171 = vmatpush1.msra.mxu0 0.0
      %1172 = vmatprep.subr.mxu0 0.0
      %1173 = vmatpush1.msra.mxu0 0.0
      %1174 = vmatprep.subr.mxu0 0.0
      %1175 = vmatpush1.msra.mxu0 0.0
      %1176 = vmatprep.subr.mxu0 0.0
      %1177 = vmatpush1.msra.mxu0 0.0
      %1178 = vmatprep.subr.mxu0 0.0
      %1179 = vmatpush1.msra.mxu0 0.0
      %1180 = vmatprep.mubr.f32.mxu0 0.0
      %1181 = vmatmul.mubr.f32.gmra.mrb[0].mxu0 %v1021
      %v1182 = vpop.f32.mrb[0].mxu0
      %v1183 = vadd.f32 %v1018, %v1182
      %v1184 = vpop.f32.mrb[0].mxu0
      %1185 = vmatprep.mubr.f32.mxu0 0.0
      %1186 = vmatmul.mubr.f32.gmra.mrb[0].mxu0 %v1024
      %v1187 = vpop.f32.mrb[0].mxu0
      %v1188 = vadd.f32 %v1018, %v1187
      %v1189 = vpop.f32.mrb[0].mxu0
      %1190 = vmatprep.mubr.f32.mxu0 0.0
      %1191 = vmatmul.mubr.f32.gmra.mrb[0].mxu0 %v1027
      %v1192 = vpop.f32.mrb[0].mxu0
      %v1193 = vadd.f32 %v1018, %v1192
      %v1194 = vpop.f32.mrb[0].mxu0
      %1195 = vmatprep.mubr.f32.mxu0 0.0
      %1196 = vmatmul.mubr.f32.gmra.mrb[0].mxu0 %v1030
      %v1197 = vpop.f32.mrb[0].mxu0
      %v1198 = vadd.f32 %v1018, %v1197
      %v1199 = vpop.f32.mrb[0].mxu0
      %1200 = vmatprep.mubr.f32.mxu0 0.0
      %1201 = vmatmul.mubr.f32.gmra.mrb[0].mxu0 %v1033
      %v1202 = vpop.f32.mrb[0].mxu0
      %v1203 = vadd.f32 %v1018, %v1202
      %v1204 = vpop.f32.mrb[0].mxu0
      %1205 = vmatprep.mubr.f32.mxu0 0.0
      %1206 = vmatmul.mubr.f32.gmra.mrb[0].mxu0 %v1036
      %v1207 = vpop.f32.mrb[0].mxu0
      %v1208 = vadd.f32 %v1018, %v1207
      %v1209 = vpop.f32.mrb[0].mxu0
      %1210 = vmatprep.mubr.f32.mxu0 0.0
      %1211 = vmatmul.mubr.f32.gmra.mrb[0].mxu0 %v1039
      %v1212 = vpop.f32.mrb[0].mxu0
      %v1213 = vadd.f32 %v1018, %v1212
      %v1214 = vpop.f32.mrb[0].mxu0
      %1215 = vmatprep.mubr.f32.mxu0 0.0
      %1216 = vmatmul.mubr.f32.gmra.mrb[0].mxu0 %v1042
      %v1217 = vpop.f32.mrb[0].mxu0
      %v1218 = vadd.f32 %v1018, %v1217
      %v1219 = vpop.f32.mrb[0].mxu0
      %1220 = vmatprep.mubr.f32.mxu0 0.0
      %1221 = vmatmul.mubr.f32.gmra.mrb[0].mxu0 %v1045
      %v1222 = vpop.f32.mrb[0].mxu0
      %v1223 = vadd.f32 %v1018, %v1222
      %v1224 = vpop.f32.mrb[0].mxu0
      %1225 = vmatprep.mubr.f32.mxu0 0.0
      %1226 = vmatmul.mubr.f32.gmra.mrb[0].mxu0 %v1048
      %v1227 = vpop.f32.mrb[0].mxu0
      %v1228 = vadd.f32 %v1018, %v1227
      %v1229 = vpop.f32.mrb[0].mxu0
      %1230 = vmatprep.mubr.f32.mxu0 0.0
      %1231 = vmatmul.mubr.f32.gmra.mrb[0].mxu0 %v1051
      %v1232 = vpop.f32.mrb[0].mxu0
      %v1233 = vadd.f32 %v1018, %v1232
      %v1234 = vpop.f32.mrb[0].mxu0
      %1235 = vmatprep.mubr.f32.mxu0 0.0
      %1236 = vmatmul.mubr.f32.gmra.mrb[0].mxu0 %v1054
      %v1237 = vpop.f32.mrb[0].mxu0
      %v1238 = vadd.f32 %v1018, %v1237
      %v1239 = vpop.f32.mrb[0].mxu0
      %1240 = vmatprep.mubr.f32.mxu0 0.0
      %1241 = vmatmul.mubr.f32.gmra.mrb[0].mxu0 %v1057
      %v1242 = vpop.f32.mrb[0].mxu0
      %v1243 = vadd.f32 %v1018, %v1242
      %v1244 = vpop.f32.mrb[0].mxu0
      %1245 = vmatprep.mubr.f32.mxu0 0.0
      %1246 = vmatmul.mubr.f32.gmra.mrb[0].mxu0 %v1060
      %v1247 = vpop.f32.mrb[0].mxu0
      %v1248 = vadd.f32 %v1018, %v1247
      %v1249 = vpop.f32.mrb[0].mxu0
      %1250 = vmatprep.mubr.f32.mxu0 0.0
      %1251 = vmatmul.mubr.f32.gmra.mrb[0].mxu0 %v1063
      %v1252 = vpop.f32.mrb[0].mxu0
      %v1253 = vadd.f32 %v1018, %v1252
      %v1254 = vpop.f32.mrb[0].mxu0
      %1255 = vmatprep.mubr.f32.mxu0 0.0
      %1256 = vmatmul.mubr.f32.gmra.mrb[0].mxu0 %v1066
      %v1257 = vpop.f32.mrb[0].mxu0
      %v1258 = vadd.f32 %v1018, %v1257
      %v1259 = vpop.f32.mrb[0].mxu0
      %1260 = vmatprep.mubr.f32.mxu0 0.0
      %1261 = vmatmul.mubr.f32.gmra.mrb[0].mxu0 %v1069
      %v1262 = vpop.f32.mrb[0].mxu0
      %v1263 = vadd.f32 %v1018, %v1262
      %v1264 = vpop.f32.mrb[0].mxu0
      %1265 = vmatprep.mubr.f32.mxu0 0.0
      %1266 = vmatmul.mubr.f32.gmra.mrb[0].mxu0 %v1072
      %v1267 = vpop.f32.mrb[0].mxu0
      %v1268 = vadd.f32 %v1018, %v1267
      %v1269 = vpop.f32.mrb[0].mxu0
      %1270 = vmatprep.mubr.f32.mxu0 0.0
      %1271 = vmatmul.mubr.f32.gmra.mrb[0].mxu0 %v1075
      %v1272 = vpop.f32.mrb[0].mxu0
      %v1273 = vadd.f32 %v1018, %v1272
      %v1274 = vpop.f32.mrb[0].mxu0
      %1275 = vmatprep.mubr.f32.mxu0 0.0
      %1276 = vmatmul.mubr.f32.gmra.mrb[0].mxu0 %v1078
      %v1277 = vpop.f32.mrb[0].mxu0
      %v1278 = vadd.f32 %v1018, %v1277
      %v1279 = vpop.f32.mrb[0].mxu0
      %1280 = vmatprep.mubr.f32.mxu0 0.0
      %1281 = vmatmul.mubr.f32.gmra.mrb[0].mxu0 %v1081
      %v1282 = vpop.f32.mrb[0].mxu0
      %v1283 = vadd.f32 %v1018, %v1282
      %v1284 = vpop.f32.mrb[0].mxu0
      %1285 = vmatprep.mubr.f32.mxu0 0.0
      %1286 = vmatmul.mubr.f32.gmra.mrb[0].mxu0 %v1084
      %v1287 = vpop.f32.mrb[0].mxu0
      %v1288 = vadd.f32 %v1018, %v1287
      %v1289 = vpop.f32.mrb[0].mxu0
      %1290 = vmatprep.mubr.f32.mxu0 0.0
      %1291 = vmatmul.mubr.f32.gmra.mrb[0].mxu0 %v1087
      %v1292 = vpop.f32.mrb[0].mxu0
      %v1293 = vadd.f32 %v1018, %v1292
      %v1294 = vpop.f32.mrb[0].mxu0
      %1295 = vmatprep.mubr.f32.mxu0 0.0
      %1296 = vmatmul.mubr.f32.gmra.mrb[0].mxu0 %v1090
      %v1297 = vpop.f32.mrb[0].mxu0
      %v1298 = vadd.f32 %v1018, %v1297
      %v1299 = vpop.f32.mrb[0].mxu0
      %1300 = vmatprep.mubr.f32.mxu0 0.0
      %1301 = vmatmul.mubr.f32.gmra.mrb[0].mxu0 %v1093
      %v1302 = vpop.f32.mrb[0].mxu0
      %v1303 = vadd.f32 %v1018, %v1302
      %v1304 = vpop.f32.mrb[0].mxu0
      %1305 = vmatprep.mubr.f32.mxu0 0.0
      %1306 = vmatmul.mubr.f32.gmra.mrb[0].mxu0 %v1096
      %v1307 = vpop.f32.mrb[0].mxu0
      %v1308 = vadd.f32 %v1018, %v1307
      %v1309 = vpop.f32.mrb[0].mxu0
      %1310 = vmatprep.mubr.f32.mxu0 0.0
      %1311 = vmatmul.mubr.f32.gmra.mrb[0].mxu0 %v1099
      %v1312 = vpop.f32.mrb[0].mxu0
      %v1313 = vadd.f32 %v1018, %v1312
      %v1314 = vpop.f32.mrb[0].mxu0
      %1315 = vmatprep.mubr.f32.mxu0 0.0
      %1316 = vmatmul.mubr.f32.gmra.mrb[0].mxu0 %v1102
      %v1317 = vpop.f32.mrb[0].mxu0
      %v1318 = vadd.f32 %v1018, %v1317
      %v1319 = vpop.f32.mrb[0].mxu0
      %1320 = vmatprep.mubr.f32.mxu0 0.0
      %1321 = vmatmul.mubr.f32.gmra.mrb[0].mxu0 %v1105
      %v1322 = vpop.f32.mrb[0].mxu0
      %v1323 = vadd.f32 %v1018, %v1322
      %v1324 = vpop.f32.mrb[0].mxu0
      %1325 = vmatprep.mubr.f32.mxu0 0.0
      %1326 = vmatmul.mubr.f32.gmra.mrb[0].mxu0 %v1108
      %v1327 = vpop.f32.mrb[0].mxu0
      %v1328 = vadd.f32 %v1018, %v1327
      %v1329 = vpop.f32.mrb[0].mxu0
      %1330 = vmatprep.mubr.f32.mxu0 0.0
      %1331 = vmatmul.mubr.f32.gmra.mrb[0].mxu0 %v1111
      %v1332 = vpop.f32.mrb[0].mxu0
      %v1333 = vadd.f32 %v1018, %v1332
      %v1334 = vpop.f32.mrb[0].mxu0
      %1335 = vmatprep.mubr.f32.mxu0 0.0
      %1336 = vmatmul.mubr.f32.gmra.mrb[0].mxu0 %v1114
      %v1337 = vpop.f32.mrb[0].mxu0
      %v1338 = vadd.f32 %v1018, %v1337
      %v1339 = vpop.f32.mrb[0].mxu0
      %1340 = vdwg.mxu0
      %v1341 = vld [vmem:[%s5] sm:$0xff]
      %v1342 = vld [vmem:[%s5 + $0x8] sm:$0xff]
      %v1343 = vld [vmem:[%s5 + $0x10] sm:$0xff]
      %v1344 = vld [vmem:[%s5 + $0x18] sm:$0xff]
      %v1345 = vld [vmem:[%s6] sm:$0x1]
      %v1347 = vlaneseq
      %v1348 = vshrl.u32 %v1347, 7
      %v1349 = vsub.s32 0, %v1348
      %v1350 = vrot.slane %v1345, %v1349
      %1352 = vmatprep.subr.mxu0 0.0
      %1353 = vmatpush1.msra.mxu0 %v1341
      %1354 = vmatprep.subr.mxu0 0.0
      %1355 = vmatpush1.msra.mxu0 %v1342
      %1356 = vmatprep.subr.mxu0 0.0
      %1357 = vmatpush1.msra.mxu0 %v1343
      %1358 = vmatprep.subr.mxu0 0.0
      %1359 = vmatpush1.msra.mxu0 %v1344
      %1360 = vmatprep.subr.mxu0 0.0
      %1361 = vmatpush1.msra.mxu0 0.0
      %1362 = vmatprep.subr.mxu0 0.0
      %1363 = vmatpush1.msra.mxu0 0.0
      %1364 = vmatprep.subr.mxu0 0.0
      %1365 = vmatpush1.msra.mxu0 0.0
      %1366 = vmatprep.subr.mxu0 0.0
      %1367 = vmatpush1.msra.mxu0 0.0
      %1368 = vmatprep.subr.mxu0 0.0
      %1369 = vmatpush1.msra.mxu0 0.0
      %1370 = vmatprep.subr.mxu0 0.0
      %1371 = vmatpush1.msra.mxu0 0.0
      %1372 = vmatprep.subr.mxu0 0.0
      %1373 = vmatpush1.msra.mxu0 0.0
      %1374 = vmatprep.subr.mxu0 0.0
      %1375 = vmatpush1.msra.mxu0 0.0
      %1376 = vmatprep.subr.mxu0 0.0
      %1377 = vmatpush1.msra.mxu0 0.0
      %1378 = vmatprep.subr.mxu0 0.0
      %1379 = vmatpush1.msra.mxu0 0.0
      %1380 = vmatprep.subr.mxu0 0.0
      %1381 = vmatpush1.msra.mxu0 0.0
      %1382 = vmatprep.subr.mxu0 0.0
      %1383 = vmatpush1.msra.mxu0 0.0
      %1384 = vmatprep.subr.mxu0 0.0
      %1385 = vmatpush1.msra.mxu0 0.0
      %1386 = vmatprep.subr.mxu0 0.0
      %1387 = vmatpush1.msra.mxu0 0.0
      %1388 = vmatprep.subr.mxu0 0.0
      %1389 = vmatpush1.msra.mxu0 0.0
      %1390 = vmatprep.subr.mxu0 0.0
      %1391 = vmatpush1.msra.mxu0 0.0
      %1392 = vmatprep.subr.mxu0 0.0
      %1393 = vmatpush1.msra.mxu0 0.0
      %1394 = vmatprep.subr.mxu0 0.0
      %1395 = vmatpush1.msra.mxu0 0.0
      %1396 = vmatprep.subr.mxu0 0.0
      %1397 = vmatpush1.msra.mxu0 0.0
      %1398 = vmatprep.subr.mxu0 0.0
      %1399 = vmatpush1.msra.mxu0 0.0
      %1400 = vmatprep.subr.mxu0 0.0
      %1401 = vmatpush1.msra.mxu0 0.0
      %1402 = vmatprep.subr.mxu0 0.0
      %1403 = vmatpush1.msra.mxu0 0.0
      %1404 = vmatprep.subr.mxu0 0.0
      %1405 = vmatpush1.msra.mxu0 0.0
      %1406 = vmatprep.subr.mxu0 0.0
      %1407 = vmatpush1.msra.mxu0 0.0
      %1408 = vmatprep.subr.mxu0 0.0
      %1409 = vmatpush1.msra.mxu0 0.0
      %1410 = vmatprep.subr.mxu0 0.0
      %1411 = vmatpush1.msra.mxu0 0.0
      %1412 = vmatprep.subr.mxu0 0.0
      %1413 = vmatpush1.msra.mxu0 0.0
      %1414 = vmatprep.subr.mxu0 0.0
      %1415 = vmatpush1.msra.mxu0 0.0
      %1416 = vmatprep.mubr.f32.mxu0 0.0
      %1417 = vmatmul.mubr.f32.gmra.mrb[0].mxu0 %v1021
      %v1418 = vpop.f32.mrb[0].mxu0
      %v1419 = vadd.f32 %v1350, %v1418
      %v1420 = vpop.f32.mrb[0].mxu0
      %1421 = vmatprep.mubr.f32.mxu0 0.0
      %1422 = vmatmul.mubr.f32.gmra.mrb[0].mxu0 %v1024
      %v1423 = vpop.f32.mrb[0].mxu0
      %v1424 = vadd.f32 %v1350, %v1423
      %v1425 = vpop.f32.mrb[0].mxu0
      %1426 = vmatprep.mubr.f32.mxu0 0.0
      %1427 = vmatmul.mubr.f32.gmra.mrb[0].mxu0 %v1027
      %v1428 = vpop.f32.mrb[0].mxu0
      %v1429 = vadd.f32 %v1350, %v1428
      %v1430 = vpop.f32.mrb[0].mxu0
      %1431 = vmatprep.mubr.f32.mxu0 0.0
      %1432 = vmatmul.mubr.f32.gmra.mrb[0].mxu0 %v1030
      %v1433 = vpop.f32.mrb[0].mxu0
      %v1434 = vadd.f32 %v1350, %v1433
      %v1435 = vpop.f32.mrb[0].mxu0
      %1436 = vmatprep.mubr.f32.mxu0 0.0
      %1437 = vmatmul.mubr.f32.gmra.mrb[0].mxu0 %v1033
      %v1438 = vpop.f32.mrb[0].mxu0
      %v1439 = vadd.f32 %v1350, %v1438
      %v1440 = vpop.f32.mrb[0].mxu0
      %1441 = vmatprep.mubr.f32.mxu0 0.0
      %1442 = vmatmul.mubr.f32.gmra.mrb[0].mxu0 %v1036
      %v1443 = vpop.f32.mrb[0].mxu0
      %v1444 = vadd.f32 %v1350, %v1443
      %v1445 = vpop.f32.mrb[0].mxu0
      %1446 = vmatprep.mubr.f32.mxu0 0.0
      %1447 = vmatmul.mubr.f32.gmra.mrb[0].mxu0 %v1039
      %v1448 = vpop.f32.mrb[0].mxu0
      %v1449 = vadd.f32 %v1350, %v1448
      %v1450 = vpop.f32.mrb[0].mxu0
      %1451 = vmatprep.mubr.f32.mxu0 0.0
      %1452 = vmatmul.mubr.f32.gmra.mrb[0].mxu0 %v1042
      %v1453 = vpop.f32.mrb[0].mxu0
      %v1454 = vadd.f32 %v1350, %v1453
      %v1455 = vpop.f32.mrb[0].mxu0
      %1456 = vmatprep.mubr.f32.mxu0 0.0
      %1457 = vmatmul.mubr.f32.gmra.mrb[0].mxu0 %v1045
      %v1458 = vpop.f32.mrb[0].mxu0
      %v1459 = vadd.f32 %v1350, %v1458
      %v1460 = vpop.f32.mrb[0].mxu0
      %1461 = vmatprep.mubr.f32.mxu0 0.0
      %1462 = vmatmul.mubr.f32.gmra.mrb[0].mxu0 %v1048
      %v1463 = vpop.f32.mrb[0].mxu0
      %v1464 = vadd.f32 %v1350, %v1463
      %v1465 = vpop.f32.mrb[0].mxu0
      %1466 = vmatprep.mubr.f32.mxu0 0.0
      %1467 = vmatmul.mubr.f32.gmra.mrb[0].mxu0 %v1051
      %v1468 = vpop.f32.mrb[0].mxu0
      %v1469 = vadd.f32 %v1350, %v1468
      %v1470 = vpop.f32.mrb[0].mxu0
      %1471 = vmatprep.mubr.f32.mxu0 0.0
      %1472 = vmatmul.mubr.f32.gmra.mrb[0].mxu0 %v1054
      %v1473 = vpop.f32.mrb[0].mxu0
      %v1474 = vadd.f32 %v1350, %v1473
      %v1475 = vpop.f32.mrb[0].mxu0
      %1476 = vmatprep.mubr.f32.mxu0 0.0
      %1477 = vmatmul.mubr.f32.gmra.mrb[0].mxu0 %v1057
      %v1478 = vpop.f32.mrb[0].mxu0
      %v1479 = vadd.f32 %v1350, %v1478
      %v1480 = vpop.f32.mrb[0].mxu0
      %1481 = vmatprep.mubr.f32.mxu0 0.0
      %1482 = vmatmul.mubr.f32.gmra.mrb[0].mxu0 %v1060
      %v1483 = vpop.f32.mrb[0].mxu0
      %v1484 = vadd.f32 %v1350, %v1483
      %v1485 = vpop.f32.mrb[0].mxu0
      %1486 = vmatprep.mubr.f32.mxu0 0.0
      %1487 = vmatmul.mubr.f32.gmra.mrb[0].mxu0 %v1063
      %v1488 = vpop.f32.mrb[0].mxu0
      %v1489 = vadd.f32 %v1350, %v1488
      %v1490 = vpop.f32.mrb[0].mxu0
      %1491 = vmatprep.mubr.f32.mxu0 0.0
      %1492 = vmatmul.mubr.f32.gmra.mrb[0].mxu0 %v1066
      %v1493 = vpop.f32.mrb[0].mxu0
      %v1494 = vadd.f32 %v1350, %v1493
      %v1495 = vpop.f32.mrb[0].mxu0
      %1496 = vmatprep.mubr.f32.mxu0 0.0
      %1497 = vmatmul.mubr.f32.gmra.mrb[0].mxu0 %v1069
      %v1498 = vpop.f32.mrb[0].mxu0
      %v1499 = vadd.f32 %v1350, %v1498
      %v1500 = vpop.f32.mrb[0].mxu0
      %1501 = vmatprep.mubr.f32.mxu0 0.0
      %1502 = vmatmul.mubr.f32.gmra.mrb[0].mxu0 %v1072
      %v1503 = vpop.f32.mrb[0].mxu0
      %v1504 = vadd.f32 %v1350, %v1503
      %v1505 = vpop.f32.mrb[0].mxu0
      %1506 = vmatprep.mubr.f32.mxu0 0.0
      %1507 = vmatmul.mubr.f32.gmra.mrb[0].mxu0 %v1075
      %v1508 = vpop.f32.mrb[0].mxu0
      %v1509 = vadd.f32 %v1350, %v1508
      %v1510 = vpop.f32.mrb[0].mxu0
      %1511 = vmatprep.mubr.f32.mxu0 0.0
      %1512 = vmatmul.mubr.f32.gmra.mrb[0].mxu0 %v1078
      %v1513 = vpop.f32.mrb[0].mxu0
      %v1514 = vadd.f32 %v1350, %v1513
      %v1515 = vpop.f32.mrb[0].mxu0
      %1516 = vmatprep.mubr.f32.mxu0 0.0
      %1517 = vmatmul.mubr.f32.gmra.mrb[0].mxu0 %v1081
      %v1518 = vpop.f32.mrb[0].mxu0
      %v1519 = vadd.f32 %v1350, %v1518
      %v1520 = vpop.f32.mrb[0].mxu0
      %1521 = vmatprep.mubr.f32.mxu0 0.0
      %1522 = vmatmul.mubr.f32.gmra.mrb[0].mxu0 %v1084
      %v1523 = vpop.f32.mrb[0].mxu0
      %v1524 = vadd.f32 %v1350, %v1523
      %v1525 = vpop.f32.mrb[0].mxu0
      %1526 = vmatprep.mubr.f32.mxu0 0.0
      %1527 = vmatmul.mubr.f32.gmra.mrb[0].mxu0 %v1087
      %v1528 = vpop.f32.mrb[0].mxu0
      %v1529 = vadd.f32 %v1350, %v1528
      %v1530 = vpop.f32.mrb[0].mxu0
      %1531 = vmatprep.mubr.f32.mxu0 0.0
      %1532 = vmatmul.mubr.f32.gmra.mrb[0].mxu0 %v1090
      %v1533 = vpop.f32.mrb[0].mxu0
      %v1534 = vadd.f32 %v1350, %v1533
      %v1535 = vpop.f32.mrb[0].mxu0
      %1536 = vmatprep.mubr.f32.mxu0 0.0
      %1537 = vmatmul.mubr.f32.gmra.mrb[0].mxu0 %v1093
      %v1538 = vpop.f32.mrb[0].mxu0
      %v1539 = vadd.f32 %v1350, %v1538
      %v1540 = vpop.f32.mrb[0].mxu0
      %1541 = vmatprep.mubr.f32.mxu0 0.0
      %1542 = vmatmul.mubr.f32.gmra.mrb[0].mxu0 %v1096
      %v1543 = vpop.f32.mrb[0].mxu0
      %v1544 = vadd.f32 %v1350, %v1543
      %v1545 = vpop.f32.mrb[0].mxu0
      %1546 = vmatprep.mubr.f32.mxu0 0.0
      %1547 = vmatmul.mubr.f32.gmra.mrb[0].mxu0 %v1099
      %v1548 = vpop.f32.mrb[0].mxu0
      %v1549 = vadd.f32 %v1350, %v1548
      %v1550 = vpop.f32.mrb[0].mxu0
      %1551 = vmatprep.mubr.f32.mxu0 0.0
      %1552 = vmatmul.mubr.f32.gmra.mrb[0].mxu0 %v1102
      %v1553 = vpop.f32.mrb[0].mxu0
      %v1554 = vadd.f32 %v1350, %v1553
      %v1555 = vpop.f32.mrb[0].mxu0
      %1556 = vmatprep.mubr.f32.mxu0 0.0
      %1557 = vmatmul.mubr.f32.gmra.mrb[0].mxu0 %v1105
      %v1558 = vpop.f32.mrb[0].mxu0
      %v1559 = vadd.f32 %v1350, %v1558
      %v1560 = vpop.f32.mrb[0].mxu0
      %1561 = vmatprep.mubr.f32.mxu0 0.0
      %1562 = vmatmul.mubr.f32.gmra.mrb[0].mxu0 %v1108
      %v1563 = vpop.f32.mrb[0].mxu0
      %v1564 = vadd.f32 %v1350, %v1563
      %v1565 = vpop.f32.mrb[0].mxu0
      %1566 = vmatprep.mubr.f32.mxu0 0.0
      %1567 = vmatmul.mubr.f32.gmra.mrb[0].mxu0 %v1111
      %v1568 = vpop.f32.mrb[0].mxu0
      %v1569 = vadd.f32 %v1350, %v1568
      %v1570 = vpop.f32.mrb[0].mxu0
      %1571 = vmatprep.mubr.f32.mxu0 0.0
      %1572 = vmatmul.mubr.f32.gmra.mrb[0].mxu0 %v1114
      %v1573 = vpop.f32.mrb[0].mxu0
      %v1574 = vadd.f32 %v1350, %v1573
      %v1575 = vpop.f32.mrb[0].mxu0
      %1576 = vdwg.mxu0
      %v1577 = vld [vmem:[%s7] sm:$0xff]
      %v1578 = vld [vmem:[%s7 + $0x8] sm:$0xff]
      %v1579 = vld [vmem:[%s7 + $0x10] sm:$0xff]
      %v1580 = vld [vmem:[%s7 + $0x18] sm:$0xff]
      %v1581 = vld [vmem:[%s8] sm:$0x1]
      %v1583 = vlaneseq
      %v1584 = vshrl.u32 %v1583, 7
      %v1585 = vsub.s32 0, %v1584
      %v1586 = vrot.slane %v1581, %v1585
      %1588 = vmatprep.subr.mxu0 0.0
      %1589 = vmatpush1.msra.mxu0 %v1577
      %1590 = vmatprep.subr.mxu0 0.0
      %1591 = vmatpush1.msra.mxu0 %v1578
      %1592 = vmatprep.subr.mxu0 0.0
      %1593 = vmatpush1.msra.mxu0 %v1579
      %1594 = vmatprep.subr.mxu0 0.0
      %1595 = vmatpush1.msra.mxu0 %v1580
      %1596 = vmatprep.subr.mxu0 0.0
      %1597 = vmatpush1.msra.mxu0 0.0
      %1598 = vmatprep.subr.mxu0 0.0
      %1599 = vmatpush1.msra.mxu0 0.0
      %1600 = vmatprep.subr.mxu0 0.0
      %1601 = vmatpush1.msra.mxu0 0.0
      %1602 = vmatprep.subr.mxu0 0.0
      %1603 = vmatpush1.msra.mxu0 0.0
      %1604 = vmatprep.subr.mxu0 0.0
      %1605 = vmatpush1.msra.mxu0 0.0
      %1606 = vmatprep.subr.mxu0 0.0
      %1607 = vmatpush1.msra.mxu0 0.0
      %1608 = vmatprep.subr.mxu0 0.0
      %1609 = vmatpush1.msra.mxu0 0.0
      %1610 = vmatprep.subr.mxu0 0.0
      %1611 = vmatpush1.msra.mxu0 0.0
      %1612 = vmatprep.subr.mxu0 0.0
      %1613 = vmatpush1.msra.mxu0 0.0
      %1614 = vmatprep.subr.mxu0 0.0
      %1615 = vmatpush1.msra.mxu0 0.0
      %1616 = vmatprep.subr.mxu0 0.0
      %1617 = vmatpush1.msra.mxu0 0.0
      %1618 = vmatprep.subr.mxu0 0.0
      %1619 = vmatpush1.msra.mxu0 0.0
      %1620 = vmatprep.subr.mxu0 0.0
      %1621 = vmatpush1.msra.mxu0 0.0
      %1622 = vmatprep.subr.mxu0 0.0
      %1623 = vmatpush1.msra.mxu0 0.0
      %1624 = vmatprep.subr.mxu0 0.0
      %1625 = vmatpush1.msra.mxu0 0.0
      %1626 = vmatprep.subr.mxu0 0.0
      %1627 = vmatpush1.msra.mxu0 0.0
      %1628 = vmatprep.subr.mxu0 0.0
      %1629 = vmatpush1.msra.mxu0 0.0
      %1630 = vmatprep.subr.mxu0 0.0
      %1631 = vmatpush1.msra.mxu0 0.0
      %1632 = vmatprep.subr.mxu0 0.0
      %1633 = vmatpush1.msra.mxu0 0.0
      %1634 = vmatprep.subr.mxu0 0.0
      %1635 = vmatpush1.msra.mxu0 0.0
      %1636 = vmatprep.subr.mxu0 0.0
      %1637 = vmatpush1.msra.mxu0 0.0
      %1638 = vmatprep.subr.mxu0 0.0
      %1639 = vmatpush1.msra.mxu0 0.0
      %1640 = vmatprep.subr.mxu0 0.0
      %1641 = vmatpush1.msra.mxu0 0.0
      %1642 = vmatprep.subr.mxu0 0.0
      %1643 = vmatpush1.msra.mxu0 0.0
      %1644 = vmatprep.subr.mxu0 0.0
      %1645 = vmatpush1.msra.mxu0 0.0
      %1646 = vmatprep.subr.mxu0 0.0
      %1647 = vmatpush1.msra.mxu0 0.0
      %1648 = vmatprep.subr.mxu0 0.0
      %1649 = vmatpush1.msra.mxu0 0.0
      %1650 = vmatprep.subr.mxu0 0.0
      %1651 = vmatpush1.msra.mxu0 0.0
      %1652 = vmatprep.mubr.f32.mxu0 0.0
      %1653 = vmatmul.mubr.f32.gmra.mrb[0].mxu0 %v1021
      %v1654 = vpop.f32.mrb[0].mxu0
      %v1655 = vadd.f32 %v1586, %v1654
      %v1656 = vpop.f32.mrb[0].mxu0
      %1657 = vmatprep.mubr.f32.mxu0 0.0
      %1658 = vmatmul.mubr.f32.gmra.mrb[0].mxu0 %v1024
      %v1659 = vpop.f32.mrb[0].mxu0
      %v1660 = vadd.f32 %v1586, %v1659
      %v1661 = vpop.f32.mrb[0].mxu0
      %1662 = vmatprep.mubr.f32.mxu0 0.0
      %1663 = vmatmul.mubr.f32.gmra.mrb[0].mxu0 %v1027
      %v1664 = vpop.f32.mrb[0].mxu0
      %v1665 = vadd.f32 %v1586, %v1664
      %v1666 = vpop.f32.mrb[0].mxu0
      %1667 = vmatprep.mubr.f32.mxu0 0.0
      %1668 = vmatmul.mubr.f32.gmra.mrb[0].mxu0 %v1030
      %v1669 = vpop.f32.mrb[0].mxu0
      %v1670 = vadd.f32 %v1586, %v1669
      %v1671 = vpop.f32.mrb[0].mxu0
      %1672 = vmatprep.mubr.f32.mxu0 0.0
      %1673 = vmatmul.mubr.f32.gmra.mrb[0].mxu0 %v1033
      %v1674 = vpop.f32.mrb[0].mxu0
      %v1675 = vadd.f32 %v1586, %v1674
      %v1676 = vpop.f32.mrb[0].mxu0
      %1677 = vmatprep.mubr.f32.mxu0 0.0
      %1678 = vmatmul.mubr.f32.gmra.mrb[0].mxu0 %v1036
      %v1679 = vpop.f32.mrb[0].mxu0
      %v1680 = vadd.f32 %v1586, %v1679
      %v1681 = vpop.f32.mrb[0].mxu0
      %1682 = vmatprep.mubr.f32.mxu0 0.0
      %1683 = vmatmul.mubr.f32.gmra.mrb[0].mxu0 %v1039
      %v1684 = vpop.f32.mrb[0].mxu0
      %v1685 = vadd.f32 %v1586, %v1684
      %v1686 = vpop.f32.mrb[0].mxu0
      %1687 = vmatprep.mubr.f32.mxu0 0.0
      %1688 = vmatmul.mubr.f32.gmra.mrb[0].mxu0 %v1042
      %v1689 = vpop.f32.mrb[0].mxu0
      %v1690 = vadd.f32 %v1586, %v1689
      %v1691 = vpop.f32.mrb[0].mxu0
      %1692 = vmatprep.mubr.f32.mxu0 0.0
      %1693 = vmatmul.mubr.f32.gmra.mrb[0].mxu0 %v1045
      %v1694 = vpop.f32.mrb[0].mxu0
      %v1695 = vadd.f32 %v1586, %v1694
      %v1696 = vpop.f32.mrb[0].mxu0
      %1697 = vmatprep.mubr.f32.mxu0 0.0
      %1698 = vmatmul.mubr.f32.gmra.mrb[0].mxu0 %v1048
      %v1699 = vpop.f32.mrb[0].mxu0
      %v1700 = vadd.f32 %v1586, %v1699
      %v1701 = vpop.f32.mrb[0].mxu0
      %1702 = vmatprep.mubr.f32.mxu0 0.0
      %1703 = vmatmul.mubr.f32.gmra.mrb[0].mxu0 %v1051
      %v1704 = vpop.f32.mrb[0].mxu0
      %v1705 = vadd.f32 %v1586, %v1704
      %v1706 = vpop.f32.mrb[0].mxu0
      %1707 = vmatprep.mubr.f32.mxu0 0.0
      %1708 = vmatmul.mubr.f32.gmra.mrb[0].mxu0 %v1054
      %v1709 = vpop.f32.mrb[0].mxu0
      %v1710 = vadd.f32 %v1586, %v1709
      %v1711 = vpop.f32.mrb[0].mxu0
      %1712 = vmatprep.mubr.f32.mxu0 0.0
      %1713 = vmatmul.mubr.f32.gmra.mrb[0].mxu0 %v1057
      %v1714 = vpop.f32.mrb[0].mxu0
      %v1715 = vadd.f32 %v1586, %v1714
      %v1716 = vpop.f32.mrb[0].mxu0
      %1717 = vmatprep.mubr.f32.mxu0 0.0
      %1718 = vmatmul.mubr.f32.gmra.mrb[0].mxu0 %v1060
      %v1719 = vpop.f32.mrb[0].mxu0
      %v1720 = vadd.f32 %v1586, %v1719
      %v1721 = vpop.f32.mrb[0].mxu0
      %1722 = vmatprep.mubr.f32.mxu0 0.0
      %1723 = vmatmul.mubr.f32.gmra.mrb[0].mxu0 %v1063
      %v1724 = vpop.f32.mrb[0].mxu0
      %v1725 = vadd.f32 %v1586, %v1724
      %v1726 = vpop.f32.mrb[0].mxu0
      %1727 = vmatprep.mubr.f32.mxu0 0.0
      %1728 = vmatmul.mubr.f32.gmra.mrb[0].mxu0 %v1066
      %v1729 = vpop.f32.mrb[0].mxu0
      %v1730 = vadd.f32 %v1586, %v1729
      %v1731 = vpop.f32.mrb[0].mxu0
      %1732 = vmatprep.mubr.f32.mxu0 0.0
      %1733 = vmatmul.mubr.f32.gmra.mrb[0].mxu0 %v1069
      %v1734 = vpop.f32.mrb[0].mxu0
      %v1735 = vadd.f32 %v1586, %v1734
      %v1736 = vpop.f32.mrb[0].mxu0
      %1737 = vmatprep.mubr.f32.mxu0 0.0
      %1738 = vmatmul.mubr.f32.gmra.mrb[0].mxu0 %v1072
      %v1739 = vpop.f32.mrb[0].mxu0
      %v1740 = vadd.f32 %v1586, %v1739
      %v1741 = vpop.f32.mrb[0].mxu0
      %1742 = vmatprep.mubr.f32.mxu0 0.0
      %1743 = vmatmul.mubr.f32.gmra.mrb[0].mxu0 %v1075
      %v1744 = vpop.f32.mrb[0].mxu0
      %v1745 = vadd.f32 %v1586, %v1744
      %v1746 = vpop.f32.mrb[0].mxu0
      %1747 = vmatprep.mubr.f32.mxu0 0.0
      %1748 = vmatmul.mubr.f32.gmra.mrb[0].mxu0 %v1078
      %v1749 = vpop.f32.mrb[0].mxu0
      %v1750 = vadd.f32 %v1586, %v1749
      %v1751 = vpop.f32.mrb[0].mxu0
      %1752 = vmatprep.mubr.f32.mxu0 0.0
      %1753 = vmatmul.mubr.f32.gmra.mrb[0].mxu0 %v1081
      %v1754 = vpop.f32.mrb[0].mxu0
      %v1755 = vadd.f32 %v1586, %v1754
      %v1756 = vpop.f32.mrb[0].mxu0
      %1757 = vmatprep.mubr.f32.mxu0 0.0
      %1758 = vmatmul.mubr.f32.gmra.mrb[0].mxu0 %v1084
      %v1759 = vpop.f32.mrb[0].mxu0
      %v1760 = vadd.f32 %v1586, %v1759
      %v1761 = vpop.f32.mrb[0].mxu0
      %1762 = vmatprep.mubr.f32.mxu0 0.0
      %1763 = vmatmul.mubr.f32.gmra.mrb[0].mxu0 %v1087
      %v1764 = vpop.f32.mrb[0].mxu0
      %v1765 = vadd.f32 %v1586, %v1764
      %v1766 = vpop.f32.mrb[0].mxu0
      %1767 = vmatprep.mubr.f32.mxu0 0.0
      %1768 = vmatmul.mubr.f32.gmra.mrb[0].mxu0 %v1090
      %v1769 = vpop.f32.mrb[0].mxu0
      %v1770 = vadd.f32 %v1586, %v1769
      %v1771 = vpop.f32.mrb[0].mxu0
      %1772 = vmatprep.mubr.f32.mxu0 0.0
      %1773 = vmatmul.mubr.f32.gmra.mrb[0].mxu0 %v1093
      %v1774 = vpop.f32.mrb[0].mxu0
      %v1775 = vadd.f32 %v1586, %v1774
      %v1776 = vpop.f32.mrb[0].mxu0
      %1777 = vmatprep.mubr.f32.mxu0 0.0
      %1778 = vmatmul.mubr.f32.gmra.mrb[0].mxu0 %v1096
      %v1779 = vpop.f32.mrb[0].mxu0
      %v1780 = vadd.f32 %v1586, %v1779
      %v1781 = vpop.f32.mrb[0].mxu0
      %1782 = vmatprep.mubr.f32.mxu0 0.0
      %1783 = vmatmul.mubr.f32.gmra.mrb[0].mxu0 %v1099
      %v1784 = vpop.f32.mrb[0].mxu0
      %v1785 = vadd.f32 %v1586, %v1784
      %v1786 = vpop.f32.mrb[0].mxu0
      %1787 = vmatprep.mubr.f32.mxu0 0.0
      %1788 = vmatmul.mubr.f32.gmra.mrb[0].mxu0 %v1102
      %v1789 = vpop.f32.mrb[0].mxu0
      %v1790 = vadd.f32 %v1586, %v1789
      %v1791 = vpop.f32.mrb[0].mxu0
      %1792 = vmatprep.mubr.f32.mxu0 0.0
      %1793 = vmatmul.mubr.f32.gmra.mrb[0].mxu0 %v1105
      %v1794 = vpop.f32.mrb[0].mxu0
      %v1795 = vadd.f32 %v1586, %v1794
      %v1796 = vpop.f32.mrb[0].mxu0
      %1797 = vmatprep.mubr.f32.mxu0 0.0
      %1798 = vmatmul.mubr.f32.gmra.mrb[0].mxu0 %v1108
      %v1799 = vpop.f32.mrb[0].mxu0
      %v1800 = vadd.f32 %v1586, %v1799
      %v1801 = vpop.f32.mrb[0].mxu0
      %1802 = vmatprep.mubr.f32.mxu0 0.0
      %1803 = vmatmul.mubr.f32.gmra.mrb[0].mxu0 %v1111
      %v1804 = vpop.f32.mrb[0].mxu0
      %v1805 = vadd.f32 %v1586, %v1804
      %v1806 = vpop.f32.mrb[0].mxu0
      %1807 = vmatprep.mubr.f32.mxu0 0.0
      %1808 = vmatmul.mubr.f32.gmra.mrb[0].mxu0 %v1114
      %v1809 = vpop.f32.mrb[0].mxu0
      %v1810 = vadd.f32 %v1586, %v1809
      %v1811 = vpop.f32.mrb[0].mxu0
      %1812 = vdwg.mxu0
      %v1813 = vmul.f32 %v1183, 0.25
      %v1814 = vmul.f32 %v1188, 0.25
      %v1815 = vmul.f32 %v1193, 0.25
      %v1816 = vmul.f32 %v1198, 0.25
      %v1817 = vmul.f32 %v1203, 0.25
      %v1818 = vmul.f32 %v1208, 0.25
      %v1819 = vmul.f32 %v1213, 0.25
      %v1820 = vmul.f32 %v1218, 0.25
      %v1821 = vmul.f32 %v1223, 0.25
      %v1822 = vmul.f32 %v1228, 0.25
      %v1823 = vmul.f32 %v1233, 0.25
      %v1824 = vmul.f32 %v1238, 0.25
      %v1825 = vmul.f32 %v1243, 0.25
      %v1826 = vmul.f32 %v1248, 0.25
      %v1827 = vmul.f32 %v1253, 0.25
      %v1828 = vmul.f32 %v1258, 0.25
      %v1829 = vmul.f32 %v1263, 0.25
      %v1830 = vmul.f32 %v1268, 0.25
      %v1831 = vmul.f32 %v1273, 0.25
      %v1832 = vmul.f32 %v1278, 0.25
      %v1833 = vmul.f32 %v1283, 0.25
      %v1834 = vmul.f32 %v1288, 0.25
      %v1835 = vmul.f32 %v1293, 0.25
      %v1836 = vmul.f32 %v1298, 0.25
      %v1837 = vmul.f32 %v1303, 0.25
      %v1838 = vmul.f32 %v1308, 0.25
      %v1839 = vmul.f32 %v1313, 0.25
      %v1840 = vmul.f32 %v1318, 0.25
      %v1841 = vmul.f32 %v1323, 0.25
      %v1842 = vmul.f32 %v1328, 0.25
      %v1843 = vmul.f32 %v1333, 0.25
      %v1844 = vmul.f32 %v1338, 0.25
      %v1845 = vld [vmem:[%s11] sm:$0xff]
      %v1846 = vld [vmem:[%s11 + $0x8] sm:$0xff]
      %v1847 = vld [vmem:[%s11 + $0x10] sm:$0xff]
      %v1848 = vld [vmem:[%s11 + $0x18] sm:$0xff]
      %v1849 = vld [vmem:[%s11 + $0x20] sm:$0xff]
      %v1850 = vld [vmem:[%s11 + $0x28] sm:$0xff]
      %v1851 = vld [vmem:[%s11 + $0x30] sm:$0xff]
      %v1852 = vld [vmem:[%s11 + $0x38] sm:$0xff]
      %vm1853 = vcmask 130048
      %v1855 = vsel %vm1853, %v1813, 0
      %v1858 = vsel %vm1853, %v1814, 0
      %v1861 = vsel %vm1853, %v1815, 0
      %v1864 = vsel %vm1853, %v1816, 0
      %v1867 = vsel %vm1853, %v1817, 0
      %v1870 = vsel %vm1853, %v1818, 0
      %v1873 = vsel %vm1853, %v1819, 0
      %v1876 = vsel %vm1853, %v1820, 0
      %v1879 = vsel %vm1853, %v1419, 0
      %v1882 = vsel %vm1853, %v1424, 0
      %v1885 = vsel %vm1853, %v1429, 0
      %v1888 = vsel %vm1853, %v1434, 0
      %v1891 = vsel %vm1853, %v1439, 0
      %v1894 = vsel %vm1853, %v1444, 0
      %v1897 = vsel %vm1853, %v1449, 0
      %v1900 = vsel %vm1853, %v1454, 0
      %1902 = vmatprep.subr.mxu0 0.0
      %1903 = vmatpush1.xpose.msra.mxu0 %v1879
      %1904 = vmatprep.subr.mxu0 0.0
      %1905 = vmatpush1.xpose.msra.mxu0 %v1882
      %1906 = vmatprep.subr.mxu0 0.0
      %1907 = vmatpush1.xpose.msra.mxu0 %v1885
      %1908 = vmatprep.subr.mxu0 0.0
      %1909 = vmatpush1.xpose.msra.mxu0 %v1888
      %1910 = vmatprep.subr.mxu0 0.0
      %1911 = vmatpush1.xpose.msra.mxu0 %v1891
      %1912 = vmatprep.subr.mxu0 0.0
      %1913 = vmatpush1.xpose.msra.mxu0 %v1894
      %1914 = vmatprep.subr.mxu0 0.0
      %1915 = vmatpush1.xpose.msra.mxu0 %v1897
      %1916 = vmatprep.subr.mxu0 0.0
      %1917 = vmatpush1.xpose.msra.mxu0 %v1900
      %1918 = vmatprep.subr.mxu0 0.0
      %1919 = vmatpush1.xpose.msra.mxu0 0.0
      %1920 = vmatprep.subr.mxu0 0.0
      %1921 = vmatpush1.xpose.msra.mxu0 0.0
      %1922 = vmatprep.subr.mxu0 0.0
      %1923 = vmatpush1.xpose.msra.mxu0 0.0
      %1924 = vmatprep.subr.mxu0 0.0
      %1925 = vmatpush1.xpose.msra.mxu0 0.0
      %1926 = vmatprep.subr.mxu0 0.0
      %1927 = vmatpush1.xpose.msra.mxu0 0.0
      %1928 = vmatprep.subr.mxu0 0.0
      %1929 = vmatpush1.xpose.msra.mxu0 0.0
      %1930 = vmatprep.subr.mxu0 0.0
      %1931 = vmatpush1.xpose.msra.mxu0 0.0
      %1932 = vmatprep.subr.mxu0 0.0
      %1933 = vmatpush1.xpose.msra.mxu0 0.0
      %1934 = vmatprep.subr.mxu0 0.0
      %1935 = vmatpush1.xpose.msra.mxu0 0.0
      %1936 = vmatprep.subr.mxu0 0.0
      %1937 = vmatpush1.xpose.msra.mxu0 0.0
      %1938 = vmatprep.subr.mxu0 0.0
      %1939 = vmatpush1.xpose.msra.mxu0 0.0
      %1940 = vmatprep.subr.mxu0 0.0
      %1941 = vmatpush1.xpose.msra.mxu0 0.0
      %1942 = vmatprep.subr.mxu0 0.0
      %1943 = vmatpush1.xpose.msra.mxu0 0.0
      %1944 = vmatprep.subr.mxu0 0.0
      %1945 = vmatpush1.xpose.msra.mxu0 0.0
      %1946 = vmatprep.subr.mxu0 0.0
      %1947 = vmatpush1.xpose.msra.mxu0 0.0
      %1948 = vmatprep.subr.mxu0 0.0
      %1949 = vmatpush1.xpose.msra.mxu0 0.0
      %1950 = vmatprep.subr.mxu0 0.0
      %1951 = vmatpush1.xpose.msra.mxu0 0.0
      %1952 = vmatprep.subr.mxu0 0.0
      %1953 = vmatpush1.xpose.msra.mxu0 0.0
      %1954 = vmatprep.subr.mxu0 0.0
      %1955 = vmatpush1.xpose.msra.mxu0 0.0
      %1956 = vmatprep.subr.mxu0 0.0
      %1957 = vmatpush1.xpose.msra.mxu0 0.0
      %1958 = vmatprep.subr.mxu0 0.0
      %1959 = vmatpush1.xpose.msra.mxu0 0.0
      %1960 = vmatprep.subr.mxu0 0.0
      %1961 = vmatpush1.xpose.msra.mxu0 0.0
      %1962 = vmatprep.subr.mxu0 0.0
      %1963 = vmatpush1.xpose.msra.mxu0 0.0
      %1964 = vmatprep.subr.mxu0 0.0
      %1965 = vmatpush1.xpose.msra.mxu0 0.0
      %1966 = vmatprep.mubr.f32.mxu0 0.0
      %1967 = vmatmul.mubr.f32.gmra.mrb[0].mxu0 %v1855
      %v1968 = vpop.f32.mrb[0].mxu0
      %v1969 = vadd.f32 %v1845, %v1968
      %v1970 = vpop.f32.mrb[0].mxu0
      %1971 = vmatprep.mubr.f32.mxu0 0.0
      %1972 = vmatmul.mubr.f32.gmra.mrb[0].mxu0 %v1858
      %v1973 = vpop.f32.mrb[0].mxu0
      %v1974 = vadd.f32 %v1846, %v1973
      %v1975 = vpop.f32.mrb[0].mxu0
      %1976 = vmatprep.mubr.f32.mxu0 0.0
      %1977 = vmatmul.mubr.f32.gmra.mrb[0].mxu0 %v1861
      %v1978 = vpop.f32.mrb[0].mxu0
      %v1979 = vadd.f32 %v1847, %v1978
      %v1980 = vpop.f32.mrb[0].mxu0
      %1981 = vmatprep.mubr.f32.mxu0 0.0
      %1982 = vmatmul.mubr.f32.gmra.mrb[0].mxu0 %v1864
      %v1983 = vpop.f32.mrb[0].mxu0
      %v1984 = vadd.f32 %v1848, %v1983
      %v1985 = vpop.f32.mrb[0].mxu0
      %1986 = vmatprep.mubr.f32.mxu0 0.0
      %1987 = vmatmul.mubr.f32.gmra.mrb[0].mxu0 %v1867
      %v1988 = vpop.f32.mrb[0].mxu0
      %v1989 = vadd.f32 %v1849, %v1988
      %v1990 = vpop.f32.mrb[0].mxu0
      %1991 = vmatprep.mubr.f32.mxu0 0.0
      %1992 = vmatmul.mubr.f32.gmra.mrb[0].mxu0 %v1870
      %v1993 = vpop.f32.mrb[0].mxu0
      %v1994 = vadd.f32 %v1850, %v1993
      %v1995 = vpop.f32.mrb[0].mxu0
      %1996 = vmatprep.mubr.f32.mxu0 0.0
      %1997 = vmatmul.mubr.f32.gmra.mrb[0].mxu0 %v1873
      %v1998 = vpop.f32.mrb[0].mxu0
      %v1999 = vadd.f32 %v1851, %v1998
      %v2000 = vpop.f32.mrb[0].mxu0
      %2001 = vmatprep.mubr.f32.mxu0 0.0
      %2002 = vmatmul.mubr.f32.gmra.mrb[0].mxu0 %v1876
      %v2003 = vpop.f32.mrb[0].mxu0
      %v2004 = vadd.f32 %v1852, %v2003
      %v2005 = vpop.f32.mrb[0].mxu0
      %2006 = vdwg.mxu0
      %v2008 = vsel %vm1853, %v1821, 0
      %v2011 = vsel %vm1853, %v1822, 0
      %v2014 = vsel %vm1853, %v1823, 0
      %v2017 = vsel %vm1853, %v1824, 0
      %v2020 = vsel %vm1853, %v1825, 0
      %v2023 = vsel %vm1853, %v1826, 0
      %v2026 = vsel %vm1853, %v1827, 0
      %v2029 = vsel %vm1853, %v1828, 0
      %v2032 = vsel %vm1853, %v1459, 0
      %v2035 = vsel %vm1853, %v1464, 0
      %v2038 = vsel %vm1853, %v1469, 0
      %v2041 = vsel %vm1853, %v1474, 0
      %v2044 = vsel %vm1853, %v1479, 0
      %v2047 = vsel %vm1853, %v1484, 0
      %v2050 = vsel %vm1853, %v1489, 0
      %v2053 = vsel %vm1853, %v1494, 0
      %2055 = vmatprep.subr.mxu0 0.0
      %2056 = vmatpush1.xpose.msra.mxu0 %v2032
      %2057 = vmatprep.subr.mxu0 0.0
      %2058 = vmatpush1.xpose.msra.mxu0 %v2035
      %2059 = vmatprep.subr.mxu0 0.0
      %2060 = vmatpush1.xpose.msra.mxu0 %v2038
      %2061 = vmatprep.subr.mxu0 0.0
      %2062 = vmatpush1.xpose.msra.mxu0 %v2041
      %2063 = vmatprep.subr.mxu0 0.0
      %2064 = vmatpush1.xpose.msra.mxu0 %v2044
      %2065 = vmatprep.subr.mxu0 0.0
      %2066 = vmatpush1.xpose.msra.mxu0 %v2047
      %2067 = vmatprep.subr.mxu0 0.0
      %2068 = vmatpush1.xpose.msra.mxu0 %v2050
      %2069 = vmatprep.subr.mxu0 0.0
      %2070 = vmatpush1.xpose.msra.mxu0 %v2053
      %2071 = vmatprep.subr.mxu0 0.0
      %2072 = vmatpush1.xpose.msra.mxu0 0.0
      %2073 = vmatprep.subr.mxu0 0.0
      %2074 = vmatpush1.xpose.msra.mxu0 0.0
      %2075 = vmatprep.subr.mxu0 0.0
      %2076 = vmatpush1.xpose.msra.mxu0 0.0
      %2077 = vmatprep.subr.mxu0 0.0
      %2078 = vmatpush1.xpose.msra.mxu0 0.0
      %2079 = vmatprep.subr.mxu0 0.0
      %2080 = vmatpush1.xpose.msra.mxu0 0.0
      %2081 = vmatprep.subr.mxu0 0.0
      %2082 = vmatpush1.xpose.msra.mxu0 0.0
      %2083 = vmatprep.subr.mxu0 0.0
      %2084 = vmatpush1.xpose.msra.mxu0 0.0
      %2085 = vmatprep.subr.mxu0 0.0
      %2086 = vmatpush1.xpose.msra.mxu0 0.0
      %2087 = vmatprep.subr.mxu0 0.0
      %2088 = vmatpush1.xpose.msra.mxu0 0.0
      %2089 = vmatprep.subr.mxu0 0.0
      %2090 = vmatpush1.xpose.msra.mxu0 0.0
      %2091 = vmatprep.subr.mxu0 0.0
      %2092 = vmatpush1.xpose.msra.mxu0 0.0
      %2093 = vmatprep.subr.mxu0 0.0
      %2094 = vmatpush1.xpose.msra.mxu0 0.0
      %2095 = vmatprep.subr.mxu0 0.0
      %2096 = vmatpush1.xpose.msra.mxu0 0.0
      %2097 = vmatprep.subr.mxu0 0.0
      %2098 = vmatpush1.xpose.msra.mxu0 0.0
      %2099 = vmatprep.subr.mxu0 0.0
      %2100 = vmatpush1.xpose.msra.mxu0 0.0
      %2101 = vmatprep.subr.mxu0 0.0
      %2102 = vmatpush1.xpose.msra.mxu0 0.0
      %2103 = vmatprep.subr.mxu0 0.0
      %2104 = vmatpush1.xpose.msra.mxu0 0.0
      %2105 = vmatprep.subr.mxu0 0.0
      %2106 = vmatpush1.xpose.msra.mxu0 0.0
      %2107 = vmatprep.subr.mxu0 0.0
      %2108 = vmatpush1.xpose.msra.mxu0 0.0
      %2109 = vmatprep.subr.mxu0 0.0
      %2110 = vmatpush1.xpose.msra.mxu0 0.0
      %2111 = vmatprep.subr.mxu0 0.0
      %2112 = vmatpush1.xpose.msra.mxu0 0.0
      %2113 = vmatprep.subr.mxu0 0.0
      %2114 = vmatpush1.xpose.msra.mxu0 0.0
      %2115 = vmatprep.subr.mxu0 0.0
      %2116 = vmatpush1.xpose.msra.mxu0 0.0
      %2117 = vmatprep.subr.mxu0 0.0
      %2118 = vmatpush1.xpose.msra.mxu0 0.0
      %2119 = vmatprep.mubr.f32.mxu0 0.0
      %2120 = vmatmul.mubr.f32.gmra.mrb[0].mxu0 %v2008
      %v2121 = vpop.f32.mrb[0].mxu0
      %v2122 = vadd.f32 %v1845, %v2121
      %v2123 = vpop.f32.mrb[0].mxu0
      %2124 = vmatprep.mubr.f32.mxu0 0.0
      %2125 = vmatmul.mubr.f32.gmra.mrb[0].mxu0 %v2011
      %v2126 = vpop.f32.mrb[0].mxu0
      %v2127 = vadd.f32 %v1846, %v2126
      %v2128 = vpop.f32.mrb[0].mxu0
      %2129 = vmatprep.mubr.f32.mxu0 0.0
      %2130 = vmatmul.mubr.f32.gmra.mrb[0].mxu0 %v2014
      %v2131 = vpop.f32.mrb[0].mxu0
      %v2132 = vadd.f32 %v1847, %v2131
      %v2133 = vpop.f32.mrb[0].mxu0
      %2134 = vmatprep.mubr.f32.mxu0 0.0
      %2135 = vmatmul.mubr.f32.gmra.mrb[0].mxu0 %v2017
      %v2136 = vpop.f32.mrb[0].mxu0
      %v2137 = vadd.f32 %v1848, %v2136
      %v2138 = vpop.f32.mrb[0].mxu0
      %2139 = vmatprep.mubr.f32.mxu0 0.0
      %2140 = vmatmul.mubr.f32.gmra.mrb[0].mxu0 %v2020
      %v2141 = vpop.f32.mrb[0].mxu0
      %v2142 = vadd.f32 %v1849, %v2141
      %v2143 = vpop.f32.mrb[0].mxu0
      %2144 = vmatprep.mubr.f32.mxu0 0.0
      %2145 = vmatmul.mubr.f32.gmra.mrb[0].mxu0 %v2023
      %v2146 = vpop.f32.mrb[0].mxu0
      %v2147 = vadd.f32 %v1850, %v2146
      %v2148 = vpop.f32.mrb[0].mxu0
      %2149 = vmatprep.mubr.f32.mxu0 0.0
      %2150 = vmatmul.mubr.f32.gmra.mrb[0].mxu0 %v2026
      %v2151 = vpop.f32.mrb[0].mxu0
      %v2152 = vadd.f32 %v1851, %v2151
      %v2153 = vpop.f32.mrb[0].mxu0
      %2154 = vmatprep.mubr.f32.mxu0 0.0
      %2155 = vmatmul.mubr.f32.gmra.mrb[0].mxu0 %v2029
      %v2156 = vpop.f32.mrb[0].mxu0
      %v2157 = vadd.f32 %v1852, %v2156
      %v2158 = vpop.f32.mrb[0].mxu0
      %2159 = vdwg.mxu0
      %v2161 = vsel %vm1853, %v1829, 0
      %v2164 = vsel %vm1853, %v1830, 0
      %v2167 = vsel %vm1853, %v1831, 0
      %v2170 = vsel %vm1853, %v1832, 0
      %v2173 = vsel %vm1853, %v1833, 0
      %v2176 = vsel %vm1853, %v1834, 0
      %v2179 = vsel %vm1853, %v1835, 0
      %v2182 = vsel %vm1853, %v1836, 0
      %v2185 = vsel %vm1853, %v1499, 0
      %v2188 = vsel %vm1853, %v1504, 0
      %v2191 = vsel %vm1853, %v1509, 0
      %v2194 = vsel %vm1853, %v1514, 0
      %v2197 = vsel %vm1853, %v1519, 0
      %v2200 = vsel %vm1853, %v1524, 0
      %v2203 = vsel %vm1853, %v1529, 0
      %v2206 = vsel %vm1853, %v1534, 0
      %2208 = vmatprep.subr.mxu0 0.0
      %2209 = vmatpush1.xpose.msra.mxu0 %v2185
      %2210 = vmatprep.subr.mxu0 0.0
      %2211 = vmatpush1.xpose.msra.mxu0 %v2188
      %2212 = vmatprep.subr.mxu0 0.0
      %2213 = vmatpush1.xpose.msra.mxu0 %v2191
      %2214 = vmatprep.subr.mxu0 0.0
      %2215 = vmatpush1.xpose.msra.mxu0 %v2194
      %2216 = vmatprep.subr.mxu0 0.0
      %2217 = vmatpush1.xpose.msra.mxu0 %v2197
      %2218 = vmatprep.subr.mxu0 0.0
      %2219 = vmatpush1.xpose.msra.mxu0 %v2200
      %2220 = vmatprep.subr.mxu0 0.0
      %2221 = vmatpush1.xpose.msra.mxu0 %v2203
      %2222 = vmatprep.subr.mxu0 0.0
      %2223 = vmatpush1.xpose.msra.mxu0 %v2206
      %2224 = vmatprep.subr.mxu0 0.0
      %2225 = vmatpush1.xpose.msra.mxu0 0.0
      %2226 = vmatprep.subr.mxu0 0.0
      %2227 = vmatpush1.xpose.msra.mxu0 0.0
      %2228 = vmatprep.subr.mxu0 0.0
      %2229 = vmatpush1.xpose.msra.mxu0 0.0
      %2230 = vmatprep.subr.mxu0 0.0
      %2231 = vmatpush1.xpose.msra.mxu0 0.0
      %2232 = vmatprep.subr.mxu0 0.0
      %2233 = vmatpush1.xpose.msra.mxu0 0.0
      %2234 = vmatprep.subr.mxu0 0.0
      %2235 = vmatpush1.xpose.msra.mxu0 0.0
      %2236 = vmatprep.subr.mxu0 0.0
      %2237 = vmatpush1.xpose.msra.mxu0 0.0
      %2238 = vmatprep.subr.mxu0 0.0
      %2239 = vmatpush1.xpose.msra.mxu0 0.0
      %2240 = vmatprep.subr.mxu0 0.0
      %2241 = vmatpush1.xpose.msra.mxu0 0.0
      %2242 = vmatprep.subr.mxu0 0.0
      %2243 = vmatpush1.xpose.msra.mxu0 0.0
      %2244 = vmatprep.subr.mxu0 0.0
      %2245 = vmatpush1.xpose.msra.mxu0 0.0
      %2246 = vmatprep.subr.mxu0 0.0
      %2247 = vmatpush1.xpose.msra.mxu0 0.0
      %2248 = vmatprep.subr.mxu0 0.0
      %2249 = vmatpush1.xpose.msra.mxu0 0.0
      %2250 = vmatprep.subr.mxu0 0.0
      %2251 = vmatpush1.xpose.msra.mxu0 0.0
      %2252 = vmatprep.subr.mxu0 0.0
      %2253 = vmatpush1.xpose.msra.mxu0 0.0
      %2254 = vmatprep.subr.mxu0 0.0
      %2255 = vmatpush1.xpose.msra.mxu0 0.0
      %2256 = vmatprep.subr.mxu0 0.0
      %2257 = vmatpush1.xpose.msra.mxu0 0.0
      %2258 = vmatprep.subr.mxu0 0.0
      %2259 = vmatpush1.xpose.msra.mxu0 0.0
      %2260 = vmatprep.subr.mxu0 0.0
      %2261 = vmatpush1.xpose.msra.mxu0 0.0
      %2262 = vmatprep.subr.mxu0 0.0
      %2263 = vmatpush1.xpose.msra.mxu0 0.0
      %2264 = vmatprep.subr.mxu0 0.0
      %2265 = vmatpush1.xpose.msra.mxu0 0.0
      %2266 = vmatprep.subr.mxu0 0.0
      %2267 = vmatpush1.xpose.msra.mxu0 0.0
      %2268 = vmatprep.subr.mxu0 0.0
      %2269 = vmatpush1.xpose.msra.mxu0 0.0
      %2270 = vmatprep.subr.mxu0 0.0
      %2271 = vmatpush1.xpose.msra.mxu0 0.0
      %2272 = vmatprep.mubr.f32.mxu0 0.0
      %2273 = vmatmul.mubr.f32.gmra.mrb[0].mxu0 %v2161
      %v2274 = vpop.f32.mrb[0].mxu0
      %v2275 = vadd.f32 %v1845, %v2274
      %v2276 = vpop.f32.mrb[0].mxu0
      %2277 = vmatprep.mubr.f32.mxu0 0.0
      %2278 = vmatmul.mubr.f32.gmra.mrb[0].mxu0 %v2164
      %v2279 = vpop.f32.mrb[0].mxu0
      %v2280 = vadd.f32 %v1846, %v2279
      %v2281 = vpop.f32.mrb[0].mxu0
      %2282 = vmatprep.mubr.f32.mxu0 0.0
      %2283 = vmatmul.mubr.f32.gmra.mrb[0].mxu0 %v2167
      %v2284 = vpop.f32.mrb[0].mxu0
      %v2285 = vadd.f32 %v1847, %v2284
      %v2286 = vpop.f32.mrb[0].mxu0
      %2287 = vmatprep.mubr.f32.mxu0 0.0
      %2288 = vmatmul.mubr.f32.gmra.mrb[0].mxu0 %v2170
      %v2289 = vpop.f32.mrb[0].mxu0
      %v2290 = vadd.f32 %v1848, %v2289
      %v2291 = vpop.f32.mrb[0].mxu0
      %2292 = vmatprep.mubr.f32.mxu0 0.0
      %2293 = vmatmul.mubr.f32.gmra.mrb[0].mxu0 %v2173
      %v2294 = vpop.f32.mrb[0].mxu0
      %v2295 = vadd.f32 %v1849, %v2294
      %v2296 = vpop.f32.mrb[0].mxu0
      %2297 = vmatprep.mubr.f32.mxu0 0.0
      %2298 = vmatmul.mubr.f32.gmra.mrb[0].mxu0 %v2176
      %v2299 = vpop.f32.mrb[0].mxu0
      %v2300 = vadd.f32 %v1850, %v2299
      %v2301 = vpop.f32.mrb[0].mxu0
      %2302 = vmatprep.mubr.f32.mxu0 0.0
      %2303 = vmatmul.mubr.f32.gmra.mrb[0].mxu0 %v2179
      %v2304 = vpop.f32.mrb[0].mxu0
      %v2305 = vadd.f32 %v1851, %v2304
      %v2306 = vpop.f32.mrb[0].mxu0
      %2307 = vmatprep.mubr.f32.mxu0 0.0
      %2308 = vmatmul.mubr.f32.gmra.mrb[0].mxu0 %v2182
      %v2309 = vpop.f32.mrb[0].mxu0
      %v2310 = vadd.f32 %v1852, %v2309
      %v2311 = vpop.f32.mrb[0].mxu0
      %2312 = vdwg.mxu0
      %v2314 = vsel %vm1853, %v1837, 0
      %v2317 = vsel %vm1853, %v1838, 0
      %v2320 = vsel %vm1853, %v1839, 0
      %v2323 = vsel %vm1853, %v1840, 0
      %v2326 = vsel %vm1853, %v1841, 0
      %v2329 = vsel %vm1853, %v1842, 0
      %v2332 = vsel %vm1853, %v1843, 0
      %v2335 = vsel %vm1853, %v1844, 0
      %v2338 = vsel %vm1853, %v1539, 0
      %v2341 = vsel %vm1853, %v1544, 0
      %v2344 = vsel %vm1853, %v1549, 0
      %v2347 = vsel %vm1853, %v1554, 0
      %v2350 = vsel %vm1853, %v1559, 0
      %v2353 = vsel %vm1853, %v1564, 0
      %v2356 = vsel %vm1853, %v1569, 0
      %v2359 = vsel %vm1853, %v1574, 0
      %2361 = vmatprep.subr.mxu0 0.0
      %2362 = vmatpush1.xpose.msra.mxu0 %v2338
      %2363 = vmatprep.subr.mxu0 0.0
      %2364 = vmatpush1.xpose.msra.mxu0 %v2341
      %2365 = vmatprep.subr.mxu0 0.0
      %2366 = vmatpush1.xpose.msra.mxu0 %v2344
      %2367 = vmatprep.subr.mxu0 0.0
      %2368 = vmatpush1.xpose.msra.mxu0 %v2347
      %2369 = vmatprep.subr.mxu0 0.0
      %2370 = vmatpush1.xpose.msra.mxu0 %v2350
      %2371 = vmatprep.subr.mxu0 0.0
      %2372 = vmatpush1.xpose.msra.mxu0 %v2353
      %2373 = vmatprep.subr.mxu0 0.0
      %2374 = vmatpush1.xpose.msra.mxu0 %v2356
      %2375 = vmatprep.subr.mxu0 0.0
      %2376 = vmatpush1.xpose.msra.mxu0 %v2359
      %2377 = vmatprep.subr.mxu0 0.0
      %2378 = vmatpush1.xpose.msra.mxu0 0.0
      %2379 = vmatprep.subr.mxu0 0.0
      %2380 = vmatpush1.xpose.msra.mxu0 0.0
      %2381 = vmatprep.subr.mxu0 0.0
      %2382 = vmatpush1.xpose.msra.mxu0 0.0
      %2383 = vmatprep.subr.mxu0 0.0
      %2384 = vmatpush1.xpose.msra.mxu0 0.0
      %2385 = vmatprep.subr.mxu0 0.0
      %2386 = vmatpush1.xpose.msra.mxu0 0.0
      %2387 = vmatprep.subr.mxu0 0.0
      %2388 = vmatpush1.xpose.msra.mxu0 0.0
      %2389 = vmatprep.subr.mxu0 0.0
      %2390 = vmatpush1.xpose.msra.mxu0 0.0
      %2391 = vmatprep.subr.mxu0 0.0
      %2392 = vmatpush1.xpose.msra.mxu0 0.0
      %2393 = vmatprep.subr.mxu0 0.0
      %2394 = vmatpush1.xpose.msra.mxu0 0.0
      %2395 = vmatprep.subr.mxu0 0.0
      %2396 = vmatpush1.xpose.msra.mxu0 0.0
      %2397 = vmatprep.subr.mxu0 0.0
      %2398 = vmatpush1.xpose.msra.mxu0 0.0
      %2399 = vmatprep.subr.mxu0 0.0
      %2400 = vmatpush1.xpose.msra.mxu0 0.0
      %2401 = vmatprep.subr.mxu0 0.0
      %2402 = vmatpush1.xpose.msra.mxu0 0.0
      %2403 = vmatprep.subr.mxu0 0.0
      %2404 = vmatpush1.xpose.msra.mxu0 0.0
      %2405 = vmatprep.subr.mxu0 0.0
      %2406 = vmatpush1.xpose.msra.mxu0 0.0
      %2407 = vmatprep.subr.mxu0 0.0
      %2408 = vmatpush1.xpose.msra.mxu0 0.0
      %2409 = vmatprep.subr.mxu0 0.0
      %2410 = vmatpush1.xpose.msra.mxu0 0.0
      %2411 = vmatprep.subr.mxu0 0.0
      %2412 = vmatpush1.xpose.msra.mxu0 0.0
      %2413 = vmatprep.subr.mxu0 0.0
      %2414 = vmatpush1.xpose.msra.mxu0 0.0
      %2415 = vmatprep.subr.mxu0 0.0
      %2416 = vmatpush1.xpose.msra.mxu0 0.0
      %2417 = vmatprep.subr.mxu0 0.0
      %2418 = vmatpush1.xpose.msra.mxu0 0.0
      %2419 = vmatprep.subr.mxu0 0.0
      %2420 = vmatpush1.xpose.msra.mxu0 0.0
      %2421 = vmatprep.subr.mxu0 0.0
      %2422 = vmatpush1.xpose.msra.mxu0 0.0
      %2423 = vmatprep.subr.mxu0 0.0
      %2424 = vmatpush1.xpose.msra.mxu0 0.0
      %2425 = vmatprep.mubr.f32.mxu0 0.0
      %2426 = vmatmul.mubr.f32.gmra.mrb[0].mxu0 %v2314
      %v2427 = vpop.f32.mrb[0].mxu0
      %v2428 = vadd.f32 %v1845, %v2427
      %v2429 = vpop.f32.mrb[0].mxu0
      %2430 = vmatprep.mubr.f32.mxu0 0.0
      %2431 = vmatmul.mubr.f32.gmra.mrb[0].mxu0 %v2317
      %v2432 = vpop.f32.mrb[0].mxu0
      %v2433 = vadd.f32 %v1846, %v2432
      %v2434 = vpop.f32.mrb[0].mxu0
      %2435 = vmatprep.mubr.f32.mxu0 0.0
      %2436 = vmatmul.mubr.f32.gmra.mrb[0].mxu0 %v2320
      %v2437 = vpop.f32.mrb[0].mxu0
      %v2438 = vadd.f32 %v1847, %v2437
      %v2439 = vpop.f32.mrb[0].mxu0
      %2440 = vmatprep.mubr.f32.mxu0 0.0
      %2441 = vmatmul.mubr.f32.gmra.mrb[0].mxu0 %v2323
      %v2442 = vpop.f32.mrb[0].mxu0
      %v2443 = vadd.f32 %v1848, %v2442
      %v2444 = vpop.f32.mrb[0].mxu0
      %2445 = vmatprep.mubr.f32.mxu0 0.0
      %2446 = vmatmul.mubr.f32.gmra.mrb[0].mxu0 %v2326
      %v2447 = vpop.f32.mrb[0].mxu0
      %v2448 = vadd.f32 %v1849, %v2447
      %v2449 = vpop.f32.mrb[0].mxu0
      %2450 = vmatprep.mubr.f32.mxu0 0.0
      %2451 = vmatmul.mubr.f32.gmra.mrb[0].mxu0 %v2329
      %v2452 = vpop.f32.mrb[0].mxu0
      %v2453 = vadd.f32 %v1850, %v2452
      %v2454 = vpop.f32.mrb[0].mxu0
      %2455 = vmatprep.mubr.f32.mxu0 0.0
      %2456 = vmatmul.mubr.f32.gmra.mrb[0].mxu0 %v2332
      %v2457 = vpop.f32.mrb[0].mxu0
      %v2458 = vadd.f32 %v1851, %v2457
      %v2459 = vpop.f32.mrb[0].mxu0
      %2460 = vmatprep.mubr.f32.mxu0 0.0
      %2461 = vmatmul.mubr.f32.gmra.mrb[0].mxu0 %v2335
      %v2462 = vpop.f32.mrb[0].mxu0
      %v2463 = vadd.f32 %v1852, %v2462
      %v2464 = vpop.f32.mrb[0].mxu0
      %2465 = vdwg.mxu0
      %v2466 = vadd.f32 %v1969, %v977
      %v2467 = vadd.f32 %v1974, %v978
      %v2468 = vadd.f32 %v1979, %v979
      %v2469 = vadd.f32 %v1984, %v980
      %v2470 = vadd.f32 %v1989, %v981
      %v2471 = vadd.f32 %v1994, %v982
      %v2472 = vadd.f32 %v1999, %v983
      %v2473 = vadd.f32 %v2004, %v984
      %v2474 = vadd.f32 %v2122, %v985
      %v2475 = vadd.f32 %v2127, %v986
      %v2476 = vadd.f32 %v2132, %v987
      %v2477 = vadd.f32 %v2137, %v988
      %v2478 = vadd.f32 %v2142, %v989
      %v2479 = vadd.f32 %v2147, %v990
      %v2480 = vadd.f32 %v2152, %v991
      %v2481 = vadd.f32 %v2157, %v992
      %v2482 = vadd.f32 %v2275, %v993
      %v2483 = vadd.f32 %v2280, %v994
      %v2484 = vadd.f32 %v2285, %v995
      %v2485 = vadd.f32 %v2290, %v996
      %v2486 = vadd.f32 %v2295, %v997
      %v2487 = vadd.f32 %v2300, %v998
      %v2488 = vadd.f32 %v2305, %v999
      %v2489 = vadd.f32 %v2310, %v1000
      %v2490 = vadd.f32 %v2428, %v1001
      %v2491 = vadd.f32 %v2433, %v1002
      %v2492 = vadd.f32 %v2438, %v1003
      %v2493 = vadd.f32 %v2443, %v1004
      %v2494 = vadd.f32 %v2448, %v1005
      %v2495 = vadd.f32 %v2453, %v1006
      %v2496 = vadd.f32 %v2458, %v1007
      %v2497 = vadd.f32 %v2463, %v1008
      %vm2498 = vcmask 523264
      %v2499 = vsel %vm2498, %v2466, -inf
      %2500 = vmax.xlane.f32.xlu0 %v2499
      %v2501 = vpop.xlane.xlu0 %2500
      %v2502 = vsel %vm2498, %v2467, -inf
      %2503 = vmax.xlane.f32.xlu0 %v2502
      %v2504 = vpop.xlane.xlu0 %2503
      %v2505 = vsel %vm2498, %v2468, -inf
      %2506 = vmax.xlane.f32.xlu0 %v2505
      %v2507 = vpop.xlane.xlu0 %2506
      %v2508 = vsel %vm2498, %v2469, -inf
      %2509 = vmax.xlane.f32.xlu0 %v2508
      %v2510 = vpop.xlane.xlu0 %2509
      %v2511 = vsel %vm2498, %v2470, -inf
      %2512 = vmax.xlane.f32.xlu0 %v2511
      %v2513 = vpop.xlane.xlu0 %2512
      %v2514 = vsel %vm2498, %v2471, -inf
      %2515 = vmax.xlane.f32.xlu0 %v2514
      %v2516 = vpop.xlane.xlu0 %2515
      %v2517 = vsel %vm2498, %v2472, -inf
      %2518 = vmax.xlane.f32.xlu0 %v2517
      %v2519 = vpop.xlane.xlu0 %2518
      %v2520 = vsel %vm2498, %v2473, -inf
      %2521 = vmax.xlane.f32.xlu0 %v2520
      %v2522 = vpop.xlane.xlu0 %2521
      %v2523 = vsel %vm2498, %v2474, -inf
      %2524 = vmax.xlane.f32.xlu0 %v2523
      %v2525 = vpop.xlane.xlu0 %2524
      %v2526 = vsel %vm2498, %v2475, -inf
      %2527 = vmax.xlane.f32.xlu0 %v2526
      %v2528 = vpop.xlane.xlu0 %2527
      %v2529 = vsel %vm2498, %v2476, -inf
      %2530 = vmax.xlane.f32.xlu0 %v2529
      %v2531 = vpop.xlane.xlu0 %2530
      %v2532 = vsel %vm2498, %v2477, -inf
      %2533 = vmax.xlane.f32.xlu0 %v2532
      %v2534 = vpop.xlane.xlu0 %2533
      %v2535 = vsel %vm2498, %v2478, -inf
      %2536 = vmax.xlane.f32.xlu0 %v2535
      %v2537 = vpop.xlane.xlu0 %2536
      %v2538 = vsel %vm2498, %v2479, -inf
      %2539 = vmax.xlane.f32.xlu0 %v2538
      %v2540 = vpop.xlane.xlu0 %2539
      %v2541 = vsel %vm2498, %v2480, -inf
      %2542 = vmax.xlane.f32.xlu0 %v2541
      %v2543 = vpop.xlane.xlu0 %2542
      %v2544 = vsel %vm2498, %v2481, -inf
      %2545 = vmax.xlane.f32.xlu0 %v2544
      %v2546 = vpop.xlane.xlu0 %2545
      %v2547 = vsel %vm2498, %v2482, -inf
      %2548 = vmax.xlane.f32.xlu0 %v2547
      %v2549 = vpop.xlane.xlu0 %2548
      %v2550 = vsel %vm2498, %v2483, -inf
      %2551 = vmax.xlane.f32.xlu0 %v2550
      %v2552 = vpop.xlane.xlu0 %2551
      %v2553 = vsel %vm2498, %v2484, -inf
      %2554 = vmax.xlane.f32.xlu0 %v2553
      %v2555 = vpop.xlane.xlu0 %2554
      %v2556 = vsel %vm2498, %v2485, -inf
      %2557 = vmax.xlane.f32.xlu0 %v2556
      %v2558 = vpop.xlane.xlu0 %2557
      %v2559 = vsel %vm2498, %v2486, -inf
      %2560 = vmax.xlane.f32.xlu0 %v2559
      %v2561 = vpop.xlane.xlu0 %2560
      %v2562 = vsel %vm2498, %v2487, -inf
      %2563 = vmax.xlane.f32.xlu0 %v2562
      %v2564 = vpop.xlane.xlu0 %2563
      %v2565 = vsel %vm2498, %v2488, -inf
      %2566 = vmax.xlane.f32.xlu0 %v2565
      %v2567 = vpop.xlane.xlu0 %2566
      %v2568 = vsel %vm2498, %v2489, -inf
      %2569 = vmax.xlane.f32.xlu0 %v2568
      %v2570 = vpop.xlane.xlu0 %2569
      %v2571 = vsel %vm2498, %v2490, -inf
      %2572 = vmax.xlane.f32.xlu0 %v2571
      %v2573 = vpop.xlane.xlu0 %2572
      %v2574 = vsel %vm2498, %v2491, -inf
      %2575 = vmax.xlane.f32.xlu0 %v2574
      %v2576 = vpop.xlane.xlu0 %2575
      %v2577 = vsel %vm2498, %v2492, -inf
      %2578 = vmax.xlane.f32.xlu0 %v2577
      %v2579 = vpop.xlane.xlu0 %2578
      %v2580 = vsel %vm2498, %v2493, -inf
      %2581 = vmax.xlane.f32.xlu0 %v2580
      %v2582 = vpop.xlane.xlu0 %2581
      %v2583 = vsel %vm2498, %v2494, -inf
      %2584 = vmax.xlane.f32.xlu0 %v2583
      %v2585 = vpop.xlane.xlu0 %2584
      %v2586 = vsel %vm2498, %v2495, -inf
      %2587 = vmax.xlane.f32.xlu0 %v2586
      %v2588 = vpop.xlane.xlu0 %2587
      %v2589 = vsel %vm2498, %v2496, -inf
      %2590 = vmax.xlane.f32.xlu0 %v2589
      %v2591 = vpop.xlane.xlu0 %2590
      %v2592 = vsel %vm2498, %v2497, -inf
      %2593 = vmax.xlane.f32.xlu0 %v2592
      %v2594 = vpop.xlane.xlu0 %2593
      %v2595 = vsub.f32 %v2466, %v2501
      %v2596 = vsub.f32 %v2467, %v2504
      %v2597 = vsub.f32 %v2468, %v2507
      %v2598 = vsub.f32 %v2469, %v2510
      %v2599 = vsub.f32 %v2470, %v2513
      %v2600 = vsub.f32 %v2471, %v2516
      %v2601 = vsub.f32 %v2472, %v2519
      %v2602 = vsub.f32 %v2473, %v2522
      %v2603 = vsub.f32 %v2474, %v2525
      %v2604 = vsub.f32 %v2475, %v2528
      %v2605 = vsub.f32 %v2476, %v2531
      %v2606 = vsub.f32 %v2477, %v2534
      %v2607 = vsub.f32 %v2478, %v2537
      %v2608 = vsub.f32 %v2479, %v2540
      %v2609 = vsub.f32 %v2480, %v2543
      %v2610 = vsub.f32 %v2481, %v2546
      %v2611 = vsub.f32 %v2482, %v2549
      %v2612 = vsub.f32 %v2483, %v2552
      %v2613 = vsub.f32 %v2484, %v2555
      %v2614 = vsub.f32 %v2485, %v2558
      %v2615 = vsub.f32 %v2486, %v2561
      %v2616 = vsub.f32 %v2487, %v2564
      %v2617 = vsub.f32 %v2488, %v2567
      %v2618 = vsub.f32 %v2489, %v2570
      %v2619 = vsub.f32 %v2490, %v2573
      %v2620 = vsub.f32 %v2491, %v2576
      %v2621 = vsub.f32 %v2492, %v2579
      %v2622 = vsub.f32 %v2493, %v2582
      %v2623 = vsub.f32 %v2494, %v2585
      %v2624 = vsub.f32 %v2495, %v2588
      %v2625 = vsub.f32 %v2496, %v2591
      %v2626 = vsub.f32 %v2497, %v2594
      %v2627 = vmul.f32 %v2595, 1.442695
      %v2628 = vpow.pop %v2627
      %v2629 = vmul.f32 %v2596, 1.442695
      %v2630 = vpow.pop %v2629
      %v2631 = vmul.f32 %v2597, 1.442695
      %v2632 = vpow.pop %v2631
      %v2633 = vmul.f32 %v2598, 1.442695
      %v2634 = vpow.pop %v2633
      %v2635 = vmul.f32 %v2599, 1.442695
      %v2636 = vpow.pop %v2635
      %v2637 = vmul.f32 %v2600, 1.442695
      %v2638 = vpow.pop %v2637
      %v2639 = vmul.f32 %v2601, 1.442695
      %v2640 = vpow.pop %v2639
      %v2641 = vmul.f32 %v2602, 1.442695
      %v2642 = vpow.pop %v2641
      %v2643 = vmul.f32 %v2603, 1.442695
      %v2644 = vpow.pop %v2643
      %v2645 = vmul.f32 %v2604, 1.442695
      %v2646 = vpow.pop %v2645
      %v2647 = vmul.f32 %v2605, 1.442695
      %v2648 = vpow.pop %v2647
      %v2649 = vmul.f32 %v2606, 1.442695
      %v2650 = vpow.pop %v2649
      %v2651 = vmul.f32 %v2607, 1.442695
      %v2652 = vpow.pop %v2651
      %v2653 = vmul.f32 %v2608, 1.442695
      %v2654 = vpow.pop %v2653
      %v2655 = vmul.f32 %v2609, 1.442695
      %v2656 = vpow.pop %v2655
      %v2657 = vmul.f32 %v2610, 1.442695
      %v2658 = vpow.pop %v2657
      %v2659 = vmul.f32 %v2611, 1.442695
      %v2660 = vpow.pop %v2659
      %v2661 = vmul.f32 %v2612, 1.442695
      %v2662 = vpow.pop %v2661
      %v2663 = vmul.f32 %v2613, 1.442695
      %v2664 = vpow.pop %v2663
      %v2665 = vmul.f32 %v2614, 1.442695
      %v2666 = vpow.pop %v2665
      %v2667 = vmul.f32 %v2615, 1.442695
      %v2668 = vpow.pop %v2667
      %v2669 = vmul.f32 %v2616, 1.442695
      %v2670 = vpow.pop %v2669
      %v2671 = vmul.f32 %v2617, 1.442695
      %v2672 = vpow.pop %v2671
      %v2673 = vmul.f32 %v2618, 1.442695
      %v2674 = vpow.pop %v2673
      %v2675 = vmul.f32 %v2619, 1.442695
      %v2676 = vpow.pop %v2675
      %v2677 = vmul.f32 %v2620, 1.442695
      %v2678 = vpow.pop %v2677
      %v2679 = vmul.f32 %v2621, 1.442695
      %v2680 = vpow.pop %v2679
      %v2681 = vmul.f32 %v2622, 1.442695
      %v2682 = vpow.pop %v2681
      %v2683 = vmul.f32 %v2623, 1.442695
      %v2684 = vpow.pop %v2683
      %v2685 = vmul.f32 %v2624, 1.442695
      %v2686 = vpow.pop %v2685
      %v2687 = vmul.f32 %v2625, 1.442695
      %v2688 = vpow.pop %v2687
      %v2689 = vmul.f32 %v2626, 1.442695
      %v2690 = vpow.pop %v2689
      %v2691 = vsel %vm2498, %v2628, 0.0
      %2692 = vadd.xlane.f32.xlu0 %v2691
      %v2693 = vpop.xlane.xlu0 %2692
      %v2694 = vsel %vm2498, %v2630, 0.0
      %2695 = vadd.xlane.f32.xlu0 %v2694
      %v2696 = vpop.xlane.xlu0 %2695
      %v2697 = vsel %vm2498, %v2632, 0.0
      %2698 = vadd.xlane.f32.xlu0 %v2697
      %v2699 = vpop.xlane.xlu0 %2698
      %v2700 = vsel %vm2498, %v2634, 0.0
      %2701 = vadd.xlane.f32.xlu0 %v2700
      %v2702 = vpop.xlane.xlu0 %2701
      %v2703 = vsel %vm2498, %v2636, 0.0
      %2704 = vadd.xlane.f32.xlu0 %v2703
      %v2705 = vpop.xlane.xlu0 %2704
      %v2706 = vsel %vm2498, %v2638, 0.0
      %2707 = vadd.xlane.f32.xlu0 %v2706
      %v2708 = vpop.xlane.xlu0 %2707
      %v2709 = vsel %vm2498, %v2640, 0.0
      %2710 = vadd.xlane.f32.xlu0 %v2709
      %v2711 = vpop.xlane.xlu0 %2710
      %v2712 = vsel %vm2498, %v2642, 0.0
      %2713 = vadd.xlane.f32.xlu0 %v2712
      %v2714 = vpop.xlane.xlu0 %2713
      %v2715 = vsel %vm2498, %v2644, 0.0
      %2716 = vadd.xlane.f32.xlu0 %v2715
      %v2717 = vpop.xlane.xlu0 %2716
      %v2718 = vsel %vm2498, %v2646, 0.0
      %2719 = vadd.xlane.f32.xlu0 %v2718
      %v2720 = vpop.xlane.xlu0 %2719
      %v2721 = vsel %vm2498, %v2648, 0.0
      %2722 = vadd.xlane.f32.xlu0 %v2721
      %v2723 = vpop.xlane.xlu0 %2722
      %v2724 = vsel %vm2498, %v2650, 0.0
      %2725 = vadd.xlane.f32.xlu0 %v2724
      %v2726 = vpop.xlane.xlu0 %2725
      %v2727 = vsel %vm2498, %v2652, 0.0
      %2728 = vadd.xlane.f32.xlu0 %v2727
      %v2729 = vpop.xlane.xlu0 %2728
      %v2730 = vsel %vm2498, %v2654, 0.0
      %2731 = vadd.xlane.f32.xlu0 %v2730
      %v2732 = vpop.xlane.xlu0 %2731
      %v2733 = vsel %vm2498, %v2656, 0.0
      %2734 = vadd.xlane.f32.xlu0 %v2733
      %v2735 = vpop.xlane.xlu0 %2734
      %v2736 = vsel %vm2498, %v2658, 0.0
      %2737 = vadd.xlane.f32.xlu0 %v2736
      %v2738 = vpop.xlane.xlu0 %2737
      %v2739 = vsel %vm2498, %v2660, 0.0
      %2740 = vadd.xlane.f32.xlu0 %v2739
      %v2741 = vpop.xlane.xlu0 %2740
      %v2742 = vsel %vm2498, %v2662, 0.0
      %2743 = vadd.xlane.f32.xlu0 %v2742
      %v2744 = vpop.xlane.xlu0 %2743
      %v2745 = vsel %vm2498, %v2664, 0.0
      %2746 = vadd.xlane.f32.xlu0 %v2745
      %v2747 = vpop.xlane.xlu0 %2746
      %v2748 = vsel %vm2498, %v2666, 0.0
      %2749 = vadd.xlane.f32.xlu0 %v2748
      %v2750 = vpop.xlane.xlu0 %2749
      %v2751 = vsel %vm2498, %v2668, 0.0
      %2752 = vadd.xlane.f32.xlu0 %v2751
      %v2753 = vpop.xlane.xlu0 %2752
      %v2754 = vsel %vm2498, %v2670, 0.0
      %2755 = vadd.xlane.f32.xlu0 %v2754
      %v2756 = vpop.xlane.xlu0 %2755
      %v2757 = vsel %vm2498, %v2672, 0.0
      %2758 = vadd.xlane.f32.xlu0 %v2757
      %v2759 = vpop.xlane.xlu0 %2758
      %v2760 = vsel %vm2498, %v2674, 0.0
      %2761 = vadd.xlane.f32.xlu0 %v2760
      %v2762 = vpop.xlane.xlu0 %2761
      %v2763 = vsel %vm2498, %v2676, 0.0
      %2764 = vadd.xlane.f32.xlu0 %v2763
      %v2765 = vpop.xlane.xlu0 %2764
      %v2766 = vsel %vm2498, %v2678, 0.0
      %2767 = vadd.xlane.f32.xlu0 %v2766
      %v2768 = vpop.xlane.xlu0 %2767
      %v2769 = vsel %vm2498, %v2680, 0.0
      %2770 = vadd.xlane.f32.xlu0 %v2769
      %v2771 = vpop.xlane.xlu0 %2770
      %v2772 = vsel %vm2498, %v2682, 0.0
      %2773 = vadd.xlane.f32.xlu0 %v2772
      %v2774 = vpop.xlane.xlu0 %2773
      %v2775 = vsel %vm2498, %v2684, 0.0
      %2776 = vadd.xlane.f32.xlu0 %v2775
      %v2777 = vpop.xlane.xlu0 %2776
      %v2778 = vsel %vm2498, %v2686, 0.0
      %2779 = vadd.xlane.f32.xlu0 %v2778
      %v2780 = vpop.xlane.xlu0 %2779
      %v2781 = vsel %vm2498, %v2688, 0.0
      %2782 = vadd.xlane.f32.xlu0 %v2781
      %v2783 = vpop.xlane.xlu0 %2782
      %v2784 = vsel %vm2498, %v2690, 0.0
      %2785 = vadd.xlane.f32.xlu0 %v2784
      %v2786 = vpop.xlane.xlu0 %2785
      %v2787 = vrcp.pop %v2693
      %v2788 = vmul.f32 %v2628, %v2787
      %v2789 = vrcp.pop %v2696
      %v2790 = vmul.f32 %v2630, %v2789
      %v2791 = vrcp.pop %v2699
      %v2792 = vmul.f32 %v2632, %v2791
      %v2793 = vrcp.pop %v2702
      %v2794 = vmul.f32 %v2634, %v2793
      %v2795 = vrcp.pop %v2705
      %v2796 = vmul.f32 %v2636, %v2795
      %v2797 = vrcp.pop %v2708
      %v2798 = vmul.f32 %v2638, %v2797
      %v2799 = vrcp.pop %v2711
      %v2800 = vmul.f32 %v2640, %v2799
      %v2801 = vrcp.pop %v2714
      %v2802 = vmul.f32 %v2642, %v2801
      %v2803 = vrcp.pop %v2717
      %v2804 = vmul.f32 %v2644, %v2803
      %v2805 = vrcp.pop %v2720
      %v2806 = vmul.f32 %v2646, %v2805
      %v2807 = vrcp.pop %v2723
      %v2808 = vmul.f32 %v2648, %v2807
      %v2809 = vrcp.pop %v2726
      %v2810 = vmul.f32 %v2650, %v2809
      %v2811 = vrcp.pop %v2729
      %v2812 = vmul.f32 %v2652, %v2811
      %v2813 = vrcp.pop %v2732
      %v2814 = vmul.f32 %v2654, %v2813
      %v2815 = vrcp.pop %v2735
      %v2816 = vmul.f32 %v2656, %v2815
      %v2817 = vrcp.pop %v2738
      %v2818 = vmul.f32 %v2658, %v2817
      %v2819 = vrcp.pop %v2741
      %v2820 = vmul.f32 %v2660, %v2819
      %v2821 = vrcp.pop %v2744
      %v2822 = vmul.f32 %v2662, %v2821
      %v2823 = vrcp.pop %v2747
      %v2824 = vmul.f32 %v2664, %v2823
      %v2825 = vrcp.pop %v2750
      %v2826 = vmul.f32 %v2666, %v2825
      %v2827 = vrcp.pop %v2753
      %v2828 = vmul.f32 %v2668, %v2827
      %v2829 = vrcp.pop %v2756
      %v2830 = vmul.f32 %v2670, %v2829
      %v2831 = vrcp.pop %v2759
      %v2832 = vmul.f32 %v2672, %v2831
      %v2833 = vrcp.pop %v2762
      %v2834 = vmul.f32 %v2674, %v2833
      %v2835 = vrcp.pop %v2765
      %v2836 = vmul.f32 %v2676, %v2835
      %v2837 = vrcp.pop %v2768
      %v2838 = vmul.f32 %v2678, %v2837
      %v2839 = vrcp.pop %v2771
      %v2840 = vmul.f32 %v2680, %v2839
      %v2841 = vrcp.pop %v2774
      %v2842 = vmul.f32 %v2682, %v2841
      %v2843 = vrcp.pop %v2777
      %v2844 = vmul.f32 %v2684, %v2843
      %v2845 = vrcp.pop %v2780
      %v2846 = vmul.f32 %v2686, %v2845
      %v2847 = vrcp.pop %v2783
      %v2848 = vmul.f32 %v2688, %v2847
      %v2849 = vrcp.pop %v2786
      %v2850 = vmul.f32 %v2690, %v2849
      %v2852 = vsel %vm2498, %v2788, 0
      %v2855 = vsel %vm2498, %v2790, 0
      %v2858 = vsel %vm2498, %v2792, 0
      %v2861 = vsel %vm2498, %v2794, 0
      %v2864 = vsel %vm2498, %v2796, 0
      %v2867 = vsel %vm2498, %v2798, 0
      %v2870 = vsel %vm2498, %v2800, 0
      %v2873 = vsel %vm2498, %v2802, 0
      %2875 = vmatprep.subr.mxu0 0.0
      %2876 = vmatpush1.msra.mxu0 %v1655
      %2877 = vmatprep.subr.mxu0 0.0
      %2878 = vmatpush1.msra.mxu0 %v1660
      %2879 = vmatprep.subr.mxu0 0.0
      %2880 = vmatpush1.msra.mxu0 %v1665
      %2881 = vmatprep.subr.mxu0 0.0
      %2882 = vmatpush1.msra.mxu0 %v1670
      %2883 = vmatprep.subr.mxu0 0.0
      %2884 = vmatpush1.msra.mxu0 %v1675
      %2885 = vmatprep.subr.mxu0 0.0
      %2886 = vmatpush1.msra.mxu0 %v1680
      %2887 = vmatprep.subr.mxu0 0.0
      %2888 = vmatpush1.msra.mxu0 %v1685
      %2889 = vmatprep.subr.mxu0 0.0
      %2890 = vmatpush1.msra.mxu0 %v1690
      %2891 = vmatprep.subr.mxu0 0.0
      %2892 = vmatpush1.msra.mxu0 0.0
      %2893 = vmatprep.subr.mxu0 0.0
      %2894 = vmatpush1.msra.mxu0 0.0
      %2895 = vmatprep.subr.mxu0 0.0
      %2896 = vmatpush1.msra.mxu0 0.0
      %2897 = vmatprep.subr.mxu0 0.0
      %2898 = vmatpush1.msra.mxu0 0.0
      %2899 = vmatprep.subr.mxu0 0.0
      %2900 = vmatpush1.msra.mxu0 0.0
      %2901 = vmatprep.subr.mxu0 0.0
      %2902 = vmatpush1.msra.mxu0 0.0
      %2903 = vmatprep.subr.mxu0 0.0
      %2904 = vmatpush1.msra.mxu0 0.0
      %2905 = vmatprep.subr.mxu0 0.0
      %2906 = vmatpush1.msra.mxu0 0.0
      %2907 = vmatprep.subr.mxu0 0.0
      %2908 = vmatpush1.msra.mxu0 0.0
      %2909 = vmatprep.subr.mxu0 0.0
      %2910 = vmatpush1.msra.mxu0 0.0
      %2911 = vmatprep.subr.mxu0 0.0
      %2912 = vmatpush1.msra.mxu0 0.0
      %2913 = vmatprep.subr.mxu0 0.0
      %2914 = vmatpush1.msra.mxu0 0.0
      %2915 = vmatprep.subr.mxu0 0.0
      %2916 = vmatpush1.msra.mxu0 0.0
      %2917 = vmatprep.subr.mxu0 0.0
      %2918 = vmatpush1.msra.mxu0 0.0
      %2919 = vmatprep.subr.mxu0 0.0
      %2920 = vmatpush1.msra.mxu0 0.0
      %2921 = vmatprep.subr.mxu0 0.0
      %2922 = vmatpush1.msra.mxu0 0.0
      %2923 = vmatprep.subr.mxu0 0.0
      %2924 = vmatpush1.msra.mxu0 0.0
      %2925 = vmatprep.subr.mxu0 0.0
      %2926 = vmatpush1.msra.mxu0 0.0
      %2927 = vmatprep.subr.mxu0 0.0
      %2928 = vmatpush1.msra.mxu0 0.0
      %2929 = vmatprep.subr.mxu0 0.0
      %2930 = vmatpush1.msra.mxu0 0.0
      %2931 = vmatprep.subr.mxu0 0.0
      %2932 = vmatpush1.msra.mxu0 0.0
      %2933 = vmatprep.subr.mxu0 0.0
      %2934 = vmatpush1.msra.mxu0 0.0
      %2935 = vmatprep.subr.mxu0 0.0
      %2936 = vmatpush1.msra.mxu0 0.0
      %2937 = vmatprep.subr.mxu0 0.0
      %2938 = vmatpush1.msra.mxu0 0.0
      %2939 = vmatprep.mubr.f32.mxu0 0.0
      %2940 = vmatmul.mubr.f32.gmra.mrb[0].mxu0 %v2852
      %v2941 = vpop.f32.mrb[0].mxu0
      %v2942 = vadd.f32 0.0, %v2941
      %v2943 = vpop.f32.mrb[0].mxu0
      %2944 = vmatprep.mubr.f32.mxu0 0.0
      %2945 = vmatmul.mubr.f32.gmra.mrb[0].mxu0 %v2855
      %v2946 = vpop.f32.mrb[0].mxu0
      %v2947 = vadd.f32 0.0, %v2946
      %v2948 = vpop.f32.mrb[0].mxu0
      %2949 = vmatprep.mubr.f32.mxu0 0.0
      %2950 = vmatmul.mubr.f32.gmra.mrb[0].mxu0 %v2858
      %v2951 = vpop.f32.mrb[0].mxu0
      %v2952 = vadd.f32 0.0, %v2951
      %v2953 = vpop.f32.mrb[0].mxu0
      %2954 = vmatprep.mubr.f32.mxu0 0.0
      %2955 = vmatmul.mubr.f32.gmra.mrb[0].mxu0 %v2861
      %v2956 = vpop.f32.mrb[0].mxu0
      %v2957 = vadd.f32 0.0, %v2956
      %v2958 = vpop.f32.mrb[0].mxu0
      %2959 = vmatprep.mubr.f32.mxu0 0.0
      %2960 = vmatmul.mubr.f32.gmra.mrb[0].mxu0 %v2864
      %v2961 = vpop.f32.mrb[0].mxu0
      %v2962 = vadd.f32 0.0, %v2961
      %v2963 = vpop.f32.mrb[0].mxu0
      %2964 = vmatprep.mubr.f32.mxu0 0.0
      %2965 = vmatmul.mubr.f32.gmra.mrb[0].mxu0 %v2867
      %v2966 = vpop.f32.mrb[0].mxu0
      %v2967 = vadd.f32 0.0, %v2966
      %v2968 = vpop.f32.mrb[0].mxu0
      %2969 = vmatprep.mubr.f32.mxu0 0.0
      %2970 = vmatmul.mubr.f32.gmra.mrb[0].mxu0 %v2870
      %v2971 = vpop.f32.mrb[0].mxu0
      %v2972 = vadd.f32 0.0, %v2971
      %v2973 = vpop.f32.mrb[0].mxu0
      %2974 = vmatprep.mubr.f32.mxu0 0.0
      %2975 = vmatmul.mubr.f32.gmra.mrb[0].mxu0 %v2873
      %v2976 = vpop.f32.mrb[0].mxu0
      %v2977 = vadd.f32 0.0, %v2976
      %v2978 = vpop.f32.mrb[0].mxu0
      %2979 = vdwg.mxu0
      %v2981 = vsel %vm2498, %v2804, 0
      %v2984 = vsel %vm2498, %v2806, 0
      %v2987 = vsel %vm2498, %v2808, 0
      %v2990 = vsel %vm2498, %v2810, 0
      %v2993 = vsel %vm2498, %v2812, 0
      %v2996 = vsel %vm2498, %v2814, 0
      %v2999 = vsel %vm2498, %v2816, 0
      %v3002 = vsel %vm2498, %v2818, 0
      %3004 = vmatprep.subr.mxu0 0.0
      %3005 = vmatpush1.msra.mxu0 %v1695
      %3006 = vmatprep.subr.mxu0 0.0
      %3007 = vmatpush1.msra.mxu0 %v1700
      %3008 = vmatprep.subr.mxu0 0.0
      %3009 = vmatpush1.msra.mxu0 %v1705
      %3010 = vmatprep.subr.mxu0 0.0
      %3011 = vmatpush1.msra.mxu0 %v1710
      %3012 = vmatprep.subr.mxu0 0.0
      %3013 = vmatpush1.msra.mxu0 %v1715
      %3014 = vmatprep.subr.mxu0 0.0
      %3015 = vmatpush1.msra.mxu0 %v1720
      %3016 = vmatprep.subr.mxu0 0.0
      %3017 = vmatpush1.msra.mxu0 %v1725
      %3018 = vmatprep.subr.mxu0 0.0
      %3019 = vmatpush1.msra.mxu0 %v1730
      %3020 = vmatprep.subr.mxu0 0.0
      %3021 = vmatpush1.msra.mxu0 0.0
      %3022 = vmatprep.subr.mxu0 0.0
      %3023 = vmatpush1.msra.mxu0 0.0
      %3024 = vmatprep.subr.mxu0 0.0
      %3025 = vmatpush1.msra.mxu0 0.0
      %3026 = vmatprep.subr.mxu0 0.0
      %3027 = vmatpush1.msra.mxu0 0.0
      %3028 = vmatprep.subr.mxu0 0.0
      %3029 = vmatpush1.msra.mxu0 0.0
      %3030 = vmatprep.subr.mxu0 0.0
      %3031 = vmatpush1.msra.mxu0 0.0
      %3032 = vmatprep.subr.mxu0 0.0
      %3033 = vmatpush1.msra.mxu0 0.0
      %3034 = vmatprep.subr.mxu0 0.0
      %3035 = vmatpush1.msra.mxu0 0.0
      %3036 = vmatprep.subr.mxu0 0.0
      %3037 = vmatpush1.msra.mxu0 0.0
      %3038 = vmatprep.subr.mxu0 0.0
      %3039 = vmatpush1.msra.mxu0 0.0
      %3040 = vmatprep.subr.mxu0 0.0
      %3041 = vmatpush1.msra.mxu0 0.0
      %3042 = vmatprep.subr.mxu0 0.0
      %3043 = vmatpush1.msra.mxu0 0.0
      %3044 = vmatprep.subr.mxu0 0.0
      %3045 = vmatpush1.msra.mxu0 0.0
      %3046 = vmatprep.subr.mxu0 0.0
      %3047 = vmatpush1.msra.mxu0 0.0
      %3048 = vmatprep.subr.mxu0 0.0
      %3049 = vmatpush1.msra.mxu0 0.0
      %3050 = vmatprep.subr.mxu0 0.0
      %3051 = vmatpush1.msra.mxu0 0.0
      %3052 = vmatprep.subr.mxu0 0.0
      %3053 = vmatpush1.msra.mxu0 0.0
      %3054 = vmatprep.subr.mxu0 0.0
      %3055 = vmatpush1.msra.mxu0 0.0
      %3056 = vmatprep.subr.mxu0 0.0
      %3057 = vmatpush1.msra.mxu0 0.0
      %3058 = vmatprep.subr.mxu0 0.0
      %3059 = vmatpush1.msra.mxu0 0.0
      %3060 = vmatprep.subr.mxu0 0.0
      %3061 = vmatpush1.msra.mxu0 0.0
      %3062 = vmatprep.subr.mxu0 0.0
      %3063 = vmatpush1.msra.mxu0 0.0
      %3064 = vmatprep.subr.mxu0 0.0
      %3065 = vmatpush1.msra.mxu0 0.0
      %3066 = vmatprep.subr.mxu0 0.0
      %3067 = vmatpush1.msra.mxu0 0.0
      %3068 = vmatprep.mubr.f32.mxu0 0.0
      %3069 = vmatmul.mubr.f32.gmra.mrb[0].mxu0 %v2981
      %v3070 = vpop.f32.mrb[0].mxu0
      %v3071 = vadd.f32 0.0, %v3070
      %v3072 = vpop.f32.mrb[0].mxu0
      %3073 = vmatprep.mubr.f32.mxu0 0.0
      %3074 = vmatmul.mubr.f32.gmra.mrb[0].mxu0 %v2984
      %v3075 = vpop.f32.mrb[0].mxu0
      %v3076 = vadd.f32 0.0, %v3075
      %v3077 = vpop.f32.mrb[0].mxu0
      %3078 = vmatprep.mubr.f32.mxu0 0.0
      %3079 = vmatmul.mubr.f32.gmra.mrb[0].mxu0 %v2987
      %v3080 = vpop.f32.mrb[0].mxu0
      %v3081 = vadd.f32 0.0, %v3080
      %v3082 = vpop.f32.mrb[0].mxu0
      %3083 = vmatprep.mubr.f32.mxu0 0.0
      %3084 = vmatmul.mubr.f32.gmra.mrb[0].mxu0 %v2990
      %v3085 = vpop.f32.mrb[0].mxu0
      %v3086 = vadd.f32 0.0, %v3085
      %v3087 = vpop.f32.mrb[0].mxu0
      %3088 = vmatprep.mubr.f32.mxu0 0.0
      %3089 = vmatmul.mubr.f32.gmra.mrb[0].mxu0 %v2993
      %v3090 = vpop.f32.mrb[0].mxu0
      %v3091 = vadd.f32 0.0, %v3090
      %v3092 = vpop.f32.mrb[0].mxu0
      %3093 = vmatprep.mubr.f32.mxu0 0.0
      %3094 = vmatmul.mubr.f32.gmra.mrb[0].mxu0 %v2996
      %v3095 = vpop.f32.mrb[0].mxu0
      %v3096 = vadd.f32 0.0, %v3095
      %v3097 = vpop.f32.mrb[0].mxu0
      %3098 = vmatprep.mubr.f32.mxu0 0.0
      %3099 = vmatmul.mubr.f32.gmra.mrb[0].mxu0 %v2999
      %v3100 = vpop.f32.mrb[0].mxu0
      %v3101 = vadd.f32 0.0, %v3100
      %v3102 = vpop.f32.mrb[0].mxu0
      %3103 = vmatprep.mubr.f32.mxu0 0.0
      %3104 = vmatmul.mubr.f32.gmra.mrb[0].mxu0 %v3002
      %v3105 = vpop.f32.mrb[0].mxu0
      %v3106 = vadd.f32 0.0, %v3105
      %v3107 = vpop.f32.mrb[0].mxu0
      %3108 = vdwg.mxu0
      %v3110 = vsel %vm2498, %v2820, 0
      %v3113 = vsel %vm2498, %v2822, 0
      %v3116 = vsel %vm2498, %v2824, 0
      %v3119 = vsel %vm2498, %v2826, 0
      %v3122 = vsel %vm2498, %v2828, 0
      %v3125 = vsel %vm2498, %v2830, 0
      %v3128 = vsel %vm2498, %v2832, 0
      %v3131 = vsel %vm2498, %v2834, 0
      %3133 = vmatprep.subr.mxu0 0.0
      %3134 = vmatpush1.msra.mxu0 %v1735
      %3135 = vmatprep.subr.mxu0 0.0
      %3136 = vmatpush1.msra.mxu0 %v1740
      %3137 = vmatprep.subr.mxu0 0.0
      %3138 = vmatpush1.msra.mxu0 %v1745
      %3139 = vmatprep.subr.mxu0 0.0
      %3140 = vmatpush1.msra.mxu0 %v1750
      %3141 = vmatprep.subr.mxu0 0.0
      %3142 = vmatpush1.msra.mxu0 %v1755
      %3143 = vmatprep.subr.mxu0 0.0
      %3144 = vmatpush1.msra.mxu0 %v1760
      %3145 = vmatprep.subr.mxu0 0.0
      %3146 = vmatpush1.msra.mxu0 %v1765
      %3147 = vmatprep.subr.mxu0 0.0
      %3148 = vmatpush1.msra.mxu0 %v1770
      %3149 = vmatprep.subr.mxu0 0.0
      %3150 = vmatpush1.msra.mxu0 0.0
      %3151 = vmatprep.subr.mxu0 0.0
      %3152 = vmatpush1.msra.mxu0 0.0
      %3153 = vmatprep.subr.mxu0 0.0
      %3154 = vmatpush1.msra.mxu0 0.0
      %3155 = vmatprep.subr.mxu0 0.0
      %3156 = vmatpush1.msra.mxu0 0.0
      %3157 = vmatprep.subr.mxu0 0.0
      %3158 = vmatpush1.msra.mxu0 0.0
      %3159 = vmatprep.subr.mxu0 0.0
      %3160 = vmatpush1.msra.mxu0 0.0
      %3161 = vmatprep.subr.mxu0 0.0
      %3162 = vmatpush1.msra.mxu0 0.0
      %3163 = vmatprep.subr.mxu0 0.0
      %3164 = vmatpush1.msra.mxu0 0.0
      %3165 = vmatprep.subr.mxu0 0.0
      %3166 = vmatpush1.msra.mxu0 0.0
      %3167 = vmatprep.subr.mxu0 0.0
      %3168 = vmatpush1.msra.mxu0 0.0
      %3169 = vmatprep.subr.mxu0 0.0
      %3170 = vmatpush1.msra.mxu0 0.0
      %3171 = vmatprep.subr.mxu0 0.0
      %3172 = vmatpush1.msra.mxu0 0.0
      %3173 = vmatprep.subr.mxu0 0.0
      %3174 = vmatpush1.msra.mxu0 0.0
      %3175 = vmatprep.subr.mxu0 0.0
      %3176 = vmatpush1.msra.mxu0 0.0
      %3177 = vmatprep.subr.mxu0 0.0
      %3178 = vmatpush1.msra.mxu0 0.0
      %3179 = vmatprep.subr.mxu0 0.0
      %3180 = vmatpush1.msra.mxu0 0.0
      %3181 = vmatprep.subr.mxu0 0.0
      %3182 = vmatpush1.msra.mxu0 0.0
      %3183 = vmatprep.subr.mxu0 0.0
      %3184 = vmatpush1.msra.mxu0 0.0
      %3185 = vmatprep.subr.mxu0 0.0
      %3186 = vmatpush1.msra.mxu0 0.0
      %3187 = vmatprep.subr.mxu0 0.0
      %3188 = vmatpush1.msra.mxu0 0.0
      %3189 = vmatprep.subr.mxu0 0.0
      %3190 = vmatpush1.msra.mxu0 0.0
      %3191 = vmatprep.subr.mxu0 0.0
      %3192 = vmatpush1.msra.mxu0 0.0
      %3193 = vmatprep.subr.mxu0 0.0
      %3194 = vmatpush1.msra.mxu0 0.0
      %3195 = vmatprep.subr.mxu0 0.0
      %3196 = vmatpush1.msra.mxu0 0.0
      %3197 = vmatprep.mubr.f32.mxu0 0.0
      %3198 = vmatmul.mubr.f32.gmra.mrb[0].mxu0 %v3110
      %v3199 = vpop.f32.mrb[0].mxu0
      %v3200 = vadd.f32 0.0, %v3199
      %v3201 = vpop.f32.mrb[0].mxu0
      %3202 = vmatprep.mubr.f32.mxu0 0.0
      %3203 = vmatmul.mubr.f32.gmra.mrb[0].mxu0 %v3113
      %v3204 = vpop.f32.mrb[0].mxu0
      %v3205 = vadd.f32 0.0, %v3204
      %v3206 = vpop.f32.mrb[0].mxu0
      %3207 = vmatprep.mubr.f32.mxu0 0.0
      %3208 = vmatmul.mubr.f32.gmra.mrb[0].mxu0 %v3116
      %v3209 = vpop.f32.mrb[0].mxu0
      %v3210 = vadd.f32 0.0, %v3209
      %v3211 = vpop.f32.mrb[0].mxu0
      %3212 = vmatprep.mubr.f32.mxu0 0.0
      %3213 = vmatmul.mubr.f32.gmra.mrb[0].mxu0 %v3119
      %v3214 = vpop.f32.mrb[0].mxu0
      %v3215 = vadd.f32 0.0, %v3214
      %v3216 = vpop.f32.mrb[0].mxu0
      %3217 = vmatprep.mubr.f32.mxu0 0.0
      %3218 = vmatmul.mubr.f32.gmra.mrb[0].mxu0 %v3122
      %v3219 = vpop.f32.mrb[0].mxu0
      %v3220 = vadd.f32 0.0, %v3219
      %v3221 = vpop.f32.mrb[0].mxu0
      %3222 = vmatprep.mubr.f32.mxu0 0.0
      %3223 = vmatmul.mubr.f32.gmra.mrb[0].mxu0 %v3125
      %v3224 = vpop.f32.mrb[0].mxu0
      %v3225 = vadd.f32 0.0, %v3224
      %v3226 = vpop.f32.mrb[0].mxu0
      %3227 = vmatprep.mubr.f32.mxu0 0.0
      %3228 = vmatmul.mubr.f32.gmra.mrb[0].mxu0 %v3128
      %v3229 = vpop.f32.mrb[0].mxu0
      %v3230 = vadd.f32 0.0, %v3229
      %v3231 = vpop.f32.mrb[0].mxu0
      %3232 = vmatprep.mubr.f32.mxu0 0.0
      %3233 = vmatmul.mubr.f32.gmra.mrb[0].mxu0 %v3131
      %v3234 = vpop.f32.mrb[0].mxu0
      %v3235 = vadd.f32 0.0, %v3234
      %v3236 = vpop.f32.mrb[0].mxu0
      %3237 = vdwg.mxu0
      %v3239 = vsel %vm2498, %v2836, 0
      %v3242 = vsel %vm2498, %v2838, 0
      %v3245 = vsel %vm2498, %v2840, 0
      %v3248 = vsel %vm2498, %v2842, 0
      %v3251 = vsel %vm2498, %v2844, 0
      %v3254 = vsel %vm2498, %v2846, 0
      %v3257 = vsel %vm2498, %v2848, 0
      %v3260 = vsel %vm2498, %v2850, 0
      %3262 = vmatprep.subr.mxu0 0.0
      %3263 = vmatpush1.msra.mxu0 %v1775
      %3264 = vmatprep.subr.mxu0 0.0
      %3265 = vmatpush1.msra.mxu0 %v1780
      %3266 = vmatprep.subr.mxu0 0.0
      %3267 = vmatpush1.msra.mxu0 %v1785
      %3268 = vmatprep.subr.mxu0 0.0
      %3269 = vmatpush1.msra.mxu0 %v1790
      %3270 = vmatprep.subr.mxu0 0.0
      %3271 = vmatpush1.msra.mxu0 %v1795
      %3272 = vmatprep.subr.mxu0 0.0
      %3273 = vmatpush1.msra.mxu0 %v1800
      %3274 = vmatprep.subr.mxu0 0.0
      %3275 = vmatpush1.msra.mxu0 %v1805
      %3276 = vmatprep.subr.mxu0 0.0
      %3277 = vmatpush1.msra.mxu0 %v1810
      %3278 = vmatprep.subr.mxu0 0.0
      %3279 = vmatpush1.msra.mxu0 0.0
      %3280 = vmatprep.subr.mxu0 0.0
      %3281 = vmatpush1.msra.mxu0 0.0
      %3282 = vmatprep.subr.mxu0 0.0
      %3283 = vmatpush1.msra.mxu0 0.0
      %3284 = vmatprep.subr.mxu0 0.0
      %3285 = vmatpush1.msra.mxu0 0.0
      %3286 = vmatprep.subr.mxu0 0.0
      %3287 = vmatpush1.msra.mxu0 0.0
      %3288 = vmatprep.subr.mxu0 0.0
      %3289 = vmatpush1.msra.mxu0 0.0
      %3290 = vmatprep.subr.mxu0 0.0
      %3291 = vmatpush1.msra.mxu0 0.0
      %3292 = vmatprep.subr.mxu0 0.0
      %3293 = vmatpush1.msra.mxu0 0.0
      %3294 = vmatprep.subr.mxu0 0.0
      %3295 = vmatpush1.msra.mxu0 0.0
      %3296 = vmatprep.subr.mxu0 0.0
      %3297 = vmatpush1.msra.mxu0 0.0
      %3298 = vmatprep.subr.mxu0 0.0
      %3299 = vmatpush1.msra.mxu0 0.0
      %3300 = vmatprep.subr.mxu0 0.0
      %3301 = vmatpush1.msra.mxu0 0.0
      %3302 = vmatprep.subr.mxu0 0.0
      %3303 = vmatpush1.msra.mxu0 0.0
      %3304 = vmatprep.subr.mxu0 0.0
      %3305 = vmatpush1.msra.mxu0 0.0
      %3306 = vmatprep.subr.mxu0 0.0
      %3307 = vmatpush1.msra.mxu0 0.0
      %3308 = vmatprep.subr.mxu0 0.0
      %3309 = vmatpush1.msra.mxu0 0.0
      %3310 = vmatprep.subr.mxu0 0.0
      %3311 = vmatpush1.msra.mxu0 0.0
      %3312 = vmatprep.subr.mxu0 0.0
      %3313 = vmatpush1.msra.mxu0 0.0
      %3314 = vmatprep.subr.mxu0 0.0
      %3315 = vmatpush1.msra.mxu0 0.0
      %3316 = vmatprep.subr.mxu0 0.0
      %3317 = vmatpush1.msra.mxu0 0.0
      %3318 = vmatprep.subr.mxu0 0.0
      %3319 = vmatpush1.msra.mxu0 0.0
      %3320 = vmatprep.subr.mxu0 0.0
      %3321 = vmatpush1.msra.mxu0 0.0
      %3322 = vmatprep.subr.mxu0 0.0
      %3323 = vmatpush1.msra.mxu0 0.0
      %3324 = vmatprep.subr.mxu0 0.0
      %3325 = vmatpush1.msra.mxu0 0.0
      %3326 = vmatprep.mubr.f32.mxu0 0.0
      %3327 = vmatmul.mubr.f32.gmra.mrb[0].mxu0 %v3239
      %v3328 = vpop.f32.mrb[0].mxu0
      %v3329 = vadd.f32 0.0, %v3328
      %v3330 = vpop.f32.mrb[0].mxu0
      %3331 = vmatprep.mubr.f32.mxu0 0.0
      %3332 = vmatmul.mubr.f32.gmra.mrb[0].mxu0 %v3242
      %v3333 = vpop.f32.mrb[0].mxu0
      %v3334 = vadd.f32 0.0, %v3333
      %v3335 = vpop.f32.mrb[0].mxu0
      %3336 = vmatprep.mubr.f32.mxu0 0.0
      %3337 = vmatmul.mubr.f32.gmra.mrb[0].mxu0 %v3245
      %v3338 = vpop.f32.mrb[0].mxu0
      %v3339 = vadd.f32 0.0, %v3338
      %v3340 = vpop.f32.mrb[0].mxu0
      %3341 = vmatprep.mubr.f32.mxu0 0.0
      %3342 = vmatmul.mubr.f32.gmra.mrb[0].mxu0 %v3248
      %v3343 = vpop.f32.mrb[0].mxu0
      %v3344 = vadd.f32 0.0, %v3343
      %v3345 = vpop.f32.mrb[0].mxu0
      %3346 = vmatprep.mubr.f32.mxu0 0.0
      %3347 = vmatmul.mubr.f32.gmra.mrb[0].mxu0 %v3251
      %v3348 = vpop.f32.mrb[0].mxu0
      %v3349 = vadd.f32 0.0, %v3348
      %v3350 = vpop.f32.mrb[0].mxu0
      %3351 = vmatprep.mubr.f32.mxu0 0.0
      %3352 = vmatmul.mubr.f32.gmra.mrb[0].mxu0 %v3254
      %v3353 = vpop.f32.mrb[0].mxu0
      %v3354 = vadd.f32 0.0, %v3353
      %v3355 = vpop.f32.mrb[0].mxu0
      %3356 = vmatprep.mubr.f32.mxu0 0.0
      %3357 = vmatmul.mubr.f32.gmra.mrb[0].mxu0 %v3257
      %v3358 = vpop.f32.mrb[0].mxu0
      %v3359 = vadd.f32 0.0, %v3358
      %v3360 = vpop.f32.mrb[0].mxu0
      %3361 = vmatprep.mubr.f32.mxu0 0.0
      %3362 = vmatmul.mubr.f32.gmra.mrb[0].mxu0 %v3260
      %v3363 = vpop.f32.mrb[0].mxu0
      %v3364 = vadd.f32 0.0, %v3363
      %v3365 = vpop.f32.mrb[0].mxu0
      %3366 = vdwg.mxu0
      %v3367 = vld [vmem:[%s9] sm:$0xff]
      %v3368 = vld [vmem:[%s9 + $0x8] sm:$0xff]
      %s3369 = scalar_lea.vmem %s3, 32
      %v3370 = vld [vmem:[%s3369] sm:$0xff]
      %v3371 = vld [vmem:[%s3369 + $0x8] sm:$0xff]
      %v3372 = vld [vmem:[%s3369 + $0x10] sm:$0xff]
      %v3373 = vld [vmem:[%s3369 + $0x18] sm:$0xff]
      %s3374 = scalar_lea.vmem %s4, 1
      %v3375 = vld [vmem:[%s3374] sm:$0x1]
      %v3377 = vlaneseq
      %v3378 = vshrl.u32 %v3377, 7
      %v3379 = vsub.s32 0, %v3378
      %v3380 = vrot.slane %v3375, %v3379
      %3382 = vmatprep.subr.mxu0 0.0
      %3383 = vmatpush1.msra.mxu0 %v3370
      %3384 = vmatprep.subr.mxu0 0.0
      %3385 = vmatpush1.msra.mxu0 %v3371
      %3386 = vmatprep.subr.mxu0 0.0
      %3387 = vmatpush1.msra.mxu0 %v3372
      %3388 = vmatprep.subr.mxu0 0.0
      %3389 = vmatpush1.msra.mxu0 %v3373
      %3390 = vmatprep.subr.mxu0 0.0
      %3391 = vmatpush1.msra.mxu0 0.0
      %3392 = vmatprep.subr.mxu0 0.0
      %3393 = vmatpush1.msra.mxu0 0.0
      %3394 = vmatprep.subr.mxu0 0.0
      %3395 = vmatpush1.msra.mxu0 0.0
      %3396 = vmatprep.subr.mxu0 0.0
      %3397 = vmatpush1.msra.mxu0 0.0
      %3398 = vmatprep.subr.mxu0 0.0
      %3399 = vmatpush1.msra.mxu0 0.0
      %3400 = vmatprep.subr.mxu0 0.0
      %3401 = vmatpush1.msra.mxu0 0.0
      %3402 = vmatprep.subr.mxu0 0.0
      %3403 = vmatpush1.msra.mxu0 0.0
      %3404 = vmatprep.subr.mxu0 0.0
      %3405 = vmatpush1.msra.mxu0 0.0
      %3406 = vmatprep.subr.mxu0 0.0
      %3407 = vmatpush1.msra.mxu0 0.0
      %3408 = vmatprep.subr.mxu0 0.0
      %3409 = vmatpush1.msra.mxu0 0.0
      %3410 = vmatprep.subr.mxu0 0.0
      %3411 = vmatpush1.msra.mxu0 0.0
      %3412 = vmatprep.subr.mxu0 0.0
      %3413 = vmatpush1.msra.mxu0 0.0
      %3414 = vmatprep.subr.mxu0 0.0
      %3415 = vmatpush1.msra.mxu0 0.0
      %3416 = vmatprep.subr.mxu0 0.0
      %3417 = vmatpush1.msra.mxu0 0.0
      %3418 = vmatprep.subr.mxu0 0.0
      %3419 = vmatpush1.msra.mxu0 0.0
      %3420 = vmatprep.subr.mxu0 0.0
      %3421 = vmatpush1.msra.mxu0 0.0
      %3422 = vmatprep.subr.mxu0 0.0
      %3423 = vmatpush1.msra.mxu0 0.0
      %3424 = vmatprep.subr.mxu0 0.0
      %3425 = vmatpush1.msra.mxu0 0.0
      %3426 = vmatprep.subr.mxu0 0.0
      %3427 = vmatpush1.msra.mxu0 0.0
      %3428 = vmatprep.subr.mxu0 0.0
      %3429 = vmatpush1.msra.mxu0 0.0
      %3430 = vmatprep.subr.mxu0 0.0
      %3431 = vmatpush1.msra.mxu0 0.0
      %3432 = vmatprep.subr.mxu0 0.0
      %3433 = vmatpush1.msra.mxu0 0.0
      %3434 = vmatprep.subr.mxu0 0.0
      %3435 = vmatpush1.msra.mxu0 0.0
      %3436 = vmatprep.subr.mxu0 0.0
      %3437 = vmatpush1.msra.mxu0 0.0
      %3438 = vmatprep.subr.mxu0 0.0
      %3439 = vmatpush1.msra.mxu0 0.0
      %3440 = vmatprep.subr.mxu0 0.0
      %3441 = vmatpush1.msra.mxu0 0.0
      %3442 = vmatprep.subr.mxu0 0.0
      %3443 = vmatpush1.msra.mxu0 0.0
      %3444 = vmatprep.subr.mxu0 0.0
      %3445 = vmatpush1.msra.mxu0 0.0
      %3446 = vmatprep.mubr.f32.mxu0 0.0
      %3447 = vmatmul.mubr.f32.gmra.mrb[0].mxu0 %v1021
      %v3448 = vpop.f32.mrb[0].mxu0
      %v3449 = vadd.f32 %v3380, %v3448
      %v3450 = vpop.f32.mrb[0].mxu0
      %3451 = vmatprep.mubr.f32.mxu0 0.0
      %3452 = vmatmul.mubr.f32.gmra.mrb[0].mxu0 %v1024
      %v3453 = vpop.f32.mrb[0].mxu0
      %v3454 = vadd.f32 %v3380, %v3453
      %v3455 = vpop.f32.mrb[0].mxu0
      %3456 = vmatprep.mubr.f32.mxu0 0.0
      %3457 = vmatmul.mubr.f32.gmra.mrb[0].mxu0 %v1027
      %v3458 = vpop.f32.mrb[0].mxu0
      %v3459 = vadd.f32 %v3380, %v3458
      %v3460 = vpop.f32.mrb[0].mxu0
      %3461 = vmatprep.mubr.f32.mxu0 0.0
      %3462 = vmatmul.mubr.f32.gmra.mrb[0].mxu0 %v1030
      %v3463 = vpop.f32.mrb[0].mxu0
      %v3464 = vadd.f32 %v3380, %v3463
      %v3465 = vpop.f32.mrb[0].mxu0
      %3466 = vmatprep.mubr.f32.mxu0 0.0
      %3467 = vmatmul.mubr.f32.gmra.mrb[0].mxu0 %v1033
      %v3468 = vpop.f32.mrb[0].mxu0
      %v3469 = vadd.f32 %v3380, %v3468
      %v3470 = vpop.f32.mrb[0].mxu0
      %3471 = vmatprep.mubr.f32.mxu0 0.0
      %3472 = vmatmul.mubr.f32.gmra.mrb[0].mxu0 %v1036
      %v3473 = vpop.f32.mrb[0].mxu0
      %v3474 = vadd.f32 %v3380, %v3473
      %v3475 = vpop.f32.mrb[0].mxu0
      %3476 = vmatprep.mubr.f32.mxu0 0.0
      %3477 = vmatmul.mubr.f32.gmra.mrb[0].mxu0 %v1039
      %v3478 = vpop.f32.mrb[0].mxu0
      %v3479 = vadd.f32 %v3380, %v3478
      %v3480 = vpop.f32.mrb[0].mxu0
      %3481 = vmatprep.mubr.f32.mxu0 0.0
      %3482 = vmatmul.mubr.f32.gmra.mrb[0].mxu0 %v1042
      %v3483 = vpop.f32.mrb[0].mxu0
      %v3484 = vadd.f32 %v3380, %v3483
      %v3485 = vpop.f32.mrb[0].mxu0
      %3486 = vmatprep.mubr.f32.mxu0 0.0
      %3487 = vmatmul.mubr.f32.gmra.mrb[0].mxu0 %v1045
      %v3488 = vpop.f32.mrb[0].mxu0
      %v3489 = vadd.f32 %v3380, %v3488
      %v3490 = vpop.f32.mrb[0].mxu0
      %3491 = vmatprep.mubr.f32.mxu0 0.0
      %3492 = vmatmul.mubr.f32.gmra.mrb[0].mxu0 %v1048
      %v3493 = vpop.f32.mrb[0].mxu0
      %v3494 = vadd.f32 %v3380, %v3493
      %v3495 = vpop.f32.mrb[0].mxu0
      %3496 = vmatprep.mubr.f32.mxu0 0.0
      %3497 = vmatmul.mubr.f32.gmra.mrb[0].mxu0 %v1051
      %v3498 = vpop.f32.mrb[0].mxu0
      %v3499 = vadd.f32 %v3380, %v3498
      %v3500 = vpop.f32.mrb[0].mxu0
      %3501 = vmatprep.mubr.f32.mxu0 0.0
      %3502 = vmatmul.mubr.f32.gmra.mrb[0].mxu0 %v1054
      %v3503 = vpop.f32.mrb[0].mxu0
      %v3504 = vadd.f32 %v3380, %v3503
      %v3505 = vpop.f32.mrb[0].mxu0
      %3506 = vmatprep.mubr.f32.mxu0 0.0
      %3507 = vmatmul.mubr.f32.gmra.mrb[0].mxu0 %v1057
      %v3508 = vpop.f32.mrb[0].mxu0
      %v3509 = vadd.f32 %v3380, %v3508
      %v3510 = vpop.f32.mrb[0].mxu0
      %3511 = vmatprep.mubr.f32.mxu0 0.0
      %3512 = vmatmul.mubr.f32.gmra.mrb[0].mxu0 %v1060
      %v3513 = vpop.f32.mrb[0].mxu0
      %v3514 = vadd.f32 %v3380, %v3513
      %v3515 = vpop.f32.mrb[0].mxu0
      %3516 = vmatprep.mubr.f32.mxu0 0.0
      %3517 = vmatmul.mubr.f32.gmra.mrb[0].mxu0 %v1063
      %v3518 = vpop.f32.mrb[0].mxu0
      %v3519 = vadd.f32 %v3380, %v3518
      %v3520 = vpop.f32.mrb[0].mxu0
      %3521 = vmatprep.mubr.f32.mxu0 0.0
      %3522 = vmatmul.mubr.f32.gmra.mrb[0].mxu0 %v1066
      %v3523 = vpop.f32.mrb[0].mxu0
      %v3524 = vadd.f32 %v3380, %v3523
      %v3525 = vpop.f32.mrb[0].mxu0
      %3526 = vmatprep.mubr.f32.mxu0 0.0
      %3527 = vmatmul.mubr.f32.gmra.mrb[0].mxu0 %v1069
      %v3528 = vpop.f32.mrb[0].mxu0
      %v3529 = vadd.f32 %v3380, %v3528
      %v3530 = vpop.f32.mrb[0].mxu0
      %3531 = vmatprep.mubr.f32.mxu0 0.0
      %3532 = vmatmul.mubr.f32.gmra.mrb[0].mxu0 %v1072
      %v3533 = vpop.f32.mrb[0].mxu0
      %v3534 = vadd.f32 %v3380, %v3533
      %v3535 = vpop.f32.mrb[0].mxu0
      %3536 = vmatprep.mubr.f32.mxu0 0.0
      %3537 = vmatmul.mubr.f32.gmra.mrb[0].mxu0 %v1075
      %v3538 = vpop.f32.mrb[0].mxu0
      %v3539 = vadd.f32 %v3380, %v3538
      %v3540 = vpop.f32.mrb[0].mxu0
      %3541 = vmatprep.mubr.f32.mxu0 0.0
      %3542 = vmatmul.mubr.f32.gmra.mrb[0].mxu0 %v1078
      %v3543 = vpop.f32.mrb[0].mxu0
      %v3544 = vadd.f32 %v3380, %v3543
      %v3545 = vpop.f32.mrb[0].mxu0
      %3546 = vmatprep.mubr.f32.mxu0 0.0
      %3547 = vmatmul.mubr.f32.gmra.mrb[0].mxu0 %v1081
      %v3548 = vpop.f32.mrb[0].mxu0
      %v3549 = vadd.f32 %v3380, %v3548
      %v3550 = vpop.f32.mrb[0].mxu0
      %3551 = vmatprep.mubr.f32.mxu0 0.0
      %3552 = vmatmul.mubr.f32.gmra.mrb[0].mxu0 %v1084
      %v3553 = vpop.f32.mrb[0].mxu0
      %v3554 = vadd.f32 %v3380, %v3553
      %v3555 = vpop.f32.mrb[0].mxu0
      %3556 = vmatprep.mubr.f32.mxu0 0.0
      %3557 = vmatmul.mubr.f32.gmra.mrb[0].mxu0 %v1087
      %v3558 = vpop.f32.mrb[0].mxu0
      %v3559 = vadd.f32 %v3380, %v3558
      %v3560 = vpop.f32.mrb[0].mxu0
      %3561 = vmatprep.mubr.f32.mxu0 0.0
      %3562 = vmatmul.mubr.f32.gmra.mrb[0].mxu0 %v1090
      %v3563 = vpop.f32.mrb[0].mxu0
      %v3564 = vadd.f32 %v3380, %v3563
      %v3565 = vpop.f32.mrb[0].mxu0
      %3566 = vmatprep.mubr.f32.mxu0 0.0
      %3567 = vmatmul.mubr.f32.gmra.mrb[0].mxu0 %v1093
      %v3568 = vpop.f32.mrb[0].mxu0
      %v3569 = vadd.f32 %v3380, %v3568
      %v3570 = vpop.f32.mrb[0].mxu0
      %3571 = vmatprep.mubr.f32.mxu0 0.0
      %3572 = vmatmul.mubr.f32.gmra.mrb[0].mxu0 %v1096
      %v3573 = vpop.f32.mrb[0].mxu0
      %v3574 = vadd.f32 %v3380, %v3573
      %v3575 = vpop.f32.mrb[0].mxu0
      %3576 = vmatprep.mubr.f32.mxu0 0.0
      %3577 = vmatmul.mubr.f32.gmra.mrb[0].mxu0 %v1099
      %v3578 = vpop.f32.mrb[0].mxu0
      %v3579 = vadd.f32 %v3380, %v3578
      %v3580 = vpop.f32.mrb[0].mxu0
      %3581 = vmatprep.mubr.f32.mxu0 0.0
      %3582 = vmatmul.mubr.f32.gmra.mrb[0].mxu0 %v1102
      %v3583 = vpop.f32.mrb[0].mxu0
      %v3584 = vadd.f32 %v3380, %v3583
      %v3585 = vpop.f32.mrb[0].mxu0
      %3586 = vmatprep.mubr.f32.mxu0 0.0
      %3587 = vmatmul.mubr.f32.gmra.mrb[0].mxu0 %v1105
      %v3588 = vpop.f32.mrb[0].mxu0
      %v3589 = vadd.f32 %v3380, %v3588
      %v3590 = vpop.f32.mrb[0].mxu0
      %3591 = vmatprep.mubr.f32.mxu0 0.0
      %3592 = vmatmul.mubr.f32.gmra.mrb[0].mxu0 %v1108
      %v3593 = vpop.f32.mrb[0].mxu0
      %v3594 = vadd.f32 %v3380, %v3593
      %v3595 = vpop.f32.mrb[0].mxu0
      %3596 = vmatprep.mubr.f32.mxu0 0.0
      %3597 = vmatmul.mubr.f32.gmra.mrb[0].mxu0 %v1111
      %v3598 = vpop.f32.mrb[0].mxu0
      %v3599 = vadd.f32 %v3380, %v3598
      %v3600 = vpop.f32.mrb[0].mxu0
      %3601 = vmatprep.mubr.f32.mxu0 0.0
      %3602 = vmatmul.mubr.f32.gmra.mrb[0].mxu0 %v1114
      %v3603 = vpop.f32.mrb[0].mxu0
      %v3604 = vadd.f32 %v3380, %v3603
      %v3605 = vpop.f32.mrb[0].mxu0
      %3606 = vdwg.mxu0
      %s3607 = scalar_lea.vmem %s5, 32
      %v3608 = vld [vmem:[%s3607] sm:$0xff]
      %v3609 = vld [vmem:[%s3607 + $0x8] sm:$0xff]
      %v3610 = vld [vmem:[%s3607 + $0x10] sm:$0xff]
      %v3611 = vld [vmem:[%s3607 + $0x18] sm:$0xff]
      %s3612 = scalar_lea.vmem %s6, 1
      %v3613 = vld [vmem:[%s3612] sm:$0x1]
      %v3615 = vlaneseq
      %v3616 = vshrl.u32 %v3615, 7
      %v3617 = vsub.s32 0, %v3616
      %v3618 = vrot.slane %v3613, %v3617
      %3620 = vmatprep.subr.mxu0 0.0
      %3621 = vmatpush1.msra.mxu0 %v3608
      %3622 = vmatprep.subr.mxu0 0.0
      %3623 = vmatpush1.msra.mxu0 %v3609
      %3624 = vmatprep.subr.mxu0 0.0
      %3625 = vmatpush1.msra.mxu0 %v3610
      %3626 = vmatprep.subr.mxu0 0.0
      %3627 = vmatpush1.msra.mxu0 %v3611
      %3628 = vmatprep.subr.mxu0 0.0
      %3629 = vmatpush1.msra.mxu0 0.0
      %3630 = vmatprep.subr.mxu0 0.0
      %3631 = vmatpush1.msra.mxu0 0.0
      %3632 = vmatprep.subr.mxu0 0.0
      %3633 = vmatpush1.msra.mxu0 0.0
      %3634 = vmatprep.subr.mxu0 0.0
      %3635 = vmatpush1.msra.mxu0 0.0
      %3636 = vmatprep.subr.mxu0 0.0
      %3637 = vmatpush1.msra.mxu0 0.0
      %3638 = vmatprep.subr.mxu0 0.0
      %3639 = vmatpush1.msra.mxu0 0.0
      %3640 = vmatprep.subr.mxu0 0.0
      %3641 = vmatpush1.msra.mxu0 0.0
      %3642 = vmatprep.subr.mxu0 0.0
      %3643 = vmatpush1.msra.mxu0 0.0
      %3644 = vmatprep.subr.mxu0 0.0
      %3645 = vmatpush1.msra.mxu0 0.0
      %3646 = vmatprep.subr.mxu0 0.0
      %3647 = vmatpush1.msra.mxu0 0.0
      %3648 = vmatprep.subr.mxu0 0.0
      %3649 = vmatpush1.msra.mxu0 0.0
      %3650 = vmatprep.subr.mxu0 0.0
      %3651 = vmatpush1.msra.mxu0 0.0
      %3652 = vmatprep.subr.mxu0 0.0
      %3653 = vmatpush1.msra.mxu0 0.0
      %3654 = vmatprep.subr.mxu0 0.0
      %3655 = vmatpush1.msra.mxu0 0.0
      %3656 = vmatprep.subr.mxu0 0.0
      %3657 = vmatpush1.msra.mxu0 0.0
      %3658 = vmatprep.subr.mxu0 0.0
      %3659 = vmatpush1.msra.mxu0 0.0
      %3660 = vmatprep.subr.mxu0 0.0
      %3661 = vmatpush1.msra.mxu0 0.0
      %3662 = vmatprep.subr.mxu0 0.0
      %3663 = vmatpush1.msra.mxu0 0.0
      %3664 = vmatprep.subr.mxu0 0.0
      %3665 = vmatpush1.msra.mxu0 0.0
      %3666 = vmatprep.subr.mxu0 0.0
      %3667 = vmatpush1.msra.mxu0 0.0
      %3668 = vmatprep.subr.mxu0 0.0
      %3669 = vmatpush1.msra.mxu0 0.0
      %3670 = vmatprep.subr.mxu0 0.0
      %3671 = vmatpush1.msra.mxu0 0.0
      %3672 = vmatprep.subr.mxu0 0.0
      %3673 = vmatpush1.msra.mxu0 0.0
      %3674 = vmatprep.subr.mxu0 0.0
      %3675 = vmatpush1.msra.mxu0 0.0
      %3676 = vmatprep.subr.mxu0 0.0
      %3677 = vmatpush1.msra.mxu0 0.0
      %3678 = vmatprep.subr.mxu0 0.0
      %3679 = vmatpush1.msra.mxu0 0.0
      %3680 = vmatprep.subr.mxu0 0.0
      %3681 = vmatpush1.msra.mxu0 0.0
      %3682 = vmatprep.subr.mxu0 0.0
      %3683 = vmatpush1.msra.mxu0 0.0
      %3684 = vmatprep.mubr.f32.mxu0 0.0
      %3685 = vmatmul.mubr.f32.gmra.mrb[0].mxu0 %v1021
      %v3686 = vpop.f32.mrb[0].mxu0
      %v3687 = vadd.f32 %v3618, %v3686
      %v3688 = vpop.f32.mrb[0].mxu0
      %3689 = vmatprep.mubr.f32.mxu0 0.0
      %3690 = vmatmul.mubr.f32.gmra.mrb[0].mxu0 %v1024
      %v3691 = vpop.f32.mrb[0].mxu0
      %v3692 = vadd.f32 %v3618, %v3691
      %v3693 = vpop.f32.mrb[0].mxu0
      %3694 = vmatprep.mubr.f32.mxu0 0.0
      %3695 = vmatmul.mubr.f32.gmra.mrb[0].mxu0 %v1027
      %v3696 = vpop.f32.mrb[0].mxu0
      %v3697 = vadd.f32 %v3618, %v3696
      %v3698 = vpop.f32.mrb[0].mxu0
      %3699 = vmatprep.mubr.f32.mxu0 0.0
      %3700 = vmatmul.mubr.f32.gmra.mrb[0].mxu0 %v1030
      %v3701 = vpop.f32.mrb[0].mxu0
      %v3702 = vadd.f32 %v3618, %v3701
      %v3703 = vpop.f32.mrb[0].mxu0
      %3704 = vmatprep.mubr.f32.mxu0 0.0
      %3705 = vmatmul.mubr.f32.gmra.mrb[0].mxu0 %v1033
      %v3706 = vpop.f32.mrb[0].mxu0
      %v3707 = vadd.f32 %v3618, %v3706
      %v3708 = vpop.f32.mrb[0].mxu0
      %3709 = vmatprep.mubr.f32.mxu0 0.0
      %3710 = vmatmul.mubr.f32.gmra.mrb[0].mxu0 %v1036
      %v3711 = vpop.f32.mrb[0].mxu0
      %v3712 = vadd.f32 %v3618, %v3711
      %v3713 = vpop.f32.mrb[0].mxu0
      %3714 = vmatprep.mubr.f32.mxu0 0.0
      %3715 = vmatmul.mubr.f32.gmra.mrb[0].mxu0 %v1039
      %v3716 = vpop.f32.mrb[0].mxu0
      %v3717 = vadd.f32 %v3618, %v3716
      %v3718 = vpop.f32.mrb[0].mxu0
      %3719 = vmatprep.mubr.f32.mxu0 0.0
      %3720 = vmatmul.mubr.f32.gmra.mrb[0].mxu0 %v1042
      %v3721 = vpop.f32.mrb[0].mxu0
      %v3722 = vadd.f32 %v3618, %v3721
      %v3723 = vpop.f32.mrb[0].mxu0
      %3724 = vmatprep.mubr.f32.mxu0 0.0
      %3725 = vmatmul.mubr.f32.gmra.mrb[0].mxu0 %v1045
      %v3726 = vpop.f32.mrb[0].mxu0
      %v3727 = vadd.f32 %v3618, %v3726
      %v3728 = vpop.f32.mrb[0].mxu0
      %3729 = vmatprep.mubr.f32.mxu0 0.0
      %3730 = vmatmul.mubr.f32.gmra.mrb[0].mxu0 %v1048
      %v3731 = vpop.f32.mrb[0].mxu0
      %v3732 = vadd.f32 %v3618, %v3731
      %v3733 = vpop.f32.mrb[0].mxu0
      %3734 = vmatprep.mubr.f32.mxu0 0.0
      %3735 = vmatmul.mubr.f32.gmra.mrb[0].mxu0 %v1051
      %v3736 = vpop.f32.mrb[0].mxu0
      %v3737 = vadd.f32 %v3618, %v3736
      %v3738 = vpop.f32.mrb[0].mxu0
      %3739 = vmatprep.mubr.f32.mxu0 0.0
      %3740 = vmatmul.mubr.f32.gmra.mrb[0].mxu0 %v1054
      %v3741 = vpop.f32.mrb[0].mxu0
      %v3742 = vadd.f32 %v3618, %v3741
      %v3743 = vpop.f32.mrb[0].mxu0
      %3744 = vmatprep.mubr.f32.mxu0 0.0
      %3745 = vmatmul.mubr.f32.gmra.mrb[0].mxu0 %v1057
      %v3746 = vpop.f32.mrb[0].mxu0
      %v3747 = vadd.f32 %v3618, %v3746
      %v3748 = vpop.f32.mrb[0].mxu0
      %3749 = vmatprep.mubr.f32.mxu0 0.0
      %3750 = vmatmul.mubr.f32.gmra.mrb[0].mxu0 %v1060
      %v3751 = vpop.f32.mrb[0].mxu0
      %v3752 = vadd.f32 %v3618, %v3751
      %v3753 = vpop.f32.mrb[0].mxu0
      %3754 = vmatprep.mubr.f32.mxu0 0.0
      %3755 = vmatmul.mubr.f32.gmra.mrb[0].mxu0 %v1063
      %v3756 = vpop.f32.mrb[0].mxu0
      %v3757 = vadd.f32 %v3618, %v3756
      %v3758 = vpop.f32.mrb[0].mxu0
      %3759 = vmatprep.mubr.f32.mxu0 0.0
      %3760 = vmatmul.mubr.f32.gmra.mrb[0].mxu0 %v1066
      %v3761 = vpop.f32.mrb[0].mxu0
      %v3762 = vadd.f32 %v3618, %v3761
      %v3763 = vpop.f32.mrb[0].mxu0
      %3764 = vmatprep.mubr.f32.mxu0 0.0
      %3765 = vmatmul.mubr.f32.gmra.mrb[0].mxu0 %v1069
      %v3766 = vpop.f32.mrb[0].mxu0
      %v3767 = vadd.f32 %v3618, %v3766
      %v3768 = vpop.f32.mrb[0].mxu0
      %3769 = vmatprep.mubr.f32.mxu0 0.0
      %3770 = vmatmul.mubr.f32.gmra.mrb[0].mxu0 %v1072
      %v3771 = vpop.f32.mrb[0].mxu0
      %v3772 = vadd.f32 %v3618, %v3771
      %v3773 = vpop.f32.mrb[0].mxu0
      %3774 = vmatprep.mubr.f32.mxu0 0.0
      %3775 = vmatmul.mubr.f32.gmra.mrb[0].mxu0 %v1075
      %v3776 = vpop.f32.mrb[0].mxu0
      %v3777 = vadd.f32 %v3618, %v3776
      %v3778 = vpop.f32.mrb[0].mxu0
      %3779 = vmatprep.mubr.f32.mxu0 0.0
      %3780 = vmatmul.mubr.f32.gmra.mrb[0].mxu0 %v1078
      %v3781 = vpop.f32.mrb[0].mxu0
      %v3782 = vadd.f32 %v3618, %v3781
      %v3783 = vpop.f32.mrb[0].mxu0
      %3784 = vmatprep.mubr.f32.mxu0 0.0
      %3785 = vmatmul.mubr.f32.gmra.mrb[0].mxu0 %v1081
      %v3786 = vpop.f32.mrb[0].mxu0
      %v3787 = vadd.f32 %v3618, %v3786
      %v3788 = vpop.f32.mrb[0].mxu0
      %3789 = vmatprep.mubr.f32.mxu0 0.0
      %3790 = vmatmul.mubr.f32.gmra.mrb[0].mxu0 %v1084
      %v3791 = vpop.f32.mrb[0].mxu0
      %v3792 = vadd.f32 %v3618, %v3791
      %v3793 = vpop.f32.mrb[0].mxu0
      %3794 = vmatprep.mubr.f32.mxu0 0.0
      %3795 = vmatmul.mubr.f32.gmra.mrb[0].mxu0 %v1087
      %v3796 = vpop.f32.mrb[0].mxu0
      %v3797 = vadd.f32 %v3618, %v3796
      %v3798 = vpop.f32.mrb[0].mxu0
      %3799 = vmatprep.mubr.f32.mxu0 0.0
      %3800 = vmatmul.mubr.f32.gmra.mrb[0].mxu0 %v1090
      %v3801 = vpop.f32.mrb[0].mxu0
      %v3802 = vadd.f32 %v3618, %v3801
      %v3803 = vpop.f32.mrb[0].mxu0
      %3804 = vmatprep.mubr.f32.mxu0 0.0
      %3805 = vmatmul.mubr.f32.gmra.mrb[0].mxu0 %v1093
      %v3806 = vpop.f32.mrb[0].mxu0
      %v3807 = vadd.f32 %v3618, %v3806
      %v3808 = vpop.f32.mrb[0].mxu0
      %3809 = vmatprep.mubr.f32.mxu0 0.0
      %3810 = vmatmul.mubr.f32.gmra.mrb[0].mxu0 %v1096
      %v3811 = vpop.f32.mrb[0].mxu0
      %v3812 = vadd.f32 %v3618, %v3811
      %v3813 = vpop.f32.mrb[0].mxu0
      %3814 = vmatprep.mubr.f32.mxu0 0.0
      %3815 = vmatmul.mubr.f32.gmra.mrb[0].mxu0 %v1099
      %v3816 = vpop.f32.mrb[0].mxu0
      %v3817 = vadd.f32 %v3618, %v3816
      %v3818 = vpop.f32.mrb[0].mxu0
      %3819 = vmatprep.mubr.f32.mxu0 0.0
      %3820 = vmatmul.mubr.f32.gmra.mrb[0].mxu0 %v1102
      %v3821 = vpop.f32.mrb[0].mxu0
      %v3822 = vadd.f32 %v3618, %v3821
      %v3823 = vpop.f32.mrb[0].mxu0
      %3824 = vmatprep.mubr.f32.mxu0 0.0
      %3825 = vmatmul.mubr.f32.gmra.mrb[0].mxu0 %v1105
      %v3826 = vpop.f32.mrb[0].mxu0
      %v3827 = vadd.f32 %v3618, %v3826
      %v3828 = vpop.f32.mrb[0].mxu0
      %3829 = vmatprep.mubr.f32.mxu0 0.0
      %3830 = vmatmul.mubr.f32.gmra.mrb[0].mxu0 %v1108
      %v3831 = vpop.f32.mrb[0].mxu0
      %v3832 = vadd.f32 %v3618, %v3831
      %v3833 = vpop.f32.mrb[0].mxu0
      %3834 = vmatprep.mubr.f32.mxu0 0.0
      %3835 = vmatmul.mubr.f32.gmra.mrb[0].mxu0 %v1111
      %v3836 = vpop.f32.mrb[0].mxu0
      %v3837 = vadd.f32 %v3618, %v3836
      %v3838 = vpop.f32.mrb[0].mxu0
      %3839 = vmatprep.mubr.f32.mxu0 0.0
      %3840 = vmatmul.mubr.f32.gmra.mrb[0].mxu0 %v1114
      %v3841 = vpop.f32.mrb[0].mxu0
      %v3842 = vadd.f32 %v3618, %v3841
      %v3843 = vpop.f32.mrb[0].mxu0
      %3844 = vdwg.mxu0
      %s3845 = scalar_lea.vmem %s7, 32
      %v3846 = vld [vmem:[%s3845] sm:$0xff]
      %v3847 = vld [vmem:[%s3845 + $0x8] sm:$0xff]
      %v3848 = vld [vmem:[%s3845 + $0x10] sm:$0xff]
      %v3849 = vld [vmem:[%s3845 + $0x18] sm:$0xff]
      %s3850 = scalar_lea.vmem %s8, 1
      %v3851 = vld [vmem:[%s3850] sm:$0x1]
      %v3853 = vlaneseq
      %v3854 = vshrl.u32 %v3853, 7
      %v3855 = vsub.s32 0, %v3854
      %v3856 = vrot.slane %v3851, %v3855
      %3858 = vmatprep.subr.mxu0 0.0
      %3859 = vmatpush1.msra.mxu0 %v3846
      %3860 = vmatprep.subr.mxu0 0.0
      %3861 = vmatpush1.msra.mxu0 %v3847
      %3862 = vmatprep.subr.mxu0 0.0
      %3863 = vmatpush1.msra.mxu0 %v3848
      %3864 = vmatprep.subr.mxu0 0.0
      %3865 = vmatpush1.msra.mxu0 %v3849
      %3866 = vmatprep.subr.mxu0 0.0
      %3867 = vmatpush1.msra.mxu0 0.0
      %3868 = vmatprep.subr.mxu0 0.0
      %3869 = vmatpush1.msra.mxu0 0.0
      %3870 = vmatprep.subr.mxu0 0.0
      %3871 = vmatpush1.msra.mxu0 0.0
      %3872 = vmatprep.subr.mxu0 0.0
      %3873 = vmatpush1.msra.mxu0 0.0
      %3874 = vmatprep.subr.mxu0 0.0
      %3875 = vmatpush1.msra.mxu0 0.0
      %3876 = vmatprep.subr.mxu0 0.0
      %3877 = vmatpush1.msra.mxu0 0.0
      %3878 = vmatprep.subr.mxu0 0.0
      %3879 = vmatpush1.msra.mxu0 0.0
      %3880 = vmatprep.subr.mxu0 0.0
      %3881 = vmatpush1.msra.mxu0 0.0
      %3882 = vmatprep.subr.mxu0 0.0
      %3883 = vmatpush1.msra.mxu0 0.0
      %3884 = vmatprep.subr.mxu0 0.0
      %3885 = vmatpush1.msra.mxu0 0.0
      %3886 = vmatprep.subr.mxu0 0.0
      %3887 = vmatpush1.msra.mxu0 0.0
      %3888 = vmatprep.subr.mxu0 0.0
      %3889 = vmatpush1.msra.mxu0 0.0
      %3890 = vmatprep.subr.mxu0 0.0
      %3891 = vmatpush1.msra.mxu0 0.0
      %3892 = vmatprep.subr.mxu0 0.0
      %3893 = vmatpush1.msra.mxu0 0.0
      %3894 = vmatprep.subr.mxu0 0.0
      %3895 = vmatpush1.msra.mxu0 0.0
      %3896 = vmatprep.subr.mxu0 0.0
      %3897 = vmatpush1.msra.mxu0 0.0
      %3898 = vmatprep.subr.mxu0 0.0
      %3899 = vmatpush1.msra.mxu0 0.0
      %3900 = vmatprep.subr.mxu0 0.0
      %3901 = vmatpush1.msra.mxu0 0.0
      %3902 = vmatprep.subr.mxu0 0.0
      %3903 = vmatpush1.msra.mxu0 0.0
      %3904 = vmatprep.subr.mxu0 0.0
      %3905 = vmatpush1.msra.mxu0 0.0
      %3906 = vmatprep.subr.mxu0 0.0
      %3907 = vmatpush1.msra.mxu0 0.0
      %3908 = vmatprep.subr.mxu0 0.0
      %3909 = vmatpush1.msra.mxu0 0.0
      %3910 = vmatprep.subr.mxu0 0.0
      %3911 = vmatpush1.msra.mxu0 0.0
      %3912 = vmatprep.subr.mxu0 0.0
      %3913 = vmatpush1.msra.mxu0 0.0
      %3914 = vmatprep.subr.mxu0 0.0
      %3915 = vmatpush1.msra.mxu0 0.0
      %3916 = vmatprep.subr.mxu0 0.0
      %3917 = vmatpush1.msra.mxu0 0.0
      %3918 = vmatprep.subr.mxu0 0.0
      %3919 = vmatpush1.msra.mxu0 0.0
      %3920 = vmatprep.subr.mxu0 0.0
      %3921 = vmatpush1.msra.mxu0 0.0
      %3922 = vmatprep.mubr.f32.mxu0 0.0
      %3923 = vmatmul.mubr.f32.gmra.mrb[0].mxu0 %v1021
      %v3924 = vpop.f32.mrb[0].mxu0
      %v3925 = vadd.f32 %v3856, %v3924
      %v3926 = vpop.f32.mrb[0].mxu0
      %3927 = vmatprep.mubr.f32.mxu0 0.0
      %3928 = vmatmul.mubr.f32.gmra.mrb[0].mxu0 %v1024
      %v3929 = vpop.f32.mrb[0].mxu0
      %v3930 = vadd.f32 %v3856, %v3929
      %v3931 = vpop.f32.mrb[0].mxu0
      %3932 = vmatprep.mubr.f32.mxu0 0.0
      %3933 = vmatmul.mubr.f32.gmra.mrb[0].mxu0 %v1027
      %v3934 = vpop.f32.mrb[0].mxu0
      %v3935 = vadd.f32 %v3856, %v3934
      %v3936 = vpop.f32.mrb[0].mxu0
      %3937 = vmatprep.mubr.f32.mxu0 0.0
      %3938 = vmatmul.mubr.f32.gmra.mrb[0].mxu0 %v1030
      %v3939 = vpop.f32.mrb[0].mxu0
      %v3940 = vadd.f32 %v3856, %v3939
      %v3941 = vpop.f32.mrb[0].mxu0
      %3942 = vmatprep.mubr.f32.mxu0 0.0
      %3943 = vmatmul.mubr.f32.gmra.mrb[0].mxu0 %v1033
      %v3944 = vpop.f32.mrb[0].mxu0
      %v3945 = vadd.f32 %v3856, %v3944
      %v3946 = vpop.f32.mrb[0].mxu0
      %3947 = vmatprep.mubr.f32.mxu0 0.0
      %3948 = vmatmul.mubr.f32.gmra.mrb[0].mxu0 %v1036
      %v3949 = vpop.f32.mrb[0].mxu0
      %v3950 = vadd.f32 %v3856, %v3949
      %v3951 = vpop.f32.mrb[0].mxu0
      %3952 = vmatprep.mubr.f32.mxu0 0.0
      %3953 = vmatmul.mubr.f32.gmra.mrb[0].mxu0 %v1039
      %v3954 = vpop.f32.mrb[0].mxu0
      %v3955 = vadd.f32 %v3856, %v3954
      %v3956 = vpop.f32.mrb[0].mxu0
      %3957 = vmatprep.mubr.f32.mxu0 0.0
      %3958 = vmatmul.mubr.f32.gmra.mrb[0].mxu0 %v1042
      %v3959 = vpop.f32.mrb[0].mxu0
      %v3960 = vadd.f32 %v3856, %v3959
      %v3961 = vpop.f32.mrb[0].mxu0
      %3962 = vmatprep.mubr.f32.mxu0 0.0
      %3963 = vmatmul.mubr.f32.gmra.mrb[0].mxu0 %v1045
      %v3964 = vpop.f32.mrb[0].mxu0
      %v3965 = vadd.f32 %v3856, %v3964
      %v3966 = vpop.f32.mrb[0].mxu0
      %3967 = vmatprep.mubr.f32.mxu0 0.0
      %3968 = vmatmul.mubr.f32.gmra.mrb[0].mxu0 %v1048
      %v3969 = vpop.f32.mrb[0].mxu0
      %v3970 = vadd.f32 %v3856, %v3969
      %v3971 = vpop.f32.mrb[0].mxu0
      %3972 = vmatprep.mubr.f32.mxu0 0.0
      %3973 = vmatmul.mubr.f32.gmra.mrb[0].mxu0 %v1051
      %v3974 = vpop.f32.mrb[0].mxu0
      %v3975 = vadd.f32 %v3856, %v3974
      %v3976 = vpop.f32.mrb[0].mxu0
      %3977 = vmatprep.mubr.f32.mxu0 0.0
      %3978 = vmatmul.mubr.f32.gmra.mrb[0].mxu0 %v1054
      %v3979 = vpop.f32.mrb[0].mxu0
      %v3980 = vadd.f32 %v3856, %v3979
      %v3981 = vpop.f32.mrb[0].mxu0
      %3982 = vmatprep.mubr.f32.mxu0 0.0
      %3983 = vmatmul.mubr.f32.gmra.mrb[0].mxu0 %v1057
      %v3984 = vpop.f32.mrb[0].mxu0
      %v3985 = vadd.f32 %v3856, %v3984
      %v3986 = vpop.f32.mrb[0].mxu0
      %3987 = vmatprep.mubr.f32.mxu0 0.0
      %3988 = vmatmul.mubr.f32.gmra.mrb[0].mxu0 %v1060
      %v3989 = vpop.f32.mrb[0].mxu0
      %v3990 = vadd.f32 %v3856, %v3989
      %v3991 = vpop.f32.mrb[0].mxu0
      %3992 = vmatprep.mubr.f32.mxu0 0.0
      %3993 = vmatmul.mubr.f32.gmra.mrb[0].mxu0 %v1063
      %v3994 = vpop.f32.mrb[0].mxu0
      %v3995 = vadd.f32 %v3856, %v3994
      %v3996 = vpop.f32.mrb[0].mxu0
      %3997 = vmatprep.mubr.f32.mxu0 0.0
      %3998 = vmatmul.mubr.f32.gmra.mrb[0].mxu0 %v1066
      %v3999 = vpop.f32.mrb[0].mxu0
      %v4000 = vadd.f32 %v3856, %v3999
      %v4001 = vpop.f32.mrb[0].mxu0
      %4002 = vmatprep.mubr.f32.mxu0 0.0
      %4003 = vmatmul.mubr.f32.gmra.mrb[0].mxu0 %v1069
      %v4004 = vpop.f32.mrb[0].mxu0
      %v4005 = vadd.f32 %v3856, %v4004
      %v4006 = vpop.f32.mrb[0].mxu0
      %4007 = vmatprep.mubr.f32.mxu0 0.0
      %4008 = vmatmul.mubr.f32.gmra.mrb[0].mxu0 %v1072
      %v4009 = vpop.f32.mrb[0].mxu0
      %v4010 = vadd.f32 %v3856, %v4009
      %v4011 = vpop.f32.mrb[0].mxu0
      %4012 = vmatprep.mubr.f32.mxu0 0.0
      %4013 = vmatmul.mubr.f32.gmra.mrb[0].mxu0 %v1075
      %v4014 = vpop.f32.mrb[0].mxu0
      %v4015 = vadd.f32 %v3856, %v4014
      %v4016 = vpop.f32.mrb[0].mxu0
      %4017 = vmatprep.mubr.f32.mxu0 0.0
      %4018 = vmatmul.mubr.f32.gmra.mrb[0].mxu0 %v1078
      %v4019 = vpop.f32.mrb[0].mxu0
      %v4020 = vadd.f32 %v3856, %v4019
      %v4021 = vpop.f32.mrb[0].mxu0
      %4022 = vmatprep.mubr.f32.mxu0 0.0
      %4023 = vmatmul.mubr.f32.gmra.mrb[0].mxu0 %v1081
      %v4024 = vpop.f32.mrb[0].mxu0
      %v4025 = vadd.f32 %v3856, %v4024
      %v4026 = vpop.f32.mrb[0].mxu0
      %4027 = vmatprep.mubr.f32.mxu0 0.0
      %4028 = vmatmul.mubr.f32.gmra.mrb[0].mxu0 %v1084
      %v4029 = vpop.f32.mrb[0].mxu0
      %v4030 = vadd.f32 %v3856, %v4029
      %v4031 = vpop.f32.mrb[0].mxu0
      %4032 = vmatprep.mubr.f32.mxu0 0.0
      %4033 = vmatmul.mubr.f32.gmra.mrb[0].mxu0 %v1087
      %v4034 = vpop.f32.mrb[0].mxu0
      %v4035 = vadd.f32 %v3856, %v4034
      %v4036 = vpop.f32.mrb[0].mxu0
      %4037 = vmatprep.mubr.f32.mxu0 0.0
      %4038 = vmatmul.mubr.f32.gmra.mrb[0].mxu0 %v1090
      %v4039 = vpop.f32.mrb[0].mxu0
      %v4040 = vadd.f32 %v3856, %v4039
      %v4041 = vpop.f32.mrb[0].mxu0
      %4042 = vmatprep.mubr.f32.mxu0 0.0
      %4043 = vmatmul.mubr.f32.gmra.mrb[0].mxu0 %v1093
      %v4044 = vpop.f32.mrb[0].mxu0
      %v4045 = vadd.f32 %v3856, %v4044
      %v4046 = vpop.f32.mrb[0].mxu0
      %4047 = vmatprep.mubr.f32.mxu0 0.0
      %4048 = vmatmul.mubr.f32.gmra.mrb[0].mxu0 %v1096
      %v4049 = vpop.f32.mrb[0].mxu0
      %v4050 = vadd.f32 %v3856, %v4049
      %v4051 = vpop.f32.mrb[0].mxu0
      %4052 = vmatprep.mubr.f32.mxu0 0.0
      %4053 = vmatmul.mubr.f32.gmra.mrb[0].mxu0 %v1099
      %v4054 = vpop.f32.mrb[0].mxu0
      %v4055 = vadd.f32 %v3856, %v4054
      %v4056 = vpop.f32.mrb[0].mxu0
      %4057 = vmatprep.mubr.f32.mxu0 0.0
      %4058 = vmatmul.mubr.f32.gmra.mrb[0].mxu0 %v1102
      %v4059 = vpop.f32.mrb[0].mxu0
      %v4060 = vadd.f32 %v3856, %v4059
      %v4061 = vpop.f32.mrb[0].mxu0
      %4062 = vmatprep.mubr.f32.mxu0 0.0
      %4063 = vmatmul.mubr.f32.gmra.mrb[0].mxu0 %v1105
      %v4064 = vpop.f32.mrb[0].mxu0
      %v4065 = vadd.f32 %v3856, %v4064
      %v4066 = vpop.f32.mrb[0].mxu0
      %4067 = vmatprep.mubr.f32.mxu0 0.0
      %4068 = vmatmul.mubr.f32.gmra.mrb[0].mxu0 %v1108
      %v4069 = vpop.f32.mrb[0].mxu0
      %v4070 = vadd.f32 %v3856, %v4069
      %v4071 = vpop.f32.mrb[0].mxu0
      %4072 = vmatprep.mubr.f32.mxu0 0.0
      %4073 = vmatmul.mubr.f32.gmra.mrb[0].mxu0 %v1111
      %v4074 = vpop.f32.mrb[0].mxu0
      %v4075 = vadd.f32 %v3856, %v4074
      %v4076 = vpop.f32.mrb[0].mxu0
      %4077 = vmatprep.mubr.f32.mxu0 0.0
      %4078 = vmatmul.mubr.f32.gmra.mrb[0].mxu0 %v1114
      %v4079 = vpop.f32.mrb[0].mxu0
      %v4080 = vadd.f32 %v3856, %v4079
      %v4081 = vpop.f32.mrb[0].mxu0
      %4082 = vdwg.mxu0
      %v4083 = vmul.f32 %v3449, 0.25
      %v4084 = vmul.f32 %v3454, 0.25
      %v4085 = vmul.f32 %v3459, 0.25
      %v4086 = vmul.f32 %v3464, 0.25
      %v4087 = vmul.f32 %v3469, 0.25
      %v4088 = vmul.f32 %v3474, 0.25
      %v4089 = vmul.f32 %v3479, 0.25
      %v4090 = vmul.f32 %v3484, 0.25
      %v4091 = vmul.f32 %v3489, 0.25
      %v4092 = vmul.f32 %v3494, 0.25
      %v4093 = vmul.f32 %v3499, 0.25
      %v4094 = vmul.f32 %v3504, 0.25
      %v4095 = vmul.f32 %v3509, 0.25
      %v4096 = vmul.f32 %v3514, 0.25
      %v4097 = vmul.f32 %v3519, 0.25
      %v4098 = vmul.f32 %v3524, 0.25
      %v4099 = vmul.f32 %v3529, 0.25
      %v4100 = vmul.f32 %v3534, 0.25
      %v4101 = vmul.f32 %v3539, 0.25
      %v4102 = vmul.f32 %v3544, 0.25
      %v4103 = vmul.f32 %v3549, 0.25
      %v4104 = vmul.f32 %v3554, 0.25
      %v4105 = vmul.f32 %v3559, 0.25
      %v4106 = vmul.f32 %v3564, 0.25
      %v4107 = vmul.f32 %v3569, 0.25
      %v4108 = vmul.f32 %v3574, 0.25
      %v4109 = vmul.f32 %v3579, 0.25
      %v4110 = vmul.f32 %v3584, 0.25
      %v4111 = vmul.f32 %v3589, 0.25
      %v4112 = vmul.f32 %v3594, 0.25
      %v4113 = vmul.f32 %v3599, 0.25
      %v4114 = vmul.f32 %v3604, 0.25
      %s4115 = scalar_lea.vmem %s11, 64
      %v4116 = vld [vmem:[%s4115] sm:$0xff]
      %v4117 = vld [vmem:[%s4115 + $0x8] sm:$0xff]
      %v4118 = vld [vmem:[%s4115 + $0x10] sm:$0xff]
      %v4119 = vld [vmem:[%s4115 + $0x18] sm:$0xff]
      %v4120 = vld [vmem:[%s4115 + $0x20] sm:$0xff]
      %v4121 = vld [vmem:[%s4115 + $0x28] sm:$0xff]
      %v4122 = vld [vmem:[%s4115 + $0x30] sm:$0xff]
      %v4123 = vld [vmem:[%s4115 + $0x38] sm:$0xff]
      %v4125 = vsel %vm1853, %v4083, 0
      %v4128 = vsel %vm1853, %v4084, 0
      %v4131 = vsel %vm1853, %v4085, 0
      %v4134 = vsel %vm1853, %v4086, 0
      %v4137 = vsel %vm1853, %v4087, 0
      %v4140 = vsel %vm1853, %v4088, 0
      %v4143 = vsel %vm1853, %v4089, 0
      %v4146 = vsel %vm1853, %v4090, 0
      %v4149 = vsel %vm1853, %v3687, 0
      %v4152 = vsel %vm1853, %v3692, 0
      %v4155 = vsel %vm1853, %v3697, 0
      %v4158 = vsel %vm1853, %v3702, 0
      %v4161 = vsel %vm1853, %v3707, 0
      %v4164 = vsel %vm1853, %v3712, 0
      %v4167 = vsel %vm1853, %v3717, 0
      %v4170 = vsel %vm1853, %v3722, 0
      %4172 = vmatprep.subr.mxu0 0.0
      %4173 = vmatpush1.xpose.msra.mxu0 %v4149
      %4174 = vmatprep.subr.mxu0 0.0
      %4175 = vmatpush1.xpose.msra.mxu0 %v4152
      %4176 = vmatprep.subr.mxu0 0.0
      %4177 = vmatpush1.xpose.msra.mxu0 %v4155
      %4178 = vmatprep.subr.mxu0 0.0
      %4179 = vmatpush1.xpose.msra.mxu0 %v4158
      %4180 = vmatprep.subr.mxu0 0.0
      %4181 = vmatpush1.xpose.msra.mxu0 %v4161
      %4182 = vmatprep.subr.mxu0 0.0
      %4183 = vmatpush1.xpose.msra.mxu0 %v4164
      %4184 = vmatprep.subr.mxu0 0.0
      %4185 = vmatpush1.xpose.msra.mxu0 %v4167
      %4186 = vmatprep.subr.mxu0 0.0
      %4187 = vmatpush1.xpose.msra.mxu0 %v4170
      %4188 = vmatprep.subr.mxu0 0.0
      %4189 = vmatpush1.xpose.msra.mxu0 0.0
      %4190 = vmatprep.subr.mxu0 0.0
      %4191 = vmatpush1.xpose.msra.mxu0 0.0
      %4192 = vmatprep.subr.mxu0 0.0
      %4193 = vmatpush1.xpose.msra.mxu0 0.0
      %4194 = vmatprep.subr.mxu0 0.0
      %4195 = vmatpush1.xpose.msra.mxu0 0.0
      %4196 = vmatprep.subr.mxu0 0.0
      %4197 = vmatpush1.xpose.msra.mxu0 0.0
      %4198 = vmatprep.subr.mxu0 0.0
      %4199 = vmatpush1.xpose.msra.mxu0 0.0
      %4200 = vmatprep.subr.mxu0 0.0
      %4201 = vmatpush1.xpose.msra.mxu0 0.0
      %4202 = vmatprep.subr.mxu0 0.0
      %4203 = vmatpush1.xpose.msra.mxu0 0.0
      %4204 = vmatprep.subr.mxu0 0.0
      %4205 = vmatpush1.xpose.msra.mxu0 0.0
      %4206 = vmatprep.subr.mxu0 0.0
      %4207 = vmatpush1.xpose.msra.mxu0 0.0
      %4208 = vmatprep.subr.mxu0 0.0
      %4209 = vmatpush1.xpose.msra.mxu0 0.0
      %4210 = vmatprep.subr.mxu0 0.0
      %4211 = vmatpush1.xpose.msra.mxu0 0.0
      %4212 = vmatprep.subr.mxu0 0.0
      %4213 = vmatpush1.xpose.msra.mxu0 0.0
      %4214 = vmatprep.subr.mxu0 0.0
      %4215 = vmatpush1.xpose.msra.mxu0 0.0
      %4216 = vmatprep.subr.mxu0 0.0
      %4217 = vmatpush1.xpose.msra.mxu0 0.0
      %4218 = vmatprep.subr.mxu0 0.0
      %4219 = vmatpush1.xpose.msra.mxu0 0.0
      %4220 = vmatprep.subr.mxu0 0.0
      %4221 = vmatpush1.xpose.msra.mxu0 0.0
      %4222 = vmatprep.subr.mxu0 0.0
      %4223 = vmatpush1.xpose.msra.mxu0 0.0
      %4224 = vmatprep.subr.mxu0 0.0
      %4225 = vmatpush1.xpose.msra.mxu0 0.0
      %4226 = vmatprep.subr.mxu0 0.0
      %4227 = vmatpush1.xpose.msra.mxu0 0.0
      %4228 = vmatprep.subr.mxu0 0.0
      %4229 = vmatpush1.xpose.msra.mxu0 0.0
      %4230 = vmatprep.subr.mxu0 0.0
      %4231 = vmatpush1.xpose.msra.mxu0 0.0
      %4232 = vmatprep.subr.mxu0 0.0
      %4233 = vmatpush1.xpose.msra.mxu0 0.0
      %4234 = vmatprep.subr.mxu0 0.0
      %4235 = vmatpush1.xpose.msra.mxu0 0.0
      %4236 = vmatprep.mubr.f32.mxu0 0.0
      %4237 = vmatmul.mubr.f32.gmra.mrb[0].mxu0 %v4125
      %v4238 = vpop.f32.mrb[0].mxu0
      %v4239 = vadd.f32 %v4116, %v4238
      %v4240 = vpop.f32.mrb[0].mxu0
      %4241 = vmatprep.mubr.f32.mxu0 0.0
      %4242 = vmatmul.mubr.f32.gmra.mrb[0].mxu0 %v4128
      %v4243 = vpop.f32.mrb[0].mxu0
      %v4244 = vadd.f32 %v4117, %v4243
      %v4245 = vpop.f32.mrb[0].mxu0
      %4246 = vmatprep.mubr.f32.mxu0 0.0
      %4247 = vmatmul.mubr.f32.gmra.mrb[0].mxu0 %v4131
      %v4248 = vpop.f32.mrb[0].mxu0
      %v4249 = vadd.f32 %v4118, %v4248
      %v4250 = vpop.f32.mrb[0].mxu0
      %4251 = vmatprep.mubr.f32.mxu0 0.0
      %4252 = vmatmul.mubr.f32.gmra.mrb[0].mxu0 %v4134
      %v4253 = vpop.f32.mrb[0].mxu0
      %v4254 = vadd.f32 %v4119, %v4253
      %v4255 = vpop.f32.mrb[0].mxu0
      %4256 = vmatprep.mubr.f32.mxu0 0.0
      %4257 = vmatmul.mubr.f32.gmra.mrb[0].mxu0 %v4137
      %v4258 = vpop.f32.mrb[0].mxu0
      %v4259 = vadd.f32 %v4120, %v4258
      %v4260 = vpop.f32.mrb[0].mxu0
      %4261 = vmatprep.mubr.f32.mxu0 0.0
      %4262 = vmatmul.mubr.f32.gmra.mrb[0].mxu0 %v4140
      %v4263 = vpop.f32.mrb[0].mxu0
      %v4264 = vadd.f32 %v4121, %v4263
      %v4265 = vpop.f32.mrb[0].mxu0
      %4266 = vmatprep.mubr.f32.mxu0 0.0
      %4267 = vmatmul.mubr.f32.gmra.mrb[0].mxu0 %v4143
      %v4268 = vpop.f32.mrb[0].mxu0
      %v4269 = vadd.f32 %v4122, %v4268
      %v4270 = vpop.f32.mrb[0].mxu0
      %4271 = vmatprep.mubr.f32.mxu0 0.0
      %4272 = vmatmul.mubr.f32.gmra.mrb[0].mxu0 %v4146
      %v4273 = vpop.f32.mrb[0].mxu0
      %v4274 = vadd.f32 %v4123, %v4273
      %v4275 = vpop.f32.mrb[0].mxu0
      %4276 = vdwg.mxu0
      %v4278 = vsel %vm1853, %v4091, 0
      %v4281 = vsel %vm1853, %v4092, 0
      %v4284 = vsel %vm1853, %v4093, 0
      %v4287 = vsel %vm1853, %v4094, 0
      %v4290 = vsel %vm1853, %v4095, 0
      %v4293 = vsel %vm1853, %v4096, 0
      %v4296 = vsel %vm1853, %v4097, 0
      %v4299 = vsel %vm1853, %v4098, 0
      %v4302 = vsel %vm1853, %v3727, 0
      %v4305 = vsel %vm1853, %v3732, 0
      %v4308 = vsel %vm1853, %v3737, 0
      %v4311 = vsel %vm1853, %v3742, 0
      %v4314 = vsel %vm1853, %v3747, 0
      %v4317 = vsel %vm1853, %v3752, 0
      %v4320 = vsel %vm1853, %v3757, 0
      %v4323 = vsel %vm1853, %v3762, 0
      %4325 = vmatprep.subr.mxu0 0.0
      %4326 = vmatpush1.xpose.msra.mxu0 %v4302
      %4327 = vmatprep.subr.mxu0 0.0
      %4328 = vmatpush1.xpose.msra.mxu0 %v4305
      %4329 = vmatprep.subr.mxu0 0.0
      %4330 = vmatpush1.xpose.msra.mxu0 %v4308
      %4331 = vmatprep.subr.mxu0 0.0
      %4332 = vmatpush1.xpose.msra.mxu0 %v4311
      %4333 = vmatprep.subr.mxu0 0.0
      %4334 = vmatpush1.xpose.msra.mxu0 %v4314
      %4335 = vmatprep.subr.mxu0 0.0
      %4336 = vmatpush1.xpose.msra.mxu0 %v4317
      %4337 = vmatprep.subr.mxu0 0.0
      %4338 = vmatpush1.xpose.msra.mxu0 %v4320
      %4339 = vmatprep.subr.mxu0 0.0
      %4340 = vmatpush1.xpose.msra.mxu0 %v4323
      %4341 = vmatprep.subr.mxu0 0.0
      %4342 = vmatpush1.xpose.msra.mxu0 0.0
      %4343 = vmatprep.subr.mxu0 0.0
      %4344 = vmatpush1.xpose.msra.mxu0 0.0
      %4345 = vmatprep.subr.mxu0 0.0
      %4346 = vmatpush1.xpose.msra.mxu0 0.0
      %4347 = vmatprep.subr.mxu0 0.0
      %4348 = vmatpush1.xpose.msra.mxu0 0.0
      %4349 = vmatprep.subr.mxu0 0.0
      %4350 = vmatpush1.xpose.msra.mxu0 0.0
      %4351 = vmatprep.subr.mxu0 0.0
      %4352 = vmatpush1.xpose.msra.mxu0 0.0
      %4353 = vmatprep.subr.mxu0 0.0
      %4354 = vmatpush1.xpose.msra.mxu0 0.0
      %4355 = vmatprep.subr.mxu0 0.0
      %4356 = vmatpush1.xpose.msra.mxu0 0.0
      %4357 = vmatprep.subr.mxu0 0.0
      %4358 = vmatpush1.xpose.msra.mxu0 0.0
      %4359 = vmatprep.subr.mxu0 0.0
      %4360 = vmatpush1.xpose.msra.mxu0 0.0
      %4361 = vmatprep.subr.mxu0 0.0
      %4362 = vmatpush1.xpose.msra.mxu0 0.0
      %4363 = vmatprep.subr.mxu0 0.0
      %4364 = vmatpush1.xpose.msra.mxu0 0.0
      %4365 = vmatprep.subr.mxu0 0.0
      %4366 = vmatpush1.xpose.msra.mxu0 0.0
      %4367 = vmatprep.subr.mxu0 0.0
      %4368 = vmatpush1.xpose.msra.mxu0 0.0
      %4369 = vmatprep.subr.mxu0 0.0
      %4370 = vmatpush1.xpose.msra.mxu0 0.0
      %4371 = vmatprep.subr.mxu0 0.0
      %4372 = vmatpush1.xpose.msra.mxu0 0.0
      %4373 = vmatprep.subr.mxu0 0.0
      %4374 = vmatpush1.xpose.msra.mxu0 0.0
      %4375 = vmatprep.subr.mxu0 0.0
      %4376 = vmatpush1.xpose.msra.mxu0 0.0
      %4377 = vmatprep.subr.mxu0 0.0
      %4378 = vmatpush1.xpose.msra.mxu0 0.0
      %4379 = vmatprep.subr.mxu0 0.0
      %4380 = vmatpush1.xpose.msra.mxu0 0.0
      %4381 = vmatprep.subr.mxu0 0.0
      %4382 = vmatpush1.xpose.msra.mxu0 0.0
      %4383 = vmatprep.subr.mxu0 0.0
      %4384 = vmatpush1.xpose.msra.mxu0 0.0
      %4385 = vmatprep.subr.mxu0 0.0
      %4386 = vmatpush1.xpose.msra.mxu0 0.0
      %4387 = vmatprep.subr.mxu0 0.0
      %4388 = vmatpush1.xpose.msra.mxu0 0.0
      %4389 = vmatprep.mubr.f32.mxu0 0.0
      %4390 = vmatmul.mubr.f32.gmra.mrb[0].mxu0 %v4278
      %v4391 = vpop.f32.mrb[0].mxu0
      %v4392 = vadd.f32 %v4116, %v4391
      %v4393 = vpop.f32.mrb[0].mxu0
      %4394 = vmatprep.mubr.f32.mxu0 0.0
      %4395 = vmatmul.mubr.f32.gmra.mrb[0].mxu0 %v4281
      %v4396 = vpop.f32.mrb[0].mxu0
      %v4397 = vadd.f32 %v4117, %v4396
      %v4398 = vpop.f32.mrb[0].mxu0
      %4399 = vmatprep.mubr.f32.mxu0 0.0
      %4400 = vmatmul.mubr.f32.gmra.mrb[0].mxu0 %v4284
      %v4401 = vpop.f32.mrb[0].mxu0
      %v4402 = vadd.f32 %v4118, %v4401
      %v4403 = vpop.f32.mrb[0].mxu0
      %4404 = vmatprep.mubr.f32.mxu0 0.0
      %4405 = vmatmul.mubr.f32.gmra.mrb[0].mxu0 %v4287
      %v4406 = vpop.f32.mrb[0].mxu0
      %v4407 = vadd.f32 %v4119, %v4406
      %v4408 = vpop.f32.mrb[0].mxu0
      %4409 = vmatprep.mubr.f32.mxu0 0.0
      %4410 = vmatmul.mubr.f32.gmra.mrb[0].mxu0 %v4290
      %v4411 = vpop.f32.mrb[0].mxu0
      %v4412 = vadd.f32 %v4120, %v4411
      %v4413 = vpop.f32.mrb[0].mxu0
      %4414 = vmatprep.mubr.f32.mxu0 0.0
      %4415 = vmatmul.mubr.f32.gmra.mrb[0].mxu0 %v4293
      %v4416 = vpop.f32.mrb[0].mxu0
      %v4417 = vadd.f32 %v4121, %v4416
      %v4418 = vpop.f32.mrb[0].mxu0
      %4419 = vmatprep.mubr.f32.mxu0 0.0
      %4420 = vmatmul.mubr.f32.gmra.mrb[0].mxu0 %v4296
      %v4421 = vpop.f32.mrb[0].mxu0
      %v4422 = vadd.f32 %v4122, %v4421
      %v4423 = vpop.f32.mrb[0].mxu0
      %4424 = vmatprep.mubr.f32.mxu0 0.0
      %4425 = vmatmul.mubr.f32.gmra.mrb[0].mxu0 %v4299
      %v4426 = vpop.f32.mrb[0].mxu0
      %v4427 = vadd.f32 %v4123, %v4426
      %v4428 = vpop.f32.mrb[0].mxu0
      %4429 = vdwg.mxu0
      %v4431 = vsel %vm1853, %v4099, 0
      %v4434 = vsel %vm1853, %v4100, 0
      %v4437 = vsel %vm1853, %v4101, 0
      %v4440 = vsel %vm1853, %v4102, 0
      %v4443 = vsel %vm1853, %v4103, 0
      %v4446 = vsel %vm1853, %v4104, 0
      %v4449 = vsel %vm1853, %v4105, 0
      %v4452 = vsel %vm1853, %v4106, 0
      %v4455 = vsel %vm1853, %v3767, 0
      %v4458 = vsel %vm1853, %v3772, 0
      %v4461 = vsel %vm1853, %v3777, 0
      %v4464 = vsel %vm1853, %v3782, 0
      %v4467 = vsel %vm1853, %v3787, 0
      %v4470 = vsel %vm1853, %v3792, 0
      %v4473 = vsel %vm1853, %v3797, 0
      %v4476 = vsel %vm1853, %v3802, 0
      %4478 = vmatprep.subr.mxu0 0.0
      %4479 = vmatpush1.xpose.msra.mxu0 %v4455
      %4480 = vmatprep.subr.mxu0 0.0
      %4481 = vmatpush1.xpose.msra.mxu0 %v4458
      %4482 = vmatprep.subr.mxu0 0.0
      %4483 = vmatpush1.xpose.msra.mxu0 %v4461
      %4484 = vmatprep.subr.mxu0 0.0
      %4485 = vmatpush1.xpose.msra.mxu0 %v4464
      %4486 = vmatprep.subr.mxu0 0.0
      %4487 = vmatpush1.xpose.msra.mxu0 %v4467
      %4488 = vmatprep.subr.mxu0 0.0
      %4489 = vmatpush1.xpose.msra.mxu0 %v4470
      %4490 = vmatprep.subr.mxu0 0.0
      %4491 = vmatpush1.xpose.msra.mxu0 %v4473
      %4492 = vmatprep.subr.mxu0 0.0
      %4493 = vmatpush1.xpose.msra.mxu0 %v4476
      %4494 = vmatprep.subr.mxu0 0.0
      %4495 = vmatpush1.xpose.msra.mxu0 0.0
      %4496 = vmatprep.subr.mxu0 0.0
      %4497 = vmatpush1.xpose.msra.mxu0 0.0
      %4498 = vmatprep.subr.mxu0 0.0
      %4499 = vmatpush1.xpose.msra.mxu0 0.0
      %4500 = vmatprep.subr.mxu0 0.0
      %4501 = vmatpush1.xpose.msra.mxu0 0.0
      %4502 = vmatprep.subr.mxu0 0.0
      %4503 = vmatpush1.xpose.msra.mxu0 0.0
      %4504 = vmatprep.subr.mxu0 0.0
      %4505 = vmatpush1.xpose.msra.mxu0 0.0
      %4506 = vmatprep.subr.mxu0 0.0
      %4507 = vmatpush1.xpose.msra.mxu0 0.0
      %4508 = vmatprep.subr.mxu0 0.0
      %4509 = vmatpush1.xpose.msra.mxu0 0.0
      %4510 = vmatprep.subr.mxu0 0.0
      %4511 = vmatpush1.xpose.msra.mxu0 0.0
      %4512 = vmatprep.subr.mxu0 0.0
      %4513 = vmatpush1.xpose.msra.mxu0 0.0
      %4514 = vmatprep.subr.mxu0 0.0
      %4515 = vmatpush1.xpose.msra.mxu0 0.0
      %4516 = vmatprep.subr.mxu0 0.0
      %4517 = vmatpush1.xpose.msra.mxu0 0.0
      %4518 = vmatprep.subr.mxu0 0.0
      %4519 = vmatpush1.xpose.msra.mxu0 0.0
      %4520 = vmatprep.subr.mxu0 0.0
      %4521 = vmatpush1.xpose.msra.mxu0 0.0
      %4522 = vmatprep.subr.mxu0 0.0
      %4523 = vmatpush1.xpose.msra.mxu0 0.0
      %4524 = vmatprep.subr.mxu0 0.0
      %4525 = vmatpush1.xpose.msra.mxu0 0.0
      %4526 = vmatprep.subr.mxu0 0.0
      %4527 = vmatpush1.xpose.msra.mxu0 0.0
      %4528 = vmatprep.subr.mxu0 0.0
      %4529 = vmatpush1.xpose.msra.mxu0 0.0
      %4530 = vmatprep.subr.mxu0 0.0
      %4531 = vmatpush1.xpose.msra.mxu0 0.0
      %4532 = vmatprep.subr.mxu0 0.0
      %4533 = vmatpush1.xpose.msra.mxu0 0.0
      %4534 = vmatprep.subr.mxu0 0.0
      %4535 = vmatpush1.xpose.msra.mxu0 0.0
      %4536 = vmatprep.subr.mxu0 0.0
      %4537 = vmatpush1.xpose.msra.mxu0 0.0
      %4538 = vmatprep.subr.mxu0 0.0
      %4539 = vmatpush1.xpose.msra.mxu0 0.0
      %4540 = vmatprep.subr.mxu0 0.0
      %4541 = vmatpush1.xpose.msra.mxu0 0.0
      %4542 = vmatprep.mubr.f32.mxu0 0.0
      %4543 = vmatmul.mubr.f32.gmra.mrb[0].mxu0 %v4431
      %v4544 = vpop.f32.mrb[0].mxu0
      %v4545 = vadd.f32 %v4116, %v4544
      %v4546 = vpop.f32.mrb[0].mxu0
      %4547 = vmatprep.mubr.f32.mxu0 0.0
      %4548 = vmatmul.mubr.f32.gmra.mrb[0].mxu0 %v4434
      %v4549 = vpop.f32.mrb[0].mxu0
      %v4550 = vadd.f32 %v4117, %v4549
      %v4551 = vpop.f32.mrb[0].mxu0
      %4552 = vmatprep.mubr.f32.mxu0 0.0
      %4553 = vmatmul.mubr.f32.gmra.mrb[0].mxu0 %v4437
      %v4554 = vpop.f32.mrb[0].mxu0
      %v4555 = vadd.f32 %v4118, %v4554
      %v4556 = vpop.f32.mrb[0].mxu0
      %4557 = vmatprep.mubr.f32.mxu0 0.0
      %4558 = vmatmul.mubr.f32.gmra.mrb[0].mxu0 %v4440
      %v4559 = vpop.f32.mrb[0].mxu0
      %v4560 = vadd.f32 %v4119, %v4559
      %v4561 = vpop.f32.mrb[0].mxu0
      %4562 = vmatprep.mubr.f32.mxu0 0.0
      %4563 = vmatmul.mubr.f32.gmra.mrb[0].mxu0 %v4443
      %v4564 = vpop.f32.mrb[0].mxu0
      %v4565 = vadd.f32 %v4120, %v4564
      %v4566 = vpop.f32.mrb[0].mxu0
      %4567 = vmatprep.mubr.f32.mxu0 0.0
      %4568 = vmatmul.mubr.f32.gmra.mrb[0].mxu0 %v4446
      %v4569 = vpop.f32.mrb[0].mxu0
      %v4570 = vadd.f32 %v4121, %v4569
      %v4571 = vpop.f32.mrb[0].mxu0
      %4572 = vmatprep.mubr.f32.mxu0 0.0
      %4573 = vmatmul.mubr.f32.gmra.mrb[0].mxu0 %v4449
      %v4574 = vpop.f32.mrb[0].mxu0
      %v4575 = vadd.f32 %v4122, %v4574
      %v4576 = vpop.f32.mrb[0].mxu0
      %4577 = vmatprep.mubr.f32.mxu0 0.0
      %4578 = vmatmul.mubr.f32.gmra.mrb[0].mxu0 %v4452
      %v4579 = vpop.f32.mrb[0].mxu0
      %v4580 = vadd.f32 %v4123, %v4579
      %v4581 = vpop.f32.mrb[0].mxu0
      %4582 = vdwg.mxu0
      %v4584 = vsel %vm1853, %v4107, 0
      %v4587 = vsel %vm1853, %v4108, 0
      %v4590 = vsel %vm1853, %v4109, 0
      %v4593 = vsel %vm1853, %v4110, 0
      %v4596 = vsel %vm1853, %v4111, 0
      %v4599 = vsel %vm1853, %v4112, 0
      %v4602 = vsel %vm1853, %v4113, 0
      %v4605 = vsel %vm1853, %v4114, 0
      %v4608 = vsel %vm1853, %v3807, 0
      %v4611 = vsel %vm1853, %v3812, 0
      %v4614 = vsel %vm1853, %v3817, 0
      %v4617 = vsel %vm1853, %v3822, 0
      %v4620 = vsel %vm1853, %v3827, 0
      %v4623 = vsel %vm1853, %v3832, 0
      %v4626 = vsel %vm1853, %v3837, 0
      %v4629 = vsel %vm1853, %v3842, 0
      %4631 = vmatprep.subr.mxu0 0.0
      %4632 = vmatpush1.xpose.msra.mxu0 %v4608
      %4633 = vmatprep.subr.mxu0 0.0
      %4634 = vmatpush1.xpose.msra.mxu0 %v4611
      %4635 = vmatprep.subr.mxu0 0.0
      %4636 = vmatpush1.xpose.msra.mxu0 %v4614
      %4637 = vmatprep.subr.mxu0 0.0
      %4638 = vmatpush1.xpose.msra.mxu0 %v4617
      %4639 = vmatprep.subr.mxu0 0.0
      %4640 = vmatpush1.xpose.msra.mxu0 %v4620
      %4641 = vmatprep.subr.mxu0 0.0
      %4642 = vmatpush1.xpose.msra.mxu0 %v4623
      %4643 = vmatprep.subr.mxu0 0.0
      %4644 = vmatpush1.xpose.msra.mxu0 %v4626
      %4645 = vmatprep.subr.mxu0 0.0
      %4646 = vmatpush1.xpose.msra.mxu0 %v4629
      %4647 = vmatprep.subr.mxu0 0.0
      %4648 = vmatpush1.xpose.msra.mxu0 0.0
      %4649 = vmatprep.subr.mxu0 0.0
      %4650 = vmatpush1.xpose.msra.mxu0 0.0
      %4651 = vmatprep.subr.mxu0 0.0
      %4652 = vmatpush1.xpose.msra.mxu0 0.0
      %4653 = vmatprep.subr.mxu0 0.0
      %4654 = vmatpush1.xpose.msra.mxu0 0.0
      %4655 = vmatprep.subr.mxu0 0.0
      %4656 = vmatpush1.xpose.msra.mxu0 0.0
      %4657 = vmatprep.subr.mxu0 0.0
      %4658 = vmatpush1.xpose.msra.mxu0 0.0
      %4659 = vmatprep.subr.mxu0 0.0
      %4660 = vmatpush1.xpose.msra.mxu0 0.0
      %4661 = vmatprep.subr.mxu0 0.0
      %4662 = vmatpush1.xpose.msra.mxu0 0.0
      %4663 = vmatprep.subr.mxu0 0.0
      %4664 = vmatpush1.xpose.msra.mxu0 0.0
      %4665 = vmatprep.subr.mxu0 0.0
      %4666 = vmatpush1.xpose.msra.mxu0 0.0
      %4667 = vmatprep.subr.mxu0 0.0
      %4668 = vmatpush1.xpose.msra.mxu0 0.0
      %4669 = vmatprep.subr.mxu0 0.0
      %4670 = vmatpush1.xpose.msra.mxu0 0.0
      %4671 = vmatprep.subr.mxu0 0.0
      %4672 = vmatpush1.xpose.msra.mxu0 0.0
      %4673 = vmatprep.subr.mxu0 0.0
      %4674 = vmatpush1.xpose.msra.mxu0 0.0
      %4675 = vmatprep.subr.mxu0 0.0
      %4676 = vmatpush1.xpose.msra.mxu0 0.0
      %4677 = vmatprep.subr.mxu0 0.0
      %4678 = vmatpush1.xpose.msra.mxu0 0.0
      %4679 = vmatprep.subr.mxu0 0.0
      %4680 = vmatpush1.xpose.msra.mxu0 0.0
      %4681 = vmatprep.subr.mxu0 0.0
      %4682 = vmatpush1.xpose.msra.mxu0 0.0
      %4683 = vmatprep.subr.mxu0 0.0
      %4684 = vmatpush1.xpose.msra.mxu0 0.0
      %4685 = vmatprep.subr.mxu0 0.0
      %4686 = vmatpush1.xpose.msra.mxu0 0.0
      %4687 = vmatprep.subr.mxu0 0.0
      %4688 = vmatpush1.xpose.msra.mxu0 0.0
      %4689 = vmatprep.subr.mxu0 0.0
      %4690 = vmatpush1.xpose.msra.mxu0 0.0
      %4691 = vmatprep.subr.mxu0 0.0
      %4692 = vmatpush1.xpose.msra.mxu0 0.0
      %4693 = vmatprep.subr.mxu0 0.0
      %4694 = vmatpush1.xpose.msra.mxu0 0.0
      %4695 = vmatprep.mubr.f32.mxu0 0.0
      %4696 = vmatmul.mubr.f32.gmra.mrb[0].mxu0 %v4584
      %v4697 = vpop.f32.mrb[0].mxu0
      %v4698 = vadd.f32 %v4116, %v4697
      %v4699 = vpop.f32.mrb[0].mxu0
      %4700 = vmatprep.mubr.f32.mxu0 0.0
      %4701 = vmatmul.mubr.f32.gmra.mrb[0].mxu0 %v4587
      %v4702 = vpop.f32.mrb[0].mxu0
      %v4703 = vadd.f32 %v4117, %v4702
      %v4704 = vpop.f32.mrb[0].mxu0
      %4705 = vmatprep.mubr.f32.mxu0 0.0
      %4706 = vmatmul.mubr.f32.gmra.mrb[0].mxu0 %v4590
      %v4707 = vpop.f32.mrb[0].mxu0
      %v4708 = vadd.f32 %v4118, %v4707
      %v4709 = vpop.f32.mrb[0].mxu0
      %4710 = vmatprep.mubr.f32.mxu0 0.0
      %4711 = vmatmul.mubr.f32.gmra.mrb[0].mxu0 %v4593
      %v4712 = vpop.f32.mrb[0].mxu0
      %v4713 = vadd.f32 %v4119, %v4712
      %v4714 = vpop.f32.mrb[0].mxu0
      %4715 = vmatprep.mubr.f32.mxu0 0.0
      %4716 = vmatmul.mubr.f32.gmra.mrb[0].mxu0 %v4596
      %v4717 = vpop.f32.mrb[0].mxu0
      %v4718 = vadd.f32 %v4120, %v4717
      %v4719 = vpop.f32.mrb[0].mxu0
      %4720 = vmatprep.mubr.f32.mxu0 0.0
      %4721 = vmatmul.mubr.f32.gmra.mrb[0].mxu0 %v4599
      %v4722 = vpop.f32.mrb[0].mxu0
      %v4723 = vadd.f32 %v4121, %v4722
      %v4724 = vpop.f32.mrb[0].mxu0
      %4725 = vmatprep.mubr.f32.mxu0 0.0
      %4726 = vmatmul.mubr.f32.gmra.mrb[0].mxu0 %v4602
      %v4727 = vpop.f32.mrb[0].mxu0
      %v4728 = vadd.f32 %v4122, %v4727
      %v4729 = vpop.f32.mrb[0].mxu0
      %4730 = vmatprep.mubr.f32.mxu0 0.0
      %4731 = vmatmul.mubr.f32.gmra.mrb[0].mxu0 %v4605
      %v4732 = vpop.f32.mrb[0].mxu0
      %v4733 = vadd.f32 %v4123, %v4732
      %v4734 = vpop.f32.mrb[0].mxu0
      %4735 = vdwg.mxu0
      %v4736 = vadd.f32 %v4239, %v977
      %v4737 = vadd.f32 %v4244, %v978
      %v4738 = vadd.f32 %v4249, %v979
      %v4739 = vadd.f32 %v4254, %v980
      %v4740 = vadd.f32 %v4259, %v981
      %v4741 = vadd.f32 %v4264, %v982
      %v4742 = vadd.f32 %v4269, %v983
      %v4743 = vadd.f32 %v4274, %v984
      %v4744 = vadd.f32 %v4392, %v985
      %v4745 = vadd.f32 %v4397, %v986
      %v4746 = vadd.f32 %v4402, %v987
      %v4747 = vadd.f32 %v4407, %v988
      %v4748 = vadd.f32 %v4412, %v989
      %v4749 = vadd.f32 %v4417, %v990
      %v4750 = vadd.f32 %v4422, %v991
      %v4751 = vadd.f32 %v4427, %v992
      %v4752 = vadd.f32 %v4545, %v993
      %v4753 = vadd.f32 %v4550, %v994
      %v4754 = vadd.f32 %v4555, %v995
      %v4755 = vadd.f32 %v4560, %v996
      %v4756 = vadd.f32 %v4565, %v997
      %v4757 = vadd.f32 %v4570, %v998
      %v4758 = vadd.f32 %v4575, %v999
      %v4759 = vadd.f32 %v4580, %v1000
      %v4760 = vadd.f32 %v4698, %v1001
      %v4761 = vadd.f32 %v4703, %v1002
      %v4762 = vadd.f32 %v4708, %v1003
      %v4763 = vadd.f32 %v4713, %v1004
      %v4764 = vadd.f32 %v4718, %v1005
      %v4765 = vadd.f32 %v4723, %v1006
      %v4766 = vadd.f32 %v4728, %v1007
      %v4767 = vadd.f32 %v4733, %v1008
      %v4768 = vsel %vm2498, %v4736, -inf
      %4769 = vmax.xlane.f32.xlu0 %v4768
      %v4770 = vpop.xlane.xlu0 %4769
      %v4771 = vsel %vm2498, %v4737, -inf
      %4772 = vmax.xlane.f32.xlu0 %v4771
      %v4773 = vpop.xlane.xlu0 %4772
      %v4774 = vsel %vm2498, %v4738, -inf
      %4775 = vmax.xlane.f32.xlu0 %v4774
      %v4776 = vpop.xlane.xlu0 %4775
      %v4777 = vsel %vm2498, %v4739, -inf
      %4778 = vmax.xlane.f32.xlu0 %v4777
      %v4779 = vpop.xlane.xlu0 %4778
      %v4780 = vsel %vm2498, %v4740, -inf
      %4781 = vmax.xlane.f32.xlu0 %v4780
      %v4782 = vpop.xlane.xlu0 %4781
      %v4783 = vsel %vm2498, %v4741, -inf
      %4784 = vmax.xlane.f32.xlu0 %v4783
      %v4785 = vpop.xlane.xlu0 %4784
      %v4786 = vsel %vm2498, %v4742, -inf
      %4787 = vmax.xlane.f32.xlu0 %v4786
      %v4788 = vpop.xlane.xlu0 %4787
      %v4789 = vsel %vm2498, %v4743, -inf
      %4790 = vmax.xlane.f32.xlu0 %v4789
      %v4791 = vpop.xlane.xlu0 %4790
      %v4792 = vsel %vm2498, %v4744, -inf
      %4793 = vmax.xlane.f32.xlu0 %v4792
      %v4794 = vpop.xlane.xlu0 %4793
      %v4795 = vsel %vm2498, %v4745, -inf
      %4796 = vmax.xlane.f32.xlu0 %v4795
      %v4797 = vpop.xlane.xlu0 %4796
      %v4798 = vsel %vm2498, %v4746, -inf
      %4799 = vmax.xlane.f32.xlu0 %v4798
      %v4800 = vpop.xlane.xlu0 %4799
      %v4801 = vsel %vm2498, %v4747, -inf
      %4802 = vmax.xlane.f32.xlu0 %v4801
      %v4803 = vpop.xlane.xlu0 %4802
      %v4804 = vsel %vm2498, %v4748, -inf
      %4805 = vmax.xlane.f32.xlu0 %v4804
      %v4806 = vpop.xlane.xlu0 %4805
      %v4807 = vsel %vm2498, %v4749, -inf
      %4808 = vmax.xlane.f32.xlu0 %v4807
      %v4809 = vpop.xlane.xlu0 %4808
      %v4810 = vsel %vm2498, %v4750, -inf
      %4811 = vmax.xlane.f32.xlu0 %v4810
      %v4812 = vpop.xlane.xlu0 %4811
      %v4813 = vsel %vm2498, %v4751, -inf
      %4814 = vmax.xlane.f32.xlu0 %v4813
      %v4815 = vpop.xlane.xlu0 %4814
      %v4816 = vsel %vm2498, %v4752, -inf
      %4817 = vmax.xlane.f32.xlu0 %v4816
      %v4818 = vpop.xlane.xlu0 %4817
      %v4819 = vsel %vm2498, %v4753, -inf
      %4820 = vmax.xlane.f32.xlu0 %v4819
      %v4821 = vpop.xlane.xlu0 %4820
      %v4822 = vsel %vm2498, %v4754, -inf
      %4823 = vmax.xlane.f32.xlu0 %v4822
      %v4824 = vpop.xlane.xlu0 %4823
      %v4825 = vsel %vm2498, %v4755, -inf
      %4826 = vmax.xlane.f32.xlu0 %v4825
      %v4827 = vpop.xlane.xlu0 %4826
      %v4828 = vsel %vm2498, %v4756, -inf
      %4829 = vmax.xlane.f32.xlu0 %v4828
      %v4830 = vpop.xlane.xlu0 %4829
      %v4831 = vsel %vm2498, %v4757, -inf
      %4832 = vmax.xlane.f32.xlu0 %v4831
      %v4833 = vpop.xlane.xlu0 %4832
      %v4834 = vsel %vm2498, %v4758, -inf
      %4835 = vmax.xlane.f32.xlu0 %v4834
      %v4836 = vpop.xlane.xlu0 %4835
      %v4837 = vsel %vm2498, %v4759, -inf
      %4838 = vmax.xlane.f32.xlu0 %v4837
      %v4839 = vpop.xlane.xlu0 %4838
      %v4840 = vsel %vm2498, %v4760, -inf
      %4841 = vmax.xlane.f32.xlu0 %v4840
      %v4842 = vpop.xlane.xlu0 %4841
      %v4843 = vsel %vm2498, %v4761, -inf
      %4844 = vmax.xlane.f32.xlu0 %v4843
      %v4845 = vpop.xlane.xlu0 %4844
      %v4846 = vsel %vm2498, %v4762, -inf
      %4847 = vmax.xlane.f32.xlu0 %v4846
      %v4848 = vpop.xlane.xlu0 %4847
      %v4849 = vsel %vm2498, %v4763, -inf
      %4850 = vmax.xlane.f32.xlu0 %v4849
      %v4851 = vpop.xlane.xlu0 %4850
      %v4852 = vsel %vm2498, %v4764, -inf
      %4853 = vmax.xlane.f32.xlu0 %v4852
      %v4854 = vpop.xlane.xlu0 %4853
      %v4855 = vsel %vm2498, %v4765, -inf
      %4856 = vmax.xlane.f32.xlu0 %v4855
      %v4857 = vpop.xlane.xlu0 %4856
      %v4858 = vsel %vm2498, %v4766, -inf
      %4859 = vmax.xlane.f32.xlu0 %v4858
      %v4860 = vpop.xlane.xlu0 %4859
      %v4861 = vsel %vm2498, %v4767, -inf
      %4862 = vmax.xlane.f32.xlu0 %v4861
      %v4863 = vpop.xlane.xlu0 %4862
      %v4864 = vsub.f32 %v4736, %v4770
      %v4865 = vsub.f32 %v4737, %v4773
      %v4866 = vsub.f32 %v4738, %v4776
      %v4867 = vsub.f32 %v4739, %v4779
      %v4868 = vsub.f32 %v4740, %v4782
      %v4869 = vsub.f32 %v4741, %v4785
      %v4870 = vsub.f32 %v4742, %v4788
      %v4871 = vsub.f32 %v4743, %v4791
      %v4872 = vsub.f32 %v4744, %v4794
      %v4873 = vsub.f32 %v4745, %v4797
      %v4874 = vsub.f32 %v4746, %v4800
      %v4875 = vsub.f32 %v4747, %v4803
      %v4876 = vsub.f32 %v4748, %v4806
      %v4877 = vsub.f32 %v4749, %v4809
      %v4878 = vsub.f32 %v4750, %v4812
      %v4879 = vsub.f32 %v4751, %v4815
      %v4880 = vsub.f32 %v4752, %v4818
      %v4881 = vsub.f32 %v4753, %v4821
      %v4882 = vsub.f32 %v4754, %v4824
      %v4883 = vsub.f32 %v4755, %v4827
      %v4884 = vsub.f32 %v4756, %v4830
      %v4885 = vsub.f32 %v4757, %v4833
      %v4886 = vsub.f32 %v4758, %v4836
      %v4887 = vsub.f32 %v4759, %v4839
      %v4888 = vsub.f32 %v4760, %v4842
      %v4889 = vsub.f32 %v4761, %v4845
      %v4890 = vsub.f32 %v4762, %v4848
      %v4891 = vsub.f32 %v4763, %v4851
      %v4892 = vsub.f32 %v4764, %v4854
      %v4893 = vsub.f32 %v4765, %v4857
      %v4894 = vsub.f32 %v4766, %v4860
      %v4895 = vsub.f32 %v4767, %v4863
      %v4896 = vmul.f32 %v4864, 1.442695
      %v4897 = vpow.pop %v4896
      %v4898 = vmul.f32 %v4865, 1.442695
      %v4899 = vpow.pop %v4898
      %v4900 = vmul.f32 %v4866, 1.442695
      %v4901 = vpow.pop %v4900
      %v4902 = vmul.f32 %v4867, 1.442695
      %v4903 = vpow.pop %v4902
      %v4904 = vmul.f32 %v4868, 1.442695
      %v4905 = vpow.pop %v4904
      %v4906 = vmul.f32 %v4869, 1.442695
      %v4907 = vpow.pop %v4906
      %v4908 = vmul.f32 %v4870, 1.442695
      %v4909 = vpow.pop %v4908
      %v4910 = vmul.f32 %v4871, 1.442695
      %v4911 = vpow.pop %v4910
      %v4912 = vmul.f32 %v4872, 1.442695
      %v4913 = vpow.pop %v4912
      %v4914 = vmul.f32 %v4873, 1.442695
      %v4915 = vpow.pop %v4914
      %v4916 = vmul.f32 %v4874, 1.442695
      %v4917 = vpow.pop %v4916
      %v4918 = vmul.f32 %v4875, 1.442695
      %v4919 = vpow.pop %v4918
      %v4920 = vmul.f32 %v4876, 1.442695
      %v4921 = vpow.pop %v4920
      %v4922 = vmul.f32 %v4877, 1.442695
      %v4923 = vpow.pop %v4922
      %v4924 = vmul.f32 %v4878, 1.442695
      %v4925 = vpow.pop %v4924
      %v4926 = vmul.f32 %v4879, 1.442695
      %v4927 = vpow.pop %v4926
      %v4928 = vmul.f32 %v4880, 1.442695
      %v4929 = vpow.pop %v4928
      %v4930 = vmul.f32 %v4881, 1.442695
      %v4931 = vpow.pop %v4930
      %v4932 = vmul.f32 %v4882, 1.442695
      %v4933 = vpow.pop %v4932
      %v4934 = vmul.f32 %v4883, 1.442695
      %v4935 = vpow.pop %v4934
      %v4936 = vmul.f32 %v4884, 1.442695
      %v4937 = vpow.pop %v4936
      %v4938 = vmul.f32 %v4885, 1.442695
      %v4939 = vpow.pop %v4938
      %v4940 = vmul.f32 %v4886, 1.442695
      %v4941 = vpow.pop %v4940
      %v4942 = vmul.f32 %v4887, 1.442695
      %v4943 = vpow.pop %v4942
      %v4944 = vmul.f32 %v4888, 1.442695
      %v4945 = vpow.pop %v4944
      %v4946 = vmul.f32 %v4889, 1.442695
      %v4947 = vpow.pop %v4946
      %v4948 = vmul.f32 %v4890, 1.442695
      %v4949 = vpow.pop %v4948
      %v4950 = vmul.f32 %v4891, 1.442695
      %v4951 = vpow.pop %v4950
      %v4952 = vmul.f32 %v4892, 1.442695
      %v4953 = vpow.pop %v4952
      %v4954 = vmul.f32 %v4893, 1.442695
      %v4955 = vpow.pop %v4954
      %v4956 = vmul.f32 %v4894, 1.442695
      %v4957 = vpow.pop %v4956
      %v4958 = vmul.f32 %v4895, 1.442695
      %v4959 = vpow.pop %v4958
      %v4960 = vsel %vm2498, %v4897, 0.0
      %4961 = vadd.xlane.f32.xlu0 %v4960
      %v4962 = vpop.xlane.xlu0 %4961
      %v4963 = vsel %vm2498, %v4899, 0.0
      %4964 = vadd.xlane.f32.xlu0 %v4963
      %v4965 = vpop.xlane.xlu0 %4964
      %v4966 = vsel %vm2498, %v4901, 0.0
      %4967 = vadd.xlane.f32.xlu0 %v4966
      %v4968 = vpop.xlane.xlu0 %4967
      %v4969 = vsel %vm2498, %v4903, 0.0
      %4970 = vadd.xlane.f32.xlu0 %v4969
      %v4971 = vpop.xlane.xlu0 %4970
      %v4972 = vsel %vm2498, %v4905, 0.0
      %4973 = vadd.xlane.f32.xlu0 %v4972
      %v4974 = vpop.xlane.xlu0 %4973
      %v4975 = vsel %vm2498, %v4907, 0.0
      %4976 = vadd.xlane.f32.xlu0 %v4975
      %v4977 = vpop.xlane.xlu0 %4976
      %v4978 = vsel %vm2498, %v4909, 0.0
      %4979 = vadd.xlane.f32.xlu0 %v4978
      %v4980 = vpop.xlane.xlu0 %4979
      %v4981 = vsel %vm2498, %v4911, 0.0
      %4982 = vadd.xlane.f32.xlu0 %v4981
      %v4983 = vpop.xlane.xlu0 %4982
      %v4984 = vsel %vm2498, %v4913, 0.0
      %4985 = vadd.xlane.f32.xlu0 %v4984
      %v4986 = vpop.xlane.xlu0 %4985
      %v4987 = vsel %vm2498, %v4915, 0.0
      %4988 = vadd.xlane.f32.xlu0 %v4987
      %v4989 = vpop.xlane.xlu0 %4988
      %v4990 = vsel %vm2498, %v4917, 0.0
      %4991 = vadd.xlane.f32.xlu0 %v4990
      %v4992 = vpop.xlane.xlu0 %4991
      %v4993 = vsel %vm2498, %v4919, 0.0
      %4994 = vadd.xlane.f32.xlu0 %v4993
      %v4995 = vpop.xlane.xlu0 %4994
      %v4996 = vsel %vm2498, %v4921, 0.0
      %4997 = vadd.xlane.f32.xlu0 %v4996
      %v4998 = vpop.xlane.xlu0 %4997
      %v4999 = vsel %vm2498, %v4923, 0.0
      %5000 = vadd.xlane.f32.xlu0 %v4999
      %v5001 = vpop.xlane.xlu0 %5000
      %v5002 = vsel %vm2498, %v4925, 0.0
      %5003 = vadd.xlane.f32.xlu0 %v5002
      %v5004 = vpop.xlane.xlu0 %5003
      %v5005 = vsel %vm2498, %v4927, 0.0
      %5006 = vadd.xlane.f32.xlu0 %v5005
      %v5007 = vpop.xlane.xlu0 %5006
      %v5008 = vsel %vm2498, %v4929, 0.0
      %5009 = vadd.xlane.f32.xlu0 %v5008
      %v5010 = vpop.xlane.xlu0 %5009
      %v5011 = vsel %vm2498, %v4931, 0.0
      %5012 = vadd.xlane.f32.xlu0 %v5011
      %v5013 = vpop.xlane.xlu0 %5012
      %v5014 = vsel %vm2498, %v4933, 0.0
      %5015 = vadd.xlane.f32.xlu0 %v5014
      %v5016 = vpop.xlane.xlu0 %5015
      %v5017 = vsel %vm2498, %v4935, 0.0
      %5018 = vadd.xlane.f32.xlu0 %v5017
      %v5019 = vpop.xlane.xlu0 %5018
      %v5020 = vsel %vm2498, %v4937, 0.0
      %5021 = vadd.xlane.f32.xlu0 %v5020
      %v5022 = vpop.xlane.xlu0 %5021
      %v5023 = vsel %vm2498, %v4939, 0.0
      %5024 = vadd.xlane.f32.xlu0 %v5023
      %v5025 = vpop.xlane.xlu0 %5024
      %v5026 = vsel %vm2498, %v4941, 0.0
      %5027 = vadd.xlane.f32.xlu0 %v5026
      %v5028 = vpop.xlane.xlu0 %5027
      %v5029 = vsel %vm2498, %v4943, 0.0
      %5030 = vadd.xlane.f32.xlu0 %v5029
      %v5031 = vpop.xlane.xlu0 %5030
      %v5032 = vsel %vm2498, %v4945, 0.0
      %5033 = vadd.xlane.f32.xlu0 %v5032
      %v5034 = vpop.xlane.xlu0 %5033
      %v5035 = vsel %vm2498, %v4947, 0.0
      %5036 = vadd.xlane.f32.xlu0 %v5035
      %v5037 = vpop.xlane.xlu0 %5036
      %v5038 = vsel %vm2498, %v4949, 0.0
      %5039 = vadd.xlane.f32.xlu0 %v5038
      %v5040 = vpop.xlane.xlu0 %5039
      %v5041 = vsel %vm2498, %v4951, 0.0
      %5042 = vadd.xlane.f32.xlu0 %v5041
      %v5043 = vpop.xlane.xlu0 %5042
      %v5044 = vsel %vm2498, %v4953, 0.0
      %5045 = vadd.xlane.f32.xlu0 %v5044
      %v5046 = vpop.xlane.xlu0 %5045
      %v5047 = vsel %vm2498, %v4955, 0.0
      %5048 = vadd.xlane.f32.xlu0 %v5047
      %v5049 = vpop.xlane.xlu0 %5048
      %v5050 = vsel %vm2498, %v4957, 0.0
      %5051 = vadd.xlane.f32.xlu0 %v5050
      %v5052 = vpop.xlane.xlu0 %5051
      %v5053 = vsel %vm2498, %v4959, 0.0
      %5054 = vadd.xlane.f32.xlu0 %v5053
      %v5055 = vpop.xlane.xlu0 %5054
      %v5056 = vrcp.pop %v4962
      %v5057 = vmul.f32 %v4897, %v5056
      %v5058 = vrcp.pop %v4965
      %v5059 = vmul.f32 %v4899, %v5058
      %v5060 = vrcp.pop %v4968
      %v5061 = vmul.f32 %v4901, %v5060
      %v5062 = vrcp.pop %v4971
      %v5063 = vmul.f32 %v4903, %v5062
      %v5064 = vrcp.pop %v4974
      %v5065 = vmul.f32 %v4905, %v5064
      %v5066 = vrcp.pop %v4977
      %v5067 = vmul.f32 %v4907, %v5066
      %v5068 = vrcp.pop %v4980
      %v5069 = vmul.f32 %v4909, %v5068
      %v5070 = vrcp.pop %v4983
      %v5071 = vmul.f32 %v4911, %v5070
      %v5072 = vrcp.pop %v4986
      %v5073 = vmul.f32 %v4913, %v5072
      %v5074 = vrcp.pop %v4989
      %v5075 = vmul.f32 %v4915, %v5074
      %v5076 = vrcp.pop %v4992
      %v5077 = vmul.f32 %v4917, %v5076
      %v5078 = vrcp.pop %v4995
      %v5079 = vmul.f32 %v4919, %v5078
      %v5080 = vrcp.pop %v4998
      %v5081 = vmul.f32 %v4921, %v5080
      %v5082 = vrcp.pop %v5001
      %v5083 = vmul.f32 %v4923, %v5082
      %v5084 = vrcp.pop %v5004
      %v5085 = vmul.f32 %v4925, %v5084
      %v5086 = vrcp.pop %v5007
      %v5087 = vmul.f32 %v4927, %v5086
      %v5088 = vrcp.pop %v5010
      %v5089 = vmul.f32 %v4929, %v5088
      %v5090 = vrcp.pop %v5013
      %v5091 = vmul.f32 %v4931, %v5090
      %v5092 = vrcp.pop %v5016
      %v5093 = vmul.f32 %v4933, %v5092
      %v5094 = vrcp.pop %v5019
      %v5095 = vmul.f32 %v4935, %v5094
      %v5096 = vrcp.pop %v5022
      %v5097 = vmul.f32 %v4937, %v5096
      %v5098 = vrcp.pop %v5025
      %v5099 = vmul.f32 %v4939, %v5098
      %v5100 = vrcp.pop %v5028
      %v5101 = vmul.f32 %v4941, %v5100
      %v5102 = vrcp.pop %v5031
      %v5103 = vmul.f32 %v4943, %v5102
      %v5104 = vrcp.pop %v5034
      %v5105 = vmul.f32 %v4945, %v5104
      %v5106 = vrcp.pop %v5037
      %v5107 = vmul.f32 %v4947, %v5106
      %v5108 = vrcp.pop %v5040
      %v5109 = vmul.f32 %v4949, %v5108
      %v5110 = vrcp.pop %v5043
      %v5111 = vmul.f32 %v4951, %v5110
      %v5112 = vrcp.pop %v5046
      %v5113 = vmul.f32 %v4953, %v5112
      %v5114 = vrcp.pop %v5049
      %v5115 = vmul.f32 %v4955, %v5114
      %v5116 = vrcp.pop %v5052
      %v5117 = vmul.f32 %v4957, %v5116
      %v5118 = vrcp.pop %v5055
      %v5119 = vmul.f32 %v4959, %v5118
      %v5121 = vsel %vm2498, %v5057, 0
      %v5124 = vsel %vm2498, %v5059, 0
      %v5127 = vsel %vm2498, %v5061, 0
      %v5130 = vsel %vm2498, %v5063, 0
      %v5133 = vsel %vm2498, %v5065, 0
      %v5136 = vsel %vm2498, %v5067, 0
      %v5139 = vsel %vm2498, %v5069, 0
      %v5142 = vsel %vm2498, %v5071, 0
      %5144 = vmatprep.subr.mxu0 0.0
      %5145 = vmatpush1.msra.mxu0 %v3925
      %5146 = vmatprep.subr.mxu0 0.0
      %5147 = vmatpush1.msra.mxu0 %v3930
      %5148 = vmatprep.subr.mxu0 0.0
      %5149 = vmatpush1.msra.mxu0 %v3935
      %5150 = vmatprep.subr.mxu0 0.0
      %5151 = vmatpush1.msra.mxu0 %v3940
      %5152 = vmatprep.subr.mxu0 0.0
      %5153 = vmatpush1.msra.mxu0 %v3945
      %5154 = vmatprep.subr.mxu0 0.0
      %5155 = vmatpush1.msra.mxu0 %v3950
      %5156 = vmatprep.subr.mxu0 0.0
      %5157 = vmatpush1.msra.mxu0 %v3955
      %5158 = vmatprep.subr.mxu0 0.0
      %5159 = vmatpush1.msra.mxu0 %v3960
      %5160 = vmatprep.subr.mxu0 0.0
      %5161 = vmatpush1.msra.mxu0 0.0
      %5162 = vmatprep.subr.mxu0 0.0
      %5163 = vmatpush1.msra.mxu0 0.0
      %5164 = vmatprep.subr.mxu0 0.0
      %5165 = vmatpush1.msra.mxu0 0.0
      %5166 = vmatprep.subr.mxu0 0.0
      %5167 = vmatpush1.msra.mxu0 0.0
      %5168 = vmatprep.subr.mxu0 0.0
      %5169 = vmatpush1.msra.mxu0 0.0
      %5170 = vmatprep.subr.mxu0 0.0
      %5171 = vmatpush1.msra.mxu0 0.0
      %5172 = vmatprep.subr.mxu0 0.0
      %5173 = vmatpush1.msra.mxu0 0.0
      %5174 = vmatprep.subr.mxu0 0.0
      %5175 = vmatpush1.msra.mxu0 0.0
      %5176 = vmatprep.subr.mxu0 0.0
      %5177 = vmatpush1.msra.mxu0 0.0
      %5178 = vmatprep.subr.mxu0 0.0
      %5179 = vmatpush1.msra.mxu0 0.0
      %5180 = vmatprep.subr.mxu0 0.0
      %5181 = vmatpush1.msra.mxu0 0.0
      %5182 = vmatprep.subr.mxu0 0.0
      %5183 = vmatpush1.msra.mxu0 0.0
      %5184 = vmatprep.subr.mxu0 0.0
      %5185 = vmatpush1.msra.mxu0 0.0
      %5186 = vmatprep.subr.mxu0 0.0
      %5187 = vmatpush1.msra.mxu0 0.0
      %5188 = vmatprep.subr.mxu0 0.0
      %5189 = vmatpush1.msra.mxu0 0.0
      %5190 = vmatprep.subr.mxu0 0.0
      %5191 = vmatpush1.msra.mxu0 0.0
      %5192 = vmatprep.subr.mxu0 0.0
      %5193 = vmatpush1.msra.mxu0 0.0
      %5194 = vmatprep.subr.mxu0 0.0
      %5195 = vmatpush1.msra.mxu0 0.0
      %5196 = vmatprep.subr.mxu0 0.0
      %5197 = vmatpush1.msra.mxu0 0.0
      %5198 = vmatprep.subr.mxu0 0.0
      %5199 = vmatpush1.msra.mxu0 0.0
      %5200 = vmatprep.subr.mxu0 0.0
      %5201 = vmatpush1.msra.mxu0 0.0
      %5202 = vmatprep.subr.mxu0 0.0
      %5203 = vmatpush1.msra.mxu0 0.0
      %5204 = vmatprep.subr.mxu0 0.0
      %5205 = vmatpush1.msra.mxu0 0.0
      %5206 = vmatprep.subr.mxu0 0.0
      %5207 = vmatpush1.msra.mxu0 0.0
      %5208 = vmatprep.mubr.f32.mxu0 0.0
      %5209 = vmatmul.mubr.f32.gmra.mrb[0].mxu0 %v5121
      %v5210 = vpop.f32.mrb[0].mxu0
      %v5211 = vadd.f32 0.0, %v5210
      %v5212 = vpop.f32.mrb[0].mxu0
      %5213 = vmatprep.mubr.f32.mxu0 0.0
      %5214 = vmatmul.mubr.f32.gmra.mrb[0].mxu0 %v5124
      %v5215 = vpop.f32.mrb[0].mxu0
      %v5216 = vadd.f32 0.0, %v5215
      %v5217 = vpop.f32.mrb[0].mxu0
      %5218 = vmatprep.mubr.f32.mxu0 0.0
      %5219 = vmatmul.mubr.f32.gmra.mrb[0].mxu0 %v5127
      %v5220 = vpop.f32.mrb[0].mxu0
      %v5221 = vadd.f32 0.0, %v5220
      %v5222 = vpop.f32.mrb[0].mxu0
      %5223 = vmatprep.mubr.f32.mxu0 0.0
      %5224 = vmatmul.mubr.f32.gmra.mrb[0].mxu0 %v5130
      %v5225 = vpop.f32.mrb[0].mxu0
      %v5226 = vadd.f32 0.0, %v5225
      %v5227 = vpop.f32.mrb[0].mxu0
      %5228 = vmatprep.mubr.f32.mxu0 0.0
      %5229 = vmatmul.mubr.f32.gmra.mrb[0].mxu0 %v5133
      %v5230 = vpop.f32.mrb[0].mxu0
      %v5231 = vadd.f32 0.0, %v5230
      %v5232 = vpop.f32.mrb[0].mxu0
      %5233 = vmatprep.mubr.f32.mxu0 0.0
      %5234 = vmatmul.mubr.f32.gmra.mrb[0].mxu0 %v5136
      %v5235 = vpop.f32.mrb[0].mxu0
      %v5236 = vadd.f32 0.0, %v5235
      %v5237 = vpop.f32.mrb[0].mxu0
      %5238 = vmatprep.mubr.f32.mxu0 0.0
      %5239 = vmatmul.mubr.f32.gmra.mrb[0].mxu0 %v5139
      %v5240 = vpop.f32.mrb[0].mxu0
      %v5241 = vadd.f32 0.0, %v5240
      %v5242 = vpop.f32.mrb[0].mxu0
      %5243 = vmatprep.mubr.f32.mxu0 0.0
      %5244 = vmatmul.mubr.f32.gmra.mrb[0].mxu0 %v5142
      %v5245 = vpop.f32.mrb[0].mxu0
      %v5246 = vadd.f32 0.0, %v5245
      %v5247 = vpop.f32.mrb[0].mxu0
      %5248 = vdwg.mxu0
      %v5250 = vsel %vm2498, %v5073, 0
      %v5253 = vsel %vm2498, %v5075, 0
      %v5256 = vsel %vm2498, %v5077, 0
      %v5259 = vsel %vm2498, %v5079, 0
      %v5262 = vsel %vm2498, %v5081, 0
      %v5265 = vsel %vm2498, %v5083, 0
      %v5268 = vsel %vm2498, %v5085, 0
      %v5271 = vsel %vm2498, %v5087, 0
      %5273 = vmatprep.subr.mxu0 0.0
      %5274 = vmatpush1.msra.mxu0 %v3965
      %5275 = vmatprep.subr.mxu0 0.0
      %5276 = vmatpush1.msra.mxu0 %v3970
      %5277 = vmatprep.subr.mxu0 0.0
      %5278 = vmatpush1.msra.mxu0 %v3975
      %5279 = vmatprep.subr.mxu0 0.0
      %5280 = vmatpush1.msra.mxu0 %v3980
      %5281 = vmatprep.subr.mxu0 0.0
      %5282 = vmatpush1.msra.mxu0 %v3985
      %5283 = vmatprep.subr.mxu0 0.0
      %5284 = vmatpush1.msra.mxu0 %v3990
      %5285 = vmatprep.subr.mxu0 0.0
      %5286 = vmatpush1.msra.mxu0 %v3995
      %5287 = vmatprep.subr.mxu0 0.0
      %5288 = vmatpush1.msra.mxu0 %v4000
      %5289 = vmatprep.subr.mxu0 0.0
      %5290 = vmatpush1.msra.mxu0 0.0
      %5291 = vmatprep.subr.mxu0 0.0
      %5292 = vmatpush1.msra.mxu0 0.0
      %5293 = vmatprep.subr.mxu0 0.0
      %5294 = vmatpush1.msra.mxu0 0.0
      %5295 = vmatprep.subr.mxu0 0.0
      %5296 = vmatpush1.msra.mxu0 0.0
      %5297 = vmatprep.subr.mxu0 0.0
      %5298 = vmatpush1.msra.mxu0 0.0
      %5299 = vmatprep.subr.mxu0 0.0
      %5300 = vmatpush1.msra.mxu0 0.0
      %5301 = vmatprep.subr.mxu0 0.0
      %5302 = vmatpush1.msra.mxu0 0.0
      %5303 = vmatprep.subr.mxu0 0.0
      %5304 = vmatpush1.msra.mxu0 0.0
      %5305 = vmatprep.subr.mxu0 0.0
      %5306 = vmatpush1.msra.mxu0 0.0
      %5307 = vmatprep.subr.mxu0 0.0
      %5308 = vmatpush1.msra.mxu0 0.0
      %5309 = vmatprep.subr.mxu0 0.0
      %5310 = vmatpush1.msra.mxu0 0.0
      %5311 = vmatprep.subr.mxu0 0.0
      %5312 = vmatpush1.msra.mxu0 0.0
      %5313 = vmatprep.subr.mxu0 0.0
      %5314 = vmatpush1.msra.mxu0 0.0
      %5315 = vmatprep.subr.mxu0 0.0
      %5316 = vmatpush1.msra.mxu0 0.0
      %5317 = vmatprep.subr.mxu0 0.0
      %5318 = vmatpush1.msra.mxu0 0.0
      %5319 = vmatprep.subr.mxu0 0.0
      %5320 = vmatpush1.msra.mxu0 0.0
      %5321 = vmatprep.subr.mxu0 0.0
      %5322 = vmatpush1.msra.mxu0 0.0
      %5323 = vmatprep.subr.mxu0 0.0
      %5324 = vmatpush1.msra.mxu0 0.0
      %5325 = vmatprep.subr.mxu0 0.0
      %5326 = vmatpush1.msra.mxu0 0.0
      %5327 = vmatprep.subr.mxu0 0.0
      %5328 = vmatpush1.msra.mxu0 0.0
      %5329 = vmatprep.subr.mxu0 0.0
      %5330 = vmatpush1.msra.mxu0 0.0
      %5331 = vmatprep.subr.mxu0 0.0
      %5332 = vmatpush1.msra.mxu0 0.0
      %5333 = vmatprep.subr.mxu0 0.0
      %5334 = vmatpush1.msra.mxu0 0.0
      %5335 = vmatprep.subr.mxu0 0.0
      %5336 = vmatpush1.msra.mxu0 0.0
      %5337 = vmatprep.mubr.f32.mxu0 0.0
      %5338 = vmatmul.mubr.f32.gmra.mrb[0].mxu0 %v5250
      %v5339 = vpop.f32.mrb[0].mxu0
      %v5340 = vadd.f32 0.0, %v5339
      %v5341 = vpop.f32.mrb[0].mxu0
      %5342 = vmatprep.mubr.f32.mxu0 0.0
      %5343 = vmatmul.mubr.f32.gmra.mrb[0].mxu0 %v5253
      %v5344 = vpop.f32.mrb[0].mxu0
      %v5345 = vadd.f32 0.0, %v5344
      %v5346 = vpop.f32.mrb[0].mxu0
      %5347 = vmatprep.mubr.f32.mxu0 0.0
      %5348 = vmatmul.mubr.f32.gmra.mrb[0].mxu0 %v5256
      %v5349 = vpop.f32.mrb[0].mxu0
      %v5350 = vadd.f32 0.0, %v5349
      %v5351 = vpop.f32.mrb[0].mxu0
      %5352 = vmatprep.mubr.f32.mxu0 0.0
      %5353 = vmatmul.mubr.f32.gmra.mrb[0].mxu0 %v5259
      %v5354 = vpop.f32.mrb[0].mxu0
      %v5355 = vadd.f32 0.0, %v5354
      %v5356 = vpop.f32.mrb[0].mxu0
      %5357 = vmatprep.mubr.f32.mxu0 0.0
      %5358 = vmatmul.mubr.f32.gmra.mrb[0].mxu0 %v5262
      %v5359 = vpop.f32.mrb[0].mxu0
      %v5360 = vadd.f32 0.0, %v5359
      %v5361 = vpop.f32.mrb[0].mxu0
      %5362 = vmatprep.mubr.f32.mxu0 0.0
      %5363 = vmatmul.mubr.f32.gmra.mrb[0].mxu0 %v5265
      %v5364 = vpop.f32.mrb[0].mxu0
      %v5365 = vadd.f32 0.0, %v5364
      %v5366 = vpop.f32.mrb[0].mxu0
      %5367 = vmatprep.mubr.f32.mxu0 0.0
      %5368 = vmatmul.mubr.f32.gmra.mrb[0].mxu0 %v5268
      %v5369 = vpop.f32.mrb[0].mxu0
      %v5370 = vadd.f32 0.0, %v5369
      %v5371 = vpop.f32.mrb[0].mxu0
      %5372 = vmatprep.mubr.f32.mxu0 0.0
      %5373 = vmatmul.mubr.f32.gmra.mrb[0].mxu0 %v5271
      %v5374 = vpop.f32.mrb[0].mxu0
      %v5375 = vadd.f32 0.0, %v5374
      %v5376 = vpop.f32.mrb[0].mxu0
      %5377 = vdwg.mxu0
      %v5379 = vsel %vm2498, %v5089, 0
      %v5382 = vsel %vm2498, %v5091, 0
      %v5385 = vsel %vm2498, %v5093, 0
      %v5388 = vsel %vm2498, %v5095, 0
      %v5391 = vsel %vm2498, %v5097, 0
      %v5394 = vsel %vm2498, %v5099, 0
      %v5397 = vsel %vm2498, %v5101, 0
      %v5400 = vsel %vm2498, %v5103, 0
      %5402 = vmatprep.subr.mxu0 0.0
      %5403 = vmatpush1.msra.mxu0 %v4005
      %5404 = vmatprep.subr.mxu0 0.0
      %5405 = vmatpush1.msra.mxu0 %v4010
      %5406 = vmatprep.subr.mxu0 0.0
      %5407 = vmatpush1.msra.mxu0 %v4015
      %5408 = vmatprep.subr.mxu0 0.0
      %5409 = vmatpush1.msra.mxu0 %v4020
      %5410 = vmatprep.subr.mxu0 0.0
      %5411 = vmatpush1.msra.mxu0 %v4025
      %5412 = vmatprep.subr.mxu0 0.0
      %5413 = vmatpush1.msra.mxu0 %v4030
      %5414 = vmatprep.subr.mxu0 0.0
      %5415 = vmatpush1.msra.mxu0 %v4035
      %5416 = vmatprep.subr.mxu0 0.0
      %5417 = vmatpush1.msra.mxu0 %v4040
      %5418 = vmatprep.subr.mxu0 0.0
      %5419 = vmatpush1.msra.mxu0 0.0
      %5420 = vmatprep.subr.mxu0 0.0
      %5421 = vmatpush1.msra.mxu0 0.0
      %5422 = vmatprep.subr.mxu0 0.0
      %5423 = vmatpush1.msra.mxu0 0.0
      %5424 = vmatprep.subr.mxu0 0.0
      %5425 = vmatpush1.msra.mxu0 0.0
      %5426 = vmatprep.subr.mxu0 0.0
      %5427 = vmatpush1.msra.mxu0 0.0
      %5428 = vmatprep.subr.mxu0 0.0
      %5429 = vmatpush1.msra.mxu0 0.0
      %5430 = vmatprep.subr.mxu0 0.0
      %5431 = vmatpush1.msra.mxu0 0.0
      %5432 = vmatprep.subr.mxu0 0.0
      %5433 = vmatpush1.msra.mxu0 0.0
      %5434 = vmatprep.subr.mxu0 0.0
      %5435 = vmatpush1.msra.mxu0 0.0
      %5436 = vmatprep.subr.mxu0 0.0
      %5437 = vmatpush1.msra.mxu0 0.0
      %5438 = vmatprep.subr.mxu0 0.0
      %5439 = vmatpush1.msra.mxu0 0.0
      %5440 = vmatprep.subr.mxu0 0.0
      %5441 = vmatpush1.msra.mxu0 0.0
      %5442 = vmatprep.subr.mxu0 0.0
      %5443 = vmatpush1.msra.mxu0 0.0
      %5444 = vmatprep.subr.mxu0 0.0
      %5445 = vmatpush1.msra.mxu0 0.0
      %5446 = vmatprep.subr.mxu0 0.0
      %5447 = vmatpush1.msra.mxu0 0.0
      %5448 = vmatprep.subr.mxu0 0.0
      %5449 = vmatpush1.msra.mxu0 0.0
      %5450 = vmatprep.subr.mxu0 0.0
      %5451 = vmatpush1.msra.mxu0 0.0
      %5452 = vmatprep.subr.mxu0 0.0
      %5453 = vmatpush1.msra.mxu0 0.0
      %5454 = vmatprep.subr.mxu0 0.0
      %5455 = vmatpush1.msra.mxu0 0.0
      %5456 = vmatprep.subr.mxu0 0.0
      %5457 = vmatpush1.msra.mxu0 0.0
      %5458 = vmatprep.subr.mxu0 0.0
      %5459 = vmatpush1.msra.mxu0 0.0
      %5460 = vmatprep.subr.mxu0 0.0
      %5461 = vmatpush1.msra.mxu0 0.0
      %5462 = vmatprep.subr.mxu0 0.0
      %5463 = vmatpush1.msra.mxu0 0.0
      %5464 = vmatprep.subr.mxu0 0.0
      %5465 = vmatpush1.msra.mxu0 0.0
      %5466 = vmatprep.mubr.f32.mxu0 0.0
      %5467 = vmatmul.mubr.f32.gmra.mrb[0].mxu0 %v5379
      %v5468 = vpop.f32.mrb[0].mxu0
      %v5469 = vadd.f32 0.0, %v5468
      %v5470 = vpop.f32.mrb[0].mxu0
      %5471 = vmatprep.mubr.f32.mxu0 0.0
      %5472 = vmatmul.mubr.f32.gmra.mrb[0].mxu0 %v5382
      %v5473 = vpop.f32.mrb[0].mxu0
      %v5474 = vadd.f32 0.0, %v5473
      %v5475 = vpop.f32.mrb[0].mxu0
      %5476 = vmatprep.mubr.f32.mxu0 0.0
      %5477 = vmatmul.mubr.f32.gmra.mrb[0].mxu0 %v5385
      %v5478 = vpop.f32.mrb[0].mxu0
      %v5479 = vadd.f32 0.0, %v5478
      %v5480 = vpop.f32.mrb[0].mxu0
      %5481 = vmatprep.mubr.f32.mxu0 0.0
      %5482 = vmatmul.mubr.f32.gmra.mrb[0].mxu0 %v5388
      %v5483 = vpop.f32.mrb[0].mxu0
      %v5484 = vadd.f32 0.0, %v5483
      %v5485 = vpop.f32.mrb[0].mxu0
      %5486 = vmatprep.mubr.f32.mxu0 0.0
      %5487 = vmatmul.mubr.f32.gmra.mrb[0].mxu0 %v5391
      %v5488 = vpop.f32.mrb[0].mxu0
      %v5489 = vadd.f32 0.0, %v5488
      %v5490 = vpop.f32.mrb[0].mxu0
      %5491 = vmatprep.mubr.f32.mxu0 0.0
      %5492 = vmatmul.mubr.f32.gmra.mrb[0].mxu0 %v5394
      %v5493 = vpop.f32.mrb[0].mxu0
      %v5494 = vadd.f32 0.0, %v5493
      %v5495 = vpop.f32.mrb[0].mxu0
      %5496 = vmatprep.mubr.f32.mxu0 0.0
      %5497 = vmatmul.mubr.f32.gmra.mrb[0].mxu0 %v5397
      %v5498 = vpop.f32.mrb[0].mxu0
      %v5499 = vadd.f32 0.0, %v5498
      %v5500 = vpop.f32.mrb[0].mxu0
      %5501 = vmatprep.mubr.f32.mxu0 0.0
      %5502 = vmatmul.mubr.f32.gmra.mrb[0].mxu0 %v5400
      %v5503 = vpop.f32.mrb[0].mxu0
      %v5504 = vadd.f32 0.0, %v5503
      %v5505 = vpop.f32.mrb[0].mxu0
      %5506 = vdwg.mxu0
      %v5508 = vsel %vm2498, %v5105, 0
      %v5511 = vsel %vm2498, %v5107, 0
      %v5514 = vsel %vm2498, %v5109, 0
      %v5517 = vsel %vm2498, %v5111, 0
      %v5520 = vsel %vm2498, %v5113, 0
      %v5523 = vsel %vm2498, %v5115, 0
      %v5526 = vsel %vm2498, %v5117, 0
      %v5529 = vsel %vm2498, %v5119, 0
      %5531 = vmatprep.subr.mxu0 0.0
      %5532 = vmatpush1.msra.mxu0 %v4045
      %5533 = vmatprep.subr.mxu0 0.0
      %5534 = vmatpush1.msra.mxu0 %v4050
      %5535 = vmatprep.subr.mxu0 0.0
      %5536 = vmatpush1.msra.mxu0 %v4055
      %5537 = vmatprep.subr.mxu0 0.0
      %5538 = vmatpush1.msra.mxu0 %v4060
      %5539 = vmatprep.subr.mxu0 0.0
      %5540 = vmatpush1.msra.mxu0 %v4065
      %5541 = vmatprep.subr.mxu0 0.0
      %5542 = vmatpush1.msra.mxu0 %v4070
      %5543 = vmatprep.subr.mxu0 0.0
      %5544 = vmatpush1.msra.mxu0 %v4075
      %5545 = vmatprep.subr.mxu0 0.0
      %5546 = vmatpush1.msra.mxu0 %v4080
      %5547 = vmatprep.subr.mxu0 0.0
      %5548 = vmatpush1.msra.mxu0 0.0
      %5549 = vmatprep.subr.mxu0 0.0
      %5550 = vmatpush1.msra.mxu0 0.0
      %5551 = vmatprep.subr.mxu0 0.0
      %5552 = vmatpush1.msra.mxu0 0.0
      %5553 = vmatprep.subr.mxu0 0.0
      %5554 = vmatpush1.msra.mxu0 0.0
      %5555 = vmatprep.subr.mxu0 0.0
      %5556 = vmatpush1.msra.mxu0 0.0
      %5557 = vmatprep.subr.mxu0 0.0
      %5558 = vmatpush1.msra.mxu0 0.0
      %5559 = vmatprep.subr.mxu0 0.0
      %5560 = vmatpush1.msra.mxu0 0.0
      %5561 = vmatprep.subr.mxu0 0.0
      %5562 = vmatpush1.msra.mxu0 0.0
      %5563 = vmatprep.subr.mxu0 0.0
      %5564 = vmatpush1.msra.mxu0 0.0
      %5565 = vmatprep.subr.mxu0 0.0
      %5566 = vmatpush1.msra.mxu0 0.0
      %5567 = vmatprep.subr.mxu0 0.0
      %5568 = vmatpush1.msra.mxu0 0.0
      %5569 = vmatprep.subr.mxu0 0.0
      %5570 = vmatpush1.msra.mxu0 0.0
      %5571 = vmatprep.subr.mxu0 0.0
      %5572 = vmatpush1.msra.mxu0 0.0
      %5573 = vmatprep.subr.mxu0 0.0
      %5574 = vmatpush1.msra.mxu0 0.0
      %5575 = vmatprep.subr.mxu0 0.0
      %5576 = vmatpush1.msra.mxu0 0.0
      %5577 = vmatprep.subr.mxu0 0.0
      %5578 = vmatpush1.msra.mxu0 0.0
      %5579 = vmatprep.subr.mxu0 0.0
      %5580 = vmatpush1.msra.mxu0 0.0
      %5581 = vmatprep.subr.mxu0 0.0
      %5582 = vmatpush1.msra.mxu0 0.0
      %5583 = vmatprep.subr.mxu0 0.0
      %5584 = vmatpush1.msra.mxu0 0.0
      %5585 = vmatprep.subr.mxu0 0.0
      %5586 = vmatpush1.msra.mxu0 0.0
      %5587 = vmatprep.subr.mxu0 0.0
      %5588 = vmatpush1.msra.mxu0 0.0
      %5589 = vmatprep.subr.mxu0 0.0
      %5590 = vmatpush1.msra.mxu0 0.0
      %5591 = vmatprep.subr.mxu0 0.0
      %5592 = vmatpush1.msra.mxu0 0.0
      %5593 = vmatprep.subr.mxu0 0.0
      %5594 = vmatpush1.msra.mxu0 0.0
      %5595 = vmatprep.mubr.f32.mxu0 0.0
      %5596 = vmatmul.mubr.f32.gmra.mrb[0].mxu0 %v5508
      %v5597 = vpop.f32.mrb[0].mxu0
      %v5598 = vadd.f32 0.0, %v5597
      %v5599 = vpop.f32.mrb[0].mxu0
      %5600 = vmatprep.mubr.f32.mxu0 0.0
      %5601 = vmatmul.mubr.f32.gmra.mrb[0].mxu0 %v5511
      %v5602 = vpop.f32.mrb[0].mxu0
      %v5603 = vadd.f32 0.0, %v5602
      %v5604 = vpop.f32.mrb[0].mxu0
      %5605 = vmatprep.mubr.f32.mxu0 0.0
      %5606 = vmatmul.mubr.f32.gmra.mrb[0].mxu0 %v5514
      %v5607 = vpop.f32.mrb[0].mxu0
      %v5608 = vadd.f32 0.0, %v5607
      %v5609 = vpop.f32.mrb[0].mxu0
      %5610 = vmatprep.mubr.f32.mxu0 0.0
      %5611 = vmatmul.mubr.f32.gmra.mrb[0].mxu0 %v5517
      %v5612 = vpop.f32.mrb[0].mxu0
      %v5613 = vadd.f32 0.0, %v5612
      %v5614 = vpop.f32.mrb[0].mxu0
      %5615 = vmatprep.mubr.f32.mxu0 0.0
      %5616 = vmatmul.mubr.f32.gmra.mrb[0].mxu0 %v5520
      %v5617 = vpop.f32.mrb[0].mxu0
      %v5618 = vadd.f32 0.0, %v5617
      %v5619 = vpop.f32.mrb[0].mxu0
      %5620 = vmatprep.mubr.f32.mxu0 0.0
      %5621 = vmatmul.mubr.f32.gmra.mrb[0].mxu0 %v5523
      %v5622 = vpop.f32.mrb[0].mxu0
      %v5623 = vadd.f32 0.0, %v5622
      %v5624 = vpop.f32.mrb[0].mxu0
      %5625 = vmatprep.mubr.f32.mxu0 0.0
      %5626 = vmatmul.mubr.f32.gmra.mrb[0].mxu0 %v5526
      %v5627 = vpop.f32.mrb[0].mxu0
      %v5628 = vadd.f32 0.0, %v5627
      %v5629 = vpop.f32.mrb[0].mxu0
      %5630 = vmatprep.mubr.f32.mxu0 0.0
      %5631 = vmatmul.mubr.f32.gmra.mrb[0].mxu0 %v5529
      %v5632 = vpop.f32.mrb[0].mxu0
      %v5633 = vadd.f32 0.0, %v5632
      %v5634 = vpop.f32.mrb[0].mxu0
      %5635 = vdwg.mxu0
      %s5636 = scalar_lea.vmem %s9, 16
      %v5637 = vld [vmem:[%s5636] sm:$0xff]
      %v5638 = vld [vmem:[%s5636 + $0x8] sm:$0xff]
      %v5640 = vsel %vm1853, %v5211, 0
      %v5643 = vsel %vm1853, %v5216, 0
      %v5646 = vsel %vm1853, %v5221, 0
      %v5649 = vsel %vm1853, %v5226, 0
      %v5652 = vsel %vm1853, %v5231, 0
      %v5655 = vsel %vm1853, %v5236, 0
      %v5658 = vsel %vm1853, %v5241, 0
      %v5661 = vsel %vm1853, %v5246, 0
      %v5664 = vsel %vm1853, %v5340, 0
      %v5667 = vsel %vm1853, %v5345, 0
      %v5670 = vsel %vm1853, %v5350, 0
      %v5673 = vsel %vm1853, %v5355, 0
      %v5676 = vsel %vm1853, %v5360, 0
      %v5679 = vsel %vm1853, %v5365, 0
      %v5682 = vsel %vm1853, %v5370, 0
      %v5685 = vsel %vm1853, %v5375, 0
      %v5688 = vsel %vm1853, %v5469, 0
      %v5691 = vsel %vm1853, %v5474, 0
      %v5694 = vsel %vm1853, %v5479, 0
      %v5697 = vsel %vm1853, %v5484, 0
      %v5700 = vsel %vm1853, %v5489, 0
      %v5703 = vsel %vm1853, %v5494, 0
      %v5706 = vsel %vm1853, %v5499, 0
      %v5709 = vsel %vm1853, %v5504, 0
      %v5712 = vsel %vm1853, %v5598, 0
      %v5715 = vsel %vm1853, %v5603, 0
      %v5718 = vsel %vm1853, %v5608, 0
      %v5721 = vsel %vm1853, %v5613, 0
      %v5724 = vsel %vm1853, %v5618, 0
      %v5727 = vsel %vm1853, %v5623, 0
      %v5730 = vsel %vm1853, %v5628, 0
      %v5733 = vsel %vm1853, %v5633, 0
      %5735 = vmatprep.subr.mxu0 0.0
      %5736 = vmatpush1.msra.mxu0 %v5637
      %5737 = vmatprep.subr.mxu0 0.0
      %5738 = vmatpush1.msra.mxu0 %v5638
      %5739 = vmatprep.subr.mxu0 0.0
      %5740 = vmatpush1.msra.mxu0 0.0
      %5741 = vmatprep.subr.mxu0 0.0
      %5742 = vmatpush1.msra.mxu0 0.0
      %5743 = vmatprep.subr.mxu0 0.0
      %5744 = vmatpush1.msra.mxu0 0.0
      %5745 = vmatprep.subr.mxu0 0.0
      %5746 = vmatpush1.msra.mxu0 0.0
      %5747 = vmatprep.subr.mxu0 0.0
      %5748 = vmatpush1.msra.mxu0 0.0
      %5749 = vmatprep.subr.mxu0 0.0
      %5750 = vmatpush1.msra.mxu0 0.0
      %5751 = vmatprep.subr.mxu0 0.0
      %5752 = vmatpush1.msra.mxu0 0.0
      %5753 = vmatprep.subr.mxu0 0.0
      %5754 = vmatpush1.msra.mxu0 0.0
      %5755 = vmatprep.subr.mxu0 0.0
      %5756 = vmatpush1.msra.mxu0 0.0
      %5757 = vmatprep.subr.mxu0 0.0
      %5758 = vmatpush1.msra.mxu0 0.0
      %5759 = vmatprep.subr.mxu0 0.0
      %5760 = vmatpush1.msra.mxu0 0.0
      %5761 = vmatprep.subr.mxu0 0.0
      %5762 = vmatpush1.msra.mxu0 0.0
      %5763 = vmatprep.subr.mxu0 0.0
      %5764 = vmatpush1.msra.mxu0 0.0
      %5765 = vmatprep.subr.mxu0 0.0
      %5766 = vmatpush1.msra.mxu0 0.0
      %5767 = vmatprep.subr.mxu0 0.0
      %5768 = vmatpush1.msra.mxu0 0.0
      %5769 = vmatprep.subr.mxu0 0.0
      %5770 = vmatpush1.msra.mxu0 0.0
      %5771 = vmatprep.subr.mxu0 0.0
      %5772 = vmatpush1.msra.mxu0 0.0
      %5773 = vmatprep.subr.mxu0 0.0
      %5774 = vmatpush1.msra.mxu0 0.0
      %5775 = vmatprep.subr.mxu0 0.0
      %5776 = vmatpush1.msra.mxu0 0.0
      %5777 = vmatprep.subr.mxu0 0.0
      %5778 = vmatpush1.msra.mxu0 0.0
      %5779 = vmatprep.subr.mxu0 0.0
      %5780 = vmatpush1.msra.mxu0 0.0
      %5781 = vmatprep.subr.mxu0 0.0
      %5782 = vmatpush1.msra.mxu0 0.0
      %5783 = vmatprep.subr.mxu0 0.0
      %5784 = vmatpush1.msra.mxu0 0.0
      %5785 = vmatprep.subr.mxu0 0.0
      %5786 = vmatpush1.msra.mxu0 0.0
      %5787 = vmatprep.subr.mxu0 0.0
      %5788 = vmatpush1.msra.mxu0 0.0
      %5789 = vmatprep.subr.mxu0 0.0
      %5790 = vmatpush1.msra.mxu0 0.0
      %5791 = vmatprep.subr.mxu0 0.0
      %5792 = vmatpush1.msra.mxu0 0.0
      %5793 = vmatprep.subr.mxu0 0.0
      %5794 = vmatpush1.msra.mxu0 0.0
      %5795 = vmatprep.subr.mxu0 0.0
      %5796 = vmatpush1.msra.mxu0 0.0
      %5797 = vmatprep.subr.mxu0 0.0
      %5798 = vmatpush1.msra.mxu0 0.0
      %5799 = vmatprep.mubr.f32.mxu0 0.0
      %5800 = vmatmul.mubr.f32.gmra.mrb[0].mxu0 %v5640
      %v5801 = vpop.f32.mrb[0].mxu0
      %v5802 = vadd.f32 0.0, %v5801
      %v5803 = vpop.f32.mrb[0].mxu0
      %5804 = vmatprep.mubr.f32.mxu0 0.0
      %5805 = vmatmul.mubr.f32.gmra.mrb[0].mxu0 %v5643
      %v5806 = vpop.f32.mrb[0].mxu0
      %v5807 = vadd.f32 0.0, %v5806
      %v5808 = vpop.f32.mrb[0].mxu0
      %5809 = vmatprep.mubr.f32.mxu0 0.0
      %5810 = vmatmul.mubr.f32.gmra.mrb[0].mxu0 %v5646
      %v5811 = vpop.f32.mrb[0].mxu0
      %v5812 = vadd.f32 0.0, %v5811
      %v5813 = vpop.f32.mrb[0].mxu0
      %5814 = vmatprep.mubr.f32.mxu0 0.0
      %5815 = vmatmul.mubr.f32.gmra.mrb[0].mxu0 %v5649
      %v5816 = vpop.f32.mrb[0].mxu0
      %v5817 = vadd.f32 0.0, %v5816
      %v5818 = vpop.f32.mrb[0].mxu0
      %5819 = vmatprep.mubr.f32.mxu0 0.0
      %5820 = vmatmul.mubr.f32.gmra.mrb[0].mxu0 %v5652
      %v5821 = vpop.f32.mrb[0].mxu0
      %v5822 = vadd.f32 0.0, %v5821
      %v5823 = vpop.f32.mrb[0].mxu0
      %5824 = vmatprep.mubr.f32.mxu0 0.0
      %5825 = vmatmul.mubr.f32.gmra.mrb[0].mxu0 %v5655
      %v5826 = vpop.f32.mrb[0].mxu0
      %v5827 = vadd.f32 0.0, %v5826
      %v5828 = vpop.f32.mrb[0].mxu0
      %5829 = vmatprep.mubr.f32.mxu0 0.0
      %5830 = vmatmul.mubr.f32.gmra.mrb[0].mxu0 %v5658
      %v5831 = vpop.f32.mrb[0].mxu0
      %v5832 = vadd.f32 0.0, %v5831
      %v5833 = vpop.f32.mrb[0].mxu0
      %5834 = vmatprep.mubr.f32.mxu0 0.0
      %5835 = vmatmul.mubr.f32.gmra.mrb[0].mxu0 %v5661
      %v5836 = vpop.f32.mrb[0].mxu0
      %v5837 = vadd.f32 0.0, %v5836
      %v5838 = vpop.f32.mrb[0].mxu0
      %5839 = vmatprep.mubr.f32.mxu0 0.0
      %5840 = vmatmul.mubr.f32.gmra.mrb[0].mxu0 %v5664
      %v5841 = vpop.f32.mrb[0].mxu0
      %v5842 = vadd.f32 0.0, %v5841
      %v5843 = vpop.f32.mrb[0].mxu0
      %5844 = vmatprep.mubr.f32.mxu0 0.0
      %5845 = vmatmul.mubr.f32.gmra.mrb[0].mxu0 %v5667
      %v5846 = vpop.f32.mrb[0].mxu0
      %v5847 = vadd.f32 0.0, %v5846
      %v5848 = vpop.f32.mrb[0].mxu0
      %5849 = vmatprep.mubr.f32.mxu0 0.0
      %5850 = vmatmul.mubr.f32.gmra.mrb[0].mxu0 %v5670
      %v5851 = vpop.f32.mrb[0].mxu0
      %v5852 = vadd.f32 0.0, %v5851
      %v5853 = vpop.f32.mrb[0].mxu0
      %5854 = vmatprep.mubr.f32.mxu0 0.0
      %5855 = vmatmul.mubr.f32.gmra.mrb[0].mxu0 %v5673
      %v5856 = vpop.f32.mrb[0].mxu0
      %v5857 = vadd.f32 0.0, %v5856
      %v5858 = vpop.f32.mrb[0].mxu0
      %5859 = vmatprep.mubr.f32.mxu0 0.0
      %5860 = vmatmul.mubr.f32.gmra.mrb[0].mxu0 %v5676
      %v5861 = vpop.f32.mrb[0].mxu0
      %v5862 = vadd.f32 0.0, %v5861
      %v5863 = vpop.f32.mrb[0].mxu0
      %5864 = vmatprep.mubr.f32.mxu0 0.0
      %5865 = vmatmul.mubr.f32.gmra.mrb[0].mxu0 %v5679
      %v5866 = vpop.f32.mrb[0].mxu0
      %v5867 = vadd.f32 0.0, %v5866
      %v5868 = vpop.f32.mrb[0].mxu0
      %5869 = vmatprep.mubr.f32.mxu0 0.0
      %5870 = vmatmul.mubr.f32.gmra.mrb[0].mxu0 %v5682
      %v5871 = vpop.f32.mrb[0].mxu0
      %v5872 = vadd.f32 0.0, %v5871
      %v5873 = vpop.f32.mrb[0].mxu0
      %5874 = vmatprep.mubr.f32.mxu0 0.0
      %5875 = vmatmul.mubr.f32.gmra.mrb[0].mxu0 %v5685
      %v5876 = vpop.f32.mrb[0].mxu0
      %v5877 = vadd.f32 0.0, %v5876
      %v5878 = vpop.f32.mrb[0].mxu0
      %5879 = vmatprep.mubr.f32.mxu0 0.0
      %5880 = vmatmul.mubr.f32.gmra.mrb[0].mxu0 %v5688
      %v5881 = vpop.f32.mrb[0].mxu0
      %v5882 = vadd.f32 0.0, %v5881
      %v5883 = vpop.f32.mrb[0].mxu0
      %5884 = vmatprep.mubr.f32.mxu0 0.0
      %5885 = vmatmul.mubr.f32.gmra.mrb[0].mxu0 %v5691
      %v5886 = vpop.f32.mrb[0].mxu0
      %v5887 = vadd.f32 0.0, %v5886
      %v5888 = vpop.f32.mrb[0].mxu0
      %5889 = vmatprep.mubr.f32.mxu0 0.0
      %5890 = vmatmul.mubr.f32.gmra.mrb[0].mxu0 %v5694
      %v5891 = vpop.f32.mrb[0].mxu0
      %v5892 = vadd.f32 0.0, %v5891
      %v5893 = vpop.f32.mrb[0].mxu0
      %5894 = vmatprep.mubr.f32.mxu0 0.0
      %5895 = vmatmul.mubr.f32.gmra.mrb[0].mxu0 %v5697
      %v5896 = vpop.f32.mrb[0].mxu0
      %v5897 = vadd.f32 0.0, %v5896
      %v5898 = vpop.f32.mrb[0].mxu0
      %5899 = vmatprep.mubr.f32.mxu0 0.0
      %5900 = vmatmul.mubr.f32.gmra.mrb[0].mxu0 %v5700
      %v5901 = vpop.f32.mrb[0].mxu0
      %v5902 = vadd.f32 0.0, %v5901
      %v5903 = vpop.f32.mrb[0].mxu0
      %5904 = vmatprep.mubr.f32.mxu0 0.0
      %5905 = vmatmul.mubr.f32.gmra.mrb[0].mxu0 %v5703
      %v5906 = vpop.f32.mrb[0].mxu0
      %v5907 = vadd.f32 0.0, %v5906
      %v5908 = vpop.f32.mrb[0].mxu0
      %5909 = vmatprep.mubr.f32.mxu0 0.0
      %5910 = vmatmul.mubr.f32.gmra.mrb[0].mxu0 %v5706
      %v5911 = vpop.f32.mrb[0].mxu0
      %v5912 = vadd.f32 0.0, %v5911
      %v5913 = vpop.f32.mrb[0].mxu0
      %5914 = vmatprep.mubr.f32.mxu0 0.0
      %5915 = vmatmul.mubr.f32.gmra.mrb[0].mxu0 %v5709
      %v5916 = vpop.f32.mrb[0].mxu0
      %v5917 = vadd.f32 0.0, %v5916
      %v5918 = vpop.f32.mrb[0].mxu0
      %5919 = vmatprep.mubr.f32.mxu0 0.0
      %5920 = vmatmul.mubr.f32.gmra.mrb[0].mxu0 %v5712
      %v5921 = vpop.f32.mrb[0].mxu0
      %v5922 = vadd.f32 0.0, %v5921
      %v5923 = vpop.f32.mrb[0].mxu0
      %5924 = vmatprep.mubr.f32.mxu0 0.0
      %5925 = vmatmul.mubr.f32.gmra.mrb[0].mxu0 %v5715
      %v5926 = vpop.f32.mrb[0].mxu0
      %v5927 = vadd.f32 0.0, %v5926
      %v5928 = vpop.f32.mrb[0].mxu0
      %5929 = vmatprep.mubr.f32.mxu0 0.0
      %5930 = vmatmul.mubr.f32.gmra.mrb[0].mxu0 %v5718
      %v5931 = vpop.f32.mrb[0].mxu0
      %v5932 = vadd.f32 0.0, %v5931
      %v5933 = vpop.f32.mrb[0].mxu0
      %5934 = vmatprep.mubr.f32.mxu0 0.0
      %5935 = vmatmul.mubr.f32.gmra.mrb[0].mxu0 %v5721
      %v5936 = vpop.f32.mrb[0].mxu0
      %v5937 = vadd.f32 0.0, %v5936
      %v5938 = vpop.f32.mrb[0].mxu0
      %5939 = vmatprep.mubr.f32.mxu0 0.0
      %5940 = vmatmul.mubr.f32.gmra.mrb[0].mxu0 %v5724
      %v5941 = vpop.f32.mrb[0].mxu0
      %v5942 = vadd.f32 0.0, %v5941
      %v5943 = vpop.f32.mrb[0].mxu0
      %5944 = vmatprep.mubr.f32.mxu0 0.0
      %5945 = vmatmul.mubr.f32.gmra.mrb[0].mxu0 %v5727
      %v5946 = vpop.f32.mrb[0].mxu0
      %v5947 = vadd.f32 0.0, %v5946
      %v5948 = vpop.f32.mrb[0].mxu0
      %5949 = vmatprep.mubr.f32.mxu0 0.0
      %5950 = vmatmul.mubr.f32.gmra.mrb[0].mxu0 %v5730
      %v5951 = vpop.f32.mrb[0].mxu0
      %v5952 = vadd.f32 0.0, %v5951
      %v5953 = vpop.f32.mrb[0].mxu0
      %5954 = vmatprep.mubr.f32.mxu0 0.0
      %5955 = vmatmul.mubr.f32.gmra.mrb[0].mxu0 %v5733
      %v5956 = vpop.f32.mrb[0].mxu0
      %v5957 = vadd.f32 0.0, %v5956
      %v5958 = vpop.f32.mrb[0].mxu0
      %5959 = vdwg.mxu0
      %v5961 = vsel %vm1853, %v2942, 0
      %v5964 = vsel %vm1853, %v2947, 0
      %v5967 = vsel %vm1853, %v2952, 0
      %v5970 = vsel %vm1853, %v2957, 0
      %v5973 = vsel %vm1853, %v2962, 0
      %v5976 = vsel %vm1853, %v2967, 0
      %v5979 = vsel %vm1853, %v2972, 0
      %v5982 = vsel %vm1853, %v2977, 0
      %v5985 = vsel %vm1853, %v3071, 0
      %v5988 = vsel %vm1853, %v3076, 0
      %v5991 = vsel %vm1853, %v3081, 0
      %v5994 = vsel %vm1853, %v3086, 0
      %v5997 = vsel %vm1853, %v3091, 0
      %v6000 = vsel %vm1853, %v3096, 0
      %v6003 = vsel %vm1853, %v3101, 0
      %v6006 = vsel %vm1853, %v3106, 0
      %v6009 = vsel %vm1853, %v3200, 0
      %v6012 = vsel %vm1853, %v3205, 0
      %v6015 = vsel %vm1853, %v3210, 0
      %v6018 = vsel %vm1853, %v3215, 0
      %v6021 = vsel %vm1853, %v3220, 0
      %v6024 = vsel %vm1853, %v3225, 0
      %v6027 = vsel %vm1853, %v3230, 0
      %v6030 = vsel %vm1853, %v3235, 0
      %v6033 = vsel %vm1853, %v3329, 0
      %v6036 = vsel %vm1853, %v3334, 0
      %v6039 = vsel %vm1853, %v3339, 0
      %v6042 = vsel %vm1853, %v3344, 0
      %v6045 = vsel %vm1853, %v3349, 0
      %v6048 = vsel %vm1853, %v3354, 0
      %v6051 = vsel %vm1853, %v3359, 0
      %v6054 = vsel %vm1853, %v3364, 0
      %6056 = vmatprep.subr.mxu0 0.0
      %6057 = vmatpush1.msra.mxu0 %v3367
      %6058 = vmatprep.subr.mxu0 0.0
      %6059 = vmatpush1.msra.mxu0 %v3368
      %6060 = vmatprep.subr.mxu0 0.0
      %6061 = vmatpush1.msra.mxu0 0.0
      %6062 = vmatprep.subr.mxu0 0.0
      %6063 = vmatpush1.msra.mxu0 0.0
      %6064 = vmatprep.subr.mxu0 0.0
      %6065 = vmatpush1.msra.mxu0 0.0
      %6066 = vmatprep.subr.mxu0 0.0
      %6067 = vmatpush1.msra.mxu0 0.0
      %6068 = vmatprep.subr.mxu0 0.0
      %6069 = vmatpush1.msra.mxu0 0.0
      %6070 = vmatprep.subr.mxu0 0.0
      %6071 = vmatpush1.msra.mxu0 0.0
      %6072 = vmatprep.subr.mxu0 0.0
      %6073 = vmatpush1.msra.mxu0 0.0
      %6074 = vmatprep.subr.mxu0 0.0
      %6075 = vmatpush1.msra.mxu0 0.0
      %6076 = vmatprep.subr.mxu0 0.0
      %6077 = vmatpush1.msra.mxu0 0.0
      %6078 = vmatprep.subr.mxu0 0.0
      %6079 = vmatpush1.msra.mxu0 0.0
      %6080 = vmatprep.subr.mxu0 0.0
      %6081 = vmatpush1.msra.mxu0 0.0
      %6082 = vmatprep.subr.mxu0 0.0
      %6083 = vmatpush1.msra.mxu0 0.0
      %6084 = vmatprep.subr.mxu0 0.0
      %6085 = vmatpush1.msra.mxu0 0.0
      %6086 = vmatprep.subr.mxu0 0.0
      %6087 = vmatpush1.msra.mxu0 0.0
      %6088 = vmatprep.subr.mxu0 0.0
      %6089 = vmatpush1.msra.mxu0 0.0
      %6090 = vmatprep.subr.mxu0 0.0
      %6091 = vmatpush1.msra.mxu0 0.0
      %6092 = vmatprep.subr.mxu0 0.0
      %6093 = vmatpush1.msra.mxu0 0.0
      %6094 = vmatprep.subr.mxu0 0.0
      %6095 = vmatpush1.msra.mxu0 0.0
      %6096 = vmatprep.subr.mxu0 0.0
      %6097 = vmatpush1.msra.mxu0 0.0
      %6098 = vmatprep.subr.mxu0 0.0
      %6099 = vmatpush1.msra.mxu0 0.0
      %6100 = vmatprep.subr.mxu0 0.0
      %6101 = vmatpush1.msra.mxu0 0.0
      %6102 = vmatprep.subr.mxu0 0.0
      %6103 = vmatpush1.msra.mxu0 0.0
      %6104 = vmatprep.subr.mxu0 0.0
      %6105 = vmatpush1.msra.mxu0 0.0
      %6106 = vmatprep.subr.mxu0 0.0
      %6107 = vmatpush1.msra.mxu0 0.0
      %6108 = vmatprep.subr.mxu0 0.0
      %6109 = vmatpush1.msra.mxu0 0.0
      %6110 = vmatprep.subr.mxu0 0.0
      %6111 = vmatpush1.msra.mxu0 0.0
      %6112 = vmatprep.subr.mxu0 0.0
      %6113 = vmatpush1.msra.mxu0 0.0
      %6114 = vmatprep.subr.mxu0 0.0
      %6115 = vmatpush1.msra.mxu0 0.0
      %6116 = vmatprep.subr.mxu0 0.0
      %6117 = vmatpush1.msra.mxu0 0.0
      %6118 = vmatprep.subr.mxu0 0.0
      %6119 = vmatpush1.msra.mxu0 0.0
      %6120 = vmatprep.mubr.f32.mxu0 0.0
      %6121 = vmatmul.mubr.f32.gmra.mrb[0].mxu0 %v5961
      %v6122 = vpop.f32.mrb[0].mxu0
      %v6123 = vadd.f32 %v5802, %v6122
      %v6124 = vpop.f32.mrb[0].mxu0
      %6125 = vmatprep.mubr.f32.mxu0 0.0
      %6126 = vmatmul.mubr.f32.gmra.mrb[0].mxu0 %v5964
      %v6127 = vpop.f32.mrb[0].mxu0
      %v6128 = vadd.f32 %v5807, %v6127
      %v6129 = vpop.f32.mrb[0].mxu0
      %6130 = vmatprep.mubr.f32.mxu0 0.0
      %6131 = vmatmul.mubr.f32.gmra.mrb[0].mxu0 %v5967
      %v6132 = vpop.f32.mrb[0].mxu0
      %v6133 = vadd.f32 %v5812, %v6132
      %v6134 = vpop.f32.mrb[0].mxu0
      %6135 = vmatprep.mubr.f32.mxu0 0.0
      %6136 = vmatmul.mubr.f32.gmra.mrb[0].mxu0 %v5970
      %v6137 = vpop.f32.mrb[0].mxu0
      %v6138 = vadd.f32 %v5817, %v6137
      %v6139 = vpop.f32.mrb[0].mxu0
      %6140 = vmatprep.mubr.f32.mxu0 0.0
      %6141 = vmatmul.mubr.f32.gmra.mrb[0].mxu0 %v5973
      %v6142 = vpop.f32.mrb[0].mxu0
      %v6143 = vadd.f32 %v5822, %v6142
      %v6144 = vpop.f32.mrb[0].mxu0
      %6145 = vmatprep.mubr.f32.mxu0 0.0
      %6146 = vmatmul.mubr.f32.gmra.mrb[0].mxu0 %v5976
      %v6147 = vpop.f32.mrb[0].mxu0
      %v6148 = vadd.f32 %v5827, %v6147
      %v6149 = vpop.f32.mrb[0].mxu0
      %6150 = vmatprep.mubr.f32.mxu0 0.0
      %6151 = vmatmul.mubr.f32.gmra.mrb[0].mxu0 %v5979
      %v6152 = vpop.f32.mrb[0].mxu0
      %v6153 = vadd.f32 %v5832, %v6152
      %v6154 = vpop.f32.mrb[0].mxu0
      %6155 = vmatprep.mubr.f32.mxu0 0.0
      %6156 = vmatmul.mubr.f32.gmra.mrb[0].mxu0 %v5982
      %v6157 = vpop.f32.mrb[0].mxu0
      %v6158 = vadd.f32 %v5837, %v6157
      %v6159 = vpop.f32.mrb[0].mxu0
      %6160 = vmatprep.mubr.f32.mxu0 0.0
      %6161 = vmatmul.mubr.f32.gmra.mrb[0].mxu0 %v5985
      %v6162 = vpop.f32.mrb[0].mxu0
      %v6163 = vadd.f32 %v5842, %v6162
      %v6164 = vpop.f32.mrb[0].mxu0
      %6165 = vmatprep.mubr.f32.mxu0 0.0
      %6166 = vmatmul.mubr.f32.gmra.mrb[0].mxu0 %v5988
      %v6167 = vpop.f32.mrb[0].mxu0
      %v6168 = vadd.f32 %v5847, %v6167
      %v6169 = vpop.f32.mrb[0].mxu0
      %6170 = vmatprep.mubr.f32.mxu0 0.0
      %6171 = vmatmul.mubr.f32.gmra.mrb[0].mxu0 %v5991
      %v6172 = vpop.f32.mrb[0].mxu0
      %v6173 = vadd.f32 %v5852, %v6172
      %v6174 = vpop.f32.mrb[0].mxu0
      %6175 = vmatprep.mubr.f32.mxu0 0.0
      %6176 = vmatmul.mubr.f32.gmra.mrb[0].mxu0 %v5994
      %v6177 = vpop.f32.mrb[0].mxu0
      %v6178 = vadd.f32 %v5857, %v6177
      %v6179 = vpop.f32.mrb[0].mxu0
      %6180 = vmatprep.mubr.f32.mxu0 0.0
      %6181 = vmatmul.mubr.f32.gmra.mrb[0].mxu0 %v5997
      %v6182 = vpop.f32.mrb[0].mxu0
      %v6183 = vadd.f32 %v5862, %v6182
      %v6184 = vpop.f32.mrb[0].mxu0
      %6185 = vmatprep.mubr.f32.mxu0 0.0
      %6186 = vmatmul.mubr.f32.gmra.mrb[0].mxu0 %v6000
      %v6187 = vpop.f32.mrb[0].mxu0
      %v6188 = vadd.f32 %v5867, %v6187
      %v6189 = vpop.f32.mrb[0].mxu0
      %6190 = vmatprep.mubr.f32.mxu0 0.0
      %6191 = vmatmul.mubr.f32.gmra.mrb[0].mxu0 %v6003
      %v6192 = vpop.f32.mrb[0].mxu0
      %v6193 = vadd.f32 %v5872, %v6192
      %v6194 = vpop.f32.mrb[0].mxu0
      %6195 = vmatprep.mubr.f32.mxu0 0.0
      %6196 = vmatmul.mubr.f32.gmra.mrb[0].mxu0 %v6006
      %v6197 = vpop.f32.mrb[0].mxu0
      %v6198 = vadd.f32 %v5877, %v6197
      %v6199 = vpop.f32.mrb[0].mxu0
      %6200 = vmatprep.mubr.f32.mxu0 0.0
      %6201 = vmatmul.mubr.f32.gmra.mrb[0].mxu0 %v6009
      %v6202 = vpop.f32.mrb[0].mxu0
      %v6203 = vadd.f32 %v5882, %v6202
      %v6204 = vpop.f32.mrb[0].mxu0
      %6205 = vmatprep.mubr.f32.mxu0 0.0
      %6206 = vmatmul.mubr.f32.gmra.mrb[0].mxu0 %v6012
      %v6207 = vpop.f32.mrb[0].mxu0
      %v6208 = vadd.f32 %v5887, %v6207
      %v6209 = vpop.f32.mrb[0].mxu0
      %6210 = vmatprep.mubr.f32.mxu0 0.0
      %6211 = vmatmul.mubr.f32.gmra.mrb[0].mxu0 %v6015
      %v6212 = vpop.f32.mrb[0].mxu0
      %v6213 = vadd.f32 %v5892, %v6212
      %v6214 = vpop.f32.mrb[0].mxu0
      %6215 = vmatprep.mubr.f32.mxu0 0.0
      %6216 = vmatmul.mubr.f32.gmra.mrb[0].mxu0 %v6018
      %v6217 = vpop.f32.mrb[0].mxu0
      %v6218 = vadd.f32 %v5897, %v6217
      %v6219 = vpop.f32.mrb[0].mxu0
      %6220 = vmatprep.mubr.f32.mxu0 0.0
      %6221 = vmatmul.mubr.f32.gmra.mrb[0].mxu0 %v6021
      %v6222 = vpop.f32.mrb[0].mxu0
      %v6223 = vadd.f32 %v5902, %v6222
      %v6224 = vpop.f32.mrb[0].mxu0
      %6225 = vmatprep.mubr.f32.mxu0 0.0
      %6226 = vmatmul.mubr.f32.gmra.mrb[0].mxu0 %v6024
      %v6227 = vpop.f32.mrb[0].mxu0
      %v6228 = vadd.f32 %v5907, %v6227
      %v6229 = vpop.f32.mrb[0].mxu0
      %6230 = vmatprep.mubr.f32.mxu0 0.0
      %6231 = vmatmul.mubr.f32.gmra.mrb[0].mxu0 %v6027
      %v6232 = vpop.f32.mrb[0].mxu0
      %v6233 = vadd.f32 %v5912, %v6232
      %v6234 = vpop.f32.mrb[0].mxu0
      %6235 = vmatprep.mubr.f32.mxu0 0.0
      %6236 = vmatmul.mubr.f32.gmra.mrb[0].mxu0 %v6030
      %v6237 = vpop.f32.mrb[0].mxu0
      %v6238 = vadd.f32 %v5917, %v6237
      %v6239 = vpop.f32.mrb[0].mxu0
      %6240 = vmatprep.mubr.f32.mxu0 0.0
      %6241 = vmatmul.mubr.f32.gmra.mrb[0].mxu0 %v6033
      %v6242 = vpop.f32.mrb[0].mxu0
      %v6243 = vadd.f32 %v5922, %v6242
      %v6244 = vpop.f32.mrb[0].mxu0
      %6245 = vmatprep.mubr.f32.mxu0 0.0
      %6246 = vmatmul.mubr.f32.gmra.mrb[0].mxu0 %v6036
      %v6247 = vpop.f32.mrb[0].mxu0
      %v6248 = vadd.f32 %v5927, %v6247
      %v6249 = vpop.f32.mrb[0].mxu0
      %6250 = vmatprep.mubr.f32.mxu0 0.0
      %6251 = vmatmul.mubr.f32.gmra.mrb[0].mxu0 %v6039
      %v6252 = vpop.f32.mrb[0].mxu0
      %v6253 = vadd.f32 %v5932, %v6252
      %v6254 = vpop.f32.mrb[0].mxu0
      %6255 = vmatprep.mubr.f32.mxu0 0.0
      %6256 = vmatmul.mubr.f32.gmra.mrb[0].mxu0 %v6042
      %v6257 = vpop.f32.mrb[0].mxu0
      %v6258 = vadd.f32 %v5937, %v6257
      %v6259 = vpop.f32.mrb[0].mxu0
      %6260 = vmatprep.mubr.f32.mxu0 0.0
      %6261 = vmatmul.mubr.f32.gmra.mrb[0].mxu0 %v6045
      %v6262 = vpop.f32.mrb[0].mxu0
      %v6263 = vadd.f32 %v5942, %v6262
      %v6264 = vpop.f32.mrb[0].mxu0
      %6265 = vmatprep.mubr.f32.mxu0 0.0
      %6266 = vmatmul.mubr.f32.gmra.mrb[0].mxu0 %v6048
      %v6267 = vpop.f32.mrb[0].mxu0
      %v6268 = vadd.f32 %v5947, %v6267
      %v6269 = vpop.f32.mrb[0].mxu0
      %6270 = vmatprep.mubr.f32.mxu0 0.0
      %6271 = vmatmul.mubr.f32.gmra.mrb[0].mxu0 %v6051
      %v6272 = vpop.f32.mrb[0].mxu0
      %v6273 = vadd.f32 %v5952, %v6272
      %v6274 = vpop.f32.mrb[0].mxu0
      %6275 = vmatprep.mubr.f32.mxu0 0.0
      %6276 = vmatmul.mubr.f32.gmra.mrb[0].mxu0 %v6054
      %v6277 = vpop.f32.mrb[0].mxu0
      %v6278 = vadd.f32 %v5957, %v6277
      %v6279 = vpop.f32.mrb[0].mxu0
      %6280 = vdwg.mxu0
      %v6281 = vld [vmem:[%s10] sm:$0x1]
      %v6283 = vlaneseq
      %v6284 = vshrl.u32 %v6283, 7
      %v6285 = vsub.s32 0, %v6284
      %v6286 = vrot.slane %v6281, %v6285
      %v6288 = vadd.f32 %v6123, %v6286
      %v6289 = vadd.f32 %v6128, %v6286
      %v6290 = vadd.f32 %v6133, %v6286
      %v6291 = vadd.f32 %v6138, %v6286
      %v6292 = vadd.f32 %v6143, %v6286
      %v6293 = vadd.f32 %v6148, %v6286
      %v6294 = vadd.f32 %v6153, %v6286
      %v6295 = vadd.f32 %v6158, %v6286
      %v6296 = vadd.f32 %v6163, %v6286
      %v6297 = vadd.f32 %v6168, %v6286
      %v6298 = vadd.f32 %v6173, %v6286
      %v6299 = vadd.f32 %v6178, %v6286
      %v6300 = vadd.f32 %v6183, %v6286
      %v6301 = vadd.f32 %v6188, %v6286
      %v6302 = vadd.f32 %v6193, %v6286
      %v6303 = vadd.f32 %v6198, %v6286
      %v6304 = vadd.f32 %v6203, %v6286
      %v6305 = vadd.f32 %v6208, %v6286
      %v6306 = vadd.f32 %v6213, %v6286
      %v6307 = vadd.f32 %v6218, %v6286
      %v6308 = vadd.f32 %v6223, %v6286
      %v6309 = vadd.f32 %v6228, %v6286
      %v6310 = vadd.f32 %v6233, %v6286
      %v6311 = vadd.f32 %v6238, %v6286
      %v6312 = vadd.f32 %v6243, %v6286
      %v6313 = vadd.f32 %v6248, %v6286
      %v6314 = vadd.f32 %v6253, %v6286
      %v6315 = vadd.f32 %v6258, %v6286
      %v6316 = vadd.f32 %v6263, %v6286
      %v6317 = vadd.f32 %v6268, %v6286
      %v6318 = vadd.f32 %v6273, %v6286
      %v6319 = vadd.f32 %v6278, %v6286
      %6320 = vst.msk [vmem:[%s447] sm:$0xff] %vm481, %v6288
      %6321 = vst.msk [vmem:[%s447 + $0x8] sm:$0xff] %vm481, %v6289
      %6322 = vst.msk [vmem:[%s447 + $0x10] sm:$0xff] %vm481, %v6290
      %6323 = vst.msk [vmem:[%s447 + $0x18] sm:$0xff] %vm481, %v6291
      %6324 = vst.msk [vmem:[%s447 + $0x20] sm:$0xff] %vm481, %v6292
      %6325 = vst.msk [vmem:[%s447 + $0x28] sm:$0xff] %vm481, %v6293
      %6326 = vst.msk [vmem:[%s447 + $0x30] sm:$0xff] %vm481, %v6294
      %6327 = vst.msk [vmem:[%s447 + $0x38] sm:$0xff] %vm481, %v6295
      %6328 = vst.msk [vmem:[%s447 + $0x40] sm:$0xff] %vm481, %v6296
      %6329 = vst.msk [vmem:[%s447 + $0x48] sm:$0xff] %vm481, %v6297
      %6330 = vst.msk [vmem:[%s447 + $0x50] sm:$0xff] %vm481, %v6298
      %6331 = vst.msk [vmem:[%s447 + $0x58] sm:$0xff] %vm481, %v6299
      %6332 = vst.msk [vmem:[%s447 + $0x60] sm:$0xff] %vm481, %v6300
      %6333 = vst.msk [vmem:[%s447 + $0x68] sm:$0xff] %vm481, %v6301
      %6334 = vst.msk [vmem:[%s447 + $0x70] sm:$0xff] %vm481, %v6302
      %6335 = vst.msk [vmem:[%s447 + $0x78] sm:$0xff] %vm481, %v6303
      %6336 = vst.msk [vmem:[%s447 + $0x80] sm:$0xff] %vm481, %v6304
      %6337 = vst.msk [vmem:[%s447 + $0x88] sm:$0xff] %vm481, %v6305
      %6338 = vst.msk [vmem:[%s447 + $0x90] sm:$0xff] %vm481, %v6306
      %6339 = vst.msk [vmem:[%s447 + $0x98] sm:$0xff] %vm481, %v6307
      %6340 = vst.msk [vmem:[%s447 + $0xa0] sm:$0xff] %vm481, %v6308
      %6341 = vst.msk [vmem:[%s447 + $0xa8] sm:$0xff] %vm481, %v6309
      %6342 = vst.msk [vmem:[%s447 + $0xb0] sm:$0xff] %vm481, %v6310
      %6343 = vst.msk [vmem:[%s447 + $0xb8] sm:$0xff] %vm481, %v6311
      %6344 = vst.msk [vmem:[%s447 + $0xc0] sm:$0xff] %vm481, %v6312
      %6345 = vst.msk [vmem:[%s447 + $0xc8] sm:$0xff] %vm481, %v6313
      %6346 = vst.msk [vmem:[%s447 + $0xd0] sm:$0xff] %vm481, %v6314
      %6347 = vst.msk [vmem:[%s447 + $0xd8] sm:$0xff] %vm481, %v6315
      %6348 = vst.msk [vmem:[%s447 + $0xe0] sm:$0xff] %vm481, %v6316
      %6349 = vst.msk [vmem:[%s447 + $0xe8] sm:$0xff] %vm481, %v6317
      %6350 = vst.msk [vmem:[%s447 + $0xf0] sm:$0xff] %vm481, %v6318
      %6351 = vst.msk [vmem:[%s447 + $0xf8] sm:$0xff] %vm481, %v6319
      %s6352 = smul.u32 4, %s24
      %p6353 = scmp.lt.s32.totalorder %s6352, 7
      %s6354 = scalar_select %p6353, %s6352, 7
      %s6355 = smul.addr %s6354, 8
      %s6356 = smul.addr %s6355, 8
      %s6357 = scalar_lea.vmem %s13, %s6356
      // Predicated region
      $region73: #{swin_block_v1_pallas.2} parent=71 // pred_check
        %p6358 = pneg %p320
      $region74: #{swin_block_v1_pallas.2} parent=71 // pred_check_branch
        %6360 = sbr.rel (%p6358) target = $region76
      $region75: #{swin_block_v1_pallas.2} parent=71 // pred_region
        %s6361 = smul.u32 4, %s24
      $region76: #{swin_block_v1_pallas.2} parent=71 // pred_fallthru
        _
    $region72: #{swin_block_v1_pallas.2} parent=5 // pred_fallthru
      _
    %p6362 = scmp.le.s32.totalorder 2, %s19
    // Predicated region
    $region77: #{swin_block_v1_pallas.2} parent=5 // pred_check
      %p6363 = pneg %p6362
    $region78: #{swin_block_v1_pallas.2} parent=5 // pred_check_branch
      %6365 = sbr.rel (%p6363) target = $region80
    $region79: #{swin_block_v1_pallas.2} parent=5 // pred_region
      %s6366 = ssub.s32 %s19, 2
      // Predicated region
      $region81: #{swin_block_v1_pallas.2} parent=79 // pred_check
        %p6367 = pneg %p326
      $region82: #{swin_block_v1_pallas.2} parent=79 // pred_check_branch
        %6369 = sbr.rel (%p6367) target = $region84
      $region83: #{swin_block_v1_pallas.2} parent=79 // pred_region
        %s6370 = smul.u32 4, %s25
        %p6371 = scmp.lt.s32.totalorder %s6370, 7
        %s6372 = scalar_select %p6371, %s6370, 7
        %s6373 = smul.addr %s6372, 8
        %s6374 = smul.addr %s6373, 8
        %s6375 = scalar_lea.vmem %s13, %s6374
      $region84: #{swin_block_v1_pallas.2} parent=79 // pred_fallthru
        _
    $region80: #{swin_block_v1_pallas.2} parent=5 // pred_fallthru
      _
  $region6: #{swin_block_v1_pallas.2} parent=0 // loop_footer
    %s23 = sadd.s32 1, %s19
  $region7: #{swin_block_v1_pallas.2} parent=0 // loop_footer_branch
    %18 = sbr.rel target = $region3
  $region8: #{swin_block_v1_pallas.2} parent=0 // loop_exit
    _

</llo_original>
